<compile_context>
chip_gen: v7x
topology: tpu7x:2x2x1
jax: 0.10.0
libtpu: 0.0.40
codegen_flags: <defaults>
</compile_context>

<pallas_src>
import functools

import jax
import jax.numpy as jnp
from jax.experimental import pallas as pl
from jax.experimental.pallas import tpu as pltpu

_LANE = 128
_SUBLANE = 8
_VMEM = pl.BlockSpec(memory_space=pltpu.MemorySpace.VMEM)
_SMEM = pl.BlockSpec(memory_space=pltpu.MemorySpace.SMEM)


def _round_up(x, m):
    return (x + m - 1) // m * m


# ---------------------------------------------------------------------------
# Fused kernel: feature merger + encoder LSTM (2 layers) + decoder LSTM (2 layers)
# ---------------------------------------------------------------------------
def _vtg_fused_kernel(
    tok_ref,                 # SMEM (T_dec*B,) int32, time-major (row = t*B + b)
    feat_in_ref,             # VMEM (T_enc*B, Fin) bf16, time-major
    fm_w1_ref, fm_b1_ref, fm_w2_ref, fm_b2_ref,
    enc_wih0_ref, enc_whh0_ref, enc_b0_ref,
    enc_wih1_ref, enc_whh1_ref, enc_b1_ref,
    emb_gates_ref,           # VMEM (VP, 4HP) f32 : embedding @ W_ih[:E] (pre-folded)
    dec_wctx_ref, dec_whh0_ref, dec_b0_ref,
    dec_wih1_ref, dec_whh1_ref, dec_b1_ref,
    hseq_ref,                # OUT VMEM (B, T_dec, HP) f32 : decoder top-layer h_t
    gates_ref,               # scratch VMEM (Tmax*B, 4HP) f32 : reused gate slab
    seq_ref,                 # scratch VMEM (Tmax*B, HP)  f32 : reused hidden slab
    *, B, T_enc, T_dec, HP,
):
    f32, bf16 = jnp.float32, jnp.bfloat16

    def mm(a, w):
        # MXU matmul: bf16 operands, f32 accumulation.
        return jnp.dot(a.astype(bf16), w, preferred_element_type=f32)

    def cell(gates, c_prev):
        # Kernel gate order (i, f, o, g): one fused sigmoid over the 3*HP slab,
        # one tanh over the last HP slab (shorter serial critical path per step).
        sig = jax.nn.sigmoid(gates[:, : 3 * HP])
        i = sig[:, 0 * HP:1 * HP]
        f = sig[:, 1 * HP:2 * HP]
        o = sig[:, 2 * HP:3 * HP]
        g = jnp.tanh(gates[:, 3 * HP:4 * HP])
        c_new = f * c_prev + i * g
        return o * jnp.tanh(c_new), c_new

    zeros = jnp.zeros((B, HP), f32)

    # ---- feature merger: all encoder timesteps batched into one matmul each ----
    h1 = jnp.maximum(mm(feat_in_ref[...], fm_w1_ref[...]) + fm_b1_ref[...], 0.0)
    feat = jnp.maximum(mm(h1, fm_w2_ref[...]) + fm_b2_ref[...], 0.0)   # (Tenc*B, HP)

    # ---- encoder layer 0: batched input gates -> recurrence writes seq slab ----
    gates_ref[0:T_enc * B, :] = mm(feat, enc_wih0_ref[...]) + enc_b0_ref[...]
    whh = enc_whh0_ref[...]                       # read once, hoisted out of loop
    h, c = zeros, zeros
    for t in range(T_enc):                        # T small & static: full unroll
        g = gates_ref[t * B:(t + 1) * B, :] + mm(h, whh)
        h, c = cell(g, c)
        seq_ref[t * B:(t + 1) * B, :] = h
    h_enc0, c_enc0 = h, c

    # ---- encoder layer 1 (inter-layer dropout = identity in eval mode) ----
    gates_ref[0:T_enc * B, :] = (mm(seq_ref[0:T_enc * B, :], enc_wih1_ref[...])
                                 + enc_b1_ref[...])
    whh = enc_whh1_ref[...]
    h, c = zeros, zeros
    for t in range(T_enc):
        g = gates_ref[t * B:(t + 1) * B, :] + mm(h, whh)
        h, c = cell(g, c)
    h_enc1, c_enc1 = h, c

    # ---- decoder embedding: gather the pre-folded gate rows by SMEM token id ----
    for r in range(T_dec * B):
        gates_ref[r:r + 1, :] = emb_gates_ref[pl.ds(tok_ref[r], 1), :]

    # Context (= encoder top-layer final hidden) is constant across decoder steps:
    # fold it into the layer-0 gate bias once.
    ctx_bias = mm(h_enc1, dec_wctx_ref[...]) + dec_b0_ref[...]          # (B, 4HP)

    # ---- decoder layer 0 (init = encoder layer-0 final state) ----
    whh = dec_whh0_ref[...]
    h, c = h_enc0, c_enc0
    for t in range(T_dec):
        g = gates_ref[t * B:(t + 1) * B, :] + ctx_bias + mm(h, whh)
        h, c = cell(g, c)
        seq_ref[t * B:(t + 1) * B, :] = h

    # ---- decoder layer 1 (init = encoder layer-1 final state) ----
    gates_ref[0:T_dec * B, :] = (mm(seq_ref[0:T_dec * B, :], dec_wih1_ref[...])
                                 + dec_b1_ref[...])
    whh = dec_whh1_ref[...]
    h, c = h_enc1, c_enc1
    for t in range(T_dec):
        g = gates_ref[t * B:(t + 1) * B, :] + mm(h, whh)
        h, c = cell(g, c)
        hseq_ref[:, t, :] = h        # batch-major store: no post-kernel transpose


# ---------------------------------------------------------------------------
# Vocab projection: grid-tiled over vocab lanes, out_w streamed per tile.
# ---------------------------------------------------------------------------
def _vocab_proj_kernel(h_ref, w_ref, b_ref, out_ref, *, B, T, HP, TN):
    h = h_ref[...].reshape(B * T, HP).astype(jnp.bfloat16)
    acc = jnp.dot(h, w_ref[...], preferred_element_type=jnp.float32)
    out_ref[...] = (acc + b_ref[...]).reshape(B, T, TN)


# ---------------------------------------------------------------------------
# Parameter init (deterministic, synthetic; PyTorch-equivalent layout,
# pre-transposed to (in, out), gate order (i, f, g, o))
# ---------------------------------------------------------------------------
def init_params(key, rgb_features, audio_features, vocab_size, embedding_dim, hidden):
    keys = jax.random.split(key, 20)

    def w(k, shape, scale=0.08):
        return (scale * jax.random.normal(k, shape)).astype(jnp.float32)

    Fin, H, E, V = rgb_features + audio_features, hidden, embedding_dim, vocab_size
    p = {}
    p["fm_w1"] = w(keys[0], (Fin, H)); p["fm_b1"] = w(keys[1], (1, H))
    p["fm_w2"] = w(keys[2], (H, H));   p["fm_b2"] = w(keys[3], (1, H))
    p["enc_w_ih0"] = w(keys[4], (H, 4 * H)); p["enc_w_hh0"] = w(keys[5], (H, 4 * H))
    p["enc_b0"] = w(keys[6], (1, 4 * H))
    p["enc_w_ih1"] = w(keys[7], (H, 4 * H)); p["enc_w_hh1"] = w(keys[8], (H, 4 * H))
    p["enc_b1"] = w(keys[9], (1, 4 * H))
    p["embedding"] = w(keys[10], (V, E), scale=0.5)
    p["dec_w_ih0"] = w(keys[11], (E + H, 4 * H)); p["dec_w_hh0"] = w(keys[12], (H, 4 * H))
    p["dec_b0"] = w(keys[13], (1, 4 * H))
    p["dec_w_ih1"] = w(keys[14], (H, 4 * H)); p["dec_w_hh1"] = w(keys[15], (H, 4 * H))
    p["dec_b1"] = w(keys[16], (1, 4 * H))
    p["out_w"] = w(keys[17], (H, V)); p["out_b"] = w(keys[18], (1, V))
    return p


def prepare_params(p, rgb_features, audio_features, vocab_size, embedding_dim, hidden):
    """One-time parameter transform: lane-pad H/V to 128, per-gate column padding,
    reorder gates (i,f,g,o)->(i,f,o,g) so the sigmoid gates are contiguous, fold
    the embedding table into the decoder layer-0 input->gates table, cast MXU
    weights to bf16. Padded gate columns carry zero weight & bias so padded lanes
    of h/c stay identically zero through the recurrence."""
    H, E, V = hidden, embedding_dim, vocab_size
    HP = _round_up(H, _LANE)
    VP = _round_up(V, _LANE)
    Fin = rgb_features + audio_features
    bf16, f32 = jnp.bfloat16, jnp.float32
    gate_order = (0, 1, 3, 2)                     # PyTorch (i,f,g,o) -> (i,f,o,g)

    def pad_to(x, shape):
        return jnp.pad(x, [(0, s - d) for d, s in zip(x.shape, shape)])

    def pad_gate_cols(w):
        return jnp.concatenate(
            [pad_to(w[:, g * H:(g + 1) * H], (w.shape[0], HP)) for g in gate_order],
            axis=1)

    def gate_w(w, rows_pad):
        return pad_to(pad_gate_cols(w), (rows_pad, 4 * HP)).astype(bf16)

    def gate_b(b):
        return pad_gate_cols(b).astype(f32)

    kp = {}
    kp["fm_w1"] = pad_to(p["fm_w1"], (Fin, HP)).astype(bf16)
    kp["fm_b1"] = pad_to(p["fm_b1"], (1, HP)).astype(f32)
    kp["fm_w2"] = pad_to(p["fm_w2"], (HP, HP)).astype(bf16)
    kp["fm_b2"] = pad_to(p["fm_b2"], (1, HP)).astype(f32)
    kp["enc_wih0"] = gate_w(p["enc_w_ih0"], HP)
    kp["enc_whh0"] = gate_w(p["enc_w_hh0"], HP)
    kp["enc_b0"] = gate_b(p["enc_b0"])
    kp["enc_wih1"] = gate_w(p["enc_w_ih1"], HP)
    kp["enc_whh1"] = gate_w(p["enc_w_hh1"], HP)
    kp["enc_b1"] = gate_b(p["enc_b1"])
    # fold embedding @ W_ih[:E] -> per-token input->gate rows. Kept f32: this table
    # is only gathered (never an MXU operand), so no extra bf16 rounding.
    w_emb = pad_gate_cols(p["dec_w_ih0"][:E])                 # (E, 4HP)
    kp["emb_gates"] = pad_to(jnp.dot(p["embedding"], w_emb), (VP, 4 * HP)).astype(f32)
    kp["dec_wctx"] = gate_w(p["dec_w_ih0"][E:], HP)
    kp["dec_whh0"] = gate_w(p["dec_w_hh0"], HP)
    kp["dec_b0"] = gate_b(p["dec_b0"])
    kp["dec_wih1"] = gate_w(p["dec_w_ih1"], HP)
    kp["dec_whh1"] = gate_w(p["dec_w_hh1"], HP)
    kp["dec_b1"] = gate_b(p["dec_b1"])
    kp["out_w"] = pad_to(p["out_w"], (HP, VP)).astype(bf16)
    kp["out_b"] = pad_to(p["out_b"], (1, VP)).astype(f32)
    return kp


# ---------------------------------------------------------------------------
# Forward wrapper: fused recurrence call + grid-tiled vocab projection call
# ---------------------------------------------------------------------------
def video_title_generator_forward(kp, rgb, audio, dec_tokens, vocab_size):
    B, T_enc, _ = rgb.shape
    T_dec = dec_tokens.shape[1]
    HP = kp["enc_whh0"].shape[0]
    VP = kp["out_w"].shape[1]

    # Pad batch to a sublane multiple (>=8): fills vregs / MXU result granules and
    # amortizes the per-step W_hh streaming. Pad rows are sliced off at the end.
    B_pad = _round_up(B, _SUBLANE)
    pad_b = B_pad - B

    # Host-side: concat rgb/audio once (single fm_w1 matmul), cast to bf16 (halves
    # input DMA), time-major rows (row = t*B_pad + b) for batched gate matmuls.
    feat = jnp.concatenate([rgb, audio], axis=-1)
    tok = dec_tokens.astype(jnp.int32)
    if pad_b:
        feat = jnp.pad(feat, ((0, pad_b), (0, 0), (0, 0)))
        tok = jnp.pad(tok, ((0, pad_b), (0, 0)))
    feat2 = feat.transpose(1, 0, 2).reshape(T_enc * B_pad, -1).astype(jnp.bfloat16)
    tok2 = tok.transpose(1, 0).reshape(T_dec * B_pad)          # SMEM int32 indices

    T_max = max(T_enc, T_dec)
    args = (tok2, feat2,
            kp["fm_w1"], kp["fm_b1"], kp["fm_w2"], kp["fm_b2"],
            kp["enc_wih0"], kp["enc_whh0"], kp["enc_b0"],
            kp["enc_wih1"], kp["enc_whh1"], kp["enc_b1"],
            kp["emb_gates"], kp["dec_wctx"], kp["dec_whh0"], kp["dec_b0"],
            kp["dec_wih1"], kp["dec_whh1"], kp["dec_b1"])

    scratch = [pltpu.VMEM((T_max * B_pad, 4 * HP), jnp.float32),   # gate slab (reused)
               pltpu.VMEM((T_max * B_pad, HP), jnp.float32)]       # hidden slab (reused)

    def nbytes(a):
        return int(a.size) * a.dtype.itemsize

    resident = (sum(nbytes(a) for a in args)
                + B_pad * T_dec * HP * 4                       # hseq output
                + T_max * B_pad * (4 * HP + HP) * 4)           # scratch slabs
    vmem_fused = min(96 << 20, max(32 << 20, int(1.5 * resident) + (4 << 20)))

    flops_fused = 2 * (
        T_enc * B_pad * feat2.shape[1] * HP + T_enc * B_pad * HP * HP
        + 2 * T_enc * B_pad * HP * 4 * HP          # encoder input gates (2 layers)
        + 2 * T_enc * B_pad * HP * 4 * HP          # encoder recurrent gates
        + B_pad * HP * 4 * HP                      # context fold
        + T_dec * B_pad * HP * 4 * HP              # decoder layer-1 input gates
        + 2 * T_dec * B_pad * HP * 4 * HP)         # decoder recurrent gates
    transc_fused = 4 * B_pad * HP * 2 * (T_enc + T_dec)

    hseq = pl.pallas_call(
        functools.partial(_vtg_fused_kernel, B=B_pad, T_enc=T_enc,
                          T_dec=T_dec, HP=HP),
        out_shape=jax.ShapeDtypeStruct((B_pad, T_dec, HP), jnp.float32),
        in_specs=[_SMEM] + [_VMEM] * (len(args) - 1),
        out_specs=_VMEM,
        scratch_shapes=scratch,
        compiler_params=pltpu.CompilerParams(vmem_limit_bytes=vmem_fused),
        cost_estimate=pl.CostEstimate(flops=flops_fused,
                                      transcendentals=transc_fused,
                                      bytes_accessed=resident),
    )(*args)

    # Vocab projection: grid over vocab lane tiles; out_w streamed via BlockSpec
    # double-buffering; "parallel" axis shards tiles across both TCs on v7x.
    # Output is batch-major (B_pad, T_dec, VP) so no transpose is needed after.
    TN = 512 if VP % 512 == 0 else _LANE
    M = B_pad * T_dec
    vmem_proj = min(96 << 20,
                    max(32 << 20,
                        2 * (M * HP * 4 + 2 * (HP * TN * 2 + TN * 4 + M * TN * 4))))
    logits = pl.pallas_call(
        functools.partial(_vocab_proj_kernel, B=B_pad, T=T_dec, HP=HP, TN=TN),
        out_shape=jax.ShapeDtypeStruct((B_pad, T_dec, VP), jnp.float32),
        grid=(VP // TN,),
        in_specs=[pl.BlockSpec((B_pad, T_dec, HP), lambda j: (0, 0, 0)),
                  pl.BlockSpec((HP, TN), lambda j: (0, j)),
                  pl.BlockSpec((1, TN), lambda j: (0, j))],
        out_specs=pl.BlockSpec((B_pad, T_dec, TN), lambda j: (0, 0, j)),
        compiler_params=pltpu.CompilerParams(
            dimension_semantics=("parallel",),
            vmem_limit_bytes=vmem_proj),
        cost_estimate=pl.CostEstimate(
            flops=2 * M * HP * VP, transcendentals=0,
            bytes_accessed=M * HP * 4 + HP * VP * 2 + VP * 4 + M * VP * 4),
    )(hseq, kp["out_w"], kp["out_b"])

    return logits[:B, :, :vocab_size]


if __name__ == "__main__":
    # Small shapes consistent with the module's forward signature.
    RGB_F, AUDIO_F = 16, 16
    VOCAB, MAX_TITLE_LEN = 64, 8
    EMB_DIM, HIDDEN = 32, 32
    B, T_ENC = 2, 8

    key = jax.random.PRNGKey(0)
    k_rgb, k_aud, k_tok, k_par = jax.random.split(key, 4)

    rgb_input = jax.random.normal(k_rgb, (B, T_ENC, RGB_F), dtype=jnp.float32)
    audio_input = jax.random.normal(k_aud, (B, T_ENC, AUDIO_F), dtype=jnp.float32)
    decoder_input = jax.random.randint(k_tok, (B, MAX_TITLE_LEN), 0, VOCAB,
                                       dtype=jnp.int32)

    raw_params = init_params(k_par, RGB_F, AUDIO_F, VOCAB, EMB_DIM, HIDDEN)
    kparams = prepare_params(raw_params, RGB_F, AUDIO_F, VOCAB, EMB_DIM, HIDDEN)

    fwd = jax.jit(video_title_generator_forward, static_argnames=("vocab_size",))
    out = fwd(kparams, rgb_input, audio_input, decoder_input, vocab_size=VOCAB)
    out = jax.block_until_ready(out)

    assert out.shape == (B, MAX_TITLE_LEN, VOCAB), out.shape
    assert bool(jnp.all(jnp.isfinite(out)))
    print("KERNEL_OK")
</pallas_src>

<mosaic_0001>
module attributes {stable_mosaic.version = 11 : i64} {
  func.func @_vocab_proj_kernel(%arg0: i32, %arg1: memref<8x8x128xf32, #tpu.memory_space<vmem>>, %arg2: memref<128x128xbf16, #tpu.memory_space<vmem>>, %arg3: memref<1x128xf32, #tpu.memory_space<vmem>>, %arg4: memref<8x8x128xf32, #tpu.memory_space<vmem>>) attributes {dimension_semantics = [#tpu.dimension_semantics<parallel>], iteration_bounds = array<i64: 1>, scalar_prefetch = 0 : i64, scratch_operands = 0 : i64, tpu.core_type = #tpu.core_type<tc>, window_params = [{pipeline_mode = #tpu.pipeline_mode<synchronous>, transform_indices = @transform_0, window_bounds = array<i64: 8, 8, 128>}, {transform_indices = @transform_1, window_bounds = array<i64: 128, 128>}, {transform_indices = @transform_2, window_bounds = array<i64: 1, 128>}, {transform_indices = @transform_3, window_bounds = array<i64: 8, 8, 128>}]} {
    %c0 = arith.constant 0 : index
    %c0_0 = arith.constant 0 : index
    %c0_1 = arith.constant 0 : index
    %0 = vector.load %arg1[%c0, %c0_0, %c0_1] : memref<8x8x128xf32, #tpu.memory_space<vmem>>, vector<8x8x128xf32>
    %1 = vector.shape_cast %0 : vector<8x8x128xf32> to vector<64x128xf32>
    %2 = arith.truncf %1 : vector<64x128xf32> to vector<64x128xbf16>
    %c0_2 = arith.constant 0 : index
    %c0_3 = arith.constant 0 : index
    %3 = vector.load %arg2[%c0_2, %c0_3] : memref<128x128xbf16, #tpu.memory_space<vmem>>, vector<128x128xbf16>
    %cst = arith.constant dense<0.000000e+00> : vector<64x128xf32>
    %4 = tpu.matmul %2, %3, %cst {dimension_numbers = #tpu.dot_dimension_numbers<[1], [0], [0], [1], [0, 0, 1, 1], [], []>} : vector<64x128xbf16>, vector<128x128xbf16>, vector<64x128xf32> -> vector<64x128xf32>
    %c0_4 = arith.constant 0 : index
    %c0_5 = arith.constant 0 : index
    %5 = vector.load %arg3[%c0_4, %c0_5] : memref<1x128xf32, #tpu.memory_space<vmem>>, vector<1x128xf32>
    %6 = vector.broadcast %5 : vector<1x128xf32> to vector<64x128xf32>
    %7 = arith.addf %4, %6 : vector<64x128xf32>
    %8 = vector.shape_cast %7 : vector<64x128xf32> to vector<8x8x128xf32>
    %c0_6 = arith.constant 0 : index
    %c0_7 = arith.constant 0 : index
    %c0_8 = arith.constant 0 : index
    %9 = vector.load %arg4[%c0_6, %c0_7, %c0_8] : memref<8x8x128xf32, #tpu.memory_space<vmem>>, vector<8x8x128xf32>
    tpu.vector_store %arg4[%c0_6, %c0_7, %c0_8], %8 {strides = array<i32>} : memref<8x8x128xf32, #tpu.memory_space<vmem>>, vector<8x8x128xf32>,
    return
  }
  func.func @transform_0(%arg0: i32) -> (i32, i32, i32) {
    %c0_i32 = arith.constant 0 : i32
    %c0_i32_0 = arith.constant 0 : i32
    %c0_i32_1 = arith.constant 0 : i32
    %c0_i32_2 = arith.constant 0 : i32
    return %c0_i32, %c0_i32_0, %c0_i32_1 : i32, i32, i32
  }
  func.func @transform_1(%arg0: i32) -> (i32, i32) {
    %c0_i32 = arith.constant 0 : i32
    %c0_i32_0 = arith.constant 0 : i32
    return %c0_i32, %arg0 : i32, i32
  }
  func.func @transform_2(%arg0: i32) -> (i32, i32) {
    %c0_i32 = arith.constant 0 : i32
    %c0_i32_0 = arith.constant 0 : i32
    return %c0_i32, %arg0 : i32, i32
  }
  func.func @transform_3(%arg0: i32) -> (i32, i32, i32) {
    %c0_i32 = arith.constant 0 : i32
    %c0_i32_0 = arith.constant 0 : i32
    %c0_i32_1 = arith.constant 0 : i32
    return %c0_i32, %c0_i32_0, %arg0 : i32, i32, i32
  }
}

module attributes {stable_mosaic.version = 11 : i64} {
  func.func @_vtg_fused_kernel(%arg0: memref<64xi32, #tpu.memory_space<smem>>, %arg1: memref<64x32xbf16, #tpu.memory_space<vmem>>, %arg2: memref<32x128xbf16, #tpu.memory_space<vmem>>, %arg3: memref<1x128xf32, #tpu.memory_space<vmem>>, %arg4: memref<128x128xbf16, #tpu.memory_space<vmem>>, %arg5: memref<1x128xf32, #tpu.memory_space<vmem>>, %arg6: memref<128x512xbf16, #tpu.memory_space<vmem>>, %arg7: memref<128x512xbf16, #tpu.memory_space<vmem>>, %arg8: memref<1x512xf32, #tpu.memory_space<vmem>>, %arg9: memref<128x512xbf16, #tpu.memory_space<vmem>>, %arg10: memref<128x512xbf16, #tpu.memory_space<vmem>>, %arg11: memref<1x512xf32, #tpu.memory_space<vmem>>, %arg12: memref<128x512xf32, #tpu.memory_space<vmem>>, %arg13: memref<128x512xbf16, #tpu.memory_space<vmem>>, %arg14: memref<128x512xbf16, #tpu.memory_space<vmem>>, %arg15: memref<1x512xf32, #tpu.memory_space<vmem>>, %arg16: memref<128x512xbf16, #tpu.memory_space<vmem>>, %arg17: memref<128x512xbf16, #tpu.memory_space<vmem>>, %arg18: memref<1x512xf32, #tpu.memory_space<vmem>>, %arg19: memref<8x8x128xf32, #tpu.memory_space<vmem>>, %arg20: memref<64x512xf32, #tpu.memory_space<vmem>>, %arg21: memref<64x128xf32, #tpu.memory_space<vmem>>) attributes {dimension_semantics = [], scalar_prefetch = 0 : i64, scratch_operands = 2 : i64, tpu.core_type = #tpu.core_type<tc>} {
    %cst = arith.constant 0.000000e+00 : f32
    %0 = vector.broadcast %cst : f32 to vector<8x128xf32>
    %c0 = arith.constant 0 : index
    %c0_0 = arith.constant 0 : index
    %1 = vector.load %arg1[%c0, %c0_0] : memref<64x32xbf16, #tpu.memory_space<vmem>>, vector<64x32xbf16>
    %c0_1 = arith.constant 0 : index
    %c0_2 = arith.constant 0 : index
    %2 = vector.load %arg2[%c0_1, %c0_2] : memref<32x128xbf16, #tpu.memory_space<vmem>>, vector<32x128xbf16>
    %cst_3 = arith.constant dense<0.000000e+00> : vector<64x128xf32>
    %3 = tpu.matmul %1, %2, %cst_3 {dimension_numbers = #tpu.dot_dimension_numbers<[1], [0], [0], [1], [0, 0, 1, 1], [], []>} : vector<64x32xbf16>, vector<32x128xbf16>, vector<64x128xf32> -> vector<64x128xf32>
    %c0_4 = arith.constant 0 : index
    %c0_5 = arith.constant 0 : index
    %4 = vector.load %arg3[%c0_4, %c0_5] : memref<1x128xf32, #tpu.memory_space<vmem>>, vector<1x128xf32>
    %5 = vector.broadcast %4 : vector<1x128xf32> to vector<64x128xf32>
    %6 = arith.addf %3, %5 : vector<64x128xf32>
    %cst_6 = arith.constant 0.000000e+00 : f32
    %7 = vector.broadcast %cst_6 : f32 to vector<64x128xf32>
    %8 = arith.maximumf %6, %7 : vector<64x128xf32>
    %c0_7 = arith.constant 0 : index
    %c0_8 = arith.constant 0 : index
    %9 = vector.load %arg4[%c0_7, %c0_8] : memref<128x128xbf16, #tpu.memory_space<vmem>>, vector<128x128xbf16>
    %10 = arith.truncf %8 : vector<64x128xf32> to vector<64x128xbf16>
    %cst_9 = arith.constant dense<0.000000e+00> : vector<64x128xf32>
    %11 = tpu.matmul %10, %9, %cst_9 {dimension_numbers = #tpu.dot_dimension_numbers<[1], [0], [0], [1], [0, 0, 1, 1], [], []>} : vector<64x128xbf16>, vector<128x128xbf16>, vector<64x128xf32> -> vector<64x128xf32>
    %c0_10 = arith.constant 0 : index
    %c0_11 = arith.constant 0 : index
    %12 = vector.load %arg5[%c0_10, %c0_11] : memref<1x128xf32, #tpu.memory_space<vmem>>, vector<1x128xf32>
    %13 = vector.broadcast %12 : vector<1x128xf32> to vector<64x128xf32>
    %14 = arith.addf %11, %13 : vector<64x128xf32>
    %cst_12 = arith.constant 0.000000e+00 : f32
    %15 = vector.broadcast %cst_12 : f32 to vector<64x128xf32>
    %16 = arith.maximumf %14, %15 : vector<64x128xf32>
    %c0_13 = arith.constant 0 : index
    %c0_14 = arith.constant 0 : index
    %17 = vector.load %arg6[%c0_13, %c0_14] : memref<128x512xbf16, #tpu.memory_space<vmem>>, vector<128x512xbf16>
    %18 = arith.truncf %16 : vector<64x128xf32> to vector<64x128xbf16>
    %cst_15 = arith.constant dense<0.000000e+00> : vector<64x512xf32>
    %19 = tpu.matmul %18, %17, %cst_15 {dimension_numbers = #tpu.dot_dimension_numbers<[1], [0], [0], [1], [0, 0, 1, 1], [], []>} : vector<64x128xbf16>, vector<128x512xbf16>, vector<64x512xf32> -> vector<64x512xf32>
    %c0_16 = arith.constant 0 : index
    %c0_17 = arith.constant 0 : index
    %20 = vector.load %arg8[%c0_16, %c0_17] : memref<1x512xf32, #tpu.memory_space<vmem>>, vector<1x512xf32>
    %21 = vector.broadcast %20 : vector<1x512xf32> to vector<64x512xf32>
    %22 = arith.addf %19, %21 : vector<64x512xf32>
    %c0_18 = arith.constant 0 : index
    %c0_19 = arith.constant 0 : index
    %23 = vector.load %arg20[%c0_18, %c0_19] : memref<64x512xf32, #tpu.memory_space<vmem>>, vector<64x512xf32>
    tpu.vector_store %arg20[%c0_18, %c0_19], %22 {strides = array<i32>} : memref<64x512xf32, #tpu.memory_space<vmem>>, vector<64x512xf32>,
    %c0_20 = arith.constant 0 : index
    %c0_21 = arith.constant 0 : index
    %24 = vector.load %arg7[%c0_20, %c0_21] : memref<128x512xbf16, #tpu.memory_space<vmem>>, vector<128x512xbf16>
    %c0_22 = arith.constant 0 : index
    %c0_23 = arith.constant 0 : index
    %25 = vector.load %arg20[%c0_22, %c0_23] : memref<64x512xf32, #tpu.memory_space<vmem>>, vector<8x512xf32>
    %26 = arith.truncf %0 : vector<8x128xf32> to vector<8x128xbf16>
    %cst_24 = arith.constant dense<0.000000e+00> : vector<8x512xf32>
    %27 = tpu.matmul %26, %24, %cst_24 {dimension_numbers = #tpu.dot_dimension_numbers<[1], [0], [0], [1], [0, 0, 1, 1], [], []>} : vector<8x128xbf16>, vector<128x512xbf16>, vector<8x512xf32> -> vector<8x512xf32>
    %28 = arith.addf %25, %27 : vector<8x512xf32>
    %29 = vector.extract_strided_slice %28 {offsets = [0, 0], sizes = [8, 384], strides = [1, 1]} : vector<8x512xf32> to vector<8x384xf32>
    %30 = arith.negf %29 : vector<8x384xf32>
    %31 = math.exp %30 : vector<8x384xf32>
    %cst_25 = arith.constant 1.000000e+00 : f32
    %32 = vector.broadcast %cst_25 : f32 to vector<8x384xf32>
    %33 = arith.addf %32, %31 : vector<8x384xf32>
    %34 = arith.divf %32, %33 : vector<8x384xf32>
    %35 = vector.extract_strided_slice %34 {offsets = [0, 0], sizes = [8, 128], strides = [1, 1]} : vector<8x384xf32> to vector<8x128xf32>
    %36 = vector.extract_strided_slice %34 {offsets = [0, 128], sizes = [8, 128], strides = [1, 1]} : vector<8x384xf32> to vector<8x128xf32>
    %37 = vector.extract_strided_slice %34 {offsets = [0, 256], sizes = [8, 128], strides = [1, 1]} : vector<8x384xf32> to vector<8x128xf32>
    %38 = vector.extract_strided_slice %28 {offsets = [0, 384], sizes = [8, 128], strides = [1, 1]} : vector<8x512xf32> to vector<8x128xf32>
    %39 = math.tanh %38 : vector<8x128xf32>
    %40 = arith.mulf %36, %0 : vector<8x128xf32>
    %41 = arith.mulf %35, %39 : vector<8x128xf32>
    %42 = arith.addf %40, %41 : vector<8x128xf32>
    %43 = math.tanh %42 : vector<8x128xf32>
    %44 = arith.mulf %37, %43 : vector<8x128xf32>
    %c0_26 = arith.constant 0 : index
    %c0_27 = arith.constant 0 : index
    %45 = vector.load %arg21[%c0_26, %c0_27] : memref<64x128xf32, #tpu.memory_space<vmem>>, vector<8x128xf32>
    tpu.vector_store %arg21[%c0_26, %c0_27], %44 {strides = array<i32>} : memref<64x128xf32, #tpu.memory_space<vmem>>, vector<8x128xf32>,
    %c8 = arith.constant 8 : index
    %c0_28 = arith.constant 0 : index
    %46 = vector.load %arg20[%c8, %c0_28] : memref<64x512xf32, #tpu.memory_space<vmem>>, vector<8x512xf32>
    %47 = arith.truncf %44 : vector<8x128xf32> to vector<8x128xbf16>
    %cst_29 = arith.constant dense<0.000000e+00> : vector<8x512xf32>
    %48 = tpu.matmul %47, %24, %cst_29 {dimension_numbers = #tpu.dot_dimension_numbers<[1], [0], [0], [1], [0, 0, 1, 1], [], []>} : vector<8x128xbf16>, vector<128x512xbf16>, vector<8x512xf32> -> vector<8x512xf32>
    %49 = arith.addf %46, %48 : vector<8x512xf32>
    %50 = vector.extract_strided_slice %49 {offsets = [0, 0], sizes = [8, 384], strides = [1, 1]} : vector<8x512xf32> to vector<8x384xf32>
    %51 = arith.negf %50 : vector<8x384xf32>
    %52 = math.exp %51 : vector<8x384xf32>
    %cst_30 = arith.constant 1.000000e+00 : f32
    %53 = vector.broadcast %cst_30 : f32 to vector<8x384xf32>
    %54 = arith.addf %53, %52 : vector<8x384xf32>
    %55 = arith.divf %53, %54 : vector<8x384xf32>
    %56 = vector.extract_strided_slice %55 {offsets = [0, 0], sizes = [8, 128], strides = [1, 1]} : vector<8x384xf32> to vector<8x128xf32>
    %57 = vector.extract_strided_slice %55 {offsets = [0, 128], sizes = [8, 128], strides = [1, 1]} : vector<8x384xf32> to vector<8x128xf32>
    %58 = vector.extract_strided_slice %55 {offsets = [0, 256], sizes = [8, 128], strides = [1, 1]} : vector<8x384xf32> to vector<8x128xf32>
    %59 = vector.extract_strided_slice %49 {offsets = [0, 384], sizes = [8, 128], strides = [1, 1]} : vector<8x512xf32> to vector<8x128xf32>
    %60 = math.tanh %59 : vector<8x128xf32>
    %61 = arith.mulf %57, %42 : vector<8x128xf32>
    %62 = arith.mulf %56, %60 : vector<8x128xf32>
    %63 = arith.addf %61, %62 : vector<8x128xf32>
    %64 = math.tanh %63 : vector<8x128xf32>
    %65 = arith.mulf %58, %64 : vector<8x128xf32>
    %c8_31 = arith.constant 8 : index
    %c0_32 = arith.constant 0 : index
    %66 = vector.load %arg21[%c8_31, %c0_32] : memref<64x128xf32, #tpu.memory_space<vmem>>, vector<8x128xf32>
    tpu.vector_store %arg21[%c8_31, %c0_32], %65 {strides = array<i32>} : memref<64x128xf32, #tpu.memory_space<vmem>>, vector<8x128xf32>,
    %c16 = arith.constant 16 : index
    %c0_33 = arith.constant 0 : index
    %67 = vector.load %arg20[%c16, %c0_33] : memref<64x512xf32, #tpu.memory_space<vmem>>, vector<8x512xf32>
    %68 = arith.truncf %65 : vector<8x128xf32> to vector<8x128xbf16>
    %cst_34 = arith.constant dense<0.000000e+00> : vector<8x512xf32>
    %69 = tpu.matmul %68, %24, %cst_34 {dimension_numbers = #tpu.dot_dimension_numbers<[1], [0], [0], [1], [0, 0, 1, 1], [], []>} : vector<8x128xbf16>, vector<128x512xbf16>, vector<8x512xf32> -> vector<8x512xf32>
    %70 = arith.addf %67, %69 : vector<8x512xf32>
    %71 = vector.extract_strided_slice %70 {offsets = [0, 0], sizes = [8, 384], strides = [1, 1]} : vector<8x512xf32> to vector<8x384xf32>
    %72 = arith.negf %71 : vector<8x384xf32>
    %73 = math.exp %72 : vector<8x384xf32>
    %cst_35 = arith.constant 1.000000e+00 : f32
    %74 = vector.broadcast %cst_35 : f32 to vector<8x384xf32>
    %75 = arith.addf %74, %73 : vector<8x384xf32>
    %76 = arith.divf %74, %75 : vector<8x384xf32>
    %77 = vector.extract_strided_slice %76 {offsets = [0, 0], sizes = [8, 128], strides = [1, 1]} : vector<8x384xf32> to vector<8x128xf32>
    %78 = vector.extract_strided_slice %76 {offsets = [0, 128], sizes = [8, 128], strides = [1, 1]} : vector<8x384xf32> to vector<8x128xf32>
    %79 = vector.extract_strided_slice %76 {offsets = [0, 256], sizes = [8, 128], strides = [1, 1]} : vector<8x384xf32> to vector<8x128xf32>
    %80 = vector.extract_strided_slice %70 {offsets = [0, 384], sizes = [8, 128], strides = [1, 1]} : vector<8x512xf32> to vector<8x128xf32>
    %81 = math.tanh %80 : vector<8x128xf32>
    %82 = arith.mulf %78, %63 : vector<8x128xf32>
    %83 = arith.mulf %77, %81 : vector<8x128xf32>
    %84 = arith.addf %82, %83 : vector<8x128xf32>
    %85 = math.tanh %84 : vector<8x128xf32>
    %86 = arith.mulf %79, %85 : vector<8x128xf32>
    %c16_36 = arith.constant 16 : index
    %c0_37 = arith.constant 0 : index
    %87 = vector.load %arg21[%c16_36, %c0_37] : memref<64x128xf32, #tpu.memory_space<vmem>>, vector<8x128xf32>
    tpu.vector_store %arg21[%c16_36, %c0_37], %86 {strides = array<i32>} : memref<64x128xf32, #tpu.memory_space<vmem>>, vector<8x128xf32>,
    %c24 = arith.constant 24 : index
    %c0_38 = arith.constant 0 : index
    %88 = vector.load %arg20[%c24, %c0_38] : memref<64x512xf32, #tpu.memory_space<vmem>>, vector<8x512xf32>
    %89 = arith.truncf %86 : vector<8x128xf32> to vector<8x128xbf16>
    %cst_39 = arith.constant dense<0.000000e+00> : vector<8x512xf32>
    %90 = tpu.matmul %89, %24, %cst_39 {dimension_numbers = #tpu.dot_dimension_numbers<[1], [0], [0], [1], [0, 0, 1, 1], [], []>} : vector<8x128xbf16>, vector<128x512xbf16>, vector<8x512xf32> -> vector<8x512xf32>
    %91 = arith.addf %88, %90 : vector<8x512xf32>
    %92 = vector.extract_strided_slice %91 {offsets = [0, 0], sizes = [8, 384], strides = [1, 1]} : vector<8x512xf32> to vector<8x384xf32>
    %93 = arith.negf %92 : vector<8x384xf32>
    %94 = math.exp %93 : vector<8x384xf32>
    %cst_40 = arith.constant 1.000000e+00 : f32
    %95 = vector.broadcast %cst_40 : f32 to vector<8x384xf32>
    %96 = arith.addf %95, %94 : vector<8x384xf32>
    %97 = arith.divf %95, %96 : vector<8x384xf32>
    %98 = vector.extract_strided_slice %97 {offsets = [0, 0], sizes = [8, 128], strides = [1, 1]} : vector<8x384xf32> to vector<8x128xf32>
    %99 = vector.extract_strided_slice %97 {offsets = [0, 128], sizes = [8, 128], strides = [1, 1]} : vector<8x384xf32> to vector<8x128xf32>
    %100 = vector.extract_strided_slice %97 {offsets = [0, 256], sizes = [8, 128], strides = [1, 1]} : vector<8x384xf32> to vector<8x128xf32>
    %101 = vector.extract_strided_slice %91 {offsets = [0, 384], sizes = [8, 128], strides = [1, 1]} : vector<8x512xf32> to vector<8x128xf32>
    %102 = math.tanh %101 : vector<8x128xf32>
    %103 = arith.mulf %99, %84 : vector<8x128xf32>
    %104 = arith.mulf %98, %102 : vector<8x128xf32>
    %105 = arith.addf %103, %104 : vector<8x128xf32>
    %106 = math.tanh %105 : vector<8x128xf32>
    %107 = arith.mulf %100, %106 : vector<8x128xf32>
    %c24_41 = arith.constant 24 : index
    %c0_42 = arith.constant 0 : index
    %108 = vector.load %arg21[%c24_41, %c0_42] : memref<64x128xf32, #tpu.memory_space<vmem>>, vector<8x128xf32>
    tpu.vector_store %arg21[%c24_41, %c0_42], %107 {strides = array<i32>} : memref<64x128xf32, #tpu.memory_space<vmem>>, vector<8x128xf32>,
    %c32 = arith.constant 32 : index
    %c0_43 = arith.constant 0 : index
    %109 = vector.load %arg20[%c32, %c0_43] : memref<64x512xf32, #tpu.memory_space<vmem>>, vector<8x512xf32>
    %110 = arith.truncf %107 : vector<8x128xf32> to vector<8x128xbf16>
    %cst_44 = arith.constant dense<0.000000e+00> : vector<8x512xf32>
    %111 = tpu.matmul %110, %24, %cst_44 {dimension_numbers = #tpu.dot_dimension_numbers<[1], [0], [0], [1], [0, 0, 1, 1], [], []>} : vector<8x128xbf16>, vector<128x512xbf16>, vector<8x512xf32> -> vector<8x512xf32>
    %112 = arith.addf %109, %111 : vector<8x512xf32>
    %113 = vector.extract_strided_slice %112 {offsets = [0, 0], sizes = [8, 384], strides = [1, 1]} : vector<8x512xf32> to vector<8x384xf32>
    %114 = arith.negf %113 : vector<8x384xf32>
    %115 = math.exp %114 : vector<8x384xf32>
    %cst_45 = arith.constant 1.000000e+00 : f32
    %116 = vector.broadcast %cst_45 : f32 to vector<8x384xf32>
    %117 = arith.addf %116, %115 : vector<8x384xf32>
    %118 = arith.divf %116, %117 : vector<8x384xf32>
    %119 = vector.extract_strided_slice %118 {offsets = [0, 0], sizes = [8, 128], strides = [1, 1]} : vector<8x384xf32> to vector<8x128xf32>
    %120 = vector.extract_strided_slice %118 {offsets = [0, 128], sizes = [8, 128], strides = [1, 1]} : vector<8x384xf32> to vector<8x128xf32>
    %121 = vector.extract_strided_slice %118 {offsets = [0, 256], sizes = [8, 128], strides = [1, 1]} : vector<8x384xf32> to vector<8x128xf32>
    %122 = vector.extract_strided_slice %112 {offsets = [0, 384], sizes = [8, 128], strides = [1, 1]} : vector<8x512xf32> to vector<8x128xf32>
    %123 = math.tanh %122 : vector<8x128xf32>
    %124 = arith.mulf %120, %105 : vector<8x128xf32>
    %125 = arith.mulf %119, %123 : vector<8x128xf32>
    %126 = arith.addf %124, %125 : vector<8x128xf32>
    %127 = math.tanh %126 : vector<8x128xf32>
    %128 = arith.mulf %121, %127 : vector<8x128xf32>
    %c32_46 = arith.constant 32 : index
    %c0_47 = arith.constant 0 : index
    %129 = vector.load %arg21[%c32_46, %c0_47] : memref<64x128xf32, #tpu.memory_space<vmem>>, vector<8x128xf32>
    tpu.vector_store %arg21[%c32_46, %c0_47], %128 {strides = array<i32>} : memref<64x128xf32, #tpu.memory_space<vmem>>, vector<8x128xf32>,
    %c40 = arith.constant 40 : index
    %c0_48 = arith.constant 0 : index
    %130 = vector.load %arg20[%c40, %c0_48] : memref<64x512xf32, #tpu.memory_space<vmem>>, vector<8x512xf32>
    %131 = arith.truncf %128 : vector<8x128xf32> to vector<8x128xbf16>
    %cst_49 = arith.constant dense<0.000000e+00> : vector<8x512xf32>
    %132 = tpu.matmul %131, %24, %cst_49 {dimension_numbers = #tpu.dot_dimension_numbers<[1], [0], [0], [1], [0, 0, 1, 1], [], []>} : vector<8x128xbf16>, vector<128x512xbf16>, vector<8x512xf32> -> vector<8x512xf32>
    %133 = arith.addf %130, %132 : vector<8x512xf32>
    %134 = vector.extract_strided_slice %133 {offsets = [0, 0], sizes = [8, 384], strides = [1, 1]} : vector<8x512xf32> to vector<8x384xf32>
    %135 = arith.negf %134 : vector<8x384xf32>
    %136 = math.exp %135 : vector<8x384xf32>
    %cst_50 = arith.constant 1.000000e+00 : f32
    %137 = vector.broadcast %cst_50 : f32 to vector<8x384xf32>
    %138 = arith.addf %137, %136 : vector<8x384xf32>
    %139 = arith.divf %137, %138 : vector<8x384xf32>
    %140 = vector.extract_strided_slice %139 {offsets = [0, 0], sizes = [8, 128], strides = [1, 1]} : vector<8x384xf32> to vector<8x128xf32>
    %141 = vector.extract_strided_slice %139 {offsets = [0, 128], sizes = [8, 128], strides = [1, 1]} : vector<8x384xf32> to vector<8x128xf32>
    %142 = vector.extract_strided_slice %139 {offsets = [0, 256], sizes = [8, 128], strides = [1, 1]} : vector<8x384xf32> to vector<8x128xf32>
    %143 = vector.extract_strided_slice %133 {offsets = [0, 384], sizes = [8, 128], strides = [1, 1]} : vector<8x512xf32> to vector<8x128xf32>
    %144 = math.tanh %143 : vector<8x128xf32>
    %145 = arith.mulf %141, %126 : vector<8x128xf32>
    %146 = arith.mulf %140, %144 : vector<8x128xf32>
    %147 = arith.addf %145, %146 : vector<8x128xf32>
    %148 = math.tanh %147 : vector<8x128xf32>
    %149 = arith.mulf %142, %148 : vector<8x128xf32>
    %c40_51 = arith.constant 40 : index
    %c0_52 = arith.constant 0 : index
    %150 = vector.load %arg21[%c40_51, %c0_52] : memref<64x128xf32, #tpu.memory_space<vmem>>, vector<8x128xf32>
    tpu.vector_store %arg21[%c40_51, %c0_52], %149 {strides = array<i32>} : memref<64x128xf32, #tpu.memory_space<vmem>>, vector<8x128xf32>,
    %c48 = arith.constant 48 : index
    %c0_53 = arith.constant 0 : index
    %151 = vector.load %arg20[%c48, %c0_53] : memref<64x512xf32, #tpu.memory_space<vmem>>, vector<8x512xf32>
    %152 = arith.truncf %149 : vector<8x128xf32> to vector<8x128xbf16>
    %cst_54 = arith.constant dense<0.000000e+00> : vector<8x512xf32>
    %153 = tpu.matmul %152, %24, %cst_54 {dimension_numbers = #tpu.dot_dimension_numbers<[1], [0], [0], [1], [0, 0, 1, 1], [], []>} : vector<8x128xbf16>, vector<128x512xbf16>, vector<8x512xf32> -> vector<8x512xf32>
    %154 = arith.addf %151, %153 : vector<8x512xf32>
    %155 = vector.extract_strided_slice %154 {offsets = [0, 0], sizes = [8, 384], strides = [1, 1]} : vector<8x512xf32> to vector<8x384xf32>
    %156 = arith.negf %155 : vector<8x384xf32>
    %157 = math.exp %156 : vector<8x384xf32>
    %cst_55 = arith.constant 1.000000e+00 : f32
    %158 = vector.broadcast %cst_55 : f32 to vector<8x384xf32>
    %159 = arith.addf %158, %157 : vector<8x384xf32>
    %160 = arith.divf %158, %159 : vector<8x384xf32>
    %161 = vector.extract_strided_slice %160 {offsets = [0, 0], sizes = [8, 128], strides = [1, 1]} : vector<8x384xf32> to vector<8x128xf32>
    %162 = vector.extract_strided_slice %160 {offsets = [0, 128], sizes = [8, 128], strides = [1, 1]} : vector<8x384xf32> to vector<8x128xf32>
    %163 = vector.extract_strided_slice %160 {offsets = [0, 256], sizes = [8, 128], strides = [1, 1]} : vector<8x384xf32> to vector<8x128xf32>
    %164 = vector.extract_strided_slice %154 {offsets = [0, 384], sizes = [8, 128], strides = [1, 1]} : vector<8x512xf32> to vector<8x128xf32>
    %165 = math.tanh %164 : vector<8x128xf32>
    %166 = arith.mulf %162, %147 : vector<8x128xf32>
    %167 = arith.mulf %161, %165 : vector<8x128xf32>
    %168 = arith.addf %166, %167 : vector<8x128xf32>
    %169 = math.tanh %168 : vector<8x128xf32>
    %170 = arith.mulf %163, %169 : vector<8x128xf32>
    %c48_56 = arith.constant 48 : index
    %c0_57 = arith.constant 0 : index
    %171 = vector.load %arg21[%c48_56, %c0_57] : memref<64x128xf32, #tpu.memory_space<vmem>>, vector<8x128xf32>
    tpu.vector_store %arg21[%c48_56, %c0_57], %170 {strides = array<i32>} : memref<64x128xf32, #tpu.memory_space<vmem>>, vector<8x128xf32>,
    %c56 = arith.constant 56 : index
    %c0_58 = arith.constant 0 : index
    %172 = vector.load %arg20[%c56, %c0_58] : memref<64x512xf32, #tpu.memory_space<vmem>>, vector<8x512xf32>
    %173 = arith.truncf %170 : vector<8x128xf32> to vector<8x128xbf16>
    %cst_59 = arith.constant dense<0.000000e+00> : vector<8x512xf32>
    %174 = tpu.matmul %173, %24, %cst_59 {dimension_numbers = #tpu.dot_dimension_numbers<[1], [0], [0], [1], [0, 0, 1, 1], [], []>} : vector<8x128xbf16>, vector<128x512xbf16>, vector<8x512xf32> -> vector<8x512xf32>
    %175 = arith.addf %172, %174 : vector<8x512xf32>
    %176 = vector.extract_strided_slice %175 {offsets = [0, 0], sizes = [8, 384], strides = [1, 1]} : vector<8x512xf32> to vector<8x384xf32>
    %177 = arith.negf %176 : vector<8x384xf32>
    %178 = math.exp %177 : vector<8x384xf32>
    %cst_60 = arith.constant 1.000000e+00 : f32
    %179 = vector.broadcast %cst_60 : f32 to vector<8x384xf32>
    %180 = arith.addf %179, %178 : vector<8x384xf32>
    %181 = arith.divf %179, %180 : vector<8x384xf32>
    %182 = vector.extract_strided_slice %181 {offsets = [0, 0], sizes = [8, 128], strides = [1, 1]} : vector<8x384xf32> to vector<8x128xf32>
    %183 = vector.extract_strided_slice %181 {offsets = [0, 128], sizes = [8, 128], strides = [1, 1]} : vector<8x384xf32> to vector<8x128xf32>
    %184 = vector.extract_strided_slice %181 {offsets = [0, 256], sizes = [8, 128], strides = [1, 1]} : vector<8x384xf32> to vector<8x128xf32>
    %185 = vector.extract_strided_slice %175 {offsets = [0, 384], sizes = [8, 128], strides = [1, 1]} : vector<8x512xf32> to vector<8x128xf32>
    %186 = math.tanh %185 : vector<8x128xf32>
    %187 = arith.mulf %183, %168 : vector<8x128xf32>
    %188 = arith.mulf %182, %186 : vector<8x128xf32>
    %189 = arith.addf %187, %188 : vector<8x128xf32>
    %190 = math.tanh %189 : vector<8x128xf32>
    %191 = arith.mulf %184, %190 : vector<8x128xf32>
    %c56_61 = arith.constant 56 : index
    %c0_62 = arith.constant 0 : index
    %192 = vector.load %arg21[%c56_61, %c0_62] : memref<64x128xf32, #tpu.memory_space<vmem>>, vector<8x128xf32>
    tpu.vector_store %arg21[%c56_61, %c0_62], %191 {strides = array<i32>} : memref<64x128xf32, #tpu.memory_space<vmem>>, vector<8x128xf32>,
    %c0_63 = arith.constant 0 : index
    %c0_64 = arith.constant 0 : index
    %193 = vector.load %arg21[%c0_63, %c0_64] : memref<64x128xf32, #tpu.memory_space<vmem>>, vector<64x128xf32>
    %c0_65 = arith.constant 0 : index
    %c0_66 = arith.constant 0 : index
    %194 = vector.load %arg9[%c0_65, %c0_66] : memref<128x512xbf16, #tpu.memory_space<vmem>>, vector<128x512xbf16>
    %195 = arith.truncf %193 : vector<64x128xf32> to vector<64x128xbf16>
    %cst_67 = arith.constant dense<0.000000e+00> : vector<64x512xf32>
    %196 = tpu.matmul %195, %194, %cst_67 {dimension_numbers = #tpu.dot_dimension_numbers<[1], [0], [0], [1], [0, 0, 1, 1], [], []>} : vector<64x128xbf16>, vector<128x512xbf16>, vector<64x512xf32> -> vector<64x512xf32>
    %c0_68 = arith.constant 0 : index
    %c0_69 = arith.constant 0 : index
    %197 = vector.load %arg11[%c0_68, %c0_69] : memref<1x512xf32, #tpu.memory_space<vmem>>, vector<1x512xf32>
    %198 = vector.broadcast %197 : vector<1x512xf32> to vector<64x512xf32>
    %199 = arith.addf %196, %198 : vector<64x512xf32>
    %c0_70 = arith.constant 0 : index
    %c0_71 = arith.constant 0 : index
    %200 = vector.load %arg20[%c0_70, %c0_71] : memref<64x512xf32, #tpu.memory_space<vmem>>, vector<64x512xf32>
    tpu.vector_store %arg20[%c0_70, %c0_71], %199 {strides = array<i32>} : memref<64x512xf32, #tpu.memory_space<vmem>>, vector<64x512xf32>,
    %c0_72 = arith.constant 0 : index
    %c0_73 = arith.constant 0 : index
    %201 = vector.load %arg10[%c0_72, %c0_73] : memref<128x512xbf16, #tpu.memory_space<vmem>>, vector<128x512xbf16>
    %c0_74 = arith.constant 0 : index
    %c0_75 = arith.constant 0 : index
    %202 = vector.load %arg20[%c0_74, %c0_75] : memref<64x512xf32, #tpu.memory_space<vmem>>, vector<8x512xf32>
    %203 = arith.truncf %0 : vector<8x128xf32> to vector<8x128xbf16>
    %cst_76 = arith.constant dense<0.000000e+00> : vector<8x512xf32>
    %204 = tpu.matmul %203, %201, %cst_76 {dimension_numbers = #tpu.dot_dimension_numbers<[1], [0], [0], [1], [0, 0, 1, 1], [], []>} : vector<8x128xbf16>, vector<128x512xbf16>, vector<8x512xf32> -> vector<8x512xf32>
    %205 = arith.addf %202, %204 : vector<8x512xf32>
    %206 = vector.extract_strided_slice %205 {offsets = [0, 0], sizes = [8, 384], strides = [1, 1]} : vector<8x512xf32> to vector<8x384xf32>
    %207 = arith.negf %206 : vector<8x384xf32>
    %208 = math.exp %207 : vector<8x384xf32>
    %cst_77 = arith.constant 1.000000e+00 : f32
    %209 = vector.broadcast %cst_77 : f32 to vector<8x384xf32>
    %210 = arith.addf %209, %208 : vector<8x384xf32>
    %211 = arith.divf %209, %210 : vector<8x384xf32>
    %212 = vector.extract_strided_slice %211 {offsets = [0, 0], sizes = [8, 128], strides = [1, 1]} : vector<8x384xf32> to vector<8x128xf32>
    %213 = vector.extract_strided_slice %211 {offsets = [0, 128], sizes = [8, 128], strides = [1, 1]} : vector<8x384xf32> to vector<8x128xf32>
    %214 = vector.extract_strided_slice %211 {offsets = [0, 256], sizes = [8, 128], strides = [1, 1]} : vector<8x384xf32> to vector<8x128xf32>
    %215 = vector.extract_strided_slice %205 {offsets = [0, 384], sizes = [8, 128], strides = [1, 1]} : vector<8x512xf32> to vector<8x128xf32>
    %216 = math.tanh %215 : vector<8x128xf32>
    %217 = arith.mulf %213, %0 : vector<8x128xf32>
    %218 = arith.mulf %212, %216 : vector<8x128xf32>
    %219 = arith.addf %217, %218 : vector<8x128xf32>
    %220 = math.tanh %219 : vector<8x128xf32>
    %221 = arith.mulf %214, %220 : vector<8x128xf32>
    %c8_78 = arith.constant 8 : index
    %c0_79 = arith.constant 0 : index
    %222 = vector.load %arg20[%c8_78, %c0_79] : memref<64x512xf32, #tpu.memory_space<vmem>>, vector<8x512xf32>
    %223 = arith.truncf %221 : vector<8x128xf32> to vector<8x128xbf16>
    %cst_80 = arith.constant dense<0.000000e+00> : vector<8x512xf32>
    %224 = tpu.matmul %223, %201, %cst_80 {dimension_numbers = #tpu.dot_dimension_numbers<[1], [0], [0], [1], [0, 0, 1, 1], [], []>} : vector<8x128xbf16>, vector<128x512xbf16>, vector<8x512xf32> -> vector<8x512xf32>
    %225 = arith.addf %222, %224 : vector<8x512xf32>
    %226 = vector.extract_strided_slice %225 {offsets = [0, 0], sizes = [8, 384], strides = [1, 1]} : vector<8x512xf32> to vector<8x384xf32>
    %227 = arith.negf %226 : vector<8x384xf32>
    %228 = math.exp %227 : vector<8x384xf32>
    %cst_81 = arith.constant 1.000000e+00 : f32
    %229 = vector.broadcast %cst_81 : f32 to vector<8x384xf32>
    %230 = arith.addf %229, %228 : vector<8x384xf32>
    %231 = arith.divf %229, %230 : vector<8x384xf32>
    %232 = vector.extract_strided_slice %231 {offsets = [0, 0], sizes = [8, 128], strides = [1, 1]} : vector<8x384xf32> to vector<8x128xf32>
    %233 = vector.extract_strided_slice %231 {offsets = [0, 128], sizes = [8, 128], strides = [1, 1]} : vector<8x384xf32> to vector<8x128xf32>
    %234 = vector.extract_strided_slice %231 {offsets = [0, 256], sizes = [8, 128], strides = [1, 1]} : vector<8x384xf32> to vector<8x128xf32>
    %235 = vector.extract_strided_slice %225 {offsets = [0, 384], sizes = [8, 128], strides = [1, 1]} : vector<8x512xf32> to vector<8x128xf32>
    %236 = math.tanh %235 : vector<8x128xf32>
    %237 = arith.mulf %233, %219 : vector<8x128xf32>
    %238 = arith.mulf %232, %236 : vector<8x128xf32>
    %239 = arith.addf %237, %238 : vector<8x128xf32>
    %240 = math.tanh %239 : vector<8x128xf32>
    %241 = arith.mulf %234, %240 : vector<8x128xf32>
    %c16_82 = arith.constant 16 : index
    %c0_83 = arith.constant 0 : index
    %242 = vector.load %arg20[%c16_82, %c0_83] : memref<64x512xf32, #tpu.memory_space<vmem>>, vector<8x512xf32>
    %243 = arith.truncf %241 : vector<8x128xf32> to vector<8x128xbf16>
    %cst_84 = arith.constant dense<0.000000e+00> : vector<8x512xf32>
    %244 = tpu.matmul %243, %201, %cst_84 {dimension_numbers = #tpu.dot_dimension_numbers<[1], [0], [0], [1], [0, 0, 1, 1], [], []>} : vector<8x128xbf16>, vector<128x512xbf16>, vector<8x512xf32> -> vector<8x512xf32>
    %245 = arith.addf %242, %244 : vector<8x512xf32>
    %246 = vector.extract_strided_slice %245 {offsets = [0, 0], sizes = [8, 384], strides = [1, 1]} : vector<8x512xf32> to vector<8x384xf32>
    %247 = arith.negf %246 : vector<8x384xf32>
    %248 = math.exp %247 : vector<8x384xf32>
    %cst_85 = arith.constant 1.000000e+00 : f32
    %249 = vector.broadcast %cst_85 : f32 to vector<8x384xf32>
    %250 = arith.addf %249, %248 : vector<8x384xf32>
    %251 = arith.divf %249, %250 : vector<8x384xf32>
    %252 = vector.extract_strided_slice %251 {offsets = [0, 0], sizes = [8, 128], strides = [1, 1]} : vector<8x384xf32> to vector<8x128xf32>
    %253 = vector.extract_strided_slice %251 {offsets = [0, 128], sizes = [8, 128], strides = [1, 1]} : vector<8x384xf32> to vector<8x128xf32>
    %254 = vector.extract_strided_slice %251 {offsets = [0, 256], sizes = [8, 128], strides = [1, 1]} : vector<8x384xf32> to vector<8x128xf32>
    %255 = vector.extract_strided_slice %245 {offsets = [0, 384], sizes = [8, 128], strides = [1, 1]} : vector<8x512xf32> to vector<8x128xf32>
    %256 = math.tanh %255 : vector<8x128xf32>
    %257 = arith.mulf %253, %239 : vector<8x128xf32>
    %258 = arith.mulf %252, %256 : vector<8x128xf32>
    %259 = arith.addf %257, %258 : vector<8x128xf32>
    %260 = math.tanh %259 : vector<8x128xf32>
    %261 = arith.mulf %254, %260 : vector<8x128xf32>
    %c24_86 = arith.constant 24 : index
    %c0_87 = arith.constant 0 : index
    %262 = vector.load %arg20[%c24_86, %c0_87] : memref<64x512xf32, #tpu.memory_space<vmem>>, vector<8x512xf32>
    %263 = arith.truncf %261 : vector<8x128xf32> to vector<8x128xbf16>
    %cst_88 = arith.constant dense<0.000000e+00> : vector<8x512xf32>
    %264 = tpu.matmul %263, %201, %cst_88 {dimension_numbers = #tpu.dot_dimension_numbers<[1], [0], [0], [1], [0, 0, 1, 1], [], []>} : vector<8x128xbf16>, vector<128x512xbf16>, vector<8x512xf32> -> vector<8x512xf32>
    %265 = arith.addf %262, %264 : vector<8x512xf32>
    %266 = vector.extract_strided_slice %265 {offsets = [0, 0], sizes = [8, 384], strides = [1, 1]} : vector<8x512xf32> to vector<8x384xf32>
    %267 = arith.negf %266 : vector<8x384xf32>
    %268 = math.exp %267 : vector<8x384xf32>
    %cst_89 = arith.constant 1.000000e+00 : f32
    %269 = vector.broadcast %cst_89 : f32 to vector<8x384xf32>
    %270 = arith.addf %269, %268 : vector<8x384xf32>
    %271 = arith.divf %269, %270 : vector<8x384xf32>
    %272 = vector.extract_strided_slice %271 {offsets = [0, 0], sizes = [8, 128], strides = [1, 1]} : vector<8x384xf32> to vector<8x128xf32>
    %273 = vector.extract_strided_slice %271 {offsets = [0, 128], sizes = [8, 128], strides = [1, 1]} : vector<8x384xf32> to vector<8x128xf32>
    %274 = vector.extract_strided_slice %271 {offsets = [0, 256], sizes = [8, 128], strides = [1, 1]} : vector<8x384xf32> to vector<8x128xf32>
    %275 = vector.extract_strided_slice %265 {offsets = [0, 384], sizes = [8, 128], strides = [1, 1]} : vector<8x512xf32> to vector<8x128xf32>
    %276 = math.tanh %275 : vector<8x128xf32>
    %277 = arith.mulf %273, %259 : vector<8x128xf32>
    %278 = arith.mulf %272, %276 : vector<8x128xf32>
    %279 = arith.addf %277, %278 : vector<8x128xf32>
    %280 = math.tanh %279 : vector<8x128xf32>
    %281 = arith.mulf %274, %280 : vector<8x128xf32>
    %c32_90 = arith.constant 32 : index
    %c0_91 = arith.constant 0 : index
    %282 = vector.load %arg20[%c32_90, %c0_91] : memref<64x512xf32, #tpu.memory_space<vmem>>, vector<8x512xf32>
    %283 = arith.truncf %281 : vector<8x128xf32> to vector<8x128xbf16>
    %cst_92 = arith.constant dense<0.000000e+00> : vector<8x512xf32>
    %284 = tpu.matmul %283, %201, %cst_92 {dimension_numbers = #tpu.dot_dimension_numbers<[1], [0], [0], [1], [0, 0, 1, 1], [], []>} : vector<8x128xbf16>, vector<128x512xbf16>, vector<8x512xf32> -> vector<8x512xf32>
    %285 = arith.addf %282, %284 : vector<8x512xf32>
    %286 = vector.extract_strided_slice %285 {offsets = [0, 0], sizes = [8, 384], strides = [1, 1]} : vector<8x512xf32> to vector<8x384xf32>
    %287 = arith.negf %286 : vector<8x384xf32>
    %288 = math.exp %287 : vector<8x384xf32>
    %cst_93 = arith.constant 1.000000e+00 : f32
    %289 = vector.broadcast %cst_93 : f32 to vector<8x384xf32>
    %290 = arith.addf %289, %288 : vector<8x384xf32>
    %291 = arith.divf %289, %290 : vector<8x384xf32>
    %292 = vector.extract_strided_slice %291 {offsets = [0, 0], sizes = [8, 128], strides = [1, 1]} : vector<8x384xf32> to vector<8x128xf32>
    %293 = vector.extract_strided_slice %291 {offsets = [0, 128], sizes = [8, 128], strides = [1, 1]} : vector<8x384xf32> to vector<8x128xf32>
    %294 = vector.extract_strided_slice %291 {offsets = [0, 256], sizes = [8, 128], strides = [1, 1]} : vector<8x384xf32> to vector<8x128xf32>
    %295 = vector.extract_strided_slice %285 {offsets = [0, 384], sizes = [8, 128], strides = [1, 1]} : vector<8x512xf32> to vector<8x128xf32>
    %296 = math.tanh %295 : vector<8x128xf32>
    %297 = arith.mulf %293, %279 : vector<8x128xf32>
    %298 = arith.mulf %292, %296 : vector<8x128xf32>
    %299 = arith.addf %297, %298 : vector<8x128xf32>
    %300 = math.tanh %299 : vector<8x128xf32>
    %301 = arith.mulf %294, %300 : vector<8x128xf32>
    %c40_94 = arith.constant 40 : index
    %c0_95 = arith.constant 0 : index
    %302 = vector.load %arg20[%c40_94, %c0_95] : memref<64x512xf32, #tpu.memory_space<vmem>>, vector<8x512xf32>
    %303 = arith.truncf %301 : vector<8x128xf32> to vector<8x128xbf16>
    %cst_96 = arith.constant dense<0.000000e+00> : vector<8x512xf32>
    %304 = tpu.matmul %303, %201, %cst_96 {dimension_numbers = #tpu.dot_dimension_numbers<[1], [0], [0], [1], [0, 0, 1, 1], [], []>} : vector<8x128xbf16>, vector<128x512xbf16>, vector<8x512xf32> -> vector<8x512xf32>
    %305 = arith.addf %302, %304 : vector<8x512xf32>
    %306 = vector.extract_strided_slice %305 {offsets = [0, 0], sizes = [8, 384], strides = [1, 1]} : vector<8x512xf32> to vector<8x384xf32>
    %307 = arith.negf %306 : vector<8x384xf32>
    %308 = math.exp %307 : vector<8x384xf32>
    %cst_97 = arith.constant 1.000000e+00 : f32
    %309 = vector.broadcast %cst_97 : f32 to vector<8x384xf32>
    %310 = arith.addf %309, %308 : vector<8x384xf32>
    %311 = arith.divf %309, %310 : vector<8x384xf32>
    %312 = vector.extract_strided_slice %311 {offsets = [0, 0], sizes = [8, 128], strides = [1, 1]} : vector<8x384xf32> to vector<8x128xf32>
    %313 = vector.extract_strided_slice %311 {offsets = [0, 128], sizes = [8, 128], strides = [1, 1]} : vector<8x384xf32> to vector<8x128xf32>
    %314 = vector.extract_strided_slice %311 {offsets = [0, 256], sizes = [8, 128], strides = [1, 1]} : vector<8x384xf32> to vector<8x128xf32>
    %315 = vector.extract_strided_slice %305 {offsets = [0, 384], sizes = [8, 128], strides = [1, 1]} : vector<8x512xf32> to vector<8x128xf32>
    %316 = math.tanh %315 : vector<8x128xf32>
    %317 = arith.mulf %313, %299 : vector<8x128xf32>
    %318 = arith.mulf %312, %316 : vector<8x128xf32>
    %319 = arith.addf %317, %318 : vector<8x128xf32>
    %320 = math.tanh %319 : vector<8x128xf32>
    %321 = arith.mulf %314, %320 : vector<8x128xf32>
    %c48_98 = arith.constant 48 : index
    %c0_99 = arith.constant 0 : index
    %322 = vector.load %arg20[%c48_98, %c0_99] : memref<64x512xf32, #tpu.memory_space<vmem>>, vector<8x512xf32>
    %323 = arith.truncf %321 : vector<8x128xf32> to vector<8x128xbf16>
    %cst_100 = arith.constant dense<0.000000e+00> : vector<8x512xf32>
    %324 = tpu.matmul %323, %201, %cst_100 {dimension_numbers = #tpu.dot_dimension_numbers<[1], [0], [0], [1], [0, 0, 1, 1], [], []>} : vector<8x128xbf16>, vector<128x512xbf16>, vector<8x512xf32> -> vector<8x512xf32>
    %325 = arith.addf %322, %324 : vector<8x512xf32>
    %326 = vector.extract_strided_slice %325 {offsets = [0, 0], sizes = [8, 384], strides = [1, 1]} : vector<8x512xf32> to vector<8x384xf32>
    %327 = arith.negf %326 : vector<8x384xf32>
    %328 = math.exp %327 : vector<8x384xf32>
    %cst_101 = arith.constant 1.000000e+00 : f32
    %329 = vector.broadcast %cst_101 : f32 to vector<8x384xf32>
    %330 = arith.addf %329, %328 : vector<8x384xf32>
    %331 = arith.divf %329, %330 : vector<8x384xf32>
    %332 = vector.extract_strided_slice %331 {offsets = [0, 0], sizes = [8, 128], strides = [1, 1]} : vector<8x384xf32> to vector<8x128xf32>
    %333 = vector.extract_strided_slice %331 {offsets = [0, 128], sizes = [8, 128], strides = [1, 1]} : vector<8x384xf32> to vector<8x128xf32>
    %334 = vector.extract_strided_slice %331 {offsets = [0, 256], sizes = [8, 128], strides = [1, 1]} : vector<8x384xf32> to vector<8x128xf32>
    %335 = vector.extract_strided_slice %325 {offsets = [0, 384], sizes = [8, 128], strides = [1, 1]} : vector<8x512xf32> to vector<8x128xf32>
    %336 = math.tanh %335 : vector<8x128xf32>
    %337 = arith.mulf %333, %319 : vector<8x128xf32>
    %338 = arith.mulf %332, %336 : vector<8x128xf32>
    %339 = arith.addf %337, %338 : vector<8x128xf32>
    %340 = math.tanh %339 : vector<8x128xf32>
    %341 = arith.mulf %334, %340 : vector<8x128xf32>
    %c56_102 = arith.constant 56 : index
    %c0_103 = arith.constant 0 : index
    %342 = vector.load %arg20[%c56_102, %c0_103] : memref<64x512xf32, #tpu.memory_space<vmem>>, vector<8x512xf32>
    %343 = arith.truncf %341 : vector<8x128xf32> to vector<8x128xbf16>
    %cst_104 = arith.constant dense<0.000000e+00> : vector<8x512xf32>
    %344 = tpu.matmul %343, %201, %cst_104 {dimension_numbers = #tpu.dot_dimension_numbers<[1], [0], [0], [1], [0, 0, 1, 1], [], []>} : vector<8x128xbf16>, vector<128x512xbf16>, vector<8x512xf32> -> vector<8x512xf32>
    %345 = arith.addf %342, %344 : vector<8x512xf32>
    %346 = vector.extract_strided_slice %345 {offsets = [0, 0], sizes = [8, 384], strides = [1, 1]} : vector<8x512xf32> to vector<8x384xf32>
    %347 = arith.negf %346 : vector<8x384xf32>
    %348 = math.exp %347 : vector<8x384xf32>
    %cst_105 = arith.constant 1.000000e+00 : f32
    %349 = vector.broadcast %cst_105 : f32 to vector<8x384xf32>
    %350 = arith.addf %349, %348 : vector<8x384xf32>
    %351 = arith.divf %349, %350 : vector<8x384xf32>
    %352 = vector.extract_strided_slice %351 {offsets = [0, 0], sizes = [8, 128], strides = [1, 1]} : vector<8x384xf32> to vector<8x128xf32>
    %353 = vector.extract_strided_slice %351 {offsets = [0, 128], sizes = [8, 128], strides = [1, 1]} : vector<8x384xf32> to vector<8x128xf32>
    %354 = vector.extract_strided_slice %351 {offsets = [0, 256], sizes = [8, 128], strides = [1, 1]} : vector<8x384xf32> to vector<8x128xf32>
    %355 = vector.extract_strided_slice %345 {offsets = [0, 384], sizes = [8, 128], strides = [1, 1]} : vector<8x512xf32> to vector<8x128xf32>
    %356 = math.tanh %355 : vector<8x128xf32>
    %357 = arith.mulf %353, %339 : vector<8x128xf32>
    %358 = arith.mulf %352, %356 : vector<8x128xf32>
    %359 = arith.addf %357, %358 : vector<8x128xf32>
    %360 = math.tanh %359 : vector<8x128xf32>
    %361 = arith.mulf %354, %360 : vector<8x128xf32>
    %c0_106 = arith.constant 0 : index
    %362 = memref.load %arg0[%c0_106] : memref<64xi32, #tpu.memory_space<smem>>
    %363 = arith.index_cast %362 : i32 to index
    %c0_107 = arith.constant 0 : index
    %364 = vector.load %arg12[%363, %c0_107] : memref<128x512xf32, #tpu.memory_space<vmem>>, vector<1x512xf32>
    %c0_108 = arith.constant 0 : index
    %c0_109 = arith.constant 0 : index
    %365 = vector.load %arg20[%c0_108, %c0_109] : memref<64x512xf32, #tpu.memory_space<vmem>>, vector<1x512xf32>
    tpu.vector_store %arg20[%c0_108, %c0_109], %364 {strides = array<i32>} : memref<64x512xf32, #tpu.memory_space<vmem>>, vector<1x512xf32>,
    %c1 = arith.constant 1 : index
    %366 = memref.load %arg0[%c1] : memref<64xi32, #tpu.memory_space<smem>>
    %367 = arith.index_cast %366 : i32 to index
    %c0_110 = arith.constant 0 : index
    %368 = vector.load %arg12[%367, %c0_110] : memref<128x512xf32, #tpu.memory_space<vmem>>, vector<1x512xf32>
    %c1_111 = arith.constant 1 : index
    %c0_112 = arith.constant 0 : index
    %369 = vector.load %arg20[%c1_111, %c0_112] : memref<64x512xf32, #tpu.memory_space<vmem>>, vector<1x512xf32>
    tpu.vector_store %arg20[%c1_111, %c0_112], %368 {strides = array<i32>} : memref<64x512xf32, #tpu.memory_space<vmem>>, vector<1x512xf32>,
    %c2 = arith.constant 2 : index
    %370 = memref.load %arg0[%c2] : memref<64xi32, #tpu.memory_space<smem>>
    %371 = arith.index_cast %370 : i32 to index
    %c0_113 = arith.constant 0 : index
    %372 = vector.load %arg12[%371, %c0_113] : memref<128x512xf32, #tpu.memory_space<vmem>>, vector<1x512xf32>
    %c2_114 = arith.constant 2 : index
    %c0_115 = arith.constant 0 : index
    %373 = vector.load %arg20[%c2_114, %c0_115] : memref<64x512xf32, #tpu.memory_space<vmem>>, vector<1x512xf32>
    tpu.vector_store %arg20[%c2_114, %c0_115], %372 {strides = array<i32>} : memref<64x512xf32, #tpu.memory_space<vmem>>, vector<1x512xf32>,
    %c3 = arith.constant 3 : index
    %374 = memref.load %arg0[%c3] : memref<64xi32, #tpu.memory_space<smem>>
    %375 = arith.index_cast %374 : i32 to index
    %c0_116 = arith.constant 0 : index
    %376 = vector.load %arg12[%375, %c0_116] : memref<128x512xf32, #tpu.memory_space<vmem>>, vector<1x512xf32>
    %c3_117 = arith.constant 3 : index
    %c0_118 = arith.constant 0 : index
    %377 = vector.load %arg20[%c3_117, %c0_118] : memref<64x512xf32, #tpu.memory_space<vmem>>, vector<1x512xf32>
    tpu.vector_store %arg20[%c3_117, %c0_118], %376 {strides = array<i32>} : memref<64x512xf32, #tpu.memory_space<vmem>>, vector<1x512xf32>,
    %c4 = arith.constant 4 : index
    %378 = memref.load %arg0[%c4] : memref<64xi32, #tpu.memory_space<smem>>
    %379 = arith.index_cast %378 : i32 to index
    %c0_119 = arith.constant 0 : index
    %380 = vector.load %arg12[%379, %c0_119] : memref<128x512xf32, #tpu.memory_space<vmem>>, vector<1x512xf32>
    %c4_120 = arith.constant 4 : index
    %c0_121 = arith.constant 0 : index
    %381 = vector.load %arg20[%c4_120, %c0_121] : memref<64x512xf32, #tpu.memory_space<vmem>>, vector<1x512xf32>
    tpu.vector_store %arg20[%c4_120, %c0_121], %380 {strides = array<i32>} : memref<64x512xf32, #tpu.memory_space<vmem>>, vector<1x512xf32>,
    %c5 = arith.constant 5 : index
    %382 = memref.load %arg0[%c5] : memref<64xi32, #tpu.memory_space<smem>>
    %383 = arith.index_cast %382 : i32 to index
    %c0_122 = arith.constant 0 : index
    %384 = vector.load %arg12[%383, %c0_122] : memref<128x512xf32, #tpu.memory_space<vmem>>, vector<1x512xf32>
    %c5_123 = arith.constant 5 : index
    %c0_124 = arith.constant 0 : index
    %385 = vector.load %arg20[%c5_123, %c0_124] : memref<64x512xf32, #tpu.memory_space<vmem>>, vector<1x512xf32>
    tpu.vector_store %arg20[%c5_123, %c0_124], %384 {strides = array<i32>} : memref<64x512xf32, #tpu.memory_space<vmem>>, vector<1x512xf32>,
    %c6 = arith.constant 6 : index
    %386 = memref.load %arg0[%c6] : memref<64xi32, #tpu.memory_space<smem>>
    %387 = arith.index_cast %386 : i32 to index
    %c0_125 = arith.constant 0 : index
    %388 = vector.load %arg12[%387, %c0_125] : memref<128x512xf32, #tpu.memory_space<vmem>>, vector<1x512xf32>
    %c6_126 = arith.constant 6 : index
    %c0_127 = arith.constant 0 : index
    %389 = vector.load %arg20[%c6_126, %c0_127] : memref<64x512xf32, #tpu.memory_space<vmem>>, vector<1x512xf32>
    tpu.vector_store %arg20[%c6_126, %c0_127], %388 {strides = array<i32>} : memref<64x512xf32, #tpu.memory_space<vmem>>, vector<1x512xf32>,
    %c7 = arith.constant 7 : index
    %390 = memref.load %arg0[%c7] : memref<64xi32, #tpu.memory_space<smem>>
    %391 = arith.index_cast %390 : i32 to index
    %c0_128 = arith.constant 0 : index
    %392 = vector.load %arg12[%391, %c0_128] : memref<128x512xf32, #tpu.memory_space<vmem>>, vector<1x512xf32>
    %c7_129 = arith.constant 7 : index
    %c0_130 = arith.constant 0 : index
    %393 = vector.load %arg20[%c7_129, %c0_130] : memref<64x512xf32, #tpu.memory_space<vmem>>, vector<1x512xf32>
    tpu.vector_store %arg20[%c7_129, %c0_130], %392 {strides = array<i32>} : memref<64x512xf32, #tpu.memory_space<vmem>>, vector<1x512xf32>,
    %c8_131 = arith.constant 8 : index
    %394 = memref.load %arg0[%c8_131] : memref<64xi32, #tpu.memory_space<smem>>
    %395 = arith.index_cast %394 : i32 to index
    %c0_132 = arith.constant 0 : index
    %396 = vector.load %arg12[%395, %c0_132] : memref<128x512xf32, #tpu.memory_space<vmem>>, vector<1x512xf32>
    %c8_133 = arith.constant 8 : index
    %c0_134 = arith.constant 0 : index
    %397 = vector.load %arg20[%c8_133, %c0_134] : memref<64x512xf32, #tpu.memory_space<vmem>>, vector<1x512xf32>
    tpu.vector_store %arg20[%c8_133, %c0_134], %396 {strides = array<i32>} : memref<64x512xf32, #tpu.memory_space<vmem>>, vector<1x512xf32>,
    %c9 = arith.constant 9 : index
    %398 = memref.load %arg0[%c9] : memref<64xi32, #tpu.memory_space<smem>>
    %399 = arith.index_cast %398 : i32 to index
    %c0_135 = arith.constant 0 : index
    %400 = vector.load %arg12[%399, %c0_135] : memref<128x512xf32, #tpu.memory_space<vmem>>, vector<1x512xf32>
    %c9_136 = arith.constant 9 : index
    %c0_137 = arith.constant 0 : index
    %401 = vector.load %arg20[%c9_136, %c0_137] : memref<64x512xf32, #tpu.memory_space<vmem>>, vector<1x512xf32>
    tpu.vector_store %arg20[%c9_136, %c0_137], %400 {strides = array<i32>} : memref<64x512xf32, #tpu.memory_space<vmem>>, vector<1x512xf32>,
    %c10 = arith.constant 10 : index
    %402 = memref.load %arg0[%c10] : memref<64xi32, #tpu.memory_space<smem>>
    %403 = arith.index_cast %402 : i32 to index
    %c0_138 = arith.constant 0 : index
    %404 = vector.load %arg12[%403, %c0_138] : memref<128x512xf32, #tpu.memory_space<vmem>>, vector<1x512xf32>
    %c10_139 = arith.constant 10 : index
    %c0_140 = arith.constant 0 : index
    %405 = vector.load %arg20[%c10_139, %c0_140] : memref<64x512xf32, #tpu.memory_space<vmem>>, vector<1x512xf32>
    tpu.vector_store %arg20[%c10_139, %c0_140], %404 {strides = array<i32>} : memref<64x512xf32, #tpu.memory_space<vmem>>, vector<1x512xf32>,
    %c11 = arith.constant 11 : index
    %406 = memref.load %arg0[%c11] : memref<64xi32, #tpu.memory_space<smem>>
    %407 = arith.index_cast %406 : i32 to index
    %c0_141 = arith.constant 0 : index
    %408 = vector.load %arg12[%407, %c0_141] : memref<128x512xf32, #tpu.memory_space<vmem>>, vector<1x512xf32>
    %c11_142 = arith.constant 11 : index
    %c0_143 = arith.constant 0 : index
    %409 = vector.load %arg20[%c11_142, %c0_143] : memref<64x512xf32, #tpu.memory_space<vmem>>, vector<1x512xf32>
    tpu.vector_store %arg20[%c11_142, %c0_143], %408 {strides = array<i32>} : memref<64x512xf32, #tpu.memory_space<vmem>>, vector<1x512xf32>,
    %c12 = arith.constant 12 : index
    %410 = memref.load %arg0[%c12] : memref<64xi32, #tpu.memory_space<smem>>
    %411 = arith.index_cast %410 : i32 to index
    %c0_144 = arith.constant 0 : index
    %412 = vector.load %arg12[%411, %c0_144] : memref<128x512xf32, #tpu.memory_space<vmem>>, vector<1x512xf32>
    %c12_145 = arith.constant 12 : index
    %c0_146 = arith.constant 0 : index
    %413 = vector.load %arg20[%c12_145, %c0_146] : memref<64x512xf32, #tpu.memory_space<vmem>>, vector<1x512xf32>
    tpu.vector_store %arg20[%c12_145, %c0_146], %412 {strides = array<i32>} : memref<64x512xf32, #tpu.memory_space<vmem>>, vector<1x512xf32>,
    %c13 = arith.constant 13 : index
    %414 = memref.load %arg0[%c13] : memref<64xi32, #tpu.memory_space<smem>>
    %415 = arith.index_cast %414 : i32 to index
    %c0_147 = arith.constant 0 : index
    %416 = vector.load %arg12[%415, %c0_147] : memref<128x512xf32, #tpu.memory_space<vmem>>, vector<1x512xf32>
    %c13_148 = arith.constant 13 : index
    %c0_149 = arith.constant 0 : index
    %417 = vector.load %arg20[%c13_148, %c0_149] : memref<64x512xf32, #tpu.memory_space<vmem>>, vector<1x512xf32>
    tpu.vector_store %arg20[%c13_148, %c0_149], %416 {strides = array<i32>} : memref<64x512xf32, #tpu.memory_space<vmem>>, vector<1x512xf32>,
    %c14 = arith.constant 14 : index
    %418 = memref.load %arg0[%c14] : memref<64xi32, #tpu.memory_space<smem>>
    %419 = arith.index_cast %418 : i32 to index
    %c0_150 = arith.constant 0 : index
    %420 = vector.load %arg12[%419, %c0_150] : memref<128x512xf32, #tpu.memory_space<vmem>>, vector<1x512xf32>
    %c14_151 = arith.constant 14 : index
    %c0_152 = arith.constant 0 : index
    %421 = vector.load %arg20[%c14_151, %c0_152] : memref<64x512xf32, #tpu.memory_space<vmem>>, vector<1x512xf32>
    tpu.vector_store %arg20[%c14_151, %c0_152], %420 {strides = array<i32>} : memref<64x512xf32, #tpu.memory_space<vmem>>, vector<1x512xf32>,
    %c15 = arith.constant 15 : index
    %422 = memref.load %arg0[%c15] : memref<64xi32, #tpu.memory_space<smem>>
    %423 = arith.index_cast %422 : i32 to index
    %c0_153 = arith.constant 0 : index
    %424 = vector.load %arg12[%423, %c0_153] : memref<128x512xf32, #tpu.memory_space<vmem>>, vector<1x512xf32>
    %c15_154 = arith.constant 15 : index
    %c0_155 = arith.constant 0 : index
    %425 = vector.load %arg20[%c15_154, %c0_155] : memref<64x512xf32, #tpu.memory_space<vmem>>, vector<1x512xf32>
    tpu.vector_store %arg20[%c15_154, %c0_155], %424 {strides = array<i32>} : memref<64x512xf32, #tpu.memory_space<vmem>>, vector<1x512xf32>,
    %c16_156 = arith.constant 16 : index
    %426 = memref.load %arg0[%c16_156] : memref<64xi32, #tpu.memory_space<smem>>
    %427 = arith.index_cast %426 : i32 to index
    %c0_157 = arith.constant 0 : index
    %428 = vector.load %arg12[%427, %c0_157] : memref<128x512xf32, #tpu.memory_space<vmem>>, vector<1x512xf32>
    %c16_158 = arith.constant 16 : index
    %c0_159 = arith.constant 0 : index
    %429 = vector.load %arg20[%c16_158, %c0_159] : memref<64x512xf32, #tpu.memory_space<vmem>>, vector<1x512xf32>
    tpu.vector_store %arg20[%c16_158, %c0_159], %428 {strides = array<i32>} : memref<64x512xf32, #tpu.memory_space<vmem>>, vector<1x512xf32>,
    %c17 = arith.constant 17 : index
    %430 = memref.load %arg0[%c17] : memref<64xi32, #tpu.memory_space<smem>>
    %431 = arith.index_cast %430 : i32 to index
    %c0_160 = arith.constant 0 : index
    %432 = vector.load %arg12[%431, %c0_160] : memref<128x512xf32, #tpu.memory_space<vmem>>, vector<1x512xf32>
    %c17_161 = arith.constant 17 : index
    %c0_162 = arith.constant 0 : index
    %433 = vector.load %arg20[%c17_161, %c0_162] : memref<64x512xf32, #tpu.memory_space<vmem>>, vector<1x512xf32>
    tpu.vector_store %arg20[%c17_161, %c0_162], %432 {strides = array<i32>} : memref<64x512xf32, #tpu.memory_space<vmem>>, vector<1x512xf32>,
    %c18 = arith.constant 18 : index
    %434 = memref.load %arg0[%c18] : memref<64xi32, #tpu.memory_space<smem>>
    %435 = arith.index_cast %434 : i32 to index
    %c0_163 = arith.constant 0 : index
    %436 = vector.load %arg12[%435, %c0_163] : memref<128x512xf32, #tpu.memory_space<vmem>>, vector<1x512xf32>
    %c18_164 = arith.constant 18 : index
    %c0_165 = arith.constant 0 : index
    %437 = vector.load %arg20[%c18_164, %c0_165] : memref<64x512xf32, #tpu.memory_space<vmem>>, vector<1x512xf32>
    tpu.vector_store %arg20[%c18_164, %c0_165], %436 {strides = array<i32>} : memref<64x512xf32, #tpu.memory_space<vmem>>, vector<1x512xf32>,
    %c19 = arith.constant 19 : index
    %438 = memref.load %arg0[%c19] : memref<64xi32, #tpu.memory_space<smem>>
    %439 = arith.index_cast %438 : i32 to index
    %c0_166 = arith.constant 0 : index
    %440 = vector.load %arg12[%439, %c0_166] : memref<128x512xf32, #tpu.memory_space<vmem>>, vector<1x512xf32>
    %c19_167 = arith.constant 19 : index
    %c0_168 = arith.constant 0 : index
    %441 = vector.load %arg20[%c19_167, %c0_168] : memref<64x512xf32, #tpu.memory_space<vmem>>, vector<1x512xf32>
    tpu.vector_store %arg20[%c19_167, %c0_168], %440 {strides = array<i32>} : memref<64x512xf32, #tpu.memory_space<vmem>>, vector<1x512xf32>,
    %c20 = arith.constant 20 : index
    %442 = memref.load %arg0[%c20] : memref<64xi32, #tpu.memory_space<smem>>
    %443 = arith.index_cast %442 : i32 to index
    %c0_169 = arith.constant 0 : index
    %444 = vector.load %arg12[%443, %c0_169] : memref<128x512xf32, #tpu.memory_space<vmem>>, vector<1x512xf32>
    %c20_170 = arith.constant 20 : index
    %c0_171 = arith.constant 0 : index
    %445 = vector.load %arg20[%c20_170, %c0_171] : memref<64x512xf32, #tpu.memory_space<vmem>>, vector<1x512xf32>
    tpu.vector_store %arg20[%c20_170, %c0_171], %444 {strides = array<i32>} : memref<64x512xf32, #tpu.memory_space<vmem>>, vector<1x512xf32>,
    %c21 = arith.constant 21 : index
    %446 = memref.load %arg0[%c21] : memref<64xi32, #tpu.memory_space<smem>>
    %447 = arith.index_cast %446 : i32 to index
    %c0_172 = arith.constant 0 : index
    %448 = vector.load %arg12[%447, %c0_172] : memref<128x512xf32, #tpu.memory_space<vmem>>, vector<1x512xf32>
    %c21_173 = arith.constant 21 : index
    %c0_174 = arith.constant 0 : index
    %449 = vector.load %arg20[%c21_173, %c0_174] : memref<64x512xf32, #tpu.memory_space<vmem>>, vector<1x512xf32>
    tpu.vector_store %arg20[%c21_173, %c0_174], %448 {strides = array<i32>} : memref<64x512xf32, #tpu.memory_space<vmem>>, vector<1x512xf32>,
    %c22 = arith.constant 22 : index
    %450 = memref.load %arg0[%c22] : memref<64xi32, #tpu.memory_space<smem>>
    %451 = arith.index_cast %450 : i32 to index
    %c0_175 = arith.constant 0 : index
    %452 = vector.load %arg12[%451, %c0_175] : memref<128x512xf32, #tpu.memory_space<vmem>>, vector<1x512xf32>
    %c22_176 = arith.constant 22 : index
    %c0_177 = arith.constant 0 : index
    %453 = vector.load %arg20[%c22_176, %c0_177] : memref<64x512xf32, #tpu.memory_space<vmem>>, vector<1x512xf32>
    tpu.vector_store %arg20[%c22_176, %c0_177], %452 {strides = array<i32>} : memref<64x512xf32, #tpu.memory_space<vmem>>, vector<1x512xf32>,
    %c23 = arith.constant 23 : index
    %454 = memref.load %arg0[%c23] : memref<64xi32, #tpu.memory_space<smem>>
    %455 = arith.index_cast %454 : i32 to index
    %c0_178 = arith.constant 0 : index
    %456 = vector.load %arg12[%455, %c0_178] : memref<128x512xf32, #tpu.memory_space<vmem>>, vector<1x512xf32>
    %c23_179 = arith.constant 23 : index
    %c0_180 = arith.constant 0 : index
    %457 = vector.load %arg20[%c23_179, %c0_180] : memref<64x512xf32, #tpu.memory_space<vmem>>, vector<1x512xf32>
    tpu.vector_store %arg20[%c23_179, %c0_180], %456 {strides = array<i32>} : memref<64x512xf32, #tpu.memory_space<vmem>>, vector<1x512xf32>,
    %c24_181 = arith.constant 24 : index
    %458 = memref.load %arg0[%c24_181] : memref<64xi32, #tpu.memory_space<smem>>
    %459 = arith.index_cast %458 : i32 to index
    %c0_182 = arith.constant 0 : index
    %460 = vector.load %arg12[%459, %c0_182] : memref<128x512xf32, #tpu.memory_space<vmem>>, vector<1x512xf32>
    %c24_183 = arith.constant 24 : index
    %c0_184 = arith.constant 0 : index
    %461 = vector.load %arg20[%c24_183, %c0_184] : memref<64x512xf32, #tpu.memory_space<vmem>>, vector<1x512xf32>
    tpu.vector_store %arg20[%c24_183, %c0_184], %460 {strides = array<i32>} : memref<64x512xf32, #tpu.memory_space<vmem>>, vector<1x512xf32>,
    %c25 = arith.constant 25 : index
    %462 = memref.load %arg0[%c25] : memref<64xi32, #tpu.memory_space<smem>>
    %463 = arith.index_cast %462 : i32 to index
    %c0_185 = arith.constant 0 : index
    %464 = vector.load %arg12[%463, %c0_185] : memref<128x512xf32, #tpu.memory_space<vmem>>, vector<1x512xf32>
    %c25_186 = arith.constant 25 : index
    %c0_187 = arith.constant 0 : index
    %465 = vector.load %arg20[%c25_186, %c0_187] : memref<64x512xf32, #tpu.memory_space<vmem>>, vector<1x512xf32>
    tpu.vector_store %arg20[%c25_186, %c0_187], %464 {strides = array<i32>} : memref<64x512xf32, #tpu.memory_space<vmem>>, vector<1x512xf32>,
    %c26 = arith.constant 26 : index
    %466 = memref.load %arg0[%c26] : memref<64xi32, #tpu.memory_space<smem>>
    %467 = arith.index_cast %466 : i32 to index
    %c0_188 = arith.constant 0 : index
    %468 = vector.load %arg12[%467, %c0_188] : memref<128x512xf32, #tpu.memory_space<vmem>>, vector<1x512xf32>
    %c26_189 = arith.constant 26 : index
    %c0_190 = arith.constant 0 : index
    %469 = vector.load %arg20[%c26_189, %c0_190] : memref<64x512xf32, #tpu.memory_space<vmem>>, vector<1x512xf32>
    tpu.vector_store %arg20[%c26_189, %c0_190], %468 {strides = array<i32>} : memref<64x512xf32, #tpu.memory_space<vmem>>, vector<1x512xf32>,
    %c27 = arith.constant 27 : index
    %470 = memref.load %arg0[%c27] : memref<64xi32, #tpu.memory_space<smem>>
    %471 = arith.index_cast %470 : i32 to index
    %c0_191 = arith.constant 0 : index
    %472 = vector.load %arg12[%471, %c0_191] : memref<128x512xf32, #tpu.memory_space<vmem>>, vector<1x512xf32>
    %c27_192 = arith.constant 27 : index
    %c0_193 = arith.constant 0 : index
    %473 = vector.load %arg20[%c27_192, %c0_193] : memref<64x512xf32, #tpu.memory_space<vmem>>, vector<1x512xf32>
    tpu.vector_store %arg20[%c27_192, %c0_193], %472 {strides = array<i32>} : memref<64x512xf32, #tpu.memory_space<vmem>>, vector<1x512xf32>,
    %c28 = arith.constant 28 : index
    %474 = memref.load %arg0[%c28] : memref<64xi32, #tpu.memory_space<smem>>
    %475 = arith.index_cast %474 : i32 to index
    %c0_194 = arith.constant 0 : index
    %476 = vector.load %arg12[%475, %c0_194] : memref<128x512xf32, #tpu.memory_space<vmem>>, vector<1x512xf32>
    %c28_195 = arith.constant 28 : index
    %c0_196 = arith.constant 0 : index
    %477 = vector.load %arg20[%c28_195, %c0_196] : memref<64x512xf32, #tpu.memory_space<vmem>>, vector<1x512xf32>
    tpu.vector_store %arg20[%c28_195, %c0_196], %476 {strides = array<i32>} : memref<64x512xf32, #tpu.memory_space<vmem>>, vector<1x512xf32>,
    %c29 = arith.constant 29 : index
    %478 = memref.load %arg0[%c29] : memref<64xi32, #tpu.memory_space<smem>>
    %479 = arith.index_cast %478 : i32 to index
    %c0_197 = arith.constant 0 : index
    %480 = vector.load %arg12[%479, %c0_197] : memref<128x512xf32, #tpu.memory_space<vmem>>, vector<1x512xf32>
    %c29_198 = arith.constant 29 : index
    %c0_199 = arith.constant 0 : index
    %481 = vector.load %arg20[%c29_198, %c0_199] : memref<64x512xf32, #tpu.memory_space<vmem>>, vector<1x512xf32>
    tpu.vector_store %arg20[%c29_198, %c0_199], %480 {strides = array<i32>} : memref<64x512xf32, #tpu.memory_space<vmem>>, vector<1x512xf32>,
    %c30 = arith.constant 30 : index
    %482 = memref.load %arg0[%c30] : memref<64xi32, #tpu.memory_space<smem>>
    %483 = arith.index_cast %482 : i32 to index
    %c0_200 = arith.constant 0 : index
    %484 = vector.load %arg12[%483, %c0_200] : memref<128x512xf32, #tpu.memory_space<vmem>>, vector<1x512xf32>
    %c30_201 = arith.constant 30 : index
    %c0_202 = arith.constant 0 : index
    %485 = vector.load %arg20[%c30_201, %c0_202] : memref<64x512xf32, #tpu.memory_space<vmem>>, vector<1x512xf32>
    tpu.vector_store %arg20[%c30_201, %c0_202], %484 {strides = array<i32>} : memref<64x512xf32, #tpu.memory_space<vmem>>, vector<1x512xf32>,
    %c31 = arith.constant 31 : index
    %486 = memref.load %arg0[%c31] : memref<64xi32, #tpu.memory_space<smem>>
    %487 = arith.index_cast %486 : i32 to index
    %c0_203 = arith.constant 0 : index
    %488 = vector.load %arg12[%487, %c0_203] : memref<128x512xf32, #tpu.memory_space<vmem>>, vector<1x512xf32>
    %c31_204 = arith.constant 31 : index
    %c0_205 = arith.constant 0 : index
    %489 = vector.load %arg20[%c31_204, %c0_205] : memref<64x512xf32, #tpu.memory_space<vmem>>, vector<1x512xf32>
    tpu.vector_store %arg20[%c31_204, %c0_205], %488 {strides = array<i32>} : memref<64x512xf32, #tpu.memory_space<vmem>>, vector<1x512xf32>,
    %c32_206 = arith.constant 32 : index
    %490 = memref.load %arg0[%c32_206] : memref<64xi32, #tpu.memory_space<smem>>
    %491 = arith.index_cast %490 : i32 to index
    %c0_207 = arith.constant 0 : index
    %492 = vector.load %arg12[%491, %c0_207] : memref<128x512xf32, #tpu.memory_space<vmem>>, vector<1x512xf32>
    %c32_208 = arith.constant 32 : index
    %c0_209 = arith.constant 0 : index
    %493 = vector.load %arg20[%c32_208, %c0_209] : memref<64x512xf32, #tpu.memory_space<vmem>>, vector<1x512xf32>
    tpu.vector_store %arg20[%c32_208, %c0_209], %492 {strides = array<i32>} : memref<64x512xf32, #tpu.memory_space<vmem>>, vector<1x512xf32>,
    %c33 = arith.constant 33 : index
    %494 = memref.load %arg0[%c33] : memref<64xi32, #tpu.memory_space<smem>>
    %495 = arith.index_cast %494 : i32 to index
    %c0_210 = arith.constant 0 : index
    %496 = vector.load %arg12[%495, %c0_210] : memref<128x512xf32, #tpu.memory_space<vmem>>, vector<1x512xf32>
    %c33_211 = arith.constant 33 : index
    %c0_212 = arith.constant 0 : index
    %497 = vector.load %arg20[%c33_211, %c0_212] : memref<64x512xf32, #tpu.memory_space<vmem>>, vector<1x512xf32>
    tpu.vector_store %arg20[%c33_211, %c0_212], %496 {strides = array<i32>} : memref<64x512xf32, #tpu.memory_space<vmem>>, vector<1x512xf32>,
    %c34 = arith.constant 34 : index
    %498 = memref.load %arg0[%c34] : memref<64xi32, #tpu.memory_space<smem>>
    %499 = arith.index_cast %498 : i32 to index
    %c0_213 = arith.constant 0 : index
    %500 = vector.load %arg12[%499, %c0_213] : memref<128x512xf32, #tpu.memory_space<vmem>>, vector<1x512xf32>
    %c34_214 = arith.constant 34 : index
    %c0_215 = arith.constant 0 : index
    %501 = vector.load %arg20[%c34_214, %c0_215] : memref<64x512xf32, #tpu.memory_space<vmem>>, vector<1x512xf32>
    tpu.vector_store %arg20[%c34_214, %c0_215], %500 {strides = array<i32>} : memref<64x512xf32, #tpu.memory_space<vmem>>, vector<1x512xf32>,
    %c35 = arith.constant 35 : index
    %502 = memref.load %arg0[%c35] : memref<64xi32, #tpu.memory_space<smem>>
    %503 = arith.index_cast %502 : i32 to index
    %c0_216 = arith.constant 0 : index
    %504 = vector.load %arg12[%503, %c0_216] : memref<128x512xf32, #tpu.memory_space<vmem>>, vector<1x512xf32>
    %c35_217 = arith.constant 35 : index
    %c0_218 = arith.constant 0 : index
    %505 = vector.load %arg20[%c35_217, %c0_218] : memref<64x512xf32, #tpu.memory_space<vmem>>, vector<1x512xf32>
    tpu.vector_store %arg20[%c35_217, %c0_218], %504 {strides = array<i32>} : memref<64x512xf32, #tpu.memory_space<vmem>>, vector<1x512xf32>,
    %c36 = arith.constant 36 : index
    %506 = memref.load %arg0[%c36] : memref<64xi32, #tpu.memory_space<smem>>
    %507 = arith.index_cast %506 : i32 to index
    %c0_219 = arith.constant 0 : index
    %508 = vector.load %arg12[%507, %c0_219] : memref<128x512xf32, #tpu.memory_space<vmem>>, vector<1x512xf32>
    %c36_220 = arith.constant 36 : index
    %c0_221 = arith.constant 0 : index
    %509 = vector.load %arg20[%c36_220, %c0_221] : memref<64x512xf32, #tpu.memory_space<vmem>>, vector<1x512xf32>
    tpu.vector_store %arg20[%c36_220, %c0_221], %508 {strides = array<i32>} : memref<64x512xf32, #tpu.memory_space<vmem>>, vector<1x512xf32>,
    %c37 = arith.constant 37 : index
    %510 = memref.load %arg0[%c37] : memref<64xi32, #tpu.memory_space<smem>>
    %511 = arith.index_cast %510 : i32 to index
    %c0_222 = arith.constant 0 : index
    %512 = vector.load %arg12[%511, %c0_222] : memref<128x512xf32, #tpu.memory_space<vmem>>, vector<1x512xf32>
    %c37_223 = arith.constant 37 : index
    %c0_224 = arith.constant 0 : index
    %513 = vector.load %arg20[%c37_223, %c0_224] : memref<64x512xf32, #tpu.memory_space<vmem>>, vector<1x512xf32>
    tpu.vector_store %arg20[%c37_223, %c0_224], %512 {strides = array<i32>} : memref<64x512xf32, #tpu.memory_space<vmem>>, vector<1x512xf32>,
    %c38 = arith.constant 38 : index
    %514 = memref.load %arg0[%c38] : memref<64xi32, #tpu.memory_space<smem>>
    %515 = arith.index_cast %514 : i32 to index
    %c0_225 = arith.constant 0 : index
    %516 = vector.load %arg12[%515, %c0_225] : memref<128x512xf32, #tpu.memory_space<vmem>>, vector<1x512xf32>
    %c38_226 = arith.constant 38 : index
    %c0_227 = arith.constant 0 : index
    %517 = vector.load %arg20[%c38_226, %c0_227] : memref<64x512xf32, #tpu.memory_space<vmem>>, vector<1x512xf32>
    tpu.vector_store %arg20[%c38_226, %c0_227], %516 {strides = array<i32>} : memref<64x512xf32, #tpu.memory_space<vmem>>, vector<1x512xf32>,
    %c39 = arith.constant 39 : index
    %518 = memref.load %arg0[%c39] : memref<64xi32, #tpu.memory_space<smem>>
    %519 = arith.index_cast %518 : i32 to index
    %c0_228 = arith.constant 0 : index
    %520 = vector.load %arg12[%519, %c0_228] : memref<128x512xf32, #tpu.memory_space<vmem>>, vector<1x512xf32>
    %c39_229 = arith.constant 39 : index
    %c0_230 = arith.constant 0 : index
    %521 = vector.load %arg20[%c39_229, %c0_230] : memref<64x512xf32, #tpu.memory_space<vmem>>, vector<1x512xf32>
    tpu.vector_store %arg20[%c39_229, %c0_230], %520 {strides = array<i32>} : memref<64x512xf32, #tpu.memory_space<vmem>>, vector<1x512xf32>,
    %c40_231 = arith.constant 40 : index
    %522 = memref.load %arg0[%c40_231] : memref<64xi32, #tpu.memory_space<smem>>
    %523 = arith.index_cast %522 : i32 to index
    %c0_232 = arith.constant 0 : index
    %524 = vector.load %arg12[%523, %c0_232] : memref<128x512xf32, #tpu.memory_space<vmem>>, vector<1x512xf32>
    %c40_233 = arith.constant 40 : index
    %c0_234 = arith.constant 0 : index
    %525 = vector.load %arg20[%c40_233, %c0_234] : memref<64x512xf32, #tpu.memory_space<vmem>>, vector<1x512xf32>
    tpu.vector_store %arg20[%c40_233, %c0_234], %524 {strides = array<i32>} : memref<64x512xf32, #tpu.memory_space<vmem>>, vector<1x512xf32>,
    %c41 = arith.constant 41 : index
    %526 = memref.load %arg0[%c41] : memref<64xi32, #tpu.memory_space<smem>>
    %527 = arith.index_cast %526 : i32 to index
    %c0_235 = arith.constant 0 : index
    %528 = vector.load %arg12[%527, %c0_235] : memref<128x512xf32, #tpu.memory_space<vmem>>, vector<1x512xf32>
    %c41_236 = arith.constant 41 : index
    %c0_237 = arith.constant 0 : index
    %529 = vector.load %arg20[%c41_236, %c0_237] : memref<64x512xf32, #tpu.memory_space<vmem>>, vector<1x512xf32>
    tpu.vector_store %arg20[%c41_236, %c0_237], %528 {strides = array<i32>} : memref<64x512xf32, #tpu.memory_space<vmem>>, vector<1x512xf32>,
    %c42 = arith.constant 42 : index
    %530 = memref.load %arg0[%c42] : memref<64xi32, #tpu.memory_space<smem>>
    %531 = arith.index_cast %530 : i32 to index
    %c0_238 = arith.constant 0 : index
    %532 = vector.load %arg12[%531, %c0_238] : memref<128x512xf32, #tpu.memory_space<vmem>>, vector<1x512xf32>
    %c42_239 = arith.constant 42 : index
    %c0_240 = arith.constant 0 : index
    %533 = vector.load %arg20[%c42_239, %c0_240] : memref<64x512xf32, #tpu.memory_space<vmem>>, vector<1x512xf32>
    tpu.vector_store %arg20[%c42_239, %c0_240], %532 {strides = array<i32>} : memref<64x512xf32, #tpu.memory_space<vmem>>, vector<1x512xf32>,
    %c43 = arith.constant 43 : index
    %534 = memref.load %arg0[%c43] : memref<64xi32, #tpu.memory_space<smem>>
    %535 = arith.index_cast %534 : i32 to index
    %c0_241 = arith.constant 0 : index
    %536 = vector.load %arg12[%535, %c0_241] : memref<128x512xf32, #tpu.memory_space<vmem>>, vector<1x512xf32>
    %c43_242 = arith.constant 43 : index
    %c0_243 = arith.constant 0 : index
    %537 = vector.load %arg20[%c43_242, %c0_243] : memref<64x512xf32, #tpu.memory_space<vmem>>, vector<1x512xf32>
    tpu.vector_store %arg20[%c43_242, %c0_243], %536 {strides = array<i32>} : memref<64x512xf32, #tpu.memory_space<vmem>>, vector<1x512xf32>,
    %c44 = arith.constant 44 : index
    %538 = memref.load %arg0[%c44] : memref<64xi32, #tpu.memory_space<smem>>
    %539 = arith.index_cast %538 : i32 to index
    %c0_244 = arith.constant 0 : index
    %540 = vector.load %arg12[%539, %c0_244] : memref<128x512xf32, #tpu.memory_space<vmem>>, vector<1x512xf32>
    %c44_245 = arith.constant 44 : index
    %c0_246 = arith.constant 0 : index
    %541 = vector.load %arg20[%c44_245, %c0_246] : memref<64x512xf32, #tpu.memory_space<vmem>>, vector<1x512xf32>
    tpu.vector_store %arg20[%c44_245, %c0_246], %540 {strides = array<i32>} : memref<64x512xf32, #tpu.memory_space<vmem>>, vector<1x512xf32>,
    %c45 = arith.constant 45 : index
    %542 = memref.load %arg0[%c45] : memref<64xi32, #tpu.memory_space<smem>>
    %543 = arith.index_cast %542 : i32 to index
    %c0_247 = arith.constant 0 : index
    %544 = vector.load %arg12[%543, %c0_247] : memref<128x512xf32, #tpu.memory_space<vmem>>, vector<1x512xf32>
    %c45_248 = arith.constant 45 : index
    %c0_249 = arith.constant 0 : index
    %545 = vector.load %arg20[%c45_248, %c0_249] : memref<64x512xf32, #tpu.memory_space<vmem>>, vector<1x512xf32>
    tpu.vector_store %arg20[%c45_248, %c0_249], %544 {strides = array<i32>} : memref<64x512xf32, #tpu.memory_space<vmem>>, vector<1x512xf32>,
    %c46 = arith.constant 46 : index
    %546 = memref.load %arg0[%c46] : memref<64xi32, #tpu.memory_space<smem>>
    %547 = arith.index_cast %546 : i32 to index
    %c0_250 = arith.constant 0 : index
    %548 = vector.load %arg12[%547, %c0_250] : memref<128x512xf32, #tpu.memory_space<vmem>>, vector<1x512xf32>
    %c46_251 = arith.constant 46 : index
    %c0_252 = arith.constant 0 : index
    %549 = vector.load %arg20[%c46_251, %c0_252] : memref<64x512xf32, #tpu.memory_space<vmem>>, vector<1x512xf32>
    tpu.vector_store %arg20[%c46_251, %c0_252], %548 {strides = array<i32>} : memref<64x512xf32, #tpu.memory_space<vmem>>, vector<1x512xf32>,
    %c47 = arith.constant 47 : index
    %550 = memref.load %arg0[%c47] : memref<64xi32, #tpu.memory_space<smem>>
    %551 = arith.index_cast %550 : i32 to index
    %c0_253 = arith.constant 0 : index
    %552 = vector.load %arg12[%551, %c0_253] : memref<128x512xf32, #tpu.memory_space<vmem>>, vector<1x512xf32>
    %c47_254 = arith.constant 47 : index
    %c0_255 = arith.constant 0 : index
    %553 = vector.load %arg20[%c47_254, %c0_255] : memref<64x512xf32, #tpu.memory_space<vmem>>, vector<1x512xf32>
    tpu.vector_store %arg20[%c47_254, %c0_255], %552 {strides = array<i32>} : memref<64x512xf32, #tpu.memory_space<vmem>>, vector<1x512xf32>,
    %c48_256 = arith.constant 48 : index
    %554 = memref.load %arg0[%c48_256] : memref<64xi32, #tpu.memory_space<smem>>
    %555 = arith.index_cast %554 : i32 to index
    %c0_257 = arith.constant 0 : index
    %556 = vector.load %arg12[%555, %c0_257] : memref<128x512xf32, #tpu.memory_space<vmem>>, vector<1x512xf32>
    %c48_258 = arith.constant 48 : index
    %c0_259 = arith.constant 0 : index
    %557 = vector.load %arg20[%c48_258, %c0_259] : memref<64x512xf32, #tpu.memory_space<vmem>>, vector<1x512xf32>
    tpu.vector_store %arg20[%c48_258, %c0_259], %556 {strides = array<i32>} : memref<64x512xf32, #tpu.memory_space<vmem>>, vector<1x512xf32>,
    %c49 = arith.constant 49 : index
    %558 = memref.load %arg0[%c49] : memref<64xi32, #tpu.memory_space<smem>>
    %559 = arith.index_cast %558 : i32 to index
    %c0_260 = arith.constant 0 : index
    %560 = vector.load %arg12[%559, %c0_260] : memref<128x512xf32, #tpu.memory_space<vmem>>, vector<1x512xf32>
    %c49_261 = arith.constant 49 : index
    %c0_262 = arith.constant 0 : index
    %561 = vector.load %arg20[%c49_261, %c0_262] : memref<64x512xf32, #tpu.memory_space<vmem>>, vector<1x512xf32>
    tpu.vector_store %arg20[%c49_261, %c0_262], %560 {strides = array<i32>} : memref<64x512xf32, #tpu.memory_space<vmem>>, vector<1x512xf32>,
    %c50 = arith.constant 50 : index
    %562 = memref.load %arg0[%c50] : memref<64xi32, #tpu.memory_space<smem>>
    %563 = arith.index_cast %562 : i32 to index
    %c0_263 = arith.constant 0 : index
    %564 = vector.load %arg12[%563, %c0_263] : memref<128x512xf32, #tpu.memory_space<vmem>>, vector<1x512xf32>
    %c50_264 = arith.constant 50 : index
    %c0_265 = arith.constant 0 : index
    %565 = vector.load %arg20[%c50_264, %c0_265] : memref<64x512xf32, #tpu.memory_space<vmem>>, vector<1x512xf32>
    tpu.vector_store %arg20[%c50_264, %c0_265], %564 {strides = array<i32>} : memref<64x512xf32, #tpu.memory_space<vmem>>, vector<1x512xf32>,
    %c51 = arith.constant 51 : index
    %566 = memref.load %arg0[%c51] : memref<64xi32, #tpu.memory_space<smem>>
    %567 = arith.index_cast %566 : i32 to index
    %c0_266 = arith.constant 0 : index
    %568 = vector.load %arg12[%567, %c0_266] : memref<128x512xf32, #tpu.memory_space<vmem>>, vector<1x512xf32>
    %c51_267 = arith.constant 51 : index
    %c0_268 = arith.constant 0 : index
    %569 = vector.load %arg20[%c51_267, %c0_268] : memref<64x512xf32, #tpu.memory_space<vmem>>, vector<1x512xf32>
    tpu.vector_store %arg20[%c51_267, %c0_268], %568 {strides = array<i32>} : memref<64x512xf32, #tpu.memory_space<vmem>>, vector<1x512xf32>,
    %c52 = arith.constant 52 : index
    %570 = memref.load %arg0[%c52] : memref<64xi32, #tpu.memory_space<smem>>
    %571 = arith.index_cast %570 : i32 to index
    %c0_269 = arith.constant 0 : index
    %572 = vector.load %arg12[%571, %c0_269] : memref<128x512xf32, #tpu.memory_space<vmem>>, vector<1x512xf32>
    %c52_270 = arith.constant 52 : index
    %c0_271 = arith.constant 0 : index
    %573 = vector.load %arg20[%c52_270, %c0_271] : memref<64x512xf32, #tpu.memory_space<vmem>>, vector<1x512xf32>
    tpu.vector_store %arg20[%c52_270, %c0_271], %572 {strides = array<i32>} : memref<64x512xf32, #tpu.memory_space<vmem>>, vector<1x512xf32>,
    %c53 = arith.constant 53 : index
    %574 = memref.load %arg0[%c53] : memref<64xi32, #tpu.memory_space<smem>>
    %575 = arith.index_cast %574 : i32 to index
    %c0_272 = arith.constant 0 : index
    %576 = vector.load %arg12[%575, %c0_272] : memref<128x512xf32, #tpu.memory_space<vmem>>, vector<1x512xf32>
    %c53_273 = arith.constant 53 : index
    %c0_274 = arith.constant 0 : index
    %577 = vector.load %arg20[%c53_273, %c0_274] : memref<64x512xf32, #tpu.memory_space<vmem>>, vector<1x512xf32>
    tpu.vector_store %arg20[%c53_273, %c0_274], %576 {strides = array<i32>} : memref<64x512xf32, #tpu.memory_space<vmem>>, vector<1x512xf32>,
    %c54 = arith.constant 54 : index
    %578 = memref.load %arg0[%c54] : memref<64xi32, #tpu.memory_space<smem>>
    %579 = arith.index_cast %578 : i32 to index
    %c0_275 = arith.constant 0 : index
    %580 = vector.load %arg12[%579, %c0_275] : memref<128x512xf32, #tpu.memory_space<vmem>>, vector<1x512xf32>
    %c54_276 = arith.constant 54 : index
    %c0_277 = arith.constant 0 : index
    %581 = vector.load %arg20[%c54_276, %c0_277] : memref<64x512xf32, #tpu.memory_space<vmem>>, vector<1x512xf32>
    tpu.vector_store %arg20[%c54_276, %c0_277], %580 {strides = array<i32>} : memref<64x512xf32, #tpu.memory_space<vmem>>, vector<1x512xf32>,
    %c55 = arith.constant 55 : index
    %582 = memref.load %arg0[%c55] : memref<64xi32, #tpu.memory_space<smem>>
    %583 = arith.index_cast %582 : i32 to index
    %c0_278 = arith.constant 0 : index
    %584 = vector.load %arg12[%583, %c0_278] : memref<128x512xf32, #tpu.memory_space<vmem>>, vector<1x512xf32>
    %c55_279 = arith.constant 55 : index
    %c0_280 = arith.constant 0 : index
    %585 = vector.load %arg20[%c55_279, %c0_280] : memref<64x512xf32, #tpu.memory_space<vmem>>, vector<1x512xf32>
    tpu.vector_store %arg20[%c55_279, %c0_280], %584 {strides = array<i32>} : memref<64x512xf32, #tpu.memory_space<vmem>>, vector<1x512xf32>,
    %c56_281 = arith.constant 56 : index
    %586 = memref.load %arg0[%c56_281] : memref<64xi32, #tpu.memory_space<smem>>
    %587 = arith.index_cast %586 : i32 to index
    %c0_282 = arith.constant 0 : index
    %588 = vector.load %arg12[%587, %c0_282] : memref<128x512xf32, #tpu.memory_space<vmem>>, vector<1x512xf32>
    %c56_283 = arith.constant 56 : index
    %c0_284 = arith.constant 0 : index
    %589 = vector.load %arg20[%c56_283, %c0_284] : memref<64x512xf32, #tpu.memory_space<vmem>>, vector<1x512xf32>
    tpu.vector_store %arg20[%c56_283, %c0_284], %588 {strides = array<i32>} : memref<64x512xf32, #tpu.memory_space<vmem>>, vector<1x512xf32>,
    %c57 = arith.constant 57 : index
    %590 = memref.load %arg0[%c57] : memref<64xi32, #tpu.memory_space<smem>>
    %591 = arith.index_cast %590 : i32 to index
    %c0_285 = arith.constant 0 : index
    %592 = vector.load %arg12[%591, %c0_285] : memref<128x512xf32, #tpu.memory_space<vmem>>, vector<1x512xf32>
    %c57_286 = arith.constant 57 : index
    %c0_287 = arith.constant 0 : index
    %593 = vector.load %arg20[%c57_286, %c0_287] : memref<64x512xf32, #tpu.memory_space<vmem>>, vector<1x512xf32>
    tpu.vector_store %arg20[%c57_286, %c0_287], %592 {strides = array<i32>} : memref<64x512xf32, #tpu.memory_space<vmem>>, vector<1x512xf32>,
    %c58 = arith.constant 58 : index
    %594 = memref.load %arg0[%c58] : memref<64xi32, #tpu.memory_space<smem>>
    %595 = arith.index_cast %594 : i32 to index
    %c0_288 = arith.constant 0 : index
    %596 = vector.load %arg12[%595, %c0_288] : memref<128x512xf32, #tpu.memory_space<vmem>>, vector<1x512xf32>
    %c58_289 = arith.constant 58 : index
    %c0_290 = arith.constant 0 : index
    %597 = vector.load %arg20[%c58_289, %c0_290] : memref<64x512xf32, #tpu.memory_space<vmem>>, vector<1x512xf32>
    tpu.vector_store %arg20[%c58_289, %c0_290], %596 {strides = array<i32>} : memref<64x512xf32, #tpu.memory_space<vmem>>, vector<1x512xf32>,
    %c59 = arith.constant 59 : index
    %598 = memref.load %arg0[%c59] : memref<64xi32, #tpu.memory_space<smem>>
    %599 = arith.index_cast %598 : i32 to index
    %c0_291 = arith.constant 0 : index
    %600 = vector.load %arg12[%599, %c0_291] : memref<128x512xf32, #tpu.memory_space<vmem>>, vector<1x512xf32>
    %c59_292 = arith.constant 59 : index
    %c0_293 = arith.constant 0 : index
    %601 = vector.load %arg20[%c59_292, %c0_293] : memref<64x512xf32, #tpu.memory_space<vmem>>, vector<1x512xf32>
    tpu.vector_store %arg20[%c59_292, %c0_293], %600 {strides = array<i32>} : memref<64x512xf32, #tpu.memory_space<vmem>>, vector<1x512xf32>,
    %c60 = arith.constant 60 : index
    %602 = memref.load %arg0[%c60] : memref<64xi32, #tpu.memory_space<smem>>
    %603 = arith.index_cast %602 : i32 to index
    %c0_294 = arith.constant 0 : index
    %604 = vector.load %arg12[%603, %c0_294] : memref<128x512xf32, #tpu.memory_space<vmem>>, vector<1x512xf32>
    %c60_295 = arith.constant 60 : index
    %c0_296 = arith.constant 0 : index
    %605 = vector.load %arg20[%c60_295, %c0_296] : memref<64x512xf32, #tpu.memory_space<vmem>>, vector<1x512xf32>
    tpu.vector_store %arg20[%c60_295, %c0_296], %604 {strides = array<i32>} : memref<64x512xf32, #tpu.memory_space<vmem>>, vector<1x512xf32>,
    %c61 = arith.constant 61 : index
    %606 = memref.load %arg0[%c61] : memref<64xi32, #tpu.memory_space<smem>>
    %607 = arith.index_cast %606 : i32 to index
    %c0_297 = arith.constant 0 : index
    %608 = vector.load %arg12[%607, %c0_297] : memref<128x512xf32, #tpu.memory_space<vmem>>, vector<1x512xf32>
    %c61_298 = arith.constant 61 : index
    %c0_299 = arith.constant 0 : index
    %609 = vector.load %arg20[%c61_298, %c0_299] : memref<64x512xf32, #tpu.memory_space<vmem>>, vector<1x512xf32>
    tpu.vector_store %arg20[%c61_298, %c0_299], %608 {strides = array<i32>} : memref<64x512xf32, #tpu.memory_space<vmem>>, vector<1x512xf32>,
    %c62 = arith.constant 62 : index
    %610 = memref.load %arg0[%c62] : memref<64xi32, #tpu.memory_space<smem>>
    %611 = arith.index_cast %610 : i32 to index
    %c0_300 = arith.constant 0 : index
    %612 = vector.load %arg12[%611, %c0_300] : memref<128x512xf32, #tpu.memory_space<vmem>>, vector<1x512xf32>
    %c62_301 = arith.constant 62 : index
    %c0_302 = arith.constant 0 : index
    %613 = vector.load %arg20[%c62_301, %c0_302] : memref<64x512xf32, #tpu.memory_space<vmem>>, vector<1x512xf32>
    tpu.vector_store %arg20[%c62_301, %c0_302], %612 {strides = array<i32>} : memref<64x512xf32, #tpu.memory_space<vmem>>, vector<1x512xf32>,
    %c63 = arith.constant 63 : index
    %614 = memref.load %arg0[%c63] : memref<64xi32, #tpu.memory_space<smem>>
    %615 = arith.index_cast %614 : i32 to index
    %c0_303 = arith.constant 0 : index
    %616 = vector.load %arg12[%615, %c0_303] : memref<128x512xf32, #tpu.memory_space<vmem>>, vector<1x512xf32>
    %c63_304 = arith.constant 63 : index
    %c0_305 = arith.constant 0 : index
    %617 = vector.load %arg20[%c63_304, %c0_305] : memref<64x512xf32, #tpu.memory_space<vmem>>, vector<1x512xf32>
    tpu.vector_store %arg20[%c63_304, %c0_305], %616 {strides = array<i32>} : memref<64x512xf32, #tpu.memory_space<vmem>>, vector<1x512xf32>,
    %c0_306 = arith.constant 0 : index
    %c0_307 = arith.constant 0 : index
    %618 = vector.load %arg13[%c0_306, %c0_307] : memref<128x512xbf16, #tpu.memory_space<vmem>>, vector<128x512xbf16>
    %619 = arith.truncf %361 : vector<8x128xf32> to vector<8x128xbf16>
    %cst_308 = arith.constant dense<0.000000e+00> : vector<8x512xf32>
    %620 = tpu.matmul %619, %618, %cst_308 {dimension_numbers = #tpu.dot_dimension_numbers<[1], [0], [0], [1], [0, 0, 1, 1], [], []>} : vector<8x128xbf16>, vector<128x512xbf16>, vector<8x512xf32> -> vector<8x512xf32>
    %c0_309 = arith.constant 0 : index
    %c0_310 = arith.constant 0 : index
    %621 = vector.load %arg15[%c0_309, %c0_310] : memref<1x512xf32, #tpu.memory_space<vmem>>, vector<1x512xf32>
    %622 = vector.broadcast %621 : vector<1x512xf32> to vector<8x512xf32>
    %623 = arith.addf %620, %622 : vector<8x512xf32>
    %c0_311 = arith.constant 0 : index
    %c0_312 = arith.constant 0 : index
    %624 = vector.load %arg14[%c0_311, %c0_312] : memref<128x512xbf16, #tpu.memory_space<vmem>>, vector<128x512xbf16>
    %c0_313 = arith.constant 0 : index
    %c0_314 = arith.constant 0 : index
    %625 = vector.load %arg20[%c0_313, %c0_314] : memref<64x512xf32, #tpu.memory_space<vmem>>, vector<8x512xf32>
    %626 = arith.addf %625, %623 : vector<8x512xf32>
    %627 = arith.truncf %191 : vector<8x128xf32> to vector<8x128xbf16>
    %cst_315 = arith.constant dense<0.000000e+00> : vector<8x512xf32>
    %628 = tpu.matmul %627, %624, %cst_315 {dimension_numbers = #tpu.dot_dimension_numbers<[1], [0], [0], [1], [0, 0, 1, 1], [], []>} : vector<8x128xbf16>, vector<128x512xbf16>, vector<8x512xf32> -> vector<8x512xf32>
    %629 = arith.addf %626, %628 : vector<8x512xf32>
    %630 = vector.extract_strided_slice %629 {offsets = [0, 0], sizes = [8, 384], strides = [1, 1]} : vector<8x512xf32> to vector<8x384xf32>
    %631 = arith.negf %630 : vector<8x384xf32>
    %632 = math.exp %631 : vector<8x384xf32>
    %cst_316 = arith.constant 1.000000e+00 : f32
    %633 = vector.broadcast %cst_316 : f32 to vector<8x384xf32>
    %634 = arith.addf %633, %632 : vector<8x384xf32>
    %635 = arith.divf %633, %634 : vector<8x384xf32>
    %636 = vector.extract_strided_slice %635 {offsets = [0, 0], sizes = [8, 128], strides = [1, 1]} : vector<8x384xf32> to vector<8x128xf32>
    %637 = vector.extract_strided_slice %635 {offsets = [0, 128], sizes = [8, 128], strides = [1, 1]} : vector<8x384xf32> to vector<8x128xf32>
    %638 = vector.extract_strided_slice %635 {offsets = [0, 256], sizes = [8, 128], strides = [1, 1]} : vector<8x384xf32> to vector<8x128xf32>
    %639 = vector.extract_strided_slice %629 {offsets = [0, 384], sizes = [8, 128], strides = [1, 1]} : vector<8x512xf32> to vector<8x128xf32>
    %640 = math.tanh %639 : vector<8x128xf32>
    %641 = arith.mulf %637, %189 : vector<8x128xf32>
    %642 = arith.mulf %636, %640 : vector<8x128xf32>
    %643 = arith.addf %641, %642 : vector<8x128xf32>
    %644 = math.tanh %643 : vector<8x128xf32>
    %645 = arith.mulf %638, %644 : vector<8x128xf32>
    %c0_317 = arith.constant 0 : index
    %c0_318 = arith.constant 0 : index
    %646 = vector.load %arg21[%c0_317, %c0_318] : memref<64x128xf32, #tpu.memory_space<vmem>>, vector<8x128xf32>
    tpu.vector_store %arg21[%c0_317, %c0_318], %645 {strides = array<i32>} : memref<64x128xf32, #tpu.memory_space<vmem>>, vector<8x128xf32>,
    %c8_319 = arith.constant 8 : index
    %c0_320 = arith.constant 0 : index
    %647 = vector.load %arg20[%c8_319, %c0_320] : memref<64x512xf32, #tpu.memory_space<vmem>>, vector<8x512xf32>
    %648 = arith.addf %647, %623 : vector<8x512xf32>
    %649 = arith.truncf %645 : vector<8x128xf32> to vector<8x128xbf16>
    %cst_321 = arith.constant dense<0.000000e+00> : vector<8x512xf32>
    %650 = tpu.matmul %649, %624, %cst_321 {dimension_numbers = #tpu.dot_dimension_numbers<[1], [0], [0], [1], [0, 0, 1, 1], [], []>} : vector<8x128xbf16>, vector<128x512xbf16>, vector<8x512xf32> -> vector<8x512xf32>
    %651 = arith.addf %648, %650 : vector<8x512xf32>
    %652 = vector.extract_strided_slice %651 {offsets = [0, 0], sizes = [8, 384], strides = [1, 1]} : vector<8x512xf32> to vector<8x384xf32>
    %653 = arith.negf %652 : vector<8x384xf32>
    %654 = math.exp %653 : vector<8x384xf32>
    %cst_322 = arith.constant 1.000000e+00 : f32
    %655 = vector.broadcast %cst_322 : f32 to vector<8x384xf32>
    %656 = arith.addf %655, %654 : vector<8x384xf32>
    %657 = arith.divf %655, %656 : vector<8x384xf32>
    %658 = vector.extract_strided_slice %657 {offsets = [0, 0], sizes = [8, 128], strides = [1, 1]} : vector<8x384xf32> to vector<8x128xf32>
    %659 = vector.extract_strided_slice %657 {offsets = [0, 128], sizes = [8, 128], strides = [1, 1]} : vector<8x384xf32> to vector<8x128xf32>
    %660 = vector.extract_strided_slice %657 {offsets = [0, 256], sizes = [8, 128], strides = [1, 1]} : vector<8x384xf32> to vector<8x128xf32>
    %661 = vector.extract_strided_slice %651 {offsets = [0, 384], sizes = [8, 128], strides = [1, 1]} : vector<8x512xf32> to vector<8x128xf32>
    %662 = math.tanh %661 : vector<8x128xf32>
    %663 = arith.mulf %659, %643 : vector<8x128xf32>
    %664 = arith.mulf %658, %662 : vector<8x128xf32>
    %665 = arith.addf %663, %664 : vector<8x128xf32>
    %666 = math.tanh %665 : vector<8x128xf32>
    %667 = arith.mulf %660, %666 : vector<8x128xf32>
    %c8_323 = arith.constant 8 : index
    %c0_324 = arith.constant 0 : index
    %668 = vector.load %arg21[%c8_323, %c0_324] : memref<64x128xf32, #tpu.memory_space<vmem>>, vector<8x128xf32>
    tpu.vector_store %arg21[%c8_323, %c0_324], %667 {strides = array<i32>} : memref<64x128xf32, #tpu.memory_space<vmem>>, vector<8x128xf32>,
    %c16_325 = arith.constant 16 : index
    %c0_326 = arith.constant 0 : index
    %669 = vector.load %arg20[%c16_325, %c0_326] : memref<64x512xf32, #tpu.memory_space<vmem>>, vector<8x512xf32>
    %670 = arith.addf %669, %623 : vector<8x512xf32>
    %671 = arith.truncf %667 : vector<8x128xf32> to vector<8x128xbf16>
    %cst_327 = arith.constant dense<0.000000e+00> : vector<8x512xf32>
    %672 = tpu.matmul %671, %624, %cst_327 {dimension_numbers = #tpu.dot_dimension_numbers<[1], [0], [0], [1], [0, 0, 1, 1], [], []>} : vector<8x128xbf16>, vector<128x512xbf16>, vector<8x512xf32> -> vector<8x512xf32>
    %673 = arith.addf %670, %672 : vector<8x512xf32>
    %674 = vector.extract_strided_slice %673 {offsets = [0, 0], sizes = [8, 384], strides = [1, 1]} : vector<8x512xf32> to vector<8x384xf32>
    %675 = arith.negf %674 : vector<8x384xf32>
    %676 = math.exp %675 : vector<8x384xf32>
    %cst_328 = arith.constant 1.000000e+00 : f32
    %677 = vector.broadcast %cst_328 : f32 to vector<8x384xf32>
    %678 = arith.addf %677, %676 : vector<8x384xf32>
    %679 = arith.divf %677, %678 : vector<8x384xf32>
    %680 = vector.extract_strided_slice %679 {offsets = [0, 0], sizes = [8, 128], strides = [1, 1]} : vector<8x384xf32> to vector<8x128xf32>
    %681 = vector.extract_strided_slice %679 {offsets = [0, 128], sizes = [8, 128], strides = [1, 1]} : vector<8x384xf32> to vector<8x128xf32>
    %682 = vector.extract_strided_slice %679 {offsets = [0, 256], sizes = [8, 128], strides = [1, 1]} : vector<8x384xf32> to vector<8x128xf32>
    %683 = vector.extract_strided_slice %673 {offsets = [0, 384], sizes = [8, 128], strides = [1, 1]} : vector<8x512xf32> to vector<8x128xf32>
    %684 = math.tanh %683 : vector<8x128xf32>
    %685 = arith.mulf %681, %665 : vector<8x128xf32>
    %686 = arith.mulf %680, %684 : vector<8x128xf32>
    %687 = arith.addf %685, %686 : vector<8x128xf32>
    %688 = math.tanh %687 : vector<8x128xf32>
    %689 = arith.mulf %682, %688 : vector<8x128xf32>
    %c16_329 = arith.constant 16 : index
    %c0_330 = arith.constant 0 : index
    %690 = vector.load %arg21[%c16_329, %c0_330] : memref<64x128xf32, #tpu.memory_space<vmem>>, vector<8x128xf32>
    tpu.vector_store %arg21[%c16_329, %c0_330], %689 {strides = array<i32>} : memref<64x128xf32, #tpu.memory_space<vmem>>, vector<8x128xf32>,
    %c24_331 = arith.constant 24 : index
    %c0_332 = arith.constant 0 : index
    %691 = vector.load %arg20[%c24_331, %c0_332] : memref<64x512xf32, #tpu.memory_space<vmem>>, vector<8x512xf32>
    %692 = arith.addf %691, %623 : vector<8x512xf32>
    %693 = arith.truncf %689 : vector<8x128xf32> to vector<8x128xbf16>
    %cst_333 = arith.constant dense<0.000000e+00> : vector<8x512xf32>
    %694 = tpu.matmul %693, %624, %cst_333 {dimension_numbers = #tpu.dot_dimension_numbers<[1], [0], [0], [1], [0, 0, 1, 1], [], []>} : vector<8x128xbf16>, vector<128x512xbf16>, vector<8x512xf32> -> vector<8x512xf32>
    %695 = arith.addf %692, %694 : vector<8x512xf32>
    %696 = vector.extract_strided_slice %695 {offsets = [0, 0], sizes = [8, 384], strides = [1, 1]} : vector<8x512xf32> to vector<8x384xf32>
    %697 = arith.negf %696 : vector<8x384xf32>
    %698 = math.exp %697 : vector<8x384xf32>
    %cst_334 = arith.constant 1.000000e+00 : f32
    %699 = vector.broadcast %cst_334 : f32 to vector<8x384xf32>
    %700 = arith.addf %699, %698 : vector<8x384xf32>
    %701 = arith.divf %699, %700 : vector<8x384xf32>
    %702 = vector.extract_strided_slice %701 {offsets = [0, 0], sizes = [8, 128], strides = [1, 1]} : vector<8x384xf32> to vector<8x128xf32>
    %703 = vector.extract_strided_slice %701 {offsets = [0, 128], sizes = [8, 128], strides = [1, 1]} : vector<8x384xf32> to vector<8x128xf32>
    %704 = vector.extract_strided_slice %701 {offsets = [0, 256], sizes = [8, 128], strides = [1, 1]} : vector<8x384xf32> to vector<8x128xf32>
    %705 = vector.extract_strided_slice %695 {offsets = [0, 384], sizes = [8, 128], strides = [1, 1]} : vector<8x512xf32> to vector<8x128xf32>
    %706 = math.tanh %705 : vector<8x128xf32>
    %707 = arith.mulf %703, %687 : vector<8x128xf32>
    %708 = arith.mulf %702, %706 : vector<8x128xf32>
    %709 = arith.addf %707, %708 : vector<8x128xf32>
    %710 = math.tanh %709 : vector<8x128xf32>
    %711 = arith.mulf %704, %710 : vector<8x128xf32>
    %c24_335 = arith.constant 24 : index
    %c0_336 = arith.constant 0 : index
    %712 = vector.load %arg21[%c24_335, %c0_336] : memref<64x128xf32, #tpu.memory_space<vmem>>, vector<8x128xf32>
    tpu.vector_store %arg21[%c24_335, %c0_336], %711 {strides = array<i32>} : memref<64x128xf32, #tpu.memory_space<vmem>>, vector<8x128xf32>,
    %c32_337 = arith.constant 32 : index
    %c0_338 = arith.constant 0 : index
    %713 = vector.load %arg20[%c32_337, %c0_338] : memref<64x512xf32, #tpu.memory_space<vmem>>, vector<8x512xf32>
    %714 = arith.addf %713, %623 : vector<8x512xf32>
    %715 = arith.truncf %711 : vector<8x128xf32> to vector<8x128xbf16>
    %cst_339 = arith.constant dense<0.000000e+00> : vector<8x512xf32>
    %716 = tpu.matmul %715, %624, %cst_339 {dimension_numbers = #tpu.dot_dimension_numbers<[1], [0], [0], [1], [0, 0, 1, 1], [], []>} : vector<8x128xbf16>, vector<128x512xbf16>, vector<8x512xf32> -> vector<8x512xf32>
    %717 = arith.addf %714, %716 : vector<8x512xf32>
    %718 = vector.extract_strided_slice %717 {offsets = [0, 0], sizes = [8, 384], strides = [1, 1]} : vector<8x512xf32> to vector<8x384xf32>
    %719 = arith.negf %718 : vector<8x384xf32>
    %720 = math.exp %719 : vector<8x384xf32>
    %cst_340 = arith.constant 1.000000e+00 : f32
    %721 = vector.broadcast %cst_340 : f32 to vector<8x384xf32>
    %722 = arith.addf %721, %720 : vector<8x384xf32>
    %723 = arith.divf %721, %722 : vector<8x384xf32>
    %724 = vector.extract_strided_slice %723 {offsets = [0, 0], sizes = [8, 128], strides = [1, 1]} : vector<8x384xf32> to vector<8x128xf32>
    %725 = vector.extract_strided_slice %723 {offsets = [0, 128], sizes = [8, 128], strides = [1, 1]} : vector<8x384xf32> to vector<8x128xf32>
    %726 = vector.extract_strided_slice %723 {offsets = [0, 256], sizes = [8, 128], strides = [1, 1]} : vector<8x384xf32> to vector<8x128xf32>
    %727 = vector.extract_strided_slice %717 {offsets = [0, 384], sizes = [8, 128], strides = [1, 1]} : vector<8x512xf32> to vector<8x128xf32>
    %728 = math.tanh %727 : vector<8x128xf32>
    %729 = arith.mulf %725, %709 : vector<8x128xf32>
    %730 = arith.mulf %724, %728 : vector<8x128xf32>
    %731 = arith.addf %729, %730 : vector<8x128xf32>
    %732 = math.tanh %731 : vector<8x128xf32>
    %733 = arith.mulf %726, %732 : vector<8x128xf32>
    %c32_341 = arith.constant 32 : index
    %c0_342 = arith.constant 0 : index
    %734 = vector.load %arg21[%c32_341, %c0_342] : memref<64x128xf32, #tpu.memory_space<vmem>>, vector<8x128xf32>
    tpu.vector_store %arg21[%c32_341, %c0_342], %733 {strides = array<i32>} : memref<64x128xf32, #tpu.memory_space<vmem>>, vector<8x128xf32>,
    %c40_343 = arith.constant 40 : index
    %c0_344 = arith.constant 0 : index
    %735 = vector.load %arg20[%c40_343, %c0_344] : memref<64x512xf32, #tpu.memory_space<vmem>>, vector<8x512xf32>
    %736 = arith.addf %735, %623 : vector<8x512xf32>
    %737 = arith.truncf %733 : vector<8x128xf32> to vector<8x128xbf16>
    %cst_345 = arith.constant dense<0.000000e+00> : vector<8x512xf32>
    %738 = tpu.matmul %737, %624, %cst_345 {dimension_numbers = #tpu.dot_dimension_numbers<[1], [0], [0], [1], [0, 0, 1, 1], [], []>} : vector<8x128xbf16>, vector<128x512xbf16>, vector<8x512xf32> -> vector<8x512xf32>
    %739 = arith.addf %736, %738 : vector<8x512xf32>
    %740 = vector.extract_strided_slice %739 {offsets = [0, 0], sizes = [8, 384], strides = [1, 1]} : vector<8x512xf32> to vector<8x384xf32>
    %741 = arith.negf %740 : vector<8x384xf32>
    %742 = math.exp %741 : vector<8x384xf32>
    %cst_346 = arith.constant 1.000000e+00 : f32
    %743 = vector.broadcast %cst_346 : f32 to vector<8x384xf32>
    %744 = arith.addf %743, %742 : vector<8x384xf32>
    %745 = arith.divf %743, %744 : vector<8x384xf32>
    %746 = vector.extract_strided_slice %745 {offsets = [0, 0], sizes = [8, 128], strides = [1, 1]} : vector<8x384xf32> to vector<8x128xf32>
    %747 = vector.extract_strided_slice %745 {offsets = [0, 128], sizes = [8, 128], strides = [1, 1]} : vector<8x384xf32> to vector<8x128xf32>
    %748 = vector.extract_strided_slice %745 {offsets = [0, 256], sizes = [8, 128], strides = [1, 1]} : vector<8x384xf32> to vector<8x128xf32>
    %749 = vector.extract_strided_slice %739 {offsets = [0, 384], sizes = [8, 128], strides = [1, 1]} : vector<8x512xf32> to vector<8x128xf32>
    %750 = math.tanh %749 : vector<8x128xf32>
    %751 = arith.mulf %747, %731 : vector<8x128xf32>
    %752 = arith.mulf %746, %750 : vector<8x128xf32>
    %753 = arith.addf %751, %752 : vector<8x128xf32>
    %754 = math.tanh %753 : vector<8x128xf32>
    %755 = arith.mulf %748, %754 : vector<8x128xf32>
    %c40_347 = arith.constant 40 : index
    %c0_348 = arith.constant 0 : index
    %756 = vector.load %arg21[%c40_347, %c0_348] : memref<64x128xf32, #tpu.memory_space<vmem>>, vector<8x128xf32>
    tpu.vector_store %arg21[%c40_347, %c0_348], %755 {strides = array<i32>} : memref<64x128xf32, #tpu.memory_space<vmem>>, vector<8x128xf32>,
    %c48_349 = arith.constant 48 : index
    %c0_350 = arith.constant 0 : index
    %757 = vector.load %arg20[%c48_349, %c0_350] : memref<64x512xf32, #tpu.memory_space<vmem>>, vector<8x512xf32>
    %758 = arith.addf %757, %623 : vector<8x512xf32>
    %759 = arith.truncf %755 : vector<8x128xf32> to vector<8x128xbf16>
    %cst_351 = arith.constant dense<0.000000e+00> : vector<8x512xf32>
    %760 = tpu.matmul %759, %624, %cst_351 {dimension_numbers = #tpu.dot_dimension_numbers<[1], [0], [0], [1], [0, 0, 1, 1], [], []>} : vector<8x128xbf16>, vector<128x512xbf16>, vector<8x512xf32> -> vector<8x512xf32>
    %761 = arith.addf %758, %760 : vector<8x512xf32>
    %762 = vector.extract_strided_slice %761 {offsets = [0, 0], sizes = [8, 384], strides = [1, 1]} : vector<8x512xf32> to vector<8x384xf32>
    %763 = arith.negf %762 : vector<8x384xf32>
    %764 = math.exp %763 : vector<8x384xf32>
    %cst_352 = arith.constant 1.000000e+00 : f32
    %765 = vector.broadcast %cst_352 : f32 to vector<8x384xf32>
    %766 = arith.addf %765, %764 : vector<8x384xf32>
    %767 = arith.divf %765, %766 : vector<8x384xf32>
    %768 = vector.extract_strided_slice %767 {offsets = [0, 0], sizes = [8, 128], strides = [1, 1]} : vector<8x384xf32> to vector<8x128xf32>
    %769 = vector.extract_strided_slice %767 {offsets = [0, 128], sizes = [8, 128], strides = [1, 1]} : vector<8x384xf32> to vector<8x128xf32>
    %770 = vector.extract_strided_slice %767 {offsets = [0, 256], sizes = [8, 128], strides = [1, 1]} : vector<8x384xf32> to vector<8x128xf32>
    %771 = vector.extract_strided_slice %761 {offsets = [0, 384], sizes = [8, 128], strides = [1, 1]} : vector<8x512xf32> to vector<8x128xf32>
    %772 = math.tanh %771 : vector<8x128xf32>
    %773 = arith.mulf %769, %753 : vector<8x128xf32>
    %774 = arith.mulf %768, %772 : vector<8x128xf32>
    %775 = arith.addf %773, %774 : vector<8x128xf32>
    %776 = math.tanh %775 : vector<8x128xf32>
    %777 = arith.mulf %770, %776 : vector<8x128xf32>
    %c48_353 = arith.constant 48 : index
    %c0_354 = arith.constant 0 : index
    %778 = vector.load %arg21[%c48_353, %c0_354] : memref<64x128xf32, #tpu.memory_space<vmem>>, vector<8x128xf32>
    tpu.vector_store %arg21[%c48_353, %c0_354], %777 {strides = array<i32>} : memref<64x128xf32, #tpu.memory_space<vmem>>, vector<8x128xf32>,
    %c56_355 = arith.constant 56 : index
    %c0_356 = arith.constant 0 : index
    %779 = vector.load %arg20[%c56_355, %c0_356] : memref<64x512xf32, #tpu.memory_space<vmem>>, vector<8x512xf32>
    %780 = arith.addf %779, %623 : vector<8x512xf32>
    %781 = arith.truncf %777 : vector<8x128xf32> to vector<8x128xbf16>
    %cst_357 = arith.constant dense<0.000000e+00> : vector<8x512xf32>
    %782 = tpu.matmul %781, %624, %cst_357 {dimension_numbers = #tpu.dot_dimension_numbers<[1], [0], [0], [1], [0, 0, 1, 1], [], []>} : vector<8x128xbf16>, vector<128x512xbf16>, vector<8x512xf32> -> vector<8x512xf32>
    %783 = arith.addf %780, %782 : vector<8x512xf32>
    %784 = vector.extract_strided_slice %783 {offsets = [0, 0], sizes = [8, 384], strides = [1, 1]} : vector<8x512xf32> to vector<8x384xf32>
    %785 = arith.negf %784 : vector<8x384xf32>
    %786 = math.exp %785 : vector<8x384xf32>
    %cst_358 = arith.constant 1.000000e+00 : f32
    %787 = vector.broadcast %cst_358 : f32 to vector<8x384xf32>
    %788 = arith.addf %787, %786 : vector<8x384xf32>
    %789 = arith.divf %787, %788 : vector<8x384xf32>
    %790 = vector.extract_strided_slice %789 {offsets = [0, 0], sizes = [8, 128], strides = [1, 1]} : vector<8x384xf32> to vector<8x128xf32>
    %791 = vector.extract_strided_slice %789 {offsets = [0, 128], sizes = [8, 128], strides = [1, 1]} : vector<8x384xf32> to vector<8x128xf32>
    %792 = vector.extract_strided_slice %789 {offsets = [0, 256], sizes = [8, 128], strides = [1, 1]} : vector<8x384xf32> to vector<8x128xf32>
    %793 = vector.extract_strided_slice %783 {offsets = [0, 384], sizes = [8, 128], strides = [1, 1]} : vector<8x512xf32> to vector<8x128xf32>
    %794 = math.tanh %793 : vector<8x128xf32>
    %795 = arith.mulf %791, %775 : vector<8x128xf32>
    %796 = arith.mulf %790, %794 : vector<8x128xf32>
    %797 = arith.addf %795, %796 : vector<8x128xf32>
    %798 = math.tanh %797 : vector<8x128xf32>
    %799 = arith.mulf %792, %798 : vector<8x128xf32>
    %c56_359 = arith.constant 56 : index
    %c0_360 = arith.constant 0 : index
    %800 = vector.load %arg21[%c56_359, %c0_360] : memref<64x128xf32, #tpu.memory_space<vmem>>, vector<8x128xf32>
    tpu.vector_store %arg21[%c56_359, %c0_360], %799 {strides = array<i32>} : memref<64x128xf32, #tpu.memory_space<vmem>>, vector<8x128xf32>,
    %c0_361 = arith.constant 0 : index
    %c0_362 = arith.constant 0 : index
    %801 = vector.load %arg21[%c0_361, %c0_362] : memref<64x128xf32, #tpu.memory_space<vmem>>, vector<64x128xf32>
    %c0_363 = arith.constant 0 : index
    %c0_364 = arith.constant 0 : index
    %802 = vector.load %arg16[%c0_363, %c0_364] : memref<128x512xbf16, #tpu.memory_space<vmem>>, vector<128x512xbf16>
    %803 = arith.truncf %801 : vector<64x128xf32> to vector<64x128xbf16>
    %cst_365 = arith.constant dense<0.000000e+00> : vector<64x512xf32>
    %804 = tpu.matmul %803, %802, %cst_365 {dimension_numbers = #tpu.dot_dimension_numbers<[1], [0], [0], [1], [0, 0, 1, 1], [], []>} : vector<64x128xbf16>, vector<128x512xbf16>, vector<64x512xf32> -> vector<64x512xf32>
    %c0_366 = arith.constant 0 : index
    %c0_367 = arith.constant 0 : index
    %805 = vector.load %arg18[%c0_366, %c0_367] : memref<1x512xf32, #tpu.memory_space<vmem>>, vector<1x512xf32>
    %806 = vector.broadcast %805 : vector<1x512xf32> to vector<64x512xf32>
    %807 = arith.addf %804, %806 : vector<64x512xf32>
    %c0_368 = arith.constant 0 : index
    %c0_369 = arith.constant 0 : index
    %808 = vector.load %arg20[%c0_368, %c0_369] : memref<64x512xf32, #tpu.memory_space<vmem>>, vector<64x512xf32>
    tpu.vector_store %arg20[%c0_368, %c0_369], %807 {strides = array<i32>} : memref<64x512xf32, #tpu.memory_space<vmem>>, vector<64x512xf32>,
    %c0_370 = arith.constant 0 : index
    %c0_371 = arith.constant 0 : index
    %809 = vector.load %arg17[%c0_370, %c0_371] : memref<128x512xbf16, #tpu.memory_space<vmem>>, vector<128x512xbf16>
    %c0_372 = arith.constant 0 : index
    %c0_373 = arith.constant 0 : index
    %810 = vector.load %arg20[%c0_372, %c0_373] : memref<64x512xf32, #tpu.memory_space<vmem>>, vector<8x512xf32>
    %811 = arith.truncf %361 : vector<8x128xf32> to vector<8x128xbf16>
    %cst_374 = arith.constant dense<0.000000e+00> : vector<8x512xf32>
    %812 = tpu.matmul %811, %809, %cst_374 {dimension_numbers = #tpu.dot_dimension_numbers<[1], [0], [0], [1], [0, 0, 1, 1], [], []>} : vector<8x128xbf16>, vector<128x512xbf16>, vector<8x512xf32> -> vector<8x512xf32>
    %813 = arith.addf %810, %812 : vector<8x512xf32>
    %814 = vector.extract_strided_slice %813 {offsets = [0, 0], sizes = [8, 384], strides = [1, 1]} : vector<8x512xf32> to vector<8x384xf32>
    %815 = arith.negf %814 : vector<8x384xf32>
    %816 = math.exp %815 : vector<8x384xf32>
    %cst_375 = arith.constant 1.000000e+00 : f32
    %817 = vector.broadcast %cst_375 : f32 to vector<8x384xf32>
    %818 = arith.addf %817, %816 : vector<8x384xf32>
    %819 = arith.divf %817, %818 : vector<8x384xf32>
    %820 = vector.extract_strided_slice %819 {offsets = [0, 0], sizes = [8, 128], strides = [1, 1]} : vector<8x384xf32> to vector<8x128xf32>
    %821 = vector.extract_strided_slice %819 {offsets = [0, 128], sizes = [8, 128], strides = [1, 1]} : vector<8x384xf32> to vector<8x128xf32>
    %822 = vector.extract_strided_slice %819 {offsets = [0, 256], sizes = [8, 128], strides = [1, 1]} : vector<8x384xf32> to vector<8x128xf32>
    %823 = vector.extract_strided_slice %813 {offsets = [0, 384], sizes = [8, 128], strides = [1, 1]} : vector<8x512xf32> to vector<8x128xf32>
    %824 = math.tanh %823 : vector<8x128xf32>
    %825 = arith.mulf %821, %359 : vector<8x128xf32>
    %826 = arith.mulf %820, %824 : vector<8x128xf32>
    %827 = arith.addf %825, %826 : vector<8x128xf32>
    %828 = math.tanh %827 : vector<8x128xf32>
    %829 = arith.mulf %822, %828 : vector<8x128xf32>
    %c0_376 = arith.constant 0 : index
    %c0_377 = arith.constant 0 : index
    %c0_378 = arith.constant 0 : index
    %830 = vector.load %arg19[%c0_376, %c0_377, %c0_378] : memref<8x8x128xf32, #tpu.memory_space<vmem>>, vector<8x1x128xf32>
    %831 = vector.shape_cast %830 : vector<8x1x128xf32> to vector<8x128xf32>
    %832 = vector.shape_cast %829 : vector<8x128xf32> to vector<8x1x128xf32>
    tpu.vector_store %arg19[%c0_376, %c0_377, %c0_378], %832 {strides = array<i32>} : memref<8x8x128xf32, #tpu.memory_space<vmem>>, vector<8x1x128xf32>,
    %c8_379 = arith.constant 8 : index
    %c0_380 = arith.constant 0 : index
    %833 = vector.load %arg20[%c8_379, %c0_380] : memref<64x512xf32, #tpu.memory_space<vmem>>, vector<8x512xf32>
    %834 = arith.truncf %829 : vector<8x128xf32> to vector<8x128xbf16>
    %cst_381 = arith.constant dense<0.000000e+00> : vector<8x512xf32>
    %835 = tpu.matmul %834, %809, %cst_381 {dimension_numbers = #tpu.dot_dimension_numbers<[1], [0], [0], [1], [0, 0, 1, 1], [], []>} : vector<8x128xbf16>, vector<128x512xbf16>, vector<8x512xf32> -> vector<8x512xf32>
    %836 = arith.addf %833, %835 : vector<8x512xf32>
    %837 = vector.extract_strided_slice %836 {offsets = [0, 0], sizes = [8, 384], strides = [1, 1]} : vector<8x512xf32> to vector<8x384xf32>
    %838 = arith.negf %837 : vector<8x384xf32>
    %839 = math.exp %838 : vector<8x384xf32>
    %cst_382 = arith.constant 1.000000e+00 : f32
    %840 = vector.broadcast %cst_382 : f32 to vector<8x384xf32>
    %841 = arith.addf %840, %839 : vector<8x384xf32>
    %842 = arith.divf %840, %841 : vector<8x384xf32>
    %843 = vector.extract_strided_slice %842 {offsets = [0, 0], sizes = [8, 128], strides = [1, 1]} : vector<8x384xf32> to vector<8x128xf32>
    %844 = vector.extract_strided_slice %842 {offsets = [0, 128], sizes = [8, 128], strides = [1, 1]} : vector<8x384xf32> to vector<8x128xf32>
    %845 = vector.extract_strided_slice %842 {offsets = [0, 256], sizes = [8, 128], strides = [1, 1]} : vector<8x384xf32> to vector<8x128xf32>
    %846 = vector.extract_strided_slice %836 {offsets = [0, 384], sizes = [8, 128], strides = [1, 1]} : vector<8x512xf32> to vector<8x128xf32>
    %847 = math.tanh %846 : vector<8x128xf32>
    %848 = arith.mulf %844, %827 : vector<8x128xf32>
    %849 = arith.mulf %843, %847 : vector<8x128xf32>
    %850 = arith.addf %848, %849 : vector<8x128xf32>
    %851 = math.tanh %850 : vector<8x128xf32>
    %852 = arith.mulf %845, %851 : vector<8x128xf32>
    %c0_383 = arith.constant 0 : index
    %c1_384 = arith.constant 1 : index
    %c0_385 = arith.constant 0 : index
    %853 = vector.load %arg19[%c0_383, %c1_384, %c0_385] : memref<8x8x128xf32, #tpu.memory_space<vmem>>, vector<8x1x128xf32>
    %854 = vector.shape_cast %853 : vector<8x1x128xf32> to vector<8x128xf32>
    %855 = vector.shape_cast %852 : vector<8x128xf32> to vector<8x1x128xf32>
    tpu.vector_store %arg19[%c0_383, %c1_384, %c0_385], %855 {strides = array<i32>} : memref<8x8x128xf32, #tpu.memory_space<vmem>>, vector<8x1x128xf32>,
    %c16_386 = arith.constant 16 : index
    %c0_387 = arith.constant 0 : index
    %856 = vector.load %arg20[%c16_386, %c0_387] : memref<64x512xf32, #tpu.memory_space<vmem>>, vector<8x512xf32>
    %857 = arith.truncf %852 : vector<8x128xf32> to vector<8x128xbf16>
    %cst_388 = arith.constant dense<0.000000e+00> : vector<8x512xf32>
    %858 = tpu.matmul %857, %809, %cst_388 {dimension_numbers = #tpu.dot_dimension_numbers<[1], [0], [0], [1], [0, 0, 1, 1], [], []>} : vector<8x128xbf16>, vector<128x512xbf16>, vector<8x512xf32> -> vector<8x512xf32>
    %859 = arith.addf %856, %858 : vector<8x512xf32>
    %860 = vector.extract_strided_slice %859 {offsets = [0, 0], sizes = [8, 384], strides = [1, 1]} : vector<8x512xf32> to vector<8x384xf32>
    %861 = arith.negf %860 : vector<8x384xf32>
    %862 = math.exp %861 : vector<8x384xf32>
    %cst_389 = arith.constant 1.000000e+00 : f32
    %863 = vector.broadcast %cst_389 : f32 to vector<8x384xf32>
    %864 = arith.addf %863, %862 : vector<8x384xf32>
    %865 = arith.divf %863, %864 : vector<8x384xf32>
    %866 = vector.extract_strided_slice %865 {offsets = [0, 0], sizes = [8, 128], strides = [1, 1]} : vector<8x384xf32> to vector<8x128xf32>
    %867 = vector.extract_strided_slice %865 {offsets = [0, 128], sizes = [8, 128], strides = [1, 1]} : vector<8x384xf32> to vector<8x128xf32>
    %868 = vector.extract_strided_slice %865 {offsets = [0, 256], sizes = [8, 128], strides = [1, 1]} : vector<8x384xf32> to vector<8x128xf32>
    %869 = vector.extract_strided_slice %859 {offsets = [0, 384], sizes = [8, 128], strides = [1, 1]} : vector<8x512xf32> to vector<8x128xf32>
    %870 = math.tanh %869 : vector<8x128xf32>
    %871 = arith.mulf %867, %850 : vector<8x128xf32>
    %872 = arith.mulf %866, %870 : vector<8x128xf32>
    %873 = arith.addf %871, %872 : vector<8x128xf32>
    %874 = math.tanh %873 : vector<8x128xf32>
    %875 = arith.mulf %868, %874 : vector<8x128xf32>
    %c0_390 = arith.constant 0 : index
    %c2_391 = arith.constant 2 : index
    %c0_392 = arith.constant 0 : index
    %876 = vector.load %arg19[%c0_390, %c2_391, %c0_392] : memref<8x8x128xf32, #tpu.memory_space<vmem>>, vector<8x1x128xf32>
    %877 = vector.shape_cast %876 : vector<8x1x128xf32> to vector<8x128xf32>
    %878 = vector.shape_cast %875 : vector<8x128xf32> to vector<8x1x128xf32>
    tpu.vector_store %arg19[%c0_390, %c2_391, %c0_392], %878 {strides = array<i32>} : memref<8x8x128xf32, #tpu.memory_space<vmem>>, vector<8x1x128xf32>,
    %c24_393 = arith.constant 24 : index
    %c0_394 = arith.constant 0 : index
    %879 = vector.load %arg20[%c24_393, %c0_394] : memref<64x512xf32, #tpu.memory_space<vmem>>, vector<8x512xf32>
    %880 = arith.truncf %875 : vector<8x128xf32> to vector<8x128xbf16>
    %cst_395 = arith.constant dense<0.000000e+00> : vector<8x512xf32>
    %881 = tpu.matmul %880, %809, %cst_395 {dimension_numbers = #tpu.dot_dimension_numbers<[1], [0], [0], [1], [0, 0, 1, 1], [], []>} : vector<8x128xbf16>, vector<128x512xbf16>, vector<8x512xf32> -> vector<8x512xf32>
    %882 = arith.addf %879, %881 : vector<8x512xf32>
    %883 = vector.extract_strided_slice %882 {offsets = [0, 0], sizes = [8, 384], strides = [1, 1]} : vector<8x512xf32> to vector<8x384xf32>
    %884 = arith.negf %883 : vector<8x384xf32>
    %885 = math.exp %884 : vector<8x384xf32>
    %cst_396 = arith.constant 1.000000e+00 : f32
    %886 = vector.broadcast %cst_396 : f32 to vector<8x384xf32>
    %887 = arith.addf %886, %885 : vector<8x384xf32>
    %888 = arith.divf %886, %887 : vector<8x384xf32>
    %889 = vector.extract_strided_slice %888 {offsets = [0, 0], sizes = [8, 128], strides = [1, 1]} : vector<8x384xf32> to vector<8x128xf32>
    %890 = vector.extract_strided_slice %888 {offsets = [0, 128], sizes = [8, 128], strides = [1, 1]} : vector<8x384xf32> to vector<8x128xf32>
    %891 = vector.extract_strided_slice %888 {offsets = [0, 256], sizes = [8, 128], strides = [1, 1]} : vector<8x384xf32> to vector<8x128xf32>
    %892 = vector.extract_strided_slice %882 {offsets = [0, 384], sizes = [8, 128], strides = [1, 1]} : vector<8x512xf32> to vector<8x128xf32>
    %893 = math.tanh %892 : vector<8x128xf32>
    %894 = arith.mulf %890, %873 : vector<8x128xf32>
    %895 = arith.mulf %889, %893 : vector<8x128xf32>
    %896 = arith.addf %894, %895 : vector<8x128xf32>
    %897 = math.tanh %896 : vector<8x128xf32>
    %898 = arith.mulf %891, %897 : vector<8x128xf32>
    %c0_397 = arith.constant 0 : index
    %c3_398 = arith.constant 3 : index
    %c0_399 = arith.constant 0 : index
    %899 = vector.load %arg19[%c0_397, %c3_398, %c0_399] : memref<8x8x128xf32, #tpu.memory_space<vmem>>, vector<8x1x128xf32>
    %900 = vector.shape_cast %899 : vector<8x1x128xf32> to vector<8x128xf32>
    %901 = vector.shape_cast %898 : vector<8x128xf32> to vector<8x1x128xf32>
    tpu.vector_store %arg19[%c0_397, %c3_398, %c0_399], %901 {strides = array<i32>} : memref<8x8x128xf32, #tpu.memory_space<vmem>>, vector<8x1x128xf32>,
    %c32_400 = arith.constant 32 : index
    %c0_401 = arith.constant 0 : index
    %902 = vector.load %arg20[%c32_400, %c0_401] : memref<64x512xf32, #tpu.memory_space<vmem>>, vector<8x512xf32>
    %903 = arith.truncf %898 : vector<8x128xf32> to vector<8x128xbf16>
    %cst_402 = arith.constant dense<0.000000e+00> : vector<8x512xf32>
    %904 = tpu.matmul %903, %809, %cst_402 {dimension_numbers = #tpu.dot_dimension_numbers<[1], [0], [0], [1], [0, 0, 1, 1], [], []>} : vector<8x128xbf16>, vector<128x512xbf16>, vector<8x512xf32> -> vector<8x512xf32>
    %905 = arith.addf %902, %904 : vector<8x512xf32>
    %906 = vector.extract_strided_slice %905 {offsets = [0, 0], sizes = [8, 384], strides = [1, 1]} : vector<8x512xf32> to vector<8x384xf32>
    %907 = arith.negf %906 : vector<8x384xf32>
    %908 = math.exp %907 : vector<8x384xf32>
    %cst_403 = arith.constant 1.000000e+00 : f32
    %909 = vector.broadcast %cst_403 : f32 to vector<8x384xf32>
    %910 = arith.addf %909, %908 : vector<8x384xf32>
    %911 = arith.divf %909, %910 : vector<8x384xf32>
    %912 = vector.extract_strided_slice %911 {offsets = [0, 0], sizes = [8, 128], strides = [1, 1]} : vector<8x384xf32> to vector<8x128xf32>
    %913 = vector.extract_strided_slice %911 {offsets = [0, 128], sizes = [8, 128], strides = [1, 1]} : vector<8x384xf32> to vector<8x128xf32>
    %914 = vector.extract_strided_slice %911 {offsets = [0, 256], sizes = [8, 128], strides = [1, 1]} : vector<8x384xf32> to vector<8x128xf32>
    %915 = vector.extract_strided_slice %905 {offsets = [0, 384], sizes = [8, 128], strides = [1, 1]} : vector<8x512xf32> to vector<8x128xf32>
    %916 = math.tanh %915 : vector<8x128xf32>
    %917 = arith.mulf %913, %896 : vector<8x128xf32>
    %918 = arith.mulf %912, %916 : vector<8x128xf32>
    %919 = arith.addf %917, %918 : vector<8x128xf32>
    %920 = math.tanh %919 : vector<8x128xf32>
    %921 = arith.mulf %914, %920 : vector<8x128xf32>
    %c0_404 = arith.constant 0 : index
    %c4_405 = arith.constant 4 : index
    %c0_406 = arith.constant 0 : index
    %922 = vector.load %arg19[%c0_404, %c4_405, %c0_406] : memref<8x8x128xf32, #tpu.memory_space<vmem>>, vector<8x1x128xf32>
    %923 = vector.shape_cast %922 : vector<8x1x128xf32> to vector<8x128xf32>
    %924 = vector.shape_cast %921 : vector<8x128xf32> to vector<8x1x128xf32>
    tpu.vector_store %arg19[%c0_404, %c4_405, %c0_406], %924 {strides = array<i32>} : memref<8x8x128xf32, #tpu.memory_space<vmem>>, vector<8x1x128xf32>,
    %c40_407 = arith.constant 40 : index
    %c0_408 = arith.constant 0 : index
    %925 = vector.load %arg20[%c40_407, %c0_408] : memref<64x512xf32, #tpu.memory_space<vmem>>, vector<8x512xf32>
    %926 = arith.truncf %921 : vector<8x128xf32> to vector<8x128xbf16>
    %cst_409 = arith.constant dense<0.000000e+00> : vector<8x512xf32>
    %927 = tpu.matmul %926, %809, %cst_409 {dimension_numbers = #tpu.dot_dimension_numbers<[1], [0], [0], [1], [0, 0, 1, 1], [], []>} : vector<8x128xbf16>, vector<128x512xbf16>, vector<8x512xf32> -> vector<8x512xf32>
    %928 = arith.addf %925, %927 : vector<8x512xf32>
    %929 = vector.extract_strided_slice %928 {offsets = [0, 0], sizes = [8, 384], strides = [1, 1]} : vector<8x512xf32> to vector<8x384xf32>
    %930 = arith.negf %929 : vector<8x384xf32>
    %931 = math.exp %930 : vector<8x384xf32>
    %cst_410 = arith.constant 1.000000e+00 : f32
    %932 = vector.broadcast %cst_410 : f32 to vector<8x384xf32>
    %933 = arith.addf %932, %931 : vector<8x384xf32>
    %934 = arith.divf %932, %933 : vector<8x384xf32>
    %935 = vector.extract_strided_slice %934 {offsets = [0, 0], sizes = [8, 128], strides = [1, 1]} : vector<8x384xf32> to vector<8x128xf32>
    %936 = vector.extract_strided_slice %934 {offsets = [0, 128], sizes = [8, 128], strides = [1, 1]} : vector<8x384xf32> to vector<8x128xf32>
    %937 = vector.extract_strided_slice %934 {offsets = [0, 256], sizes = [8, 128], strides = [1, 1]} : vector<8x384xf32> to vector<8x128xf32>
    %938 = vector.extract_strided_slice %928 {offsets = [0, 384], sizes = [8, 128], strides = [1, 1]} : vector<8x512xf32> to vector<8x128xf32>
    %939 = math.tanh %938 : vector<8x128xf32>
    %940 = arith.mulf %936, %919 : vector<8x128xf32>
    %941 = arith.mulf %935, %939 : vector<8x128xf32>
    %942 = arith.addf %940, %941 : vector<8x128xf32>
    %943 = math.tanh %942 : vector<8x128xf32>
    %944 = arith.mulf %937, %943 : vector<8x128xf32>
    %c0_411 = arith.constant 0 : index
    %c5_412 = arith.constant 5 : index
    %c0_413 = arith.constant 0 : index
    %945 = vector.load %arg19[%c0_411, %c5_412, %c0_413] : memref<8x8x128xf32, #tpu.memory_space<vmem>>, vector<8x1x128xf32>
    %946 = vector.shape_cast %945 : vector<8x1x128xf32> to vector<8x128xf32>
    %947 = vector.shape_cast %944 : vector<8x128xf32> to vector<8x1x128xf32>
    tpu.vector_store %arg19[%c0_411, %c5_412, %c0_413], %947 {strides = array<i32>} : memref<8x8x128xf32, #tpu.memory_space<vmem>>, vector<8x1x128xf32>,
    %c48_414 = arith.constant 48 : index
    %c0_415 = arith.constant 0 : index
    %948 = vector.load %arg20[%c48_414, %c0_415] : memref<64x512xf32, #tpu.memory_space<vmem>>, vector<8x512xf32>
    %949 = arith.truncf %944 : vector<8x128xf32> to vector<8x128xbf16>
    %cst_416 = arith.constant dense<0.000000e+00> : vector<8x512xf32>
    %950 = tpu.matmul %949, %809, %cst_416 {dimension_numbers = #tpu.dot_dimension_numbers<[1], [0], [0], [1], [0, 0, 1, 1], [], []>} : vector<8x128xbf16>, vector<128x512xbf16>, vector<8x512xf32> -> vector<8x512xf32>
    %951 = arith.addf %948, %950 : vector<8x512xf32>
    %952 = vector.extract_strided_slice %951 {offsets = [0, 0], sizes = [8, 384], strides = [1, 1]} : vector<8x512xf32> to vector<8x384xf32>
    %953 = arith.negf %952 : vector<8x384xf32>
    %954 = math.exp %953 : vector<8x384xf32>
    %cst_417 = arith.constant 1.000000e+00 : f32
    %955 = vector.broadcast %cst_417 : f32 to vector<8x384xf32>
    %956 = arith.addf %955, %954 : vector<8x384xf32>
    %957 = arith.divf %955, %956 : vector<8x384xf32>
    %958 = vector.extract_strided_slice %957 {offsets = [0, 0], sizes = [8, 128], strides = [1, 1]} : vector<8x384xf32> to vector<8x128xf32>
    %959 = vector.extract_strided_slice %957 {offsets = [0, 128], sizes = [8, 128], strides = [1, 1]} : vector<8x384xf32> to vector<8x128xf32>
    %960 = vector.extract_strided_slice %957 {offsets = [0, 256], sizes = [8, 128], strides = [1, 1]} : vector<8x384xf32> to vector<8x128xf32>
    %961 = vector.extract_strided_slice %951 {offsets = [0, 384], sizes = [8, 128], strides = [1, 1]} : vector<8x512xf32> to vector<8x128xf32>
    %962 = math.tanh %961 : vector<8x128xf32>
    %963 = arith.mulf %959, %942 : vector<8x128xf32>
    %964 = arith.mulf %958, %962 : vector<8x128xf32>
    %965 = arith.addf %963, %964 : vector<8x128xf32>
    %966 = math.tanh %965 : vector<8x128xf32>
    %967 = arith.mulf %960, %966 : vector<8x128xf32>
    %c0_418 = arith.constant 0 : index
    %c6_419 = arith.constant 6 : index
    %c0_420 = arith.constant 0 : index
    %968 = vector.load %arg19[%c0_418, %c6_419, %c0_420] : memref<8x8x128xf32, #tpu.memory_space<vmem>>, vector<8x1x128xf32>
    %969 = vector.shape_cast %968 : vector<8x1x128xf32> to vector<8x128xf32>
    %970 = vector.shape_cast %967 : vector<8x128xf32> to vector<8x1x128xf32>
    tpu.vector_store %arg19[%c0_418, %c6_419, %c0_420], %970 {strides = array<i32>} : memref<8x8x128xf32, #tpu.memory_space<vmem>>, vector<8x1x128xf32>,
    %c56_421 = arith.constant 56 : index
    %c0_422 = arith.constant 0 : index
    %971 = vector.load %arg20[%c56_421, %c0_422] : memref<64x512xf32, #tpu.memory_space<vmem>>, vector<8x512xf32>
    %972 = arith.truncf %967 : vector<8x128xf32> to vector<8x128xbf16>
    %cst_423 = arith.constant dense<0.000000e+00> : vector<8x512xf32>
    %973 = tpu.matmul %972, %809, %cst_423 {dimension_numbers = #tpu.dot_dimension_numbers<[1], [0], [0], [1], [0, 0, 1, 1], [], []>} : vector<8x128xbf16>, vector<128x512xbf16>, vector<8x512xf32> -> vector<8x512xf32>
    %974 = arith.addf %971, %973 : vector<8x512xf32>
    %975 = vector.extract_strided_slice %974 {offsets = [0, 0], sizes = [8, 384], strides = [1, 1]} : vector<8x512xf32> to vector<8x384xf32>
    %976 = arith.negf %975 : vector<8x384xf32>
    %977 = math.exp %976 : vector<8x384xf32>
    %cst_424 = arith.constant 1.000000e+00 : f32
    %978 = vector.broadcast %cst_424 : f32 to vector<8x384xf32>
    %979 = arith.addf %978, %977 : vector<8x384xf32>
    %980 = arith.divf %978, %979 : vector<8x384xf32>
    %981 = vector.extract_strided_slice %980 {offsets = [0, 0], sizes = [8, 128], strides = [1, 1]} : vector<8x384xf32> to vector<8x128xf32>
    %982 = vector.extract_strided_slice %980 {offsets = [0, 128], sizes = [8, 128], strides = [1, 1]} : vector<8x384xf32> to vector<8x128xf32>
    %983 = vector.extract_strided_slice %980 {offsets = [0, 256], sizes = [8, 128], strides = [1, 1]} : vector<8x384xf32> to vector<8x128xf32>
    %984 = vector.extract_strided_slice %974 {offsets = [0, 384], sizes = [8, 128], strides = [1, 1]} : vector<8x512xf32> to vector<8x128xf32>
    %985 = math.tanh %984 : vector<8x128xf32>
    %986 = arith.mulf %982, %965 : vector<8x128xf32>
    %987 = arith.mulf %981, %985 : vector<8x128xf32>
    %988 = arith.addf %986, %987 : vector<8x128xf32>
    %989 = math.tanh %988 : vector<8x128xf32>
    %990 = arith.mulf %983, %989 : vector<8x128xf32>
    %c0_425 = arith.constant 0 : index
    %c7_426 = arith.constant 7 : index
    %c0_427 = arith.constant 0 : index
    %991 = vector.load %arg19[%c0_425, %c7_426, %c0_427] : memref<8x8x128xf32, #tpu.memory_space<vmem>>, vector<8x1x128xf32>
    %992 = vector.shape_cast %991 : vector<8x1x128xf32> to vector<8x128xf32>
    %993 = vector.shape_cast %990 : vector<8x128xf32> to vector<8x1x128xf32>
    tpu.vector_store %arg19[%c0_425, %c7_426, %c0_427], %993 {strides = array<i32>} : memref<8x8x128xf32, #tpu.memory_space<vmem>>, vector<8x1x128xf32>,
    return
  }
}

</mosaic_0001>

<llo_original>
// kernel: video_title_generator_forward.3
$region0: #{video_title_generator_forward.3}
  #allocation0 [shape = 'u32[]', space=smem, size = 0x4, offset = 0x4, fixed_abs, tag = 'smem constant byte address 0x4 - core index']
  #allocation1 [shape = 'u32[144,128]{1,0:T(1,128)}', space=vmem, size = 0x12000, scoped, tag = 'internal scratch']
  %s0 = inlined_call_operand.vmem [shape: f32[8,8,128], index: 0, kind: input, shape index: {}]
  %s1 = inlined_call_operand.vmem [shape: bf16[128,128], index: 1, kind: input, shape index: {}]
  %s2 = inlined_call_operand.vmem [shape: f32[1,128], index: 2, kind: input, shape index: {}]
  %s3 = inlined_call_operand.vmem [shape: f32[8,8,128], index: 3, kind: output, shape index: {}]
  %s4 = sld [smem:[#allocation0]]
  $region22: #{video_title_generator_forward.3} parent=0
    _
  %s6 = ssub.s32 1, %s4
  %s7 = scalar_select 0, %s6, %s4
  // Predicated region
  $region2: #{video_title_generator_forward.3} parent=0 // pred_check
    _
  $region3: #{video_title_generator_forward.3} parent=0 // pred_check_branch
    %9 = sbr.rel (0) target = $region5
  $region4: #{video_title_generator_forward.3} parent=0 // pred_region
    _
  $region5: #{video_title_generator_forward.3} parent=0 // pred_fallthru
    _
  // Predicated region
  $region6: #{video_title_generator_forward.3} parent=0 // pred_check
    _
  $region7: #{video_title_generator_forward.3} parent=0 // pred_check_branch
    %11 = sbr.rel (0) target = $region9
  $region8: #{video_title_generator_forward.3} parent=0 // pred_region
    _
  $region9: #{video_title_generator_forward.3} parent=0 // pred_fallthru
    _
  // Predicated region
  $region10: #{video_title_generator_forward.3} parent=0 // pred_check
    _
  $region11: #{video_title_generator_forward.3} parent=0 // pred_check_branch
    %13 = sbr.rel (0) target = $region13
  $region12: #{video_title_generator_forward.3} parent=0 // pred_region
    _
  $region13: #{video_title_generator_forward.3} parent=0 // pred_fallthru
    _
  %v15 = vld [vmem:[%s0] sm:$0xff]
  %v16 = vld [vmem:[%s0 + $0x8] sm:$0xff]
  %v17 = vld [vmem:[%s0 + $0x10] sm:$0xff]
  %v18 = vld [vmem:[%s0 + $0x18] sm:$0xff]
  %v19 = vld [vmem:[%s0 + $0x20] sm:$0xff]
  %v20 = vld [vmem:[%s0 + $0x28] sm:$0xff]
  %v21 = vld [vmem:[%s0 + $0x30] sm:$0xff]
  %v22 = vld [vmem:[%s0 + $0x38] sm:$0xff]
  %v23 = vpack.c.bf16 %v16, %v15
  %v24 = vpack.c.bf16 %v18, %v17
  %v25 = vpack.c.bf16 %v20, %v19
  %v26 = vpack.c.bf16 %v22, %v21
  %v27 = vld [vmem:[%s1] sm:$0xf]
  %v28 = vld [vmem:[%s1 + $0x4] sm:$0xf]
  %v29 = vld [vmem:[%s1 + $0x8] sm:$0xf]
  %v30 = vld [vmem:[%s1 + $0xc] sm:$0xf]
  %v31 = vld [vmem:[%s1 + $0x10] sm:$0xf]
  %v32 = vld [vmem:[%s1 + $0x14] sm:$0xf]
  %v33 = vld [vmem:[%s1 + $0x18] sm:$0xf]
  %v34 = vld [vmem:[%s1 + $0x1c] sm:$0xf]
  %v35 = vld [vmem:[%s1 + $0x20] sm:$0xf]
  %v36 = vld [vmem:[%s1 + $0x24] sm:$0xf]
  %v37 = vld [vmem:[%s1 + $0x28] sm:$0xf]
  %v38 = vld [vmem:[%s1 + $0x2c] sm:$0xf]
  %v39 = vld [vmem:[%s1 + $0x30] sm:$0xf]
  %v40 = vld [vmem:[%s1 + $0x34] sm:$0xf]
  %v41 = vld [vmem:[%s1 + $0x38] sm:$0xf]
  %v42 = vld [vmem:[%s1 + $0x3c] sm:$0xf]
  %v43 = vld [vmem:[%s2] sm:$0x1]
  %v45 = vlaneseq
  %v46 = vshrl.u32 %v45, 7
  %v47 = vsub.s32 0, %v46
  %v48 = vrot.slane %v43, %v47
  %v66 = vunpack.c.l.b16 %v27
  %v67 = vunpack.c.l.b16 %v28
  %v68 = vunpack.c.l.b16 %v29
  %v69 = vunpack.c.l.b16 %v30
  %v70 = vunpack.c.l.b16 %v31
  %v71 = vunpack.c.l.b16 %v32
  %v72 = vunpack.c.l.b16 %v33
  %v73 = vunpack.c.l.b16 %v34
  %v74 = vunpack.c.l.b16 %v35
  %v75 = vunpack.c.l.b16 %v36
  %v76 = vunpack.c.l.b16 %v37
  %v77 = vunpack.c.l.b16 %v38
  %v78 = vunpack.c.l.b16 %v39
  %v79 = vunpack.c.l.b16 %v40
  %v80 = vunpack.c.l.b16 %v41
  %v81 = vunpack.c.l.b16 %v42
  %v82 = vpack.c.b16 %v67, %v66
  %v83 = vpack.c.b16 %v69, %v68
  %v84 = vpack.c.b16 %v71, %v70
  %v85 = vpack.c.b16 %v73, %v72
  %v86 = vpack.c.b16 %v75, %v74
  %v87 = vpack.c.b16 %v77, %v76
  %v88 = vpack.c.b16 %v79, %v78
  %v89 = vpack.c.b16 %v81, %v80
  %98 = vmatprep.subr.bf16.mxu0 0
  %99 = vmatpush1.bf16.msra.mxu0 %v82
  %100 = vmatprep.subr.bf16.mxu0 0
  %101 = vmatpush1.bf16.msra.mxu0 %v83
  %102 = vmatprep.subr.bf16.mxu0 0
  %103 = vmatpush1.bf16.msra.mxu0 %v84
  %104 = vmatprep.subr.bf16.mxu0 0
  %105 = vmatpush1.bf16.msra.mxu0 %v85
  %106 = vmatprep.subr.bf16.mxu0 0
  %107 = vmatpush1.bf16.msra.mxu0 %v86
  %108 = vmatprep.subr.bf16.mxu0 0
  %109 = vmatpush1.bf16.msra.mxu0 %v87
  %110 = vmatprep.subr.bf16.mxu0 0
  %111 = vmatpush1.bf16.msra.mxu0 %v88
  %112 = vmatprep.subr.bf16.mxu0 0
  %113 = vmatpush1.bf16.msra.mxu0 %v89
  %114 = vmatprep.subr.bf16.mxu0 0
  %115 = vmatpush1.bf16.msra.mxu0 0
  %116 = vmatprep.subr.bf16.mxu0 0
  %117 = vmatpush1.bf16.msra.mxu0 0
  %118 = vmatprep.subr.bf16.mxu0 0
  %119 = vmatpush1.bf16.msra.mxu0 0
  %120 = vmatprep.subr.bf16.mxu0 0
  %121 = vmatpush1.bf16.msra.mxu0 0
  %122 = vmatprep.subr.bf16.mxu0 0
  %123 = vmatpush1.bf16.msra.mxu0 0
  %124 = vmatprep.subr.bf16.mxu0 0
  %125 = vmatpush1.bf16.msra.mxu0 0
  %126 = vmatprep.subr.bf16.mxu0 0
  %127 = vmatpush1.bf16.msra.mxu0 0
  %128 = vmatprep.subr.bf16.mxu0 0
  %129 = vmatpush1.bf16.msra.mxu0 0
  %130 = vmatprep.mubr.bf16.mxu0 0
  %131 = vmatmul.mubr.bf16.gmra.mrb[0].mxu0 %v23
  %v132 = vpop.f32.mrb[0].mxu0
  %v133 = vadd.f32 %v48, %v132
  %v134 = vpop.f32.mrb[0].mxu0
  %v135 = vpop.f32.mrb[0].mxu0
  %v136 = vadd.f32 %v48, %v135
  %v137 = vpop.f32.mrb[0].mxu0
  %138 = vmatprep.mubr.bf16.mxu0 0
  %139 = vmatmul.mubr.bf16.gmra.mrb[0].mxu0 %v24
  %v140 = vpop.f32.mrb[0].mxu0
  %v141 = vadd.f32 %v48, %v140
  %v142 = vpop.f32.mrb[0].mxu0
  %v143 = vpop.f32.mrb[0].mxu0
  %v144 = vadd.f32 %v48, %v143
  %v145 = vpop.f32.mrb[0].mxu0
  %146 = vmatprep.mubr.bf16.mxu0 0
  %147 = vmatmul.mubr.bf16.gmra.mrb[0].mxu0 %v25
  %v148 = vpop.f32.mrb[0].mxu0
  %v149 = vadd.f32 %v48, %v148
  %v150 = vpop.f32.mrb[0].mxu0
  %v151 = vpop.f32.mrb[0].mxu0
  %v152 = vadd.f32 %v48, %v151
  %v153 = vpop.f32.mrb[0].mxu0
  %154 = vmatprep.mubr.bf16.mxu0 0
  %155 = vmatmul.mubr.bf16.gmra.mrb[0].mxu0 %v26
  %v156 = vpop.f32.mrb[0].mxu0
  %v157 = vadd.f32 %v48, %v156
  %v158 = vpop.f32.mrb[0].mxu0
  %v159 = vpop.f32.mrb[0].mxu0
  %v160 = vadd.f32 %v48, %v159
  %v161 = vpop.f32.mrb[0].mxu0
  %162 = vdwg.mxu0
  %163 = vst [vmem:[%s3] sm:$0xff] %v133
  %164 = vst [vmem:[%s3 + $0x8] sm:$0xff] %v136
  %165 = vst [vmem:[%s3 + $0x10] sm:$0xff] %v141
  %166 = vst [vmem:[%s3 + $0x18] sm:$0xff] %v144
  %167 = vst [vmem:[%s3 + $0x20] sm:$0xff] %v149
  %168 = vst [vmem:[%s3 + $0x28] sm:$0xff] %v152
  %169 = vst [vmem:[%s3 + $0x30] sm:$0xff] %v157
  %170 = vst [vmem:[%s3 + $0x38] sm:$0xff] %v160
  // Predicated region
  $region14: #{video_title_generator_forward.3} parent=0 // pred_check
    _
  $region15: #{video_title_generator_forward.3} parent=0 // pred_check_branch
    %172 = sbr.rel (0) target = $region17
  $region16: #{video_title_generator_forward.3} parent=0 // pred_region
    _
  $region17: #{video_title_generator_forward.3} parent=0 // pred_fallthru
    _
  // Predicated region
  $region18: #{video_title_generator_forward.3} parent=0 // pred_check
    _
  $region19: #{video_title_generator_forward.3} parent=0 // pred_check_branch
    %174 = sbr.rel (0) target = $region21
  $region20: #{video_title_generator_forward.3} parent=0 // pred_region
    _
  $region21: #{video_title_generator_forward.3} parent=0 // pred_fallthru
    _

// kernel: video_title_generator_forward.2
$region0: #{video_title_generator_forward.2}
  #allocation0 [shape = 'u32[]', space=smem, size = 0x4, offset = 0x4, fixed_abs, tag = 'smem constant byte address 0x4 - core index']
  #allocation1 [shape = 'u32[144,128]{1,0:T(1,128)}', space=vmem, size = 0x12000, scoped, tag = 'internal scratch']
  #allocation2 [shape = 'f32[64,512]{1,0:T(8,128)}', space=vmem, size = 0x20000, scoped, tag = 'scratch operand']
  #allocation3 [shape = 'f32[64,128]{1,0:T(8,128)}', space=vmem, size = 0x8000, scoped, tag = 'scratch operand']
  %s0 = inlined_call_operand.vmem [shape: s32[64], index: 0, kind: input, shape index: {}]
  %s1 = inlined_call_operand.vmem [shape: bf16[64,32], index: 1, kind: input, shape index: {}]
  %s2 = inlined_call_operand.vmem [shape: bf16[32,128], index: 2, kind: input, shape index: {}]
  %s3 = inlined_call_operand.vmem [shape: f32[1,128], index: 3, kind: input, shape index: {}]
  %s4 = inlined_call_operand.vmem [shape: bf16[128,128], index: 4, kind: input, shape index: {}]
  %s5 = inlined_call_operand.vmem [shape: f32[1,128], index: 5, kind: input, shape index: {}]
  %s6 = inlined_call_operand.hbm [shape: bf16[128,512], index: 6, kind: input, shape index: {}]
  %s7 = inlined_call_operand.hbm [shape: bf16[128,512], index: 7, kind: input, shape index: {}]
  %s8 = inlined_call_operand.vmem [shape: f32[1,512], index: 8, kind: input, shape index: {}]
  %s9 = inlined_call_operand.hbm [shape: bf16[128,512], index: 9, kind: input, shape index: {}]
  %s10 = inlined_call_operand.hbm [shape: bf16[128,512], index: 10, kind: input, shape index: {}]
  %s11 = inlined_call_operand.vmem [shape: f32[1,512], index: 11, kind: input, shape index: {}]
  %s12 = inlined_call_operand.hbm [shape: f32[128,512], index: 12, kind: input, shape index: {}]
  %s13 = inlined_call_operand.hbm [shape: bf16[128,512], index: 13, kind: input, shape index: {}]
  %s14 = inlined_call_operand.hbm [shape: bf16[128,512], index: 14, kind: input, shape index: {}]
  %s15 = inlined_call_operand.vmem [shape: f32[1,512], index: 15, kind: input, shape index: {}]
  %s16 = inlined_call_operand.hbm [shape: bf16[128,512], index: 16, kind: input, shape index: {}]
  %s17 = inlined_call_operand.hbm [shape: bf16[128,512], index: 17, kind: input, shape index: {}]
  %s18 = inlined_call_operand.vmem [shape: f32[1,512], index: 18, kind: input, shape index: {}]
  %s19 = inlined_call_operand.vmem [shape: f32[8,8,128], index: 19, kind: output, shape index: {}]
  %s20 = sld [smem:[#allocation0]]
  $region126: #{video_title_generator_forward.2} parent=0
    _
  %s22 = ssub.s32 1, %s20
  %s23 = scalar_select 0, %s22, %s20
  $region1: #{video_title_generator_forward.2} parent=0
    #allocation4 [shape = 'u8[512]{0}', space=smem, size = 0x200, scoped, tag = 'input window, operand 0, single buffered']
    #allocation5 [shape = 's32[1]{0}', space=sflag, size = 0x4, scoped, tag = 'scoped memory for video_title_generator_forward.2']
    #allocation6 [shape = 's32[1]{0}', space=sflag, size = 0x4, scoped, tag = 'scoped memory for video_title_generator_forward.2']
    #allocation7 [shape = 'u8[131072]{0}', space=vmem, size = 0x20000, scoped, tag = 'input window, operand 6, single buffered']
    #allocation8 [shape = 'u8[131072]{0}', space=vmem, size = 0x20000, scoped, tag = 'input window, operand 7, single buffered']
    #allocation9 [shape = 's32[1]{0}', space=sflag, size = 0x4, scoped, tag = 'scoped memory for video_title_generator_forward.2']
    #allocation10 [shape = 'u8[131072]{0}', space=vmem, size = 0x20000, scoped, tag = 'input window, operand 9, single buffered']
    #allocation11 [shape = 'u8[131072]{0}', space=vmem, size = 0x20000, scoped, tag = 'input window, operand 10, single buffered']
    #allocation12 [shape = 's32[1]{0}', space=sflag, size = 0x4, scoped, tag = 'scoped memory for video_title_generator_forward.2']
    #allocation13 [shape = 'u8[262144]{0}', space=vmem, size = 0x40000, scoped, tag = 'input window, operand 12, single buffered']
    #allocation14 [shape = 'u8[131072]{0}', space=vmem, size = 0x20000, scoped, tag = 'input window, operand 13, single buffered']
    #allocation15 [shape = 's32[1]{0}', space=sflag, size = 0x4, scoped, tag = 'scoped memory for video_title_generator_forward.2']
    #allocation16 [shape = 'u8[131072]{0}', space=vmem, size = 0x20000, scoped, tag = 'input window, operand 14, single buffered']
    #allocation17 [shape = 'u8[131072]{0}', space=vmem, size = 0x20000, scoped, tag = 'input window, operand 16, single buffered']
    #allocation18 [shape = 's32[1]{0}', space=sflag, size = 0x4, scoped, tag = 'scoped memory for video_title_generator_forward.2']
    #allocation19 [shape = 'u8[131072]{0}', space=vmem, size = 0x20000, scoped, tag = 'input window, operand 17, single buffered']
    %24 = vsyncpa [#allocation6], 0
    %25 = vsyncpa [#allocation5], 0
    %26 = vsyncpa [#allocation9], 0
    %27 = vsyncpa [#allocation12], 0
    %28 = vsyncpa [#allocation15], 0
    %29 = vsyncpa [#allocation18], 0
    // Predicated region
    $region2: #{video_title_generator_forward.2} parent=1 // pred_check
      _
    $region3: #{video_title_generator_forward.2} parent=1 // pred_check_branch
      %31 = sbr.rel (0) target = $region5
    $region4: #{video_title_generator_forward.2} parent=1 // pred_region
      %s33 = ssub.s32 16, 16
      %34 = vsyncadd [#allocation6], %s33
      %s36 = sshll.u32 %s0, 4
      %s37 = int_to_ptr.vmem [resolvable:$true] %s36
      %39 = dma.vmem_to_smem %s37, 16, [#allocation4], [#allocation6]
    $region5: #{video_title_generator_forward.2} parent=1 // pred_fallthru
      _
    // Predicated region
    $region6: #{video_title_generator_forward.2} parent=1 // pred_check
      _
    $region7: #{video_title_generator_forward.2} parent=1 // pred_check_branch
      %41 = sbr.rel (0) target = $region9
    $region8: #{video_title_generator_forward.2} parent=1 // pred_region
      _
    $region9: #{video_title_generator_forward.2} parent=1 // pred_fallthru
      _
    // Predicated region
    $region10: #{video_title_generator_forward.2} parent=1 // pred_check
      _
    $region11: #{video_title_generator_forward.2} parent=1 // pred_check_branch
      %43 = sbr.rel (0) target = $region13
    $region12: #{video_title_generator_forward.2} parent=1 // pred_region
      _
    $region13: #{video_title_generator_forward.2} parent=1 // pred_fallthru
      _
    // Predicated region
    $region14: #{video_title_generator_forward.2} parent=1 // pred_check
      _
    $region15: #{video_title_generator_forward.2} parent=1 // pred_check_branch
      %45 = sbr.rel (0) target = $region17
    $region16: #{video_title_generator_forward.2} parent=1 // pred_region
      _
    $region17: #{video_title_generator_forward.2} parent=1 // pred_fallthru
      _
    // Predicated region
    $region18: #{video_title_generator_forward.2} parent=1 // pred_check
      _
    $region19: #{video_title_generator_forward.2} parent=1 // pred_check_branch
      %47 = sbr.rel (0) target = $region21
    $region20: #{video_title_generator_forward.2} parent=1 // pred_region
      _
    $region21: #{video_title_generator_forward.2} parent=1 // pred_fallthru
      _
    // Predicated region
    $region22: #{video_title_generator_forward.2} parent=1 // pred_check
      _
    $region23: #{video_title_generator_forward.2} parent=1 // pred_check_branch
      %49 = sbr.rel (0) target = $region25
    $region24: #{video_title_generator_forward.2} parent=1 // pred_region
      _
    $region25: #{video_title_generator_forward.2} parent=1 // pred_fallthru
      _
    // Predicated region
    $region26: #{video_title_generator_forward.2} parent=1 // pred_check
      _
    $region27: #{video_title_generator_forward.2} parent=1 // pred_check_branch
      %51 = sbr.rel (0) target = $region29
    $region28: #{video_title_generator_forward.2} parent=1 // pred_region
      %s53 = ssub.s32 4096, 4096
      %54 = vsyncadd [#allocation5], %s53
      %s55 = sshll.u32 [#allocation7], 4
      %s56 = int_to_ptr.vmem [resolvable:$true] %s55
      %61 = dma.hbm_to_vmem [thread:$0]  %s6, 4096, %s56, [#allocation5], 256, 256, 16
    $region29: #{video_title_generator_forward.2} parent=1 // pred_fallthru
      _
    // Predicated region
    $region30: #{video_title_generator_forward.2} parent=1 // pred_check
      _
    $region31: #{video_title_generator_forward.2} parent=1 // pred_check_branch
      %63 = sbr.rel (0) target = $region33
    $region32: #{video_title_generator_forward.2} parent=1 // pred_region
      %s65 = ssub.s32 4096, 4096
      %66 = vsyncadd [#allocation9], %s65
      %s67 = sshll.u32 [#allocation8], 4
      %s68 = int_to_ptr.vmem [resolvable:$true] %s67
      %73 = dma.hbm_to_vmem [thread:$0]  %s7, 4096, %s68, [#allocation9], 256, 256, 16
    $region33: #{video_title_generator_forward.2} parent=1 // pred_fallthru
      _
    // Predicated region
    $region34: #{video_title_generator_forward.2} parent=1 // pred_check
      _
    $region35: #{video_title_generator_forward.2} parent=1 // pred_check_branch
      %75 = sbr.rel (0) target = $region37
    $region36: #{video_title_generator_forward.2} parent=1 // pred_region
      _
    $region37: #{video_title_generator_forward.2} parent=1 // pred_fallthru
      _
    // Predicated region
    $region38: #{video_title_generator_forward.2} parent=1 // pred_check
      _
    $region39: #{video_title_generator_forward.2} parent=1 // pred_check_branch
      %77 = sbr.rel (0) target = $region41
    $region40: #{video_title_generator_forward.2} parent=1 // pred_region
      %s79 = ssub.s32 4096, 4096
      %80 = vsyncadd [#allocation9], %s79
      %s81 = sshll.u32 [#allocation10], 4
      %s82 = int_to_ptr.vmem [resolvable:$true] %s81
      %87 = dma.hbm_to_vmem [thread:$0]  %s9, 4096, %s82, [#allocation9], 256, 256, 16
    $region41: #{video_title_generator_forward.2} parent=1 // pred_fallthru
      _
    // Predicated region
    $region42: #{video_title_generator_forward.2} parent=1 // pred_check
      _
    $region43: #{video_title_generator_forward.2} parent=1 // pred_check_branch
      %89 = sbr.rel (0) target = $region45
    $region44: #{video_title_generator_forward.2} parent=1 // pred_region
      %s91 = ssub.s32 4096, 4096
      %92 = vsyncadd [#allocation12], %s91
      %s93 = sshll.u32 [#allocation11], 4
      %s94 = int_to_ptr.vmem [resolvable:$true] %s93
      %99 = dma.hbm_to_vmem [thread:$0]  %s10, 4096, %s94, [#allocation12], 256, 256, 16
    $region45: #{video_title_generator_forward.2} parent=1 // pred_fallthru
      _
    // Predicated region
    $region46: #{video_title_generator_forward.2} parent=1 // pred_check
      _
    $region47: #{video_title_generator_forward.2} parent=1 // pred_check_branch
      %101 = sbr.rel (0) target = $region49
    $region48: #{video_title_generator_forward.2} parent=1 // pred_region
      _
    $region49: #{video_title_generator_forward.2} parent=1 // pred_fallthru
      _
    // Predicated region
    $region50: #{video_title_generator_forward.2} parent=1 // pred_check
      _
    $region51: #{video_title_generator_forward.2} parent=1 // pred_check_branch
      %103 = sbr.rel (0) target = $region53
    $region52: #{video_title_generator_forward.2} parent=1 // pred_region
      %s105 = ssub.s32 8192, 8192
      %106 = vsyncadd [#allocation12], %s105
      %s107 = sshll.u32 [#allocation13], 4
      %s108 = int_to_ptr.vmem [resolvable:$true] %s107
      %113 = dma.hbm_to_vmem [thread:$0]  %s12, 8192, %s108, [#allocation12], 512, 512, 32
    $region53: #{video_title_generator_forward.2} parent=1 // pred_fallthru
      _
    // Predicated region
    $region54: #{video_title_generator_forward.2} parent=1 // pred_check
      _
    $region55: #{video_title_generator_forward.2} parent=1 // pred_check_branch
      %115 = sbr.rel (0) target = $region57
    $region56: #{video_title_generator_forward.2} parent=1 // pred_region
      %s117 = ssub.s32 4096, 4096
      %118 = vsyncadd [#allocation15], %s117
      %s119 = sshll.u32 [#allocation14], 4
      %s120 = int_to_ptr.vmem [resolvable:$true] %s119
      %125 = dma.hbm_to_vmem [thread:$0]  %s13, 4096, %s120, [#allocation15], 256, 256, 16
    $region57: #{video_title_generator_forward.2} parent=1 // pred_fallthru
      _
    // Predicated region
    $region58: #{video_title_generator_forward.2} parent=1 // pred_check
      _
    $region59: #{video_title_generator_forward.2} parent=1 // pred_check_branch
      %127 = sbr.rel (0) target = $region61
    $region60: #{video_title_generator_forward.2} parent=1 // pred_region
      %s129 = ssub.s32 4096, 4096
      %130 = vsyncadd [#allocation15], %s129
      %s131 = sshll.u32 [#allocation16], 4
      %s132 = int_to_ptr.vmem [resolvable:$true] %s131
      %137 = dma.hbm_to_vmem [thread:$0]  %s14, 4096, %s132, [#allocation15], 256, 256, 16
    $region61: #{video_title_generator_forward.2} parent=1 // pred_fallthru
      _
    // Predicated region
    $region62: #{video_title_generator_forward.2} parent=1 // pred_check
      _
    $region63: #{video_title_generator_forward.2} parent=1 // pred_check_branch
      %139 = sbr.rel (0) target = $region65
    $region64: #{video_title_generator_forward.2} parent=1 // pred_region
      _
    $region65: #{video_title_generator_forward.2} parent=1 // pred_fallthru
      _
    // Predicated region
    $region66: #{video_title_generator_forward.2} parent=1 // pred_check
      _
    $region67: #{video_title_generator_forward.2} parent=1 // pred_check_branch
      %141 = sbr.rel (0) target = $region69
    $region68: #{video_title_generator_forward.2} parent=1 // pred_region
      %s143 = ssub.s32 4096, 4096
      %144 = vsyncadd [#allocation18], %s143
      %s145 = sshll.u32 [#allocation17], 4
      %s146 = int_to_ptr.vmem [resolvable:$true] %s145
      %151 = dma.hbm_to_vmem [thread:$0]  %s16, 4096, %s146, [#allocation18], 256, 256, 16
    $region69: #{video_title_generator_forward.2} parent=1 // pred_fallthru
      _
    // Predicated region
    $region70: #{video_title_generator_forward.2} parent=1 // pred_check
      _
    $region71: #{video_title_generator_forward.2} parent=1 // pred_check_branch
      %153 = sbr.rel (0) target = $region73
    $region72: #{video_title_generator_forward.2} parent=1 // pred_region
      %s155 = ssub.s32 4096, 4096
      %156 = vsyncadd [#allocation18], %s155
      %s157 = sshll.u32 [#allocation19], 4
      %s158 = int_to_ptr.vmem [resolvable:$true] %s157
      %163 = dma.hbm_to_vmem [thread:$0]  %s17, 4096, %s158, [#allocation18], 256, 256, 16
    $region73: #{video_title_generator_forward.2} parent=1 // pred_fallthru
      _
    // Predicated region
    $region74: #{video_title_generator_forward.2} parent=1 // pred_check
      _
    $region75: #{video_title_generator_forward.2} parent=1 // pred_check_branch
      %165 = sbr.rel (0) target = $region77
    $region76: #{video_title_generator_forward.2} parent=1 // pred_region
      _
    $region77: #{video_title_generator_forward.2} parent=1 // pred_fallthru
      _
    // Predicated region
    $region78: #{video_title_generator_forward.2} parent=1 // pred_check
      _
    $region79: #{video_title_generator_forward.2} parent=1 // pred_check_branch
      %167 = sbr.rel (0) target = $region81
    $region80: #{video_title_generator_forward.2} parent=1 // pred_region
      %168 = dma.done [#allocation6], 16
    $region81: #{video_title_generator_forward.2} parent=1 // pred_fallthru
      _
    // Predicated region
    $region82: #{video_title_generator_forward.2} parent=1 // pred_check
      _
    $region83: #{video_title_generator_forward.2} parent=1 // pred_check_branch
      %170 = sbr.rel (0) target = $region85
    $region84: #{video_title_generator_forward.2} parent=1 // pred_region
      %171 = dma.done [#allocation5], 4096
    $region85: #{video_title_generator_forward.2} parent=1 // pred_fallthru
      _
    // Predicated region
    $region86: #{video_title_generator_forward.2} parent=1 // pred_check
      _
    $region87: #{video_title_generator_forward.2} parent=1 // pred_check_branch
      %173 = sbr.rel (0) target = $region89
    $region88: #{video_title_generator_forward.2} parent=1 // pred_region
      %174 = dma.done [#allocation9], 4096
    $region89: #{video_title_generator_forward.2} parent=1 // pred_fallthru
      _
    // Predicated region
    $region90: #{video_title_generator_forward.2} parent=1 // pred_check
      _
    $region91: #{video_title_generator_forward.2} parent=1 // pred_check_branch
      %176 = sbr.rel (0) target = $region93
    $region92: #{video_title_generator_forward.2} parent=1 // pred_region
      %177 = dma.done [#allocation9], 4096
    $region93: #{video_title_generator_forward.2} parent=1 // pred_fallthru
      _
    // Predicated region
    $region94: #{video_title_generator_forward.2} parent=1 // pred_check
      _
    $region95: #{video_title_generator_forward.2} parent=1 // pred_check_branch
      %179 = sbr.rel (0) target = $region97
    $region96: #{video_title_generator_forward.2} parent=1 // pred_region
      %180 = dma.done [#allocation12], 4096
    $region97: #{video_title_generator_forward.2} parent=1 // pred_fallthru
      _
    // Predicated region
    $region98: #{video_title_generator_forward.2} parent=1 // pred_check
      _
    $region99: #{video_title_generator_forward.2} parent=1 // pred_check_branch
      %182 = sbr.rel (0) target = $region101
    $region100: #{video_title_generator_forward.2} parent=1 // pred_region
      %183 = dma.done [#allocation12], 8192
    $region101: #{video_title_generator_forward.2} parent=1 // pred_fallthru
      _
    // Predicated region
    $region102: #{video_title_generator_forward.2} parent=1 // pred_check
      _
    $region103: #{video_title_generator_forward.2} parent=1 // pred_check_branch
      %185 = sbr.rel (0) target = $region105
    $region104: #{video_title_generator_forward.2} parent=1 // pred_region
      %186 = dma.done [#allocation15], 4096
    $region105: #{video_title_generator_forward.2} parent=1 // pred_fallthru
      _
    // Predicated region
    $region106: #{video_title_generator_forward.2} parent=1 // pred_check
      _
    $region107: #{video_title_generator_forward.2} parent=1 // pred_check_branch
      %188 = sbr.rel (0) target = $region109
    $region108: #{video_title_generator_forward.2} parent=1 // pred_region
      %189 = dma.done [#allocation15], 4096
    $region109: #{video_title_generator_forward.2} parent=1 // pred_fallthru
      _
    // Predicated region
    $region110: #{video_title_generator_forward.2} parent=1 // pred_check
      _
    $region111: #{video_title_generator_forward.2} parent=1 // pred_check_branch
      %191 = sbr.rel (0) target = $region113
    $region112: #{video_title_generator_forward.2} parent=1 // pred_region
      %192 = dma.done [#allocation18], 4096
    $region113: #{video_title_generator_forward.2} parent=1 // pred_fallthru
      _
    // Predicated region
    $region114: #{video_title_generator_forward.2} parent=1 // pred_check
      _
    $region115: #{video_title_generator_forward.2} parent=1 // pred_check_branch
      %194 = sbr.rel (0) target = $region117
    $region116: #{video_title_generator_forward.2} parent=1 // pred_region
      %195 = dma.done [#allocation18], 4096
    $region117: #{video_title_generator_forward.2} parent=1 // pred_fallthru
      _
    %196 = sfence
    %v198 = vld [vmem:[%s1] sm:$0xf]
    %v199 = vld [vmem:[%s1 + $0x4] sm:$0xf]
    %v200 = vld [vmem:[%s1 + $0x8] sm:$0xf]
    %v201 = vld [vmem:[%s1 + $0xc] sm:$0xf]
    %v202 = vld [vmem:[%s1 + $0x10] sm:$0xf]
    %v203 = vld [vmem:[%s1 + $0x14] sm:$0xf]
    %v204 = vld [vmem:[%s1 + $0x18] sm:$0xf]
    %v205 = vld [vmem:[%s1 + $0x1c] sm:$0xf]
    %v206 = vld [vmem:[%s2] sm:$0xf]
    %v207 = vld [vmem:[%s2 + $0x4] sm:$0xf]
    %v208 = vld [vmem:[%s2 + $0x8] sm:$0xf]
    %v209 = vld [vmem:[%s2 + $0xc] sm:$0xf]
    %v210 = vld [vmem:[%s3] sm:$0x1]
    %v212 = vlaneseq
    %v213 = vshrl.u32 %v212, 7
    %v214 = vsub.s32 0, %v213
    %v215 = vrot.slane %v210, %v214
    %v225 = vunpack.c.l.b16 %v198
    %v226 = vunpack.c.l.b16 %v199
    %v227 = vunpack.c.l.b16 %v200
    %v228 = vunpack.c.l.b16 %v201
    %v229 = vunpack.c.l.b16 %v202
    %v230 = vunpack.c.l.b16 %v203
    %v231 = vunpack.c.l.b16 %v204
    %v232 = vunpack.c.l.b16 %v205
    %v233 = vpack.c.b16 %v226, %v225
    %v234 = vpack.c.b16 %v228, %v227
    %v235 = vpack.c.b16 %v230, %v229
    %v236 = vpack.c.b16 %v232, %v231
    %v241 = vunpack.c.l.b16 %v206
    %v242 = vunpack.c.l.b16 %v207
    %v243 = vunpack.c.l.b16 %v208
    %v244 = vunpack.c.l.b16 %v209
    %v245 = vpack.c.b16 %v242, %v241
    %v246 = vpack.c.b16 %v244, %v243
    %vm249 = vcmask 261120
    %v251 = vsel %vm249, %v233, 0
    %v254 = vsel %vm249, %v234, 0
    %v257 = vsel %vm249, %v235, 0
    %v260 = vsel %vm249, %v236, 0
    %262 = vmatprep.subr.bf16.mxu0 0
    %263 = vmatpush1.bf16.msra.mxu0 %v245
    %264 = vmatprep.subr.bf16.mxu0 0
    %265 = vmatpush1.bf16.msra.mxu0 %v246
    %266 = vmatprep.subr.bf16.mxu0 0
    %267 = vmatpush1.bf16.msra.mxu0 0
    %268 = vmatprep.subr.bf16.mxu0 0
    %269 = vmatpush1.bf16.msra.mxu0 0
    %270 = vmatprep.subr.bf16.mxu0 0
    %271 = vmatpush1.bf16.msra.mxu0 0
    %272 = vmatprep.subr.bf16.mxu0 0
    %273 = vmatpush1.bf16.msra.mxu0 0
    %274 = vmatprep.subr.bf16.mxu0 0
    %275 = vmatpush1.bf16.msra.mxu0 0
    %276 = vmatprep.subr.bf16.mxu0 0
    %277 = vmatpush1.bf16.msra.mxu0 0
    %278 = vmatprep.subr.bf16.mxu0 0
    %279 = vmatpush1.bf16.msra.mxu0 0
    %280 = vmatprep.subr.bf16.mxu0 0
    %281 = vmatpush1.bf16.msra.mxu0 0
    %282 = vmatprep.subr.bf16.mxu0 0
    %283 = vmatpush1.bf16.msra.mxu0 0
    %284 = vmatprep.subr.bf16.mxu0 0
    %285 = vmatpush1.bf16.msra.mxu0 0
    %286 = vmatprep.subr.bf16.mxu0 0
    %287 = vmatpush1.bf16.msra.mxu0 0
    %288 = vmatprep.subr.bf16.mxu0 0
    %289 = vmatpush1.bf16.msra.mxu0 0
    %290 = vmatprep.subr.bf16.mxu0 0
    %291 = vmatpush1.bf16.msra.mxu0 0
    %292 = vmatprep.subr.bf16.mxu0 0
    %293 = vmatpush1.bf16.msra.mxu0 0
    %294 = vmatprep.mubr.bf16.mxu0 0
    %295 = vmatmul.mubr.bf16.gmra.mrb[0].mxu0 %v251
    %v296 = vpop.f32.mrb[0].mxu0
    %v297 = vadd.f32 %v215, %v296
    %v298 = vpop.f32.mrb[0].mxu0
    %v299 = vpop.f32.mrb[0].mxu0
    %v300 = vadd.f32 %v215, %v299
    %v301 = vpop.f32.mrb[0].mxu0
    %302 = vmatprep.mubr.bf16.mxu0 0
    %303 = vmatmul.mubr.bf16.gmra.mrb[0].mxu0 %v254
    %v304 = vpop.f32.mrb[0].mxu0
    %v305 = vadd.f32 %v215, %v304
    %v306 = vpop.f32.mrb[0].mxu0
    %v307 = vpop.f32.mrb[0].mxu0
    %v308 = vadd.f32 %v215, %v307
    %v309 = vpop.f32.mrb[0].mxu0
    %310 = vmatprep.mubr.bf16.mxu0 0
    %311 = vmatmul.mubr.bf16.gmra.mrb[0].mxu0 %v257
    %v312 = vpop.f32.mrb[0].mxu0
    %v313 = vadd.f32 %v215, %v312
    %v314 = vpop.f32.mrb[0].mxu0
    %v315 = vpop.f32.mrb[0].mxu0
    %v316 = vadd.f32 %v215, %v315
    %v317 = vpop.f32.mrb[0].mxu0
    %318 = vmatprep.mubr.bf16.mxu0 0
    %319 = vmatmul.mubr.bf16.gmra.mrb[0].mxu0 %v260
    %v320 = vpop.f32.mrb[0].mxu0
    %v321 = vadd.f32 %v215, %v320
    %v322 = vpop.f32.mrb[0].mxu0
    %v323 = vpop.f32.mrb[0].mxu0
    %v324 = vadd.f32 %v215, %v323
    %v325 = vpop.f32.mrb[0].mxu0
    %326 = vdwg.mxu0
    %v327 = vmax.f32 %v297, 0.0
    %v328 = vmax.f32 %v300, 0.0
    %v329 = vmax.f32 %v305, 0.0
    %v330 = vmax.f32 %v308, 0.0
    %v331 = vmax.f32 %v313, 0.0
    %v332 = vmax.f32 %v316, 0.0
    %v333 = vmax.f32 %v321, 0.0
    %v334 = vmax.f32 %v324, 0.0
    %v335 = vld [vmem:[%s4] sm:$0xf]
    %v336 = vld [vmem:[%s4 + $0x4] sm:$0xf]
    %v337 = vld [vmem:[%s4 + $0x8] sm:$0xf]
    %v338 = vld [vmem:[%s4 + $0xc] sm:$0xf]
    %v339 = vld [vmem:[%s4 + $0x10] sm:$0xf]
    %v340 = vld [vmem:[%s4 + $0x14] sm:$0xf]
    %v341 = vld [vmem:[%s4 + $0x18] sm:$0xf]
    %v342 = vld [vmem:[%s4 + $0x1c] sm:$0xf]
    %v343 = vld [vmem:[%s4 + $0x20] sm:$0xf]
    %v344 = vld [vmem:[%s4 + $0x24] sm:$0xf]
    %v345 = vld [vmem:[%s4 + $0x28] sm:$0xf]
    %v346 = vld [vmem:[%s4 + $0x2c] sm:$0xf]
    %v347 = vld [vmem:[%s4 + $0x30] sm:$0xf]
    %v348 = vld [vmem:[%s4 + $0x34] sm:$0xf]
    %v349 = vld [vmem:[%s4 + $0x38] sm:$0xf]
    %v350 = vld [vmem:[%s4 + $0x3c] sm:$0xf]
    %v351 = vpack.c.bf16 %v328, %v327
    %v352 = vpack.c.bf16 %v330, %v329
    %v353 = vpack.c.bf16 %v332, %v331
    %v354 = vpack.c.bf16 %v334, %v333
    %v355 = vld [vmem:[%s5] sm:$0x1]
    %v357 = vlaneseq
    %v358 = vshrl.u32 %v357, 7
    %v359 = vsub.s32 0, %v358
    %v360 = vrot.slane %v355, %v359
    %v378 = vunpack.c.l.b16 %v335
    %v379 = vunpack.c.l.b16 %v336
    %v380 = vunpack.c.l.b16 %v337
    %v381 = vunpack.c.l.b16 %v338
    %v382 = vunpack.c.l.b16 %v339
    %v383 = vunpack.c.l.b16 %v340
    %v384 = vunpack.c.l.b16 %v341
    %v385 = vunpack.c.l.b16 %v342
    %v386 = vunpack.c.l.b16 %v343
    %v387 = vunpack.c.l.b16 %v344
    %v388 = vunpack.c.l.b16 %v345
    %v389 = vunpack.c.l.b16 %v346
    %v390 = vunpack.c.l.b16 %v347
    %v391 = vunpack.c.l.b16 %v348
    %v392 = vunpack.c.l.b16 %v349
    %v393 = vunpack.c.l.b16 %v350
    %v394 = vpack.c.b16 %v379, %v378
    %v395 = vpack.c.b16 %v381, %v380
    %v396 = vpack.c.b16 %v383, %v382
    %v397 = vpack.c.b16 %v385, %v384
    %v398 = vpack.c.b16 %v387, %v386
    %v399 = vpack.c.b16 %v389, %v388
    %v400 = vpack.c.b16 %v391, %v390
    %v401 = vpack.c.b16 %v393, %v392
    %410 = vmatprep.subr.bf16.mxu0 0
    %411 = vmatpush1.bf16.msra.mxu0 %v394
    %412 = vmatprep.subr.bf16.mxu0 0
    %413 = vmatpush1.bf16.msra.mxu0 %v395
    %414 = vmatprep.subr.bf16.mxu0 0
    %415 = vmatpush1.bf16.msra.mxu0 %v396
    %416 = vmatprep.subr.bf16.mxu0 0
    %417 = vmatpush1.bf16.msra.mxu0 %v397
    %418 = vmatprep.subr.bf16.mxu0 0
    %419 = vmatpush1.bf16.msra.mxu0 %v398
    %420 = vmatprep.subr.bf16.mxu0 0
    %421 = vmatpush1.bf16.msra.mxu0 %v399
    %422 = vmatprep.subr.bf16.mxu0 0
    %423 = vmatpush1.bf16.msra.mxu0 %v400
    %424 = vmatprep.subr.bf16.mxu0 0
    %425 = vmatpush1.bf16.msra.mxu0 %v401
    %426 = vmatprep.subr.bf16.mxu0 0
    %427 = vmatpush1.bf16.msra.mxu0 0
    %428 = vmatprep.subr.bf16.mxu0 0
    %429 = vmatpush1.bf16.msra.mxu0 0
    %430 = vmatprep.subr.bf16.mxu0 0
    %431 = vmatpush1.bf16.msra.mxu0 0
    %432 = vmatprep.subr.bf16.mxu0 0
    %433 = vmatpush1.bf16.msra.mxu0 0
    %434 = vmatprep.subr.bf16.mxu0 0
    %435 = vmatpush1.bf16.msra.mxu0 0
    %436 = vmatprep.subr.bf16.mxu0 0
    %437 = vmatpush1.bf16.msra.mxu0 0
    %438 = vmatprep.subr.bf16.mxu0 0
    %439 = vmatpush1.bf16.msra.mxu0 0
    %440 = vmatprep.subr.bf16.mxu0 0
    %441 = vmatpush1.bf16.msra.mxu0 0
    %442 = vmatprep.mubr.bf16.mxu0 0
    %443 = vmatmul.mubr.bf16.gmra.mrb[0].mxu0 %v351
    %v444 = vpop.f32.mrb[0].mxu0
    %v445 = vadd.f32 %v360, %v444
    %v446 = vpop.f32.mrb[0].mxu0
    %v447 = vpop.f32.mrb[0].mxu0
    %v448 = vadd.f32 %v360, %v447
    %v449 = vpop.f32.mrb[0].mxu0
    %450 = vmatprep.mubr.bf16.mxu0 0
    %451 = vmatmul.mubr.bf16.gmra.mrb[0].mxu0 %v352
    %v452 = vpop.f32.mrb[0].mxu0
    %v453 = vadd.f32 %v360, %v452
    %v454 = vpop.f32.mrb[0].mxu0
    %v455 = vpop.f32.mrb[0].mxu0
    %v456 = vadd.f32 %v360, %v455
    %v457 = vpop.f32.mrb[0].mxu0
    %458 = vmatprep.mubr.bf16.mxu0 0
    %459 = vmatmul.mubr.bf16.gmra.mrb[0].mxu0 %v353
    %v460 = vpop.f32.mrb[0].mxu0
    %v461 = vadd.f32 %v360, %v460
    %v462 = vpop.f32.mrb[0].mxu0
    %v463 = vpop.f32.mrb[0].mxu0
    %v464 = vadd.f32 %v360, %v463
    %v465 = vpop.f32.mrb[0].mxu0
    %466 = vmatprep.mubr.bf16.mxu0 0
    %467 = vmatmul.mubr.bf16.gmra.mrb[0].mxu0 %v354
    %v468 = vpop.f32.mrb[0].mxu0
    %v469 = vadd.f32 %v360, %v468
    %v470 = vpop.f32.mrb[0].mxu0
    %v471 = vpop.f32.mrb[0].mxu0
    %v472 = vadd.f32 %v360, %v471
    %v473 = vpop.f32.mrb[0].mxu0
    %474 = vdwg.mxu0
    %v475 = vmax.f32 %v445, 0.0
    %v476 = vmax.f32 %v448, 0.0
    %v477 = vmax.f32 %v453, 0.0
    %v478 = vmax.f32 %v456, 0.0
    %v479 = vmax.f32 %v461, 0.0
    %v480 = vmax.f32 %v464, 0.0
    %v481 = vmax.f32 %v469, 0.0
    %v482 = vmax.f32 %v472, 0.0
    %v483 = vld [vmem:[#allocation7] sm:$0xff]
    %v484 = vld [vmem:[#allocation7 + $0x8] sm:$0xff]
    %v485 = vld [vmem:[#allocation7 + $0x10] sm:$0xff]
    %v486 = vld [vmem:[#allocation7 + $0x18] sm:$0xff]
    %v487 = vld [vmem:[#allocation7 + $0x20] sm:$0xff]
    %v488 = vld [vmem:[#allocation7 + $0x28] sm:$0xff]
    %v489 = vld [vmem:[#allocation7 + $0x30] sm:$0xff]
    %v490 = vld [vmem:[#allocation7 + $0x38] sm:$0xff]
    %v491 = vld [vmem:[#allocation7 + $0x40] sm:$0xff]
    %v492 = vld [vmem:[#allocation7 + $0x48] sm:$0xff]
    %v493 = vld [vmem:[#allocation7 + $0x50] sm:$0xff]
    %v494 = vld [vmem:[#allocation7 + $0x58] sm:$0xff]
    %v495 = vld [vmem:[#allocation7 + $0x60] sm:$0xff]
    %v496 = vld [vmem:[#allocation7 + $0x68] sm:$0xff]
    %v497 = vld [vmem:[#allocation7 + $0x70] sm:$0xff]
    %v498 = vld [vmem:[#allocation7 + $0x78] sm:$0xff]
    %v499 = vld [vmem:[#allocation7 + $0x80] sm:$0xff]
    %v500 = vld [vmem:[#allocation7 + $0x88] sm:$0xff]
    %v501 = vld [vmem:[#allocation7 + $0x90] sm:$0xff]
    %v502 = vld [vmem:[#allocation7 + $0x98] sm:$0xff]
    %v503 = vld [vmem:[#allocation7 + $0xa0] sm:$0xff]
    %v504 = vld [vmem:[#allocation7 + $0xa8] sm:$0xff]
    %v505 = vld [vmem:[#allocation7 + $0xb0] sm:$0xff]
    %v506 = vld [vmem:[#allocation7 + $0xb8] sm:$0xff]
    %v507 = vld [vmem:[#allocation7 + $0xc0] sm:$0xff]
    %v508 = vld [vmem:[#allocation7 + $0xc8] sm:$0xff]
    %v509 = vld [vmem:[#allocation7 + $0xd0] sm:$0xff]
    %v510 = vld [vmem:[#allocation7 + $0xd8] sm:$0xff]
    %v511 = vld [vmem:[#allocation7 + $0xe0] sm:$0xff]
    %v512 = vld [vmem:[#allocation7 + $0xe8] sm:$0xff]
    %v513 = vld [vmem:[#allocation7 + $0xf0] sm:$0xff]
    %v514 = vld [vmem:[#allocation7 + $0xf8] sm:$0xff]
    %v515 = vpack.c.bf16 %v476, %v475
    %v516 = vpack.c.bf16 %v478, %v477
    %v517 = vpack.c.bf16 %v480, %v479
    %v518 = vpack.c.bf16 %v482, %v481
    %v519 = vld [vmem:[%s8] sm:$0xf]
    %v521 = vlaneseq
    %v522 = vshrl.u32 %v521, 7
    %v523 = vsub.s32 0, %v522
    %v524 = vrot.slane %v519, %v523
    %v525 = vlaneseq
    %v526 = vshrl.u32 %v525, 7
    %v527 = vsub.s32 1, %v526
    %v528 = vrot.slane %v519, %v527
    %v529 = vlaneseq
    %v530 = vshrl.u32 %v529, 7
    %v531 = vsub.s32 2, %v530
    %v532 = vrot.slane %v519, %v531
    %v533 = vlaneseq
    %v534 = vshrl.u32 %v533, 7
    %v535 = vsub.s32 3, %v534
    %v536 = vrot.slane %v519, %v535
    %v573 = vunpack.c.l.b16 %v483
    %v574 = vunpack.c.h.b16 %v483
    %v575 = vunpack.c.l.b16 %v484
    %v576 = vunpack.c.h.b16 %v484
    %v577 = vunpack.c.l.b16 %v485
    %v578 = vunpack.c.h.b16 %v485
    %v579 = vunpack.c.l.b16 %v486
    %v580 = vunpack.c.h.b16 %v486
    %v581 = vunpack.c.l.b16 %v487
    %v582 = vunpack.c.h.b16 %v487
    %v583 = vunpack.c.l.b16 %v488
    %v584 = vunpack.c.h.b16 %v488
    %v585 = vunpack.c.l.b16 %v489
    %v586 = vunpack.c.h.b16 %v489
    %v587 = vunpack.c.l.b16 %v490
    %v588 = vunpack.c.h.b16 %v490
    %v589 = vunpack.c.l.b16 %v491
    %v590 = vunpack.c.h.b16 %v491
    %v591 = vunpack.c.l.b16 %v492
    %v592 = vunpack.c.h.b16 %v492
    %v593 = vunpack.c.l.b16 %v493
    %v594 = vunpack.c.h.b16 %v493
    %v595 = vunpack.c.l.b16 %v494
    %v596 = vunpack.c.h.b16 %v494
    %v597 = vunpack.c.l.b16 %v495
    %v598 = vunpack.c.h.b16 %v495
    %v599 = vunpack.c.l.b16 %v496
    %v600 = vunpack.c.h.b16 %v496
    %v601 = vunpack.c.l.b16 %v497
    %v602 = vunpack.c.h.b16 %v497
    %v603 = vunpack.c.l.b16 %v498
    %v604 = vunpack.c.h.b16 %v498
    %v605 = vunpack.c.l.b16 %v499
    %v606 = vunpack.c.h.b16 %v499
    %v607 = vunpack.c.l.b16 %v500
    %v608 = vunpack.c.h.b16 %v500
    %v609 = vunpack.c.l.b16 %v501
    %v610 = vunpack.c.h.b16 %v501
    %v611 = vunpack.c.l.b16 %v502
    %v612 = vunpack.c.h.b16 %v502
    %v613 = vunpack.c.l.b16 %v503
    %v614 = vunpack.c.h.b16 %v503
    %v615 = vunpack.c.l.b16 %v504
    %v616 = vunpack.c.h.b16 %v504
    %v617 = vunpack.c.l.b16 %v505
    %v618 = vunpack.c.h.b16 %v505
    %v619 = vunpack.c.l.b16 %v506
    %v620 = vunpack.c.h.b16 %v506
    %v621 = vunpack.c.l.b16 %v507
    %v622 = vunpack.c.h.b16 %v507
    %v623 = vunpack.c.l.b16 %v508
    %v624 = vunpack.c.h.b16 %v508
    %v625 = vunpack.c.l.b16 %v509
    %v626 = vunpack.c.h.b16 %v509
    %v627 = vunpack.c.l.b16 %v510
    %v628 = vunpack.c.h.b16 %v510
    %v629 = vunpack.c.l.b16 %v511
    %v630 = vunpack.c.h.b16 %v511
    %v631 = vunpack.c.l.b16 %v512
    %v632 = vunpack.c.h.b16 %v512
    %v633 = vunpack.c.l.b16 %v513
    %v634 = vunpack.c.h.b16 %v513
    %v635 = vunpack.c.l.b16 %v514
    %v636 = vunpack.c.h.b16 %v514
    %v637 = vpack.c.b16 %v577, %v573
    %v638 = vpack.c.b16 %v578, %v574
    %v639 = vpack.c.b16 %v579, %v575
    %v640 = vpack.c.b16 %v580, %v576
    %v641 = vpack.c.b16 %v585, %v581
    %v642 = vpack.c.b16 %v586, %v582
    %v643 = vpack.c.b16 %v587, %v583
    %v644 = vpack.c.b16 %v588, %v584
    %v645 = vpack.c.b16 %v593, %v589
    %v646 = vpack.c.b16 %v594, %v590
    %v647 = vpack.c.b16 %v595, %v591
    %v648 = vpack.c.b16 %v596, %v592
    %v649 = vpack.c.b16 %v601, %v597
    %v650 = vpack.c.b16 %v602, %v598
    %v651 = vpack.c.b16 %v603, %v599
    %v652 = vpack.c.b16 %v604, %v600
    %v653 = vpack.c.b16 %v609, %v605
    %v654 = vpack.c.b16 %v610, %v606
    %v655 = vpack.c.b16 %v611, %v607
    %v656 = vpack.c.b16 %v612, %v608
    %v657 = vpack.c.b16 %v617, %v613
    %v658 = vpack.c.b16 %v618, %v614
    %v659 = vpack.c.b16 %v619, %v615
    %v660 = vpack.c.b16 %v620, %v616
    %v661 = vpack.c.b16 %v625, %v621
    %v662 = vpack.c.b16 %v626, %v622
    %v663 = vpack.c.b16 %v627, %v623
    %v664 = vpack.c.b16 %v628, %v624
    %v665 = vpack.c.b16 %v633, %v629
    %v666 = vpack.c.b16 %v634, %v630
    %v667 = vpack.c.b16 %v635, %v631
    %v668 = vpack.c.b16 %v636, %v632
    %701 = vmatprep.subr.bf16.mxu0 %v638
    %702 = vmatpush1.bf16.msra.mxu0 %v637
    %703 = vmatprep.subr.bf16.mxu0 %v642
    %704 = vmatpush1.bf16.msra.mxu0 %v641
    %705 = vmatprep.subr.bf16.mxu0 %v646
    %706 = vmatpush1.bf16.msra.mxu0 %v645
    %707 = vmatprep.subr.bf16.mxu0 %v650
    %708 = vmatpush1.bf16.msra.mxu0 %v649
    %709 = vmatprep.subr.bf16.mxu0 %v654
    %710 = vmatpush1.bf16.msra.mxu0 %v653
    %711 = vmatprep.subr.bf16.mxu0 %v658
    %712 = vmatpush1.bf16.msra.mxu0 %v657
    %713 = vmatprep.subr.bf16.mxu0 %v662
    %714 = vmatpush1.bf16.msra.mxu0 %v661
    %715 = vmatprep.subr.bf16.mxu0 %v666
    %716 = vmatpush1.bf16.msra.mxu0 %v665
    %717 = vmatprep.subr.bf16.mxu0 0
    %718 = vmatpush1.bf16.msra.mxu0 0
    %719 = vmatprep.subr.bf16.mxu0 0
    %720 = vmatpush1.bf16.msra.mxu0 0
    %721 = vmatprep.subr.bf16.mxu0 0
    %722 = vmatpush1.bf16.msra.mxu0 0
    %723 = vmatprep.subr.bf16.mxu0 0
    %724 = vmatpush1.bf16.msra.mxu0 0
    %725 = vmatprep.subr.bf16.mxu0 0
    %726 = vmatpush1.bf16.msra.mxu0 0
    %727 = vmatprep.subr.bf16.mxu0 0
    %728 = vmatpush1.bf16.msra.mxu0 0
    %729 = vmatprep.subr.bf16.mxu0 0
    %730 = vmatpush1.bf16.msra.mxu0 0
    %731 = vmatprep.subr.bf16.mxu0 0
    %732 = vmatpush1.bf16.msra.mxu0 0
    %733 = vmatprep.mubr.bf16.mxu0 0
    %734 = vmatmul.mubr.bf16.gmra.mrb[0].mxu0 %v515
    %v735 = vpop.f32.mrb[0].mxu0
    %v736 = vadd.f32 %v524, %v735
    %v737 = vpop.f32.mrb[0].mxu0
    %v738 = vadd.f32 %v528, %v737
    %v739 = vpop.f32.mrb[0].mxu0
    %v740 = vadd.f32 %v524, %v739
    %v741 = vpop.f32.mrb[0].mxu0
    %v742 = vadd.f32 %v528, %v741
    %743 = vmatprep.mubr.bf16.mxu0 0
    %744 = vmatmul.mubr.bf16.gmra.mrb[0].mxu0 %v516
    %v745 = vpop.f32.mrb[0].mxu0
    %v746 = vadd.f32 %v524, %v745
    %v747 = vpop.f32.mrb[0].mxu0
    %v748 = vadd.f32 %v528, %v747
    %v749 = vpop.f32.mrb[0].mxu0
    %v750 = vadd.f32 %v524, %v749
    %v751 = vpop.f32.mrb[0].mxu0
    %v752 = vadd.f32 %v528, %v751
    %753 = vmatprep.mubr.bf16.mxu0 0
    %754 = vmatmul.mubr.bf16.gmra.mrb[0].mxu0 %v517
    %v755 = vpop.f32.mrb[0].mxu0
    %v756 = vadd.f32 %v524, %v755
    %v757 = vpop.f32.mrb[0].mxu0
    %v758 = vadd.f32 %v528, %v757
    %v759 = vpop.f32.mrb[0].mxu0
    %v760 = vadd.f32 %v524, %v759
    %v761 = vpop.f32.mrb[0].mxu0
    %v762 = vadd.f32 %v528, %v761
    %763 = vmatprep.mubr.bf16.mxu0 0
    %764 = vmatmul.mubr.bf16.gmra.mrb[0].mxu0 %v518
    %v765 = vpop.f32.mrb[0].mxu0
    %v766 = vadd.f32 %v524, %v765
    %v767 = vpop.f32.mrb[0].mxu0
    %v768 = vadd.f32 %v528, %v767
    %v769 = vpop.f32.mrb[0].mxu0
    %v770 = vadd.f32 %v524, %v769
    %v771 = vpop.f32.mrb[0].mxu0
    %v772 = vadd.f32 %v528, %v771
    %773 = vdwg.mxu0
    %774 = vmatprep.subr.bf16.mxu0 %v640
    %775 = vmatpush1.bf16.msra.mxu0 %v639
    %776 = vmatprep.subr.bf16.mxu0 %v644
    %777 = vmatpush1.bf16.msra.mxu0 %v643
    %778 = vmatprep.subr.bf16.mxu0 %v648
    %779 = vmatpush1.bf16.msra.mxu0 %v647
    %780 = vmatprep.subr.bf16.mxu0 %v652
    %781 = vmatpush1.bf16.msra.mxu0 %v651
    %782 = vmatprep.subr.bf16.mxu0 %v656
    %783 = vmatpush1.bf16.msra.mxu0 %v655
    %784 = vmatprep.subr.bf16.mxu0 %v660
    %785 = vmatpush1.bf16.msra.mxu0 %v659
    %786 = vmatprep.subr.bf16.mxu0 %v664
    %787 = vmatpush1.bf16.msra.mxu0 %v663
    %788 = vmatprep.subr.bf16.mxu0 %v668
    %789 = vmatpush1.bf16.msra.mxu0 %v667
    %790 = vmatprep.subr.bf16.mxu0 0
    %791 = vmatpush1.bf16.msra.mxu0 0
    %792 = vmatprep.subr.bf16.mxu0 0
    %793 = vmatpush1.bf16.msra.mxu0 0
    %794 = vmatprep.subr.bf16.mxu0 0
    %795 = vmatpush1.bf16.msra.mxu0 0
    %796 = vmatprep.subr.bf16.mxu0 0
    %797 = vmatpush1.bf16.msra.mxu0 0
    %798 = vmatprep.subr.bf16.mxu0 0
    %799 = vmatpush1.bf16.msra.mxu0 0
    %800 = vmatprep.subr.bf16.mxu0 0
    %801 = vmatpush1.bf16.msra.mxu0 0
    %802 = vmatprep.subr.bf16.mxu0 0
    %803 = vmatpush1.bf16.msra.mxu0 0
    %804 = vmatprep.subr.bf16.mxu0 0
    %805 = vmatpush1.bf16.msra.mxu0 0
    %806 = vmatprep.mubr.bf16.mxu0 0
    %807 = vmatmul.mubr.bf16.gmra.mrb[0].mxu0 %v515
    %v808 = vpop.f32.mrb[0].mxu0
    %v809 = vadd.f32 %v532, %v808
    %v810 = vpop.f32.mrb[0].mxu0
    %v811 = vadd.f32 %v536, %v810
    %v812 = vpop.f32.mrb[0].mxu0
    %v813 = vadd.f32 %v532, %v812
    %v814 = vpop.f32.mrb[0].mxu0
    %v815 = vadd.f32 %v536, %v814
    %816 = vmatprep.mubr.bf16.mxu0 0
    %817 = vmatmul.mubr.bf16.gmra.mrb[0].mxu0 %v516
    %v818 = vpop.f32.mrb[0].mxu0
    %v819 = vadd.f32 %v532, %v818
    %v820 = vpop.f32.mrb[0].mxu0
    %v821 = vadd.f32 %v536, %v820
    %v822 = vpop.f32.mrb[0].mxu0
    %v823 = vadd.f32 %v532, %v822
    %v824 = vpop.f32.mrb[0].mxu0
    %v825 = vadd.f32 %v536, %v824
    %826 = vmatprep.mubr.bf16.mxu0 0
    %827 = vmatmul.mubr.bf16.gmra.mrb[0].mxu0 %v517
    %v828 = vpop.f32.mrb[0].mxu0
    %v829 = vadd.f32 %v532, %v828
    %v830 = vpop.f32.mrb[0].mxu0
    %v831 = vadd.f32 %v536, %v830
    %v832 = vpop.f32.mrb[0].mxu0
    %v833 = vadd.f32 %v532, %v832
    %v834 = vpop.f32.mrb[0].mxu0
    %v835 = vadd.f32 %v536, %v834
    %836 = vmatprep.mubr.bf16.mxu0 0
    %837 = vmatmul.mubr.bf16.gmra.mrb[0].mxu0 %v518
    %v838 = vpop.f32.mrb[0].mxu0
    %v839 = vadd.f32 %v532, %v838
    %v840 = vpop.f32.mrb[0].mxu0
    %v841 = vadd.f32 %v536, %v840
    %v842 = vpop.f32.mrb[0].mxu0
    %v843 = vadd.f32 %v532, %v842
    %v844 = vpop.f32.mrb[0].mxu0
    %v845 = vadd.f32 %v536, %v844
    %846 = vdwg.mxu0
    %847 = vst [vmem:[#allocation2] sm:$0xff] %v736
    %848 = vst [vmem:[#allocation2 + $0x8] sm:$0xff] %v738
    %849 = vst [vmem:[#allocation2 + $0x10] sm:$0xff] %v809
    %850 = vst [vmem:[#allocation2 + $0x18] sm:$0xff] %v811
    %851 = vst [vmem:[#allocation2 + $0x20] sm:$0xff] %v740
    %852 = vst [vmem:[#allocation2 + $0x28] sm:$0xff] %v742
    %853 = vst [vmem:[#allocation2 + $0x30] sm:$0xff] %v813
    %854 = vst [vmem:[#allocation2 + $0x38] sm:$0xff] %v815
    %855 = vst [vmem:[#allocation2 + $0x40] sm:$0xff] %v746
    %856 = vst [vmem:[#allocation2 + $0x48] sm:$0xff] %v748
    %857 = vst [vmem:[#allocation2 + $0x50] sm:$0xff] %v819
    %858 = vst [vmem:[#allocation2 + $0x58] sm:$0xff] %v821
    %859 = vst [vmem:[#allocation2 + $0x60] sm:$0xff] %v750
    %860 = vst [vmem:[#allocation2 + $0x68] sm:$0xff] %v752
    %861 = vst [vmem:[#allocation2 + $0x70] sm:$0xff] %v823
    %862 = vst [vmem:[#allocation2 + $0x78] sm:$0xff] %v825
    %863 = vst [vmem:[#allocation2 + $0x80] sm:$0xff] %v756
    %864 = vst [vmem:[#allocation2 + $0x88] sm:$0xff] %v758
    %865 = vst [vmem:[#allocation2 + $0x90] sm:$0xff] %v829
    %866 = vst [vmem:[#allocation2 + $0x98] sm:$0xff] %v831
    %867 = vst [vmem:[#allocation2 + $0xa0] sm:$0xff] %v760
    %868 = vst [vmem:[#allocation2 + $0xa8] sm:$0xff] %v762
    %869 = vst [vmem:[#allocation2 + $0xb0] sm:$0xff] %v833
    %870 = vst [vmem:[#allocation2 + $0xb8] sm:$0xff] %v835
    %871 = vst [vmem:[#allocation2 + $0xc0] sm:$0xff] %v766
    %872 = vst [vmem:[#allocation2 + $0xc8] sm:$0xff] %v768
    %873 = vst [vmem:[#allocation2 + $0xd0] sm:$0xff] %v839
    %874 = vst [vmem:[#allocation2 + $0xd8] sm:$0xff] %v841
    %875 = vst [vmem:[#allocation2 + $0xe0] sm:$0xff] %v770
    %876 = vst [vmem:[#allocation2 + $0xe8] sm:$0xff] %v772
    %877 = vst [vmem:[#allocation2 + $0xf0] sm:$0xff] %v843
    %878 = vst [vmem:[#allocation2 + $0xf8] sm:$0xff] %v845
    %v879 = vld [vmem:[#allocation8] sm:$0xff]
    %v880 = vld [vmem:[#allocation8 + $0x8] sm:$0xff]
    %v881 = vld [vmem:[#allocation8 + $0x10] sm:$0xff]
    %v882 = vld [vmem:[#allocation8 + $0x18] sm:$0xff]
    %v883 = vld [vmem:[#allocation8 + $0x20] sm:$0xff]
    %v884 = vld [vmem:[#allocation8 + $0x28] sm:$0xff]
    %v885 = vld [vmem:[#allocation8 + $0x30] sm:$0xff]
    %v886 = vld [vmem:[#allocation8 + $0x38] sm:$0xff]
    %v887 = vld [vmem:[#allocation8 + $0x40] sm:$0xff]
    %v888 = vld [vmem:[#allocation8 + $0x48] sm:$0xff]
    %v889 = vld [vmem:[#allocation8 + $0x50] sm:$0xff]
    %v890 = vld [vmem:[#allocation8 + $0x58] sm:$0xff]
    %v891 = vld [vmem:[#allocation8 + $0x60] sm:$0xff]
    %v892 = vld [vmem:[#allocation8 + $0x68] sm:$0xff]
    %v893 = vld [vmem:[#allocation8 + $0x70] sm:$0xff]
    %v894 = vld [vmem:[#allocation8 + $0x78] sm:$0xff]
    %v895 = vld [vmem:[#allocation8 + $0x80] sm:$0xff]
    %v896 = vld [vmem:[#allocation8 + $0x88] sm:$0xff]
    %v897 = vld [vmem:[#allocation8 + $0x90] sm:$0xff]
    %v898 = vld [vmem:[#allocation8 + $0x98] sm:$0xff]
    %v899 = vld [vmem:[#allocation8 + $0xa0] sm:$0xff]
    %v900 = vld [vmem:[#allocation8 + $0xa8] sm:$0xff]
    %v901 = vld [vmem:[#allocation8 + $0xb0] sm:$0xff]
    %v902 = vld [vmem:[#allocation8 + $0xb8] sm:$0xff]
    %v903 = vld [vmem:[#allocation8 + $0xc0] sm:$0xff]
    %v904 = vld [vmem:[#allocation8 + $0xc8] sm:$0xff]
    %v905 = vld [vmem:[#allocation8 + $0xd0] sm:$0xff]
    %v906 = vld [vmem:[#allocation8 + $0xd8] sm:$0xff]
    %v907 = vld [vmem:[#allocation8 + $0xe0] sm:$0xff]
    %v908 = vld [vmem:[#allocation8 + $0xe8] sm:$0xff]
    %v909 = vld [vmem:[#allocation8 + $0xf0] sm:$0xff]
    %v910 = vld [vmem:[#allocation8 + $0xf8] sm:$0xff]
    %v911 = vld [vmem:[#allocation2] sm:$0xff]
    %v912 = vld [vmem:[#allocation2 + $0x8] sm:$0xff]
    %v913 = vld [vmem:[#allocation2 + $0x10] sm:$0xff]
    %v914 = vld [vmem:[#allocation2 + $0x18] sm:$0xff]
    %v947 = vunpack.c.l.b16 %v879
    %v948 = vunpack.c.h.b16 %v879
    %v949 = vunpack.c.l.b16 %v880
    %v950 = vunpack.c.h.b16 %v880
    %v951 = vunpack.c.l.b16 %v881
    %v952 = vunpack.c.h.b16 %v881
    %v953 = vunpack.c.l.b16 %v882
    %v954 = vunpack.c.h.b16 %v882
    %v955 = vunpack.c.l.b16 %v883
    %v956 = vunpack.c.h.b16 %v883
    %v957 = vunpack.c.l.b16 %v884
    %v958 = vunpack.c.h.b16 %v884
    %v959 = vunpack.c.l.b16 %v885
    %v960 = vunpack.c.h.b16 %v885
    %v961 = vunpack.c.l.b16 %v886
    %v962 = vunpack.c.h.b16 %v886
    %v963 = vunpack.c.l.b16 %v887
    %v964 = vunpack.c.h.b16 %v887
    %v965 = vunpack.c.l.b16 %v888
    %v966 = vunpack.c.h.b16 %v888
    %v967 = vunpack.c.l.b16 %v889
    %v968 = vunpack.c.h.b16 %v889
    %v969 = vunpack.c.l.b16 %v890
    %v970 = vunpack.c.h.b16 %v890
    %v971 = vunpack.c.l.b16 %v891
    %v972 = vunpack.c.h.b16 %v891
    %v973 = vunpack.c.l.b16 %v892
    %v974 = vunpack.c.h.b16 %v892
    %v975 = vunpack.c.l.b16 %v893
    %v976 = vunpack.c.h.b16 %v893
    %v977 = vunpack.c.l.b16 %v894
    %v978 = vunpack.c.h.b16 %v894
    %v979 = vunpack.c.l.b16 %v895
    %v980 = vunpack.c.h.b16 %v895
    %v981 = vunpack.c.l.b16 %v896
    %v982 = vunpack.c.h.b16 %v896
    %v983 = vunpack.c.l.b16 %v897
    %v984 = vunpack.c.h.b16 %v897
    %v985 = vunpack.c.l.b16 %v898
    %v986 = vunpack.c.h.b16 %v898
    %v987 = vunpack.c.l.b16 %v899
    %v988 = vunpack.c.h.b16 %v899
    %v989 = vunpack.c.l.b16 %v900
    %v990 = vunpack.c.h.b16 %v900
    %v991 = vunpack.c.l.b16 %v901
    %v992 = vunpack.c.h.b16 %v901
    %v993 = vunpack.c.l.b16 %v902
    %v994 = vunpack.c.h.b16 %v902
    %v995 = vunpack.c.l.b16 %v903
    %v996 = vunpack.c.h.b16 %v903
    %v997 = vunpack.c.l.b16 %v904
    %v998 = vunpack.c.h.b16 %v904
    %v999 = vunpack.c.l.b16 %v905
    %v1000 = vunpack.c.h.b16 %v905
    %v1001 = vunpack.c.l.b16 %v906
    %v1002 = vunpack.c.h.b16 %v906
    %v1003 = vunpack.c.l.b16 %v907
    %v1004 = vunpack.c.h.b16 %v907
    %v1005 = vunpack.c.l.b16 %v908
    %v1006 = vunpack.c.h.b16 %v908
    %v1007 = vunpack.c.l.b16 %v909
    %v1008 = vunpack.c.h.b16 %v909
    %v1009 = vunpack.c.l.b16 %v910
    %v1010 = vunpack.c.h.b16 %v910
    %v1011 = vpack.c.b16 %v951, %v947
    %v1012 = vpack.c.b16 %v952, %v948
    %v1013 = vpack.c.b16 %v953, %v949
    %v1014 = vpack.c.b16 %v954, %v950
    %v1015 = vpack.c.b16 %v959, %v955
    %v1016 = vpack.c.b16 %v960, %v956
    %v1017 = vpack.c.b16 %v961, %v957
    %v1018 = vpack.c.b16 %v962, %v958
    %v1019 = vpack.c.b16 %v967, %v963
    %v1020 = vpack.c.b16 %v968, %v964
    %v1021 = vpack.c.b16 %v969, %v965
    %v1022 = vpack.c.b16 %v970, %v966
    %v1023 = vpack.c.b16 %v975, %v971
    %v1024 = vpack.c.b16 %v976, %v972
    %v1025 = vpack.c.b16 %v977, %v973
    %v1026 = vpack.c.b16 %v978, %v974
    %v1027 = vpack.c.b16 %v983, %v979
    %v1028 = vpack.c.b16 %v984, %v980
    %v1029 = vpack.c.b16 %v985, %v981
    %v1030 = vpack.c.b16 %v986, %v982
    %v1031 = vpack.c.b16 %v991, %v987
    %v1032 = vpack.c.b16 %v992, %v988
    %v1033 = vpack.c.b16 %v993, %v989
    %v1034 = vpack.c.b16 %v994, %v990
    %v1035 = vpack.c.b16 %v999, %v995
    %v1036 = vpack.c.b16 %v1000, %v996
    %v1037 = vpack.c.b16 %v1001, %v997
    %v1038 = vpack.c.b16 %v1002, %v998
    %v1039 = vpack.c.b16 %v1007, %v1003
    %v1040 = vpack.c.b16 %v1008, %v1004
    %v1041 = vpack.c.b16 %v1009, %v1005
    %v1042 = vpack.c.b16 %v1010, %v1006
    %1075 = vmatprep.subr.bf16.mxu0 %v1012
    %1076 = vmatpush1.bf16.msra.mxu0 %v1011
    %1077 = vmatprep.subr.bf16.mxu0 %v1016
    %1078 = vmatpush1.bf16.msra.mxu0 %v1015
    %1079 = vmatprep.subr.bf16.mxu0 %v1020
    %1080 = vmatpush1.bf16.msra.mxu0 %v1019
    %1081 = vmatprep.subr.bf16.mxu0 %v1024
    %1082 = vmatpush1.bf16.msra.mxu0 %v1023
    %1083 = vmatprep.subr.bf16.mxu0 %v1028
    %1084 = vmatpush1.bf16.msra.mxu0 %v1027
    %1085 = vmatprep.subr.bf16.mxu0 %v1032
    %1086 = vmatpush1.bf16.msra.mxu0 %v1031
    %1087 = vmatprep.subr.bf16.mxu0 %v1036
    %1088 = vmatpush1.bf16.msra.mxu0 %v1035
    %1089 = vmatprep.subr.bf16.mxu0 %v1040
    %1090 = vmatpush1.bf16.msra.mxu0 %v1039
    %1091 = vmatprep.subr.bf16.mxu0 0
    %1092 = vmatpush1.bf16.msra.mxu0 0
    %1093 = vmatprep.subr.bf16.mxu0 0
    %1094 = vmatpush1.bf16.msra.mxu0 0
    %1095 = vmatprep.subr.bf16.mxu0 0
    %1096 = vmatpush1.bf16.msra.mxu0 0
    %1097 = vmatprep.subr.bf16.mxu0 0
    %1098 = vmatpush1.bf16.msra.mxu0 0
    %1099 = vmatprep.subr.bf16.mxu0 0
    %1100 = vmatpush1.bf16.msra.mxu0 0
    %1101 = vmatprep.subr.bf16.mxu0 0
    %1102 = vmatpush1.bf16.msra.mxu0 0
    %1103 = vmatprep.subr.bf16.mxu0 0
    %1104 = vmatpush1.bf16.msra.mxu0 0
    %1105 = vmatprep.subr.bf16.mxu0 0
    %1106 = vmatpush1.bf16.msra.mxu0 0
    %1107 = vmatprep.mubr.bf16.mxu0 0
    %1108 = vmatmul.mubr.bf16.gmra.mrb[0].mxu0 0
    %v1109 = vpop.f32.mrb[0].mxu0
    %v1110 = vadd.f32 0.0, %v1109
    %v1111 = vpop.f32.mrb[0].mxu0
    %v1112 = vadd.f32 0.0, %v1111
    %v1113 = vpop.f32.mrb[0].mxu0
    %v1114 = vpop.f32.mrb[0].mxu0
    %1115 = vdwg.mxu0
    %1116 = vmatprep.subr.bf16.mxu0 %v1014
    %1117 = vmatpush1.bf16.msra.mxu0 %v1013
    %1118 = vmatprep.subr.bf16.mxu0 %v1018
    %1119 = vmatpush1.bf16.msra.mxu0 %v1017
    %1120 = vmatprep.subr.bf16.mxu0 %v1022
    %1121 = vmatpush1.bf16.msra.mxu0 %v1021
    %1122 = vmatprep.subr.bf16.mxu0 %v1026
    %1123 = vmatpush1.bf16.msra.mxu0 %v1025
    %1124 = vmatprep.subr.bf16.mxu0 %v1030
    %1125 = vmatpush1.bf16.msra.mxu0 %v1029
    %1126 = vmatprep.subr.bf16.mxu0 %v1034
    %1127 = vmatpush1.bf16.msra.mxu0 %v1033
    %1128 = vmatprep.subr.bf16.mxu0 %v1038
    %1129 = vmatpush1.bf16.msra.mxu0 %v1037
    %1130 = vmatprep.subr.bf16.mxu0 %v1042
    %1131 = vmatpush1.bf16.msra.mxu0 %v1041
    %1132 = vmatprep.subr.bf16.mxu0 0
    %1133 = vmatpush1.bf16.msra.mxu0 0
    %1134 = vmatprep.subr.bf16.mxu0 0
    %1135 = vmatpush1.bf16.msra.mxu0 0
    %1136 = vmatprep.subr.bf16.mxu0 0
    %1137 = vmatpush1.bf16.msra.mxu0 0
    %1138 = vmatprep.subr.bf16.mxu0 0
    %1139 = vmatpush1.bf16.msra.mxu0 0
    %1140 = vmatprep.subr.bf16.mxu0 0
    %1141 = vmatpush1.bf16.msra.mxu0 0
    %1142 = vmatprep.subr.bf16.mxu0 0
    %1143 = vmatpush1.bf16.msra.mxu0 0
    %1144 = vmatprep.subr.bf16.mxu0 0
    %1145 = vmatpush1.bf16.msra.mxu0 0
    %1146 = vmatprep.subr.bf16.mxu0 0
    %1147 = vmatpush1.bf16.msra.mxu0 0
    %1148 = vmatprep.mubr.bf16.mxu0 0
    %1149 = vmatmul.mubr.bf16.gmra.mrb[0].mxu0 0
    %v1150 = vpop.f32.mrb[0].mxu0
    %v1151 = vadd.f32 0.0, %v1150
    %v1152 = vpop.f32.mrb[0].mxu0
    %v1153 = vadd.f32 0.0, %v1152
    %v1154 = vpop.f32.mrb[0].mxu0
    %v1155 = vpop.f32.mrb[0].mxu0
    %1156 = vdwg.mxu0
    %v1157 = vadd.f32 %v911, %v1110
    %v1158 = vadd.f32 %v912, %v1112
    %v1159 = vadd.f32 %v913, %v1151
    %v1160 = vadd.f32 %v914, %v1153
    %v1161 = vxor.u32 %v1157, 2147483648
    %v1162 = vxor.u32 %v1158, 2147483648
    %v1163 = vxor.u32 %v1159, 2147483648
    %v1164 = vmul.f32 %v1161, 1.442695
    %v1165 = vpow.pop %v1164
    %v1166 = vmul.f32 %v1162, 1.442695
    %v1167 = vpow.pop %v1166
    %v1168 = vmul.f32 %v1163, 1.442695
    %v1169 = vpow.pop %v1168
    %v1170 = vadd.f32 %v1165, 1.0
    %v1171 = vadd.f32 %v1167, 1.0
    %v1172 = vadd.f32 %v1169, 1.0
    %v1173 = vrcp.pop %v1170
    %v1174 = vmul.f32 1.0, %v1173
    %v1175 = vrcp.pop %v1171
    %v1176 = vmul.f32 1.0, %v1175
    %v1177 = vrcp.pop %v1172
    %v1178 = vmul.f32 1.0, %v1177
    %v1179 = vtanh.pop %v1160
    %v1180 = vmul.f32 %v1176, 0.0
    %v1181 = vmul.f32 %v1174, %v1179
    %v1182 = vadd.f32 %v1180, %v1181
    %v1183 = vtanh.pop %v1182
    %v1184 = vmul.f32 %v1178, %v1183
    %1185 = vst [vmem:[#allocation3] sm:$0xff] %v1184
    %v1186 = vld [vmem:[#allocation2 + $0x20] sm:$0xff]
    %v1187 = vld [vmem:[#allocation2 + $0x28] sm:$0xff]
    %v1188 = vld [vmem:[#allocation2 + $0x30] sm:$0xff]
    %v1189 = vld [vmem:[#allocation2 + $0x38] sm:$0xff]
    %v1190 = vpack.c.bf16 %v1184, %v1184
    %1191 = vmatprep.subr.bf16.mxu0 %v1012
    %1192 = vmatpush1.bf16.msra.mxu0 %v1011
    %1193 = vmatprep.subr.bf16.mxu0 %v1016
    %1194 = vmatpush1.bf16.msra.mxu0 %v1015
    %1195 = vmatprep.subr.bf16.mxu0 %v1020
    %1196 = vmatpush1.bf16.msra.mxu0 %v1019
    %1197 = vmatprep.subr.bf16.mxu0 %v1024
    %1198 = vmatpush1.bf16.msra.mxu0 %v1023
    %1199 = vmatprep.subr.bf16.mxu0 %v1028
    %1200 = vmatpush1.bf16.msra.mxu0 %v1027
    %1201 = vmatprep.subr.bf16.mxu0 %v1032
    %1202 = vmatpush1.bf16.msra.mxu0 %v1031
    %1203 = vmatprep.subr.bf16.mxu0 %v1036
    %1204 = vmatpush1.bf16.msra.mxu0 %v1035
    %1205 = vmatprep.subr.bf16.mxu0 %v1040
    %1206 = vmatpush1.bf16.msra.mxu0 %v1039
    %1207 = vmatprep.subr.bf16.mxu0 0
    %1208 = vmatpush1.bf16.msra.mxu0 0
    %1209 = vmatprep.subr.bf16.mxu0 0
    %1210 = vmatpush1.bf16.msra.mxu0 0
    %1211 = vmatprep.subr.bf16.mxu0 0
    %1212 = vmatpush1.bf16.msra.mxu0 0
    %1213 = vmatprep.subr.bf16.mxu0 0
    %1214 = vmatpush1.bf16.msra.mxu0 0
    %1215 = vmatprep.subr.bf16.mxu0 0
    %1216 = vmatpush1.bf16.msra.mxu0 0
    %1217 = vmatprep.subr.bf16.mxu0 0
    %1218 = vmatpush1.bf16.msra.mxu0 0
    %1219 = vmatprep.subr.bf16.mxu0 0
    %1220 = vmatpush1.bf16.msra.mxu0 0
    %1221 = vmatprep.subr.bf16.mxu0 0
    %1222 = vmatpush1.bf16.msra.mxu0 0
    %1223 = vmatprep.mubr.bf16.mxu0 0
    %1224 = vmatmul.mubr.bf16.gmra.mrb[0].mxu0 %v1190
    %v1225 = vpop.f32.mrb[0].mxu0
    %v1226 = vadd.f32 0.0, %v1225
    %v1227 = vpop.f32.mrb[0].mxu0
    %v1228 = vadd.f32 0.0, %v1227
    %v1229 = vpop.f32.mrb[0].mxu0
    %v1230 = vpop.f32.mrb[0].mxu0
    %1231 = vdwg.mxu0
    %1232 = vmatprep.subr.bf16.mxu0 %v1014
    %1233 = vmatpush1.bf16.msra.mxu0 %v1013
    %1234 = vmatprep.subr.bf16.mxu0 %v1018
    %1235 = vmatpush1.bf16.msra.mxu0 %v1017
    %1236 = vmatprep.subr.bf16.mxu0 %v1022
    %1237 = vmatpush1.bf16.msra.mxu0 %v1021
    %1238 = vmatprep.subr.bf16.mxu0 %v1026
    %1239 = vmatpush1.bf16.msra.mxu0 %v1025
    %1240 = vmatprep.subr.bf16.mxu0 %v1030
    %1241 = vmatpush1.bf16.msra.mxu0 %v1029
    %1242 = vmatprep.subr.bf16.mxu0 %v1034
    %1243 = vmatpush1.bf16.msra.mxu0 %v1033
    %1244 = vmatprep.subr.bf16.mxu0 %v1038
    %1245 = vmatpush1.bf16.msra.mxu0 %v1037
    %1246 = vmatprep.subr.bf16.mxu0 %v1042
    %1247 = vmatpush1.bf16.msra.mxu0 %v1041
    %1248 = vmatprep.subr.bf16.mxu0 0
    %1249 = vmatpush1.bf16.msra.mxu0 0
    %1250 = vmatprep.subr.bf16.mxu0 0
    %1251 = vmatpush1.bf16.msra.mxu0 0
    %1252 = vmatprep.subr.bf16.mxu0 0
    %1253 = vmatpush1.bf16.msra.mxu0 0
    %1254 = vmatprep.subr.bf16.mxu0 0
    %1255 = vmatpush1.bf16.msra.mxu0 0
    %1256 = vmatprep.subr.bf16.mxu0 0
    %1257 = vmatpush1.bf16.msra.mxu0 0
    %1258 = vmatprep.subr.bf16.mxu0 0
    %1259 = vmatpush1.bf16.msra.mxu0 0
    %1260 = vmatprep.subr.bf16.mxu0 0
    %1261 = vmatpush1.bf16.msra.mxu0 0
    %1262 = vmatprep.subr.bf16.mxu0 0
    %1263 = vmatpush1.bf16.msra.mxu0 0
    %1264 = vmatprep.mubr.bf16.mxu0 0
    %1265 = vmatmul.mubr.bf16.gmra.mrb[0].mxu0 %v1190
    %v1266 = vpop.f32.mrb[0].mxu0
    %v1267 = vadd.f32 0.0, %v1266
    %v1268 = vpop.f32.mrb[0].mxu0
    %v1269 = vadd.f32 0.0, %v1268
    %v1270 = vpop.f32.mrb[0].mxu0
    %v1271 = vpop.f32.mrb[0].mxu0
    %1272 = vdwg.mxu0
    %v1273 = vadd.f32 %v1186, %v1226
    %v1274 = vadd.f32 %v1187, %v1228
    %v1275 = vadd.f32 %v1188, %v1267
    %v1276 = vadd.f32 %v1189, %v1269
    %v1277 = vxor.u32 %v1273, 2147483648
    %v1278 = vxor.u32 %v1274, 2147483648
    %v1279 = vxor.u32 %v1275, 2147483648
    %v1280 = vmul.f32 %v1277, 1.442695
    %v1281 = vpow.pop %v1280
    %v1282 = vmul.f32 %v1278, 1.442695
    %v1283 = vpow.pop %v1282
    %v1284 = vmul.f32 %v1279, 1.442695
    %v1285 = vpow.pop %v1284
    %v1286 = vadd.f32 %v1281, 1.0
    %v1287 = vadd.f32 %v1283, 1.0
    %v1288 = vadd.f32 %v1285, 1.0
    %v1289 = vrcp.pop %v1286
    %v1290 = vmul.f32 1.0, %v1289
    %v1291 = vrcp.pop %v1287
    %v1292 = vmul.f32 1.0, %v1291
    %v1293 = vrcp.pop %v1288
    %v1294 = vmul.f32 1.0, %v1293
    %v1295 = vtanh.pop %v1276
    %v1296 = vmul.f32 %v1292, %v1182
    %v1297 = vmul.f32 %v1290, %v1295
    %v1298 = vadd.f32 %v1296, %v1297
    %v1299 = vtanh.pop %v1298
    %v1300 = vmul.f32 %v1294, %v1299
    %1301 = vst [vmem:[#allocation3 + $0x8] sm:$0xff] %v1300
    %v1302 = vld [vmem:[#allocation2 + $0x40] sm:$0xff]
    %v1303 = vld [vmem:[#allocation2 + $0x48] sm:$0xff]
    %v1304 = vld [vmem:[#allocation2 + $0x50] sm:$0xff]
    %v1305 = vld [vmem:[#allocation2 + $0x58] sm:$0xff]
    %v1306 = vpack.c.bf16 %v1300, %v1300
    %1307 = vmatprep.subr.bf16.mxu0 %v1012
    %1308 = vmatpush1.bf16.msra.mxu0 %v1011
    %1309 = vmatprep.subr.bf16.mxu0 %v1016
    %1310 = vmatpush1.bf16.msra.mxu0 %v1015
    %1311 = vmatprep.subr.bf16.mxu0 %v1020
    %1312 = vmatpush1.bf16.msra.mxu0 %v1019
    %1313 = vmatprep.subr.bf16.mxu0 %v1024
    %1314 = vmatpush1.bf16.msra.mxu0 %v1023
    %1315 = vmatprep.subr.bf16.mxu0 %v1028
    %1316 = vmatpush1.bf16.msra.mxu0 %v1027
    %1317 = vmatprep.subr.bf16.mxu0 %v1032
    %1318 = vmatpush1.bf16.msra.mxu0 %v1031
    %1319 = vmatprep.subr.bf16.mxu0 %v1036
    %1320 = vmatpush1.bf16.msra.mxu0 %v1035
    %1321 = vmatprep.subr.bf16.mxu0 %v1040
    %1322 = vmatpush1.bf16.msra.mxu0 %v1039
    %1323 = vmatprep.subr.bf16.mxu0 0
    %1324 = vmatpush1.bf16.msra.mxu0 0
    %1325 = vmatprep.subr.bf16.mxu0 0
    %1326 = vmatpush1.bf16.msra.mxu0 0
    %1327 = vmatprep.subr.bf16.mxu0 0
    %1328 = vmatpush1.bf16.msra.mxu0 0
    %1329 = vmatprep.subr.bf16.mxu0 0
    %1330 = vmatpush1.bf16.msra.mxu0 0
    %1331 = vmatprep.subr.bf16.mxu0 0
    %1332 = vmatpush1.bf16.msra.mxu0 0
    %1333 = vmatprep.subr.bf16.mxu0 0
    %1334 = vmatpush1.bf16.msra.mxu0 0
    %1335 = vmatprep.subr.bf16.mxu0 0
    %1336 = vmatpush1.bf16.msra.mxu0 0
    %1337 = vmatprep.subr.bf16.mxu0 0
    %1338 = vmatpush1.bf16.msra.mxu0 0
    %1339 = vmatprep.mubr.bf16.mxu0 0
    %1340 = vmatmul.mubr.bf16.gmra.mrb[0].mxu0 %v1306
    %v1341 = vpop.f32.mrb[0].mxu0
    %v1342 = vadd.f32 0.0, %v1341
    %v1343 = vpop.f32.mrb[0].mxu0
    %v1344 = vadd.f32 0.0, %v1343
    %v1345 = vpop.f32.mrb[0].mxu0
    %v1346 = vpop.f32.mrb[0].mxu0
    %1347 = vdwg.mxu0
    %1348 = vmatprep.subr.bf16.mxu0 %v1014
    %1349 = vmatpush1.bf16.msra.mxu0 %v1013
    %1350 = vmatprep.subr.bf16.mxu0 %v1018
    %1351 = vmatpush1.bf16.msra.mxu0 %v1017
    %1352 = vmatprep.subr.bf16.mxu0 %v1022
    %1353 = vmatpush1.bf16.msra.mxu0 %v1021
    %1354 = vmatprep.subr.bf16.mxu0 %v1026
    %1355 = vmatpush1.bf16.msra.mxu0 %v1025
    %1356 = vmatprep.subr.bf16.mxu0 %v1030
    %1357 = vmatpush1.bf16.msra.mxu0 %v1029
    %1358 = vmatprep.subr.bf16.mxu0 %v1034
    %1359 = vmatpush1.bf16.msra.mxu0 %v1033
    %1360 = vmatprep.subr.bf16.mxu0 %v1038
    %1361 = vmatpush1.bf16.msra.mxu0 %v1037
    %1362 = vmatprep.subr.bf16.mxu0 %v1042
    %1363 = vmatpush1.bf16.msra.mxu0 %v1041
    %1364 = vmatprep.subr.bf16.mxu0 0
    %1365 = vmatpush1.bf16.msra.mxu0 0
    %1366 = vmatprep.subr.bf16.mxu0 0
    %1367 = vmatpush1.bf16.msra.mxu0 0
    %1368 = vmatprep.subr.bf16.mxu0 0
    %1369 = vmatpush1.bf16.msra.mxu0 0
    %1370 = vmatprep.subr.bf16.mxu0 0
    %1371 = vmatpush1.bf16.msra.mxu0 0
    %1372 = vmatprep.subr.bf16.mxu0 0
    %1373 = vmatpush1.bf16.msra.mxu0 0
    %1374 = vmatprep.subr.bf16.mxu0 0
    %1375 = vmatpush1.bf16.msra.mxu0 0
    %1376 = vmatprep.subr.bf16.mxu0 0
    %1377 = vmatpush1.bf16.msra.mxu0 0
    %1378 = vmatprep.subr.bf16.mxu0 0
    %1379 = vmatpush1.bf16.msra.mxu0 0
    %1380 = vmatprep.mubr.bf16.mxu0 0
    %1381 = vmatmul.mubr.bf16.gmra.mrb[0].mxu0 %v1306
    %v1382 = vpop.f32.mrb[0].mxu0
    %v1383 = vadd.f32 0.0, %v1382
    %v1384 = vpop.f32.mrb[0].mxu0
    %v1385 = vadd.f32 0.0, %v1384
    %v1386 = vpop.f32.mrb[0].mxu0
    %v1387 = vpop.f32.mrb[0].mxu0
    %1388 = vdwg.mxu0
    %v1389 = vadd.f32 %v1302, %v1342
    %v1390 = vadd.f32 %v1303, %v1344
    %v1391 = vadd.f32 %v1304, %v1383
    %v1392 = vadd.f32 %v1305, %v1385
    %v1393 = vxor.u32 %v1389, 2147483648
    %v1394 = vxor.u32 %v1390, 2147483648
    %v1395 = vxor.u32 %v1391, 2147483648
    %v1396 = vmul.f32 %v1393, 1.442695
    %v1397 = vpow.pop %v1396
    %v1398 = vmul.f32 %v1394, 1.442695
    %v1399 = vpow.pop %v1398
    %v1400 = vmul.f32 %v1395, 1.442695
    %v1401 = vpow.pop %v1400
    %v1402 = vadd.f32 %v1397, 1.0
    %v1403 = vadd.f32 %v1399, 1.0
    %v1404 = vadd.f32 %v1401, 1.0
    %v1405 = vrcp.pop %v1402
    %v1406 = vmul.f32 1.0, %v1405
    %v1407 = vrcp.pop %v1403
    %v1408 = vmul.f32 1.0, %v1407
    %v1409 = vrcp.pop %v1404
    %v1410 = vmul.f32 1.0, %v1409
    %v1411 = vtanh.pop %v1392
    %v1412 = vmul.f32 %v1408, %v1298
    %v1413 = vmul.f32 %v1406, %v1411
    %v1414 = vadd.f32 %v1412, %v1413
    %v1415 = vtanh.pop %v1414
    %v1416 = vmul.f32 %v1410, %v1415
    %1417 = vst [vmem:[#allocation3 + $0x10] sm:$0xff] %v1416
    %v1418 = vld [vmem:[#allocation2 + $0x60] sm:$0xff]
    %v1419 = vld [vmem:[#allocation2 + $0x68] sm:$0xff]
    %v1420 = vld [vmem:[#allocation2 + $0x70] sm:$0xff]
    %v1421 = vld [vmem:[#allocation2 + $0x78] sm:$0xff]
    %v1422 = vpack.c.bf16 %v1416, %v1416
    %1423 = vmatprep.subr.bf16.mxu0 %v1012
    %1424 = vmatpush1.bf16.msra.mxu0 %v1011
    %1425 = vmatprep.subr.bf16.mxu0 %v1016
    %1426 = vmatpush1.bf16.msra.mxu0 %v1015
    %1427 = vmatprep.subr.bf16.mxu0 %v1020
    %1428 = vmatpush1.bf16.msra.mxu0 %v1019
    %1429 = vmatprep.subr.bf16.mxu0 %v1024
    %1430 = vmatpush1.bf16.msra.mxu0 %v1023
    %1431 = vmatprep.subr.bf16.mxu0 %v1028
    %1432 = vmatpush1.bf16.msra.mxu0 %v1027
    %1433 = vmatprep.subr.bf16.mxu0 %v1032
    %1434 = vmatpush1.bf16.msra.mxu0 %v1031
    %1435 = vmatprep.subr.bf16.mxu0 %v1036
    %1436 = vmatpush1.bf16.msra.mxu0 %v1035
    %1437 = vmatprep.subr.bf16.mxu0 %v1040
    %1438 = vmatpush1.bf16.msra.mxu0 %v1039
    %1439 = vmatprep.subr.bf16.mxu0 0
    %1440 = vmatpush1.bf16.msra.mxu0 0
    %1441 = vmatprep.subr.bf16.mxu0 0
    %1442 = vmatpush1.bf16.msra.mxu0 0
    %1443 = vmatprep.subr.bf16.mxu0 0
    %1444 = vmatpush1.bf16.msra.mxu0 0
    %1445 = vmatprep.subr.bf16.mxu0 0
    %1446 = vmatpush1.bf16.msra.mxu0 0
    %1447 = vmatprep.subr.bf16.mxu0 0
    %1448 = vmatpush1.bf16.msra.mxu0 0
    %1449 = vmatprep.subr.bf16.mxu0 0
    %1450 = vmatpush1.bf16.msra.mxu0 0
    %1451 = vmatprep.subr.bf16.mxu0 0
    %1452 = vmatpush1.bf16.msra.mxu0 0
    %1453 = vmatprep.subr.bf16.mxu0 0
    %1454 = vmatpush1.bf16.msra.mxu0 0
    %1455 = vmatprep.mubr.bf16.mxu0 0
    %1456 = vmatmul.mubr.bf16.gmra.mrb[0].mxu0 %v1422
    %v1457 = vpop.f32.mrb[0].mxu0
    %v1458 = vadd.f32 0.0, %v1457
    %v1459 = vpop.f32.mrb[0].mxu0
    %v1460 = vadd.f32 0.0, %v1459
    %v1461 = vpop.f32.mrb[0].mxu0
    %v1462 = vpop.f32.mrb[0].mxu0
    %1463 = vdwg.mxu0
    %1464 = vmatprep.subr.bf16.mxu0 %v1014
    %1465 = vmatpush1.bf16.msra.mxu0 %v1013
    %1466 = vmatprep.subr.bf16.mxu0 %v1018
    %1467 = vmatpush1.bf16.msra.mxu0 %v1017
    %1468 = vmatprep.subr.bf16.mxu0 %v1022
    %1469 = vmatpush1.bf16.msra.mxu0 %v1021
    %1470 = vmatprep.subr.bf16.mxu0 %v1026
    %1471 = vmatpush1.bf16.msra.mxu0 %v1025
    %1472 = vmatprep.subr.bf16.mxu0 %v1030
    %1473 = vmatpush1.bf16.msra.mxu0 %v1029
    %1474 = vmatprep.subr.bf16.mxu0 %v1034
    %1475 = vmatpush1.bf16.msra.mxu0 %v1033
    %1476 = vmatprep.subr.bf16.mxu0 %v1038
    %1477 = vmatpush1.bf16.msra.mxu0 %v1037
    %1478 = vmatprep.subr.bf16.mxu0 %v1042
    %1479 = vmatpush1.bf16.msra.mxu0 %v1041
    %1480 = vmatprep.subr.bf16.mxu0 0
    %1481 = vmatpush1.bf16.msra.mxu0 0
    %1482 = vmatprep.subr.bf16.mxu0 0
    %1483 = vmatpush1.bf16.msra.mxu0 0
    %1484 = vmatprep.subr.bf16.mxu0 0
    %1485 = vmatpush1.bf16.msra.mxu0 0
    %1486 = vmatprep.subr.bf16.mxu0 0
    %1487 = vmatpush1.bf16.msra.mxu0 0
    %1488 = vmatprep.subr.bf16.mxu0 0
    %1489 = vmatpush1.bf16.msra.mxu0 0
    %1490 = vmatprep.subr.bf16.mxu0 0
    %1491 = vmatpush1.bf16.msra.mxu0 0
    %1492 = vmatprep.subr.bf16.mxu0 0
    %1493 = vmatpush1.bf16.msra.mxu0 0
    %1494 = vmatprep.subr.bf16.mxu0 0
    %1495 = vmatpush1.bf16.msra.mxu0 0
    %1496 = vmatprep.mubr.bf16.mxu0 0
    %1497 = vmatmul.mubr.bf16.gmra.mrb[0].mxu0 %v1422
    %v1498 = vpop.f32.mrb[0].mxu0
    %v1499 = vadd.f32 0.0, %v1498
    %v1500 = vpop.f32.mrb[0].mxu0
    %v1501 = vadd.f32 0.0, %v1500
    %v1502 = vpop.f32.mrb[0].mxu0
    %v1503 = vpop.f32.mrb[0].mxu0
    %1504 = vdwg.mxu0
    %v1505 = vadd.f32 %v1418, %v1458
    %v1506 = vadd.f32 %v1419, %v1460
    %v1507 = vadd.f32 %v1420, %v1499
    %v1508 = vadd.f32 %v1421, %v1501
    %v1509 = vxor.u32 %v1505, 2147483648
    %v1510 = vxor.u32 %v1506, 2147483648
    %v1511 = vxor.u32 %v1507, 2147483648
    %v1512 = vmul.f32 %v1509, 1.442695
    %v1513 = vpow.pop %v1512
    %v1514 = vmul.f32 %v1510, 1.442695
    %v1515 = vpow.pop %v1514
    %v1516 = vmul.f32 %v1511, 1.442695
    %v1517 = vpow.pop %v1516
    %v1518 = vadd.f32 %v1513, 1.0
    %v1519 = vadd.f32 %v1515, 1.0
    %v1520 = vadd.f32 %v1517, 1.0
    %v1521 = vrcp.pop %v1518
    %v1522 = vmul.f32 1.0, %v1521
    %v1523 = vrcp.pop %v1519
    %v1524 = vmul.f32 1.0, %v1523
    %v1525 = vrcp.pop %v1520
    %v1526 = vmul.f32 1.0, %v1525
    %v1527 = vtanh.pop %v1508
    %v1528 = vmul.f32 %v1524, %v1414
    %v1529 = vmul.f32 %v1522, %v1527
    %v1530 = vadd.f32 %v1528, %v1529
    %v1531 = vtanh.pop %v1530
    %v1532 = vmul.f32 %v1526, %v1531
    %1533 = vst [vmem:[#allocation3 + $0x18] sm:$0xff] %v1532
    %v1534 = vld [vmem:[#allocation2 + $0x80] sm:$0xff]
    %v1535 = vld [vmem:[#allocation2 + $0x88] sm:$0xff]
    %v1536 = vld [vmem:[#allocation2 + $0x90] sm:$0xff]
    %v1537 = vld [vmem:[#allocation2 + $0x98] sm:$0xff]
    %v1538 = vpack.c.bf16 %v1532, %v1532
    %1539 = vmatprep.subr.bf16.mxu0 %v1012
    %1540 = vmatpush1.bf16.msra.mxu0 %v1011
    %1541 = vmatprep.subr.bf16.mxu0 %v1016
    %1542 = vmatpush1.bf16.msra.mxu0 %v1015
    %1543 = vmatprep.subr.bf16.mxu0 %v1020
    %1544 = vmatpush1.bf16.msra.mxu0 %v1019
    %1545 = vmatprep.subr.bf16.mxu0 %v1024
    %1546 = vmatpush1.bf16.msra.mxu0 %v1023
    %1547 = vmatprep.subr.bf16.mxu0 %v1028
    %1548 = vmatpush1.bf16.msra.mxu0 %v1027
    %1549 = vmatprep.subr.bf16.mxu0 %v1032
    %1550 = vmatpush1.bf16.msra.mxu0 %v1031
    %1551 = vmatprep.subr.bf16.mxu0 %v1036
    %1552 = vmatpush1.bf16.msra.mxu0 %v1035
    %1553 = vmatprep.subr.bf16.mxu0 %v1040
    %1554 = vmatpush1.bf16.msra.mxu0 %v1039
    %1555 = vmatprep.subr.bf16.mxu0 0
    %1556 = vmatpush1.bf16.msra.mxu0 0
    %1557 = vmatprep.subr.bf16.mxu0 0
    %1558 = vmatpush1.bf16.msra.mxu0 0
    %1559 = vmatprep.subr.bf16.mxu0 0
    %1560 = vmatpush1.bf16.msra.mxu0 0
    %1561 = vmatprep.subr.bf16.mxu0 0
    %1562 = vmatpush1.bf16.msra.mxu0 0
    %1563 = vmatprep.subr.bf16.mxu0 0
    %1564 = vmatpush1.bf16.msra.mxu0 0
    %1565 = vmatprep.subr.bf16.mxu0 0
    %1566 = vmatpush1.bf16.msra.mxu0 0
    %1567 = vmatprep.subr.bf16.mxu0 0
    %1568 = vmatpush1.bf16.msra.mxu0 0
    %1569 = vmatprep.subr.bf16.mxu0 0
    %1570 = vmatpush1.bf16.msra.mxu0 0
    %1571 = vmatprep.mubr.bf16.mxu0 0
    %1572 = vmatmul.mubr.bf16.gmra.mrb[0].mxu0 %v1538
    %v1573 = vpop.f32.mrb[0].mxu0
    %v1574 = vadd.f32 0.0, %v1573
    %v1575 = vpop.f32.mrb[0].mxu0
    %v1576 = vadd.f32 0.0, %v1575
    %v1577 = vpop.f32.mrb[0].mxu0
    %v1578 = vpop.f32.mrb[0].mxu0
    %1579 = vdwg.mxu0
    %1580 = vmatprep.subr.bf16.mxu0 %v1014
    %1581 = vmatpush1.bf16.msra.mxu0 %v1013
    %1582 = vmatprep.subr.bf16.mxu0 %v1018
    %1583 = vmatpush1.bf16.msra.mxu0 %v1017
    %1584 = vmatprep.subr.bf16.mxu0 %v1022
    %1585 = vmatpush1.bf16.msra.mxu0 %v1021
    %1586 = vmatprep.subr.bf16.mxu0 %v1026
    %1587 = vmatpush1.bf16.msra.mxu0 %v1025
    %1588 = vmatprep.subr.bf16.mxu0 %v1030
    %1589 = vmatpush1.bf16.msra.mxu0 %v1029
    %1590 = vmatprep.subr.bf16.mxu0 %v1034
    %1591 = vmatpush1.bf16.msra.mxu0 %v1033
    %1592 = vmatprep.subr.bf16.mxu0 %v1038
    %1593 = vmatpush1.bf16.msra.mxu0 %v1037
    %1594 = vmatprep.subr.bf16.mxu0 %v1042
    %1595 = vmatpush1.bf16.msra.mxu0 %v1041
    %1596 = vmatprep.subr.bf16.mxu0 0
    %1597 = vmatpush1.bf16.msra.mxu0 0
    %1598 = vmatprep.subr.bf16.mxu0 0
    %1599 = vmatpush1.bf16.msra.mxu0 0
    %1600 = vmatprep.subr.bf16.mxu0 0
    %1601 = vmatpush1.bf16.msra.mxu0 0
    %1602 = vmatprep.subr.bf16.mxu0 0
    %1603 = vmatpush1.bf16.msra.mxu0 0
    %1604 = vmatprep.subr.bf16.mxu0 0
    %1605 = vmatpush1.bf16.msra.mxu0 0
    %1606 = vmatprep.subr.bf16.mxu0 0
    %1607 = vmatpush1.bf16.msra.mxu0 0
    %1608 = vmatprep.subr.bf16.mxu0 0
    %1609 = vmatpush1.bf16.msra.mxu0 0
    %1610 = vmatprep.subr.bf16.mxu0 0
    %1611 = vmatpush1.bf16.msra.mxu0 0
    %1612 = vmatprep.mubr.bf16.mxu0 0
    %1613 = vmatmul.mubr.bf16.gmra.mrb[0].mxu0 %v1538
    %v1614 = vpop.f32.mrb[0].mxu0
    %v1615 = vadd.f32 0.0, %v1614
    %v1616 = vpop.f32.mrb[0].mxu0
    %v1617 = vadd.f32 0.0, %v1616
    %v1618 = vpop.f32.mrb[0].mxu0
    %v1619 = vpop.f32.mrb[0].mxu0
    %1620 = vdwg.mxu0
    %v1621 = vadd.f32 %v1534, %v1574
    %v1622 = vadd.f32 %v1535, %v1576
    %v1623 = vadd.f32 %v1536, %v1615
    %v1624 = vadd.f32 %v1537, %v1617
    %v1625 = vxor.u32 %v1621, 2147483648
    %v1626 = vxor.u32 %v1622, 2147483648
    %v1627 = vxor.u32 %v1623, 2147483648
    %v1628 = vmul.f32 %v1625, 1.442695
    %v1629 = vpow.pop %v1628
    %v1630 = vmul.f32 %v1626, 1.442695
    %v1631 = vpow.pop %v1630
    %v1632 = vmul.f32 %v1627, 1.442695
    %v1633 = vpow.pop %v1632
    %v1634 = vadd.f32 %v1629, 1.0
    %v1635 = vadd.f32 %v1631, 1.0
    %v1636 = vadd.f32 %v1633, 1.0
    %v1637 = vrcp.pop %v1634
    %v1638 = vmul.f32 1.0, %v1637
    %v1639 = vrcp.pop %v1635
    %v1640 = vmul.f32 1.0, %v1639
    %v1641 = vrcp.pop %v1636
    %v1642 = vmul.f32 1.0, %v1641
    %v1643 = vtanh.pop %v1624
    %v1644 = vmul.f32 %v1640, %v1530
    %v1645 = vmul.f32 %v1638, %v1643
    %v1646 = vadd.f32 %v1644, %v1645
    %v1647 = vtanh.pop %v1646
    %v1648 = vmul.f32 %v1642, %v1647
    %1649 = vst [vmem:[#allocation3 + $0x20] sm:$0xff] %v1648
    %v1650 = vld [vmem:[#allocation2 + $0xa0] sm:$0xff]
    %v1651 = vld [vmem:[#allocation2 + $0xa8] sm:$0xff]
    %v1652 = vld [vmem:[#allocation2 + $0xb0] sm:$0xff]
    %v1653 = vld [vmem:[#allocation2 + $0xb8] sm:$0xff]
    %v1654 = vpack.c.bf16 %v1648, %v1648
    %1655 = vmatprep.subr.bf16.mxu0 %v1012
    %1656 = vmatpush1.bf16.msra.mxu0 %v1011
    %1657 = vmatprep.subr.bf16.mxu0 %v1016
    %1658 = vmatpush1.bf16.msra.mxu0 %v1015
    %1659 = vmatprep.subr.bf16.mxu0 %v1020
    %1660 = vmatpush1.bf16.msra.mxu0 %v1019
    %1661 = vmatprep.subr.bf16.mxu0 %v1024
    %1662 = vmatpush1.bf16.msra.mxu0 %v1023
    %1663 = vmatprep.subr.bf16.mxu0 %v1028
    %1664 = vmatpush1.bf16.msra.mxu0 %v1027
    %1665 = vmatprep.subr.bf16.mxu0 %v1032
    %1666 = vmatpush1.bf16.msra.mxu0 %v1031
    %1667 = vmatprep.subr.bf16.mxu0 %v1036
    %1668 = vmatpush1.bf16.msra.mxu0 %v1035
    %1669 = vmatprep.subr.bf16.mxu0 %v1040
    %1670 = vmatpush1.bf16.msra.mxu0 %v1039
    %1671 = vmatprep.subr.bf16.mxu0 0
    %1672 = vmatpush1.bf16.msra.mxu0 0
    %1673 = vmatprep.subr.bf16.mxu0 0
    %1674 = vmatpush1.bf16.msra.mxu0 0
    %1675 = vmatprep.subr.bf16.mxu0 0
    %1676 = vmatpush1.bf16.msra.mxu0 0
    %1677 = vmatprep.subr.bf16.mxu0 0
    %1678 = vmatpush1.bf16.msra.mxu0 0
    %1679 = vmatprep.subr.bf16.mxu0 0
    %1680 = vmatpush1.bf16.msra.mxu0 0
    %1681 = vmatprep.subr.bf16.mxu0 0
    %1682 = vmatpush1.bf16.msra.mxu0 0
    %1683 = vmatprep.subr.bf16.mxu0 0
    %1684 = vmatpush1.bf16.msra.mxu0 0
    %1685 = vmatprep.subr.bf16.mxu0 0
    %1686 = vmatpush1.bf16.msra.mxu0 0
    %1687 = vmatprep.mubr.bf16.mxu0 0
    %1688 = vmatmul.mubr.bf16.gmra.mrb[0].mxu0 %v1654
    %v1689 = vpop.f32.mrb[0].mxu0
    %v1690 = vadd.f32 0.0, %v1689
    %v1691 = vpop.f32.mrb[0].mxu0
    %v1692 = vadd.f32 0.0, %v1691
    %v1693 = vpop.f32.mrb[0].mxu0
    %v1694 = vpop.f32.mrb[0].mxu0
    %1695 = vdwg.mxu0
    %1696 = vmatprep.subr.bf16.mxu0 %v1014
    %1697 = vmatpush1.bf16.msra.mxu0 %v1013
    %1698 = vmatprep.subr.bf16.mxu0 %v1018
    %1699 = vmatpush1.bf16.msra.mxu0 %v1017
    %1700 = vmatprep.subr.bf16.mxu0 %v1022
    %1701 = vmatpush1.bf16.msra.mxu0 %v1021
    %1702 = vmatprep.subr.bf16.mxu0 %v1026
    %1703 = vmatpush1.bf16.msra.mxu0 %v1025
    %1704 = vmatprep.subr.bf16.mxu0 %v1030
    %1705 = vmatpush1.bf16.msra.mxu0 %v1029
    %1706 = vmatprep.subr.bf16.mxu0 %v1034
    %1707 = vmatpush1.bf16.msra.mxu0 %v1033
    %1708 = vmatprep.subr.bf16.mxu0 %v1038
    %1709 = vmatpush1.bf16.msra.mxu0 %v1037
    %1710 = vmatprep.subr.bf16.mxu0 %v1042
    %1711 = vmatpush1.bf16.msra.mxu0 %v1041
    %1712 = vmatprep.subr.bf16.mxu0 0
    %1713 = vmatpush1.bf16.msra.mxu0 0
    %1714 = vmatprep.subr.bf16.mxu0 0
    %1715 = vmatpush1.bf16.msra.mxu0 0
    %1716 = vmatprep.subr.bf16.mxu0 0
    %1717 = vmatpush1.bf16.msra.mxu0 0
    %1718 = vmatprep.subr.bf16.mxu0 0
    %1719 = vmatpush1.bf16.msra.mxu0 0
    %1720 = vmatprep.subr.bf16.mxu0 0
    %1721 = vmatpush1.bf16.msra.mxu0 0
    %1722 = vmatprep.subr.bf16.mxu0 0
    %1723 = vmatpush1.bf16.msra.mxu0 0
    %1724 = vmatprep.subr.bf16.mxu0 0
    %1725 = vmatpush1.bf16.msra.mxu0 0
    %1726 = vmatprep.subr.bf16.mxu0 0
    %1727 = vmatpush1.bf16.msra.mxu0 0
    %1728 = vmatprep.mubr.bf16.mxu0 0
    %1729 = vmatmul.mubr.bf16.gmra.mrb[0].mxu0 %v1654
    %v1730 = vpop.f32.mrb[0].mxu0
    %v1731 = vadd.f32 0.0, %v1730
    %v1732 = vpop.f32.mrb[0].mxu0
    %v1733 = vadd.f32 0.0, %v1732
    %v1734 = vpop.f32.mrb[0].mxu0
    %v1735 = vpop.f32.mrb[0].mxu0
    %1736 = vdwg.mxu0
    %v1737 = vadd.f32 %v1650, %v1690
    %v1738 = vadd.f32 %v1651, %v1692
    %v1739 = vadd.f32 %v1652, %v1731
    %v1740 = vadd.f32 %v1653, %v1733
    %v1741 = vxor.u32 %v1737, 2147483648
    %v1742 = vxor.u32 %v1738, 2147483648
    %v1743 = vxor.u32 %v1739, 2147483648
    %v1744 = vmul.f32 %v1741, 1.442695
    %v1745 = vpow.pop %v1744
    %v1746 = vmul.f32 %v1742, 1.442695
    %v1747 = vpow.pop %v1746
    %v1748 = vmul.f32 %v1743, 1.442695
    %v1749 = vpow.pop %v1748
    %v1750 = vadd.f32 %v1745, 1.0
    %v1751 = vadd.f32 %v1747, 1.0
    %v1752 = vadd.f32 %v1749, 1.0
    %v1753 = vrcp.pop %v1750
    %v1754 = vmul.f32 1.0, %v1753
    %v1755 = vrcp.pop %v1751
    %v1756 = vmul.f32 1.0, %v1755
    %v1757 = vrcp.pop %v1752
    %v1758 = vmul.f32 1.0, %v1757
    %v1759 = vtanh.pop %v1740
    %v1760 = vmul.f32 %v1756, %v1646
    %v1761 = vmul.f32 %v1754, %v1759
    %v1762 = vadd.f32 %v1760, %v1761
    %v1763 = vtanh.pop %v1762
    %v1764 = vmul.f32 %v1758, %v1763
    %1765 = vst [vmem:[#allocation3 + $0x28] sm:$0xff] %v1764
    %v1766 = vld [vmem:[#allocation2 + $0xc0] sm:$0xff]
    %v1767 = vld [vmem:[#allocation2 + $0xc8] sm:$0xff]
    %v1768 = vld [vmem:[#allocation2 + $0xd0] sm:$0xff]
    %v1769 = vld [vmem:[#allocation2 + $0xd8] sm:$0xff]
    %v1770 = vpack.c.bf16 %v1764, %v1764
    %1771 = vmatprep.subr.bf16.mxu0 %v1012
    %1772 = vmatpush1.bf16.msra.mxu0 %v1011
    %1773 = vmatprep.subr.bf16.mxu0 %v1016
    %1774 = vmatpush1.bf16.msra.mxu0 %v1015
    %1775 = vmatprep.subr.bf16.mxu0 %v1020
    %1776 = vmatpush1.bf16.msra.mxu0 %v1019
    %1777 = vmatprep.subr.bf16.mxu0 %v1024
    %1778 = vmatpush1.bf16.msra.mxu0 %v1023
    %1779 = vmatprep.subr.bf16.mxu0 %v1028
    %1780 = vmatpush1.bf16.msra.mxu0 %v1027
    %1781 = vmatprep.subr.bf16.mxu0 %v1032
    %1782 = vmatpush1.bf16.msra.mxu0 %v1031
    %1783 = vmatprep.subr.bf16.mxu0 %v1036
    %1784 = vmatpush1.bf16.msra.mxu0 %v1035
    %1785 = vmatprep.subr.bf16.mxu0 %v1040
    %1786 = vmatpush1.bf16.msra.mxu0 %v1039
    %1787 = vmatprep.subr.bf16.mxu0 0
    %1788 = vmatpush1.bf16.msra.mxu0 0
    %1789 = vmatprep.subr.bf16.mxu0 0
    %1790 = vmatpush1.bf16.msra.mxu0 0
    %1791 = vmatprep.subr.bf16.mxu0 0
    %1792 = vmatpush1.bf16.msra.mxu0 0
    %1793 = vmatprep.subr.bf16.mxu0 0
    %1794 = vmatpush1.bf16.msra.mxu0 0
    %1795 = vmatprep.subr.bf16.mxu0 0
    %1796 = vmatpush1.bf16.msra.mxu0 0
    %1797 = vmatprep.subr.bf16.mxu0 0
    %1798 = vmatpush1.bf16.msra.mxu0 0
    %1799 = vmatprep.subr.bf16.mxu0 0
    %1800 = vmatpush1.bf16.msra.mxu0 0
    %1801 = vmatprep.subr.bf16.mxu0 0
    %1802 = vmatpush1.bf16.msra.mxu0 0
    %1803 = vmatprep.mubr.bf16.mxu0 0
    %1804 = vmatmul.mubr.bf16.gmra.mrb[0].mxu0 %v1770
    %v1805 = vpop.f32.mrb[0].mxu0
    %v1806 = vadd.f32 0.0, %v1805
    %v1807 = vpop.f32.mrb[0].mxu0
    %v1808 = vadd.f32 0.0, %v1807
    %v1809 = vpop.f32.mrb[0].mxu0
    %v1810 = vpop.f32.mrb[0].mxu0
    %1811 = vdwg.mxu0
    %1812 = vmatprep.subr.bf16.mxu0 %v1014
    %1813 = vmatpush1.bf16.msra.mxu0 %v1013
    %1814 = vmatprep.subr.bf16.mxu0 %v1018
    %1815 = vmatpush1.bf16.msra.mxu0 %v1017
    %1816 = vmatprep.subr.bf16.mxu0 %v1022
    %1817 = vmatpush1.bf16.msra.mxu0 %v1021
    %1818 = vmatprep.subr.bf16.mxu0 %v1026
    %1819 = vmatpush1.bf16.msra.mxu0 %v1025
    %1820 = vmatprep.subr.bf16.mxu0 %v1030
    %1821 = vmatpush1.bf16.msra.mxu0 %v1029
    %1822 = vmatprep.subr.bf16.mxu0 %v1034
    %1823 = vmatpush1.bf16.msra.mxu0 %v1033
    %1824 = vmatprep.subr.bf16.mxu0 %v1038
    %1825 = vmatpush1.bf16.msra.mxu0 %v1037
    %1826 = vmatprep.subr.bf16.mxu0 %v1042
    %1827 = vmatpush1.bf16.msra.mxu0 %v1041
    %1828 = vmatprep.subr.bf16.mxu0 0
    %1829 = vmatpush1.bf16.msra.mxu0 0
    %1830 = vmatprep.subr.bf16.mxu0 0
    %1831 = vmatpush1.bf16.msra.mxu0 0
    %1832 = vmatprep.subr.bf16.mxu0 0
    %1833 = vmatpush1.bf16.msra.mxu0 0
    %1834 = vmatprep.subr.bf16.mxu0 0
    %1835 = vmatpush1.bf16.msra.mxu0 0
    %1836 = vmatprep.subr.bf16.mxu0 0
    %1837 = vmatpush1.bf16.msra.mxu0 0
    %1838 = vmatprep.subr.bf16.mxu0 0
    %1839 = vmatpush1.bf16.msra.mxu0 0
    %1840 = vmatprep.subr.bf16.mxu0 0
    %1841 = vmatpush1.bf16.msra.mxu0 0
    %1842 = vmatprep.subr.bf16.mxu0 0
    %1843 = vmatpush1.bf16.msra.mxu0 0
    %1844 = vmatprep.mubr.bf16.mxu0 0
    %1845 = vmatmul.mubr.bf16.gmra.mrb[0].mxu0 %v1770
    %v1846 = vpop.f32.mrb[0].mxu0
    %v1847 = vadd.f32 0.0, %v1846
    %v1848 = vpop.f32.mrb[0].mxu0
    %v1849 = vadd.f32 0.0, %v1848
    %v1850 = vpop.f32.mrb[0].mxu0
    %v1851 = vpop.f32.mrb[0].mxu0
    %1852 = vdwg.mxu0
    %v1853 = vadd.f32 %v1766, %v1806
    %v1854 = vadd.f32 %v1767, %v1808
    %v1855 = vadd.f32 %v1768, %v1847
    %v1856 = vadd.f32 %v1769, %v1849
    %v1857 = vxor.u32 %v1853, 2147483648
    %v1858 = vxor.u32 %v1854, 2147483648
    %v1859 = vxor.u32 %v1855, 2147483648
    %v1860 = vmul.f32 %v1857, 1.442695
    %v1861 = vpow.pop %v1860
    %v1862 = vmul.f32 %v1858, 1.442695
    %v1863 = vpow.pop %v1862
    %v1864 = vmul.f32 %v1859, 1.442695
    %v1865 = vpow.pop %v1864
    %v1866 = vadd.f32 %v1861, 1.0
    %v1867 = vadd.f32 %v1863, 1.0
    %v1868 = vadd.f32 %v1865, 1.0
    %v1869 = vrcp.pop %v1866
    %v1870 = vmul.f32 1.0, %v1869
    %v1871 = vrcp.pop %v1867
    %v1872 = vmul.f32 1.0, %v1871
    %v1873 = vrcp.pop %v1868
    %v1874 = vmul.f32 1.0, %v1873
    %v1875 = vtanh.pop %v1856
    %v1876 = vmul.f32 %v1872, %v1762
    %v1877 = vmul.f32 %v1870, %v1875
    %v1878 = vadd.f32 %v1876, %v1877
    %v1879 = vtanh.pop %v1878
    %v1880 = vmul.f32 %v1874, %v1879
    %1881 = vst [vmem:[#allocation3 + $0x30] sm:$0xff] %v1880
    %v1882 = vld [vmem:[#allocation2 + $0xe0] sm:$0xff]
    %v1883 = vld [vmem:[#allocation2 + $0xe8] sm:$0xff]
    %v1884 = vld [vmem:[#allocation2 + $0xf0] sm:$0xff]
    %v1885 = vld [vmem:[#allocation2 + $0xf8] sm:$0xff]
    %v1886 = vpack.c.bf16 %v1880, %v1880
    %1887 = vmatprep.subr.bf16.mxu0 %v1012
    %1888 = vmatpush1.bf16.msra.mxu0 %v1011
    %1889 = vmatprep.subr.bf16.mxu0 %v1016
    %1890 = vmatpush1.bf16.msra.mxu0 %v1015
    %1891 = vmatprep.subr.bf16.mxu0 %v1020
    %1892 = vmatpush1.bf16.msra.mxu0 %v1019
    %1893 = vmatprep.subr.bf16.mxu0 %v1024
    %1894 = vmatpush1.bf16.msra.mxu0 %v1023
    %1895 = vmatprep.subr.bf16.mxu0 %v1028
    %1896 = vmatpush1.bf16.msra.mxu0 %v1027
    %1897 = vmatprep.subr.bf16.mxu0 %v1032
    %1898 = vmatpush1.bf16.msra.mxu0 %v1031
    %1899 = vmatprep.subr.bf16.mxu0 %v1036
    %1900 = vmatpush1.bf16.msra.mxu0 %v1035
    %1901 = vmatprep.subr.bf16.mxu0 %v1040
    %1902 = vmatpush1.bf16.msra.mxu0 %v1039
    %1903 = vmatprep.subr.bf16.mxu0 0
    %1904 = vmatpush1.bf16.msra.mxu0 0
    %1905 = vmatprep.subr.bf16.mxu0 0
    %1906 = vmatpush1.bf16.msra.mxu0 0
    %1907 = vmatprep.subr.bf16.mxu0 0
    %1908 = vmatpush1.bf16.msra.mxu0 0
    %1909 = vmatprep.subr.bf16.mxu0 0
    %1910 = vmatpush1.bf16.msra.mxu0 0
    %1911 = vmatprep.subr.bf16.mxu0 0
    %1912 = vmatpush1.bf16.msra.mxu0 0
    %1913 = vmatprep.subr.bf16.mxu0 0
    %1914 = vmatpush1.bf16.msra.mxu0 0
    %1915 = vmatprep.subr.bf16.mxu0 0
    %1916 = vmatpush1.bf16.msra.mxu0 0
    %1917 = vmatprep.subr.bf16.mxu0 0
    %1918 = vmatpush1.bf16.msra.mxu0 0
    %1919 = vmatprep.mubr.bf16.mxu0 0
    %1920 = vmatmul.mubr.bf16.gmra.mrb[0].mxu0 %v1886
    %v1921 = vpop.f32.mrb[0].mxu0
    %v1922 = vadd.f32 0.0, %v1921
    %v1923 = vpop.f32.mrb[0].mxu0
    %v1924 = vadd.f32 0.0, %v1923
    %v1925 = vpop.f32.mrb[0].mxu0
    %v1926 = vpop.f32.mrb[0].mxu0
    %1927 = vdwg.mxu0
    %1928 = vmatprep.subr.bf16.mxu0 %v1014
    %1929 = vmatpush1.bf16.msra.mxu0 %v1013
    %1930 = vmatprep.subr.bf16.mxu0 %v1018
    %1931 = vmatpush1.bf16.msra.mxu0 %v1017
    %1932 = vmatprep.subr.bf16.mxu0 %v1022
    %1933 = vmatpush1.bf16.msra.mxu0 %v1021
    %1934 = vmatprep.subr.bf16.mxu0 %v1026
    %1935 = vmatpush1.bf16.msra.mxu0 %v1025
    %1936 = vmatprep.subr.bf16.mxu0 %v1030
    %1937 = vmatpush1.bf16.msra.mxu0 %v1029
    %1938 = vmatprep.subr.bf16.mxu0 %v1034
    %1939 = vmatpush1.bf16.msra.mxu0 %v1033
    %1940 = vmatprep.subr.bf16.mxu0 %v1038
    %1941 = vmatpush1.bf16.msra.mxu0 %v1037
    %1942 = vmatprep.subr.bf16.mxu0 %v1042
    %1943 = vmatpush1.bf16.msra.mxu0 %v1041
    %1944 = vmatprep.subr.bf16.mxu0 0
    %1945 = vmatpush1.bf16.msra.mxu0 0
    %1946 = vmatprep.subr.bf16.mxu0 0
    %1947 = vmatpush1.bf16.msra.mxu0 0
    %1948 = vmatprep.subr.bf16.mxu0 0
    %1949 = vmatpush1.bf16.msra.mxu0 0
    %1950 = vmatprep.subr.bf16.mxu0 0
    %1951 = vmatpush1.bf16.msra.mxu0 0
    %1952 = vmatprep.subr.bf16.mxu0 0
    %1953 = vmatpush1.bf16.msra.mxu0 0
    %1954 = vmatprep.subr.bf16.mxu0 0
    %1955 = vmatpush1.bf16.msra.mxu0 0
    %1956 = vmatprep.subr.bf16.mxu0 0
    %1957 = vmatpush1.bf16.msra.mxu0 0
    %1958 = vmatprep.subr.bf16.mxu0 0
    %1959 = vmatpush1.bf16.msra.mxu0 0
    %1960 = vmatprep.mubr.bf16.mxu0 0
    %1961 = vmatmul.mubr.bf16.gmra.mrb[0].mxu0 %v1886
    %v1962 = vpop.f32.mrb[0].mxu0
    %v1963 = vadd.f32 0.0, %v1962
    %v1964 = vpop.f32.mrb[0].mxu0
    %v1965 = vadd.f32 0.0, %v1964
    %v1966 = vpop.f32.mrb[0].mxu0
    %v1967 = vpop.f32.mrb[0].mxu0
    %1968 = vdwg.mxu0
    %v1969 = vadd.f32 %v1882, %v1922
    %v1970 = vadd.f32 %v1883, %v1924
    %v1971 = vadd.f32 %v1884, %v1963
    %v1972 = vadd.f32 %v1885, %v1965
    %v1973 = vxor.u32 %v1969, 2147483648
    %v1974 = vxor.u32 %v1970, 2147483648
    %v1975 = vxor.u32 %v1971, 2147483648
    %v1976 = vmul.f32 %v1973, 1.442695
    %v1977 = vpow.pop %v1976
    %v1978 = vmul.f32 %v1974, 1.442695
    %v1979 = vpow.pop %v1978
    %v1980 = vmul.f32 %v1975, 1.442695
    %v1981 = vpow.pop %v1980
    %v1982 = vadd.f32 %v1977, 1.0
    %v1983 = vadd.f32 %v1979, 1.0
    %v1984 = vadd.f32 %v1981, 1.0
    %v1985 = vrcp.pop %v1982
    %v1986 = vmul.f32 1.0, %v1985
    %v1987 = vrcp.pop %v1983
    %v1988 = vmul.f32 1.0, %v1987
    %v1989 = vrcp.pop %v1984
    %v1990 = vmul.f32 1.0, %v1989
    %v1991 = vtanh.pop %v1972
    %v1992 = vmul.f32 %v1988, %v1878
    %v1993 = vmul.f32 %v1986, %v1991
    %v1994 = vadd.f32 %v1992, %v1993
    %v1995 = vtanh.pop %v1994
    %v1996 = vmul.f32 %v1990, %v1995
    %1997 = vst [vmem:[#allocation3 + $0x38] sm:$0xff] %v1996
    %v1998 = vld [vmem:[#allocation3] sm:$0xff]
    %v1999 = vld [vmem:[#allocation3 + $0x8] sm:$0xff]
    %v2000 = vld [vmem:[#allocation3 + $0x10] sm:$0xff]
    %v2001 = vld [vmem:[#allocation3 + $0x18] sm:$0xff]
    %v2002 = vld [vmem:[#allocation3 + $0x20] sm:$0xff]
    %v2003 = vld [vmem:[#allocation3 + $0x28] sm:$0xff]
    %v2004 = vld [vmem:[#allocation3 + $0x30] sm:$0xff]
    %v2005 = vld [vmem:[#allocation3 + $0x38] sm:$0xff]
    %v2006 = vld [vmem:[#allocation10] sm:$0xff]
    %v2007 = vld [vmem:[#allocation10 + $0x8] sm:$0xff]
    %v2008 = vld [vmem:[#allocation10 + $0x10] sm:$0xff]
    %v2009 = vld [vmem:[#allocation10 + $0x18] sm:$0xff]
    %v2010 = vld [vmem:[#allocation10 + $0x20] sm:$0xff]
    %v2011 = vld [vmem:[#allocation10 + $0x28] sm:$0xff]
    %v2012 = vld [vmem:[#allocation10 + $0x30] sm:$0xff]
    %v2013 = vld [vmem:[#allocation10 + $0x38] sm:$0xff]
    %v2014 = vld [vmem:[#allocation10 + $0x40] sm:$0xff]
    %v2015 = vld [vmem:[#allocation10 + $0x48] sm:$0xff]
    %v2016 = vld [vmem:[#allocation10 + $0x50] sm:$0xff]
    %v2017 = vld [vmem:[#allocation10 + $0x58] sm:$0xff]
    %v2018 = vld [vmem:[#allocation10 + $0x60] sm:$0xff]
    %v2019 = vld [vmem:[#allocation10 + $0x68] sm:$0xff]
    %v2020 = vld [vmem:[#allocation10 + $0x70] sm:$0xff]
    %v2021 = vld [vmem:[#allocation10 + $0x78] sm:$0xff]
    %v2022 = vld [vmem:[#allocation10 + $0x80] sm:$0xff]
    %v2023 = vld [vmem:[#allocation10 + $0x88] sm:$0xff]
    %v2024 = vld [vmem:[#allocation10 + $0x90] sm:$0xff]
    %v2025 = vld [vmem:[#allocation10 + $0x98] sm:$0xff]
    %v2026 = vld [vmem:[#allocation10 + $0xa0] sm:$0xff]
    %v2027 = vld [vmem:[#allocation10 + $0xa8] sm:$0xff]
    %v2028 = vld [vmem:[#allocation10 + $0xb0] sm:$0xff]
    %v2029 = vld [vmem:[#allocation10 + $0xb8] sm:$0xff]
    %v2030 = vld [vmem:[#allocation10 + $0xc0] sm:$0xff]
    %v2031 = vld [vmem:[#allocation10 + $0xc8] sm:$0xff]
    %v2032 = vld [vmem:[#allocation10 + $0xd0] sm:$0xff]
    %v2033 = vld [vmem:[#allocation10 + $0xd8] sm:$0xff]
    %v2034 = vld [vmem:[#allocation10 + $0xe0] sm:$0xff]
    %v2035 = vld [vmem:[#allocation10 + $0xe8] sm:$0xff]
    %v2036 = vld [vmem:[#allocation10 + $0xf0] sm:$0xff]
    %v2037 = vld [vmem:[#allocation10 + $0xf8] sm:$0xff]
    %v2038 = vpack.c.bf16 %v1999, %v1998
    %v2039 = vpack.c.bf16 %v2001, %v2000
    %v2040 = vpack.c.bf16 %v2003, %v2002
    %v2041 = vpack.c.bf16 %v2005, %v2004
    %v2042 = vld [vmem:[%s11] sm:$0xf]
    %v2044 = vlaneseq
    %v2045 = vshrl.u32 %v2044, 7
    %v2046 = vsub.s32 0, %v2045
    %v2047 = vrot.slane %v2042, %v2046
    %v2048 = vlaneseq
    %v2049 = vshrl.u32 %v2048, 7
    %v2050 = vsub.s32 1, %v2049
    %v2051 = vrot.slane %v2042, %v2050
    %v2052 = vlaneseq
    %v2053 = vshrl.u32 %v2052, 7
    %v2054 = vsub.s32 2, %v2053
    %v2055 = vrot.slane %v2042, %v2054
    %v2056 = vlaneseq
    %v2057 = vshrl.u32 %v2056, 7
    %v2058 = vsub.s32 3, %v2057
    %v2059 = vrot.slane %v2042, %v2058
    %v2096 = vunpack.c.l.b16 %v2006
    %v2097 = vunpack.c.h.b16 %v2006
    %v2098 = vunpack.c.l.b16 %v2007
    %v2099 = vunpack.c.h.b16 %v2007
    %v2100 = vunpack.c.l.b16 %v2008
    %v2101 = vunpack.c.h.b16 %v2008
    %v2102 = vunpack.c.l.b16 %v2009
    %v2103 = vunpack.c.h.b16 %v2009
    %v2104 = vunpack.c.l.b16 %v2010
    %v2105 = vunpack.c.h.b16 %v2010
    %v2106 = vunpack.c.l.b16 %v2011
    %v2107 = vunpack.c.h.b16 %v2011
    %v2108 = vunpack.c.l.b16 %v2012
    %v2109 = vunpack.c.h.b16 %v2012
    %v2110 = vunpack.c.l.b16 %v2013
    %v2111 = vunpack.c.h.b16 %v2013
    %v2112 = vunpack.c.l.b16 %v2014
    %v2113 = vunpack.c.h.b16 %v2014
    %v2114 = vunpack.c.l.b16 %v2015
    %v2115 = vunpack.c.h.b16 %v2015
    %v2116 = vunpack.c.l.b16 %v2016
    %v2117 = vunpack.c.h.b16 %v2016
    %v2118 = vunpack.c.l.b16 %v2017
    %v2119 = vunpack.c.h.b16 %v2017
    %v2120 = vunpack.c.l.b16 %v2018
    %v2121 = vunpack.c.h.b16 %v2018
    %v2122 = vunpack.c.l.b16 %v2019
    %v2123 = vunpack.c.h.b16 %v2019
    %v2124 = vunpack.c.l.b16 %v2020
    %v2125 = vunpack.c.h.b16 %v2020
    %v2126 = vunpack.c.l.b16 %v2021
    %v2127 = vunpack.c.h.b16 %v2021
    %v2128 = vunpack.c.l.b16 %v2022
    %v2129 = vunpack.c.h.b16 %v2022
    %v2130 = vunpack.c.l.b16 %v2023
    %v2131 = vunpack.c.h.b16 %v2023
    %v2132 = vunpack.c.l.b16 %v2024
    %v2133 = vunpack.c.h.b16 %v2024
    %v2134 = vunpack.c.l.b16 %v2025
    %v2135 = vunpack.c.h.b16 %v2025
    %v2136 = vunpack.c.l.b16 %v2026
    %v2137 = vunpack.c.h.b16 %v2026
    %v2138 = vunpack.c.l.b16 %v2027
    %v2139 = vunpack.c.h.b16 %v2027
    %v2140 = vunpack.c.l.b16 %v2028
    %v2141 = vunpack.c.h.b16 %v2028
    %v2142 = vunpack.c.l.b16 %v2029
    %v2143 = vunpack.c.h.b16 %v2029
    %v2144 = vunpack.c.l.b16 %v2030
    %v2145 = vunpack.c.h.b16 %v2030
    %v2146 = vunpack.c.l.b16 %v2031
    %v2147 = vunpack.c.h.b16 %v2031
    %v2148 = vunpack.c.l.b16 %v2032
    %v2149 = vunpack.c.h.b16 %v2032
    %v2150 = vunpack.c.l.b16 %v2033
    %v2151 = vunpack.c.h.b16 %v2033
    %v2152 = vunpack.c.l.b16 %v2034
    %v2153 = vunpack.c.h.b16 %v2034
    %v2154 = vunpack.c.l.b16 %v2035
    %v2155 = vunpack.c.h.b16 %v2035
    %v2156 = vunpack.c.l.b16 %v2036
    %v2157 = vunpack.c.h.b16 %v2036
    %v2158 = vunpack.c.l.b16 %v2037
    %v2159 = vunpack.c.h.b16 %v2037
    %v2160 = vpack.c.b16 %v2100, %v2096
    %v2161 = vpack.c.b16 %v2101, %v2097
    %v2162 = vpack.c.b16 %v2102, %v2098
    %v2163 = vpack.c.b16 %v2103, %v2099
    %v2164 = vpack.c.b16 %v2108, %v2104
    %v2165 = vpack.c.b16 %v2109, %v2105
    %v2166 = vpack.c.b16 %v2110, %v2106
    %v2167 = vpack.c.b16 %v2111, %v2107
    %v2168 = vpack.c.b16 %v2116, %v2112
    %v2169 = vpack.c.b16 %v2117, %v2113
    %v2170 = vpack.c.b16 %v2118, %v2114
    %v2171 = vpack.c.b16 %v2119, %v2115
    %v2172 = vpack.c.b16 %v2124, %v2120
    %v2173 = vpack.c.b16 %v2125, %v2121
    %v2174 = vpack.c.b16 %v2126, %v2122
    %v2175 = vpack.c.b16 %v2127, %v2123
    %v2176 = vpack.c.b16 %v2132, %v2128
    %v2177 = vpack.c.b16 %v2133, %v2129
    %v2178 = vpack.c.b16 %v2134, %v2130
    %v2179 = vpack.c.b16 %v2135, %v2131
    %v2180 = vpack.c.b16 %v2140, %v2136
    %v2181 = vpack.c.b16 %v2141, %v2137
    %v2182 = vpack.c.b16 %v2142, %v2138
    %v2183 = vpack.c.b16 %v2143, %v2139
    %v2184 = vpack.c.b16 %v2148, %v2144
    %v2185 = vpack.c.b16 %v2149, %v2145
    %v2186 = vpack.c.b16 %v2150, %v2146
    %v2187 = vpack.c.b16 %v2151, %v2147
    %v2188 = vpack.c.b16 %v2156, %v2152
    %v2189 = vpack.c.b16 %v2157, %v2153
    %v2190 = vpack.c.b16 %v2158, %v2154
    %v2191 = vpack.c.b16 %v2159, %v2155
    %2224 = vmatprep.subr.bf16.mxu0 %v2161
    %2225 = vmatpush1.bf16.msra.mxu0 %v2160
    %2226 = vmatprep.subr.bf16.mxu0 %v2165
    %2227 = vmatpush1.bf16.msra.mxu0 %v2164
    %2228 = vmatprep.subr.bf16.mxu0 %v2169
    %2229 = vmatpush1.bf16.msra.mxu0 %v2168
    %2230 = vmatprep.subr.bf16.mxu0 %v2173
    %2231 = vmatpush1.bf16.msra.mxu0 %v2172
    %2232 = vmatprep.subr.bf16.mxu0 %v2177
    %2233 = vmatpush1.bf16.msra.mxu0 %v2176
    %2234 = vmatprep.subr.bf16.mxu0 %v2181
    %2235 = vmatpush1.bf16.msra.mxu0 %v2180
    %2236 = vmatprep.subr.bf16.mxu0 %v2185
    %2237 = vmatpush1.bf16.msra.mxu0 %v2184
    %2238 = vmatprep.subr.bf16.mxu0 %v2189
    %2239 = vmatpush1.bf16.msra.mxu0 %v2188
    %2240 = vmatprep.subr.bf16.mxu0 0
    %2241 = vmatpush1.bf16.msra.mxu0 0
    %2242 = vmatprep.subr.bf16.mxu0 0
    %2243 = vmatpush1.bf16.msra.mxu0 0
    %2244 = vmatprep.subr.bf16.mxu0 0
    %2245 = vmatpush1.bf16.msra.mxu0 0
    %2246 = vmatprep.subr.bf16.mxu0 0
    %2247 = vmatpush1.bf16.msra.mxu0 0
    %2248 = vmatprep.subr.bf16.mxu0 0
    %2249 = vmatpush1.bf16.msra.mxu0 0
    %2250 = vmatprep.subr.bf16.mxu0 0
    %2251 = vmatpush1.bf16.msra.mxu0 0
    %2252 = vmatprep.subr.bf16.mxu0 0
    %2253 = vmatpush1.bf16.msra.mxu0 0
    %2254 = vmatprep.subr.bf16.mxu0 0
    %2255 = vmatpush1.bf16.msra.mxu0 0
    %2256 = vmatprep.mubr.bf16.mxu0 0
    %2257 = vmatmul.mubr.bf16.gmra.mrb[0].mxu0 %v2038
    %v2258 = vpop.f32.mrb[0].mxu0
    %v2259 = vadd.f32 %v2047, %v2258
    %v2260 = vpop.f32.mrb[0].mxu0
    %v2261 = vadd.f32 %v2051, %v2260
    %v2262 = vpop.f32.mrb[0].mxu0
    %v2263 = vadd.f32 %v2047, %v2262
    %v2264 = vpop.f32.mrb[0].mxu0
    %v2265 = vadd.f32 %v2051, %v2264
    %2266 = vmatprep.mubr.bf16.mxu0 0
    %2267 = vmatmul.mubr.bf16.gmra.mrb[0].mxu0 %v2039
    %v2268 = vpop.f32.mrb[0].mxu0
    %v2269 = vadd.f32 %v2047, %v2268
    %v2270 = vpop.f32.mrb[0].mxu0
    %v2271 = vadd.f32 %v2051, %v2270
    %v2272 = vpop.f32.mrb[0].mxu0
    %v2273 = vadd.f32 %v2047, %v2272
    %v2274 = vpop.f32.mrb[0].mxu0
    %v2275 = vadd.f32 %v2051, %v2274
    %2276 = vmatprep.mubr.bf16.mxu0 0
    %2277 = vmatmul.mubr.bf16.gmra.mrb[0].mxu0 %v2040
    %v2278 = vpop.f32.mrb[0].mxu0
    %v2279 = vadd.f32 %v2047, %v2278
    %v2280 = vpop.f32.mrb[0].mxu0
    %v2281 = vadd.f32 %v2051, %v2280
    %v2282 = vpop.f32.mrb[0].mxu0
    %v2283 = vadd.f32 %v2047, %v2282
    %v2284 = vpop.f32.mrb[0].mxu0
    %v2285 = vadd.f32 %v2051, %v2284
    %2286 = vmatprep.mubr.bf16.mxu0 0
    %2287 = vmatmul.mubr.bf16.gmra.mrb[0].mxu0 %v2041
    %v2288 = vpop.f32.mrb[0].mxu0
    %v2289 = vadd.f32 %v2047, %v2288
    %v2290 = vpop.f32.mrb[0].mxu0
    %v2291 = vadd.f32 %v2051, %v2290
    %v2292 = vpop.f32.mrb[0].mxu0
    %v2293 = vadd.f32 %v2047, %v2292
    %v2294 = vpop.f32.mrb[0].mxu0
    %v2295 = vadd.f32 %v2051, %v2294
    %2296 = vdwg.mxu0
    %2297 = vmatprep.subr.bf16.mxu0 %v2163
    %2298 = vmatpush1.bf16.msra.mxu0 %v2162
    %2299 = vmatprep.subr.bf16.mxu0 %v2167
    %2300 = vmatpush1.bf16.msra.mxu0 %v2166
    %2301 = vmatprep.subr.bf16.mxu0 %v2171
    %2302 = vmatpush1.bf16.msra.mxu0 %v2170
    %2303 = vmatprep.subr.bf16.mxu0 %v2175
    %2304 = vmatpush1.bf16.msra.mxu0 %v2174
    %2305 = vmatprep.subr.bf16.mxu0 %v2179
    %2306 = vmatpush1.bf16.msra.mxu0 %v2178
    %2307 = vmatprep.subr.bf16.mxu0 %v2183
    %2308 = vmatpush1.bf16.msra.mxu0 %v2182
    %2309 = vmatprep.subr.bf16.mxu0 %v2187
    %2310 = vmatpush1.bf16.msra.mxu0 %v2186
    %2311 = vmatprep.subr.bf16.mxu0 %v2191
    %2312 = vmatpush1.bf16.msra.mxu0 %v2190
    %2313 = vmatprep.subr.bf16.mxu0 0
    %2314 = vmatpush1.bf16.msra.mxu0 0
    %2315 = vmatprep.subr.bf16.mxu0 0
    %2316 = vmatpush1.bf16.msra.mxu0 0
    %2317 = vmatprep.subr.bf16.mxu0 0
    %2318 = vmatpush1.bf16.msra.mxu0 0
    %2319 = vmatprep.subr.bf16.mxu0 0
    %2320 = vmatpush1.bf16.msra.mxu0 0
    %2321 = vmatprep.subr.bf16.mxu0 0
    %2322 = vmatpush1.bf16.msra.mxu0 0
    %2323 = vmatprep.subr.bf16.mxu0 0
    %2324 = vmatpush1.bf16.msra.mxu0 0
    %2325 = vmatprep.subr.bf16.mxu0 0
    %2326 = vmatpush1.bf16.msra.mxu0 0
    %2327 = vmatprep.subr.bf16.mxu0 0
    %2328 = vmatpush1.bf16.msra.mxu0 0
    %2329 = vmatprep.mubr.bf16.mxu0 0
    %2330 = vmatmul.mubr.bf16.gmra.mrb[0].mxu0 %v2038
    %v2331 = vpop.f32.mrb[0].mxu0
    %v2332 = vadd.f32 %v2055, %v2331
    %v2333 = vpop.f32.mrb[0].mxu0
    %v2334 = vadd.f32 %v2059, %v2333
    %v2335 = vpop.f32.mrb[0].mxu0
    %v2336 = vadd.f32 %v2055, %v2335
    %v2337 = vpop.f32.mrb[0].mxu0
    %v2338 = vadd.f32 %v2059, %v2337
    %2339 = vmatprep.mubr.bf16.mxu0 0
    %2340 = vmatmul.mubr.bf16.gmra.mrb[0].mxu0 %v2039
    %v2341 = vpop.f32.mrb[0].mxu0
    %v2342 = vadd.f32 %v2055, %v2341
    %v2343 = vpop.f32.mrb[0].mxu0
    %v2344 = vadd.f32 %v2059, %v2343
    %v2345 = vpop.f32.mrb[0].mxu0
    %v2346 = vadd.f32 %v2055, %v2345
    %v2347 = vpop.f32.mrb[0].mxu0
    %v2348 = vadd.f32 %v2059, %v2347
    %2349 = vmatprep.mubr.bf16.mxu0 0
    %2350 = vmatmul.mubr.bf16.gmra.mrb[0].mxu0 %v2040
    %v2351 = vpop.f32.mrb[0].mxu0
    %v2352 = vadd.f32 %v2055, %v2351
    %v2353 = vpop.f32.mrb[0].mxu0
    %v2354 = vadd.f32 %v2059, %v2353
    %v2355 = vpop.f32.mrb[0].mxu0
    %v2356 = vadd.f32 %v2055, %v2355
    %v2357 = vpop.f32.mrb[0].mxu0
    %v2358 = vadd.f32 %v2059, %v2357
    %2359 = vmatprep.mubr.bf16.mxu0 0
    %2360 = vmatmul.mubr.bf16.gmra.mrb[0].mxu0 %v2041
    %v2361 = vpop.f32.mrb[0].mxu0
    %v2362 = vadd.f32 %v2055, %v2361
    %v2363 = vpop.f32.mrb[0].mxu0
    %v2364 = vadd.f32 %v2059, %v2363
    %v2365 = vpop.f32.mrb[0].mxu0
    %v2366 = vadd.f32 %v2055, %v2365
    %v2367 = vpop.f32.mrb[0].mxu0
    %v2368 = vadd.f32 %v2059, %v2367
    %2369 = vdwg.mxu0
    %2370 = vst [vmem:[#allocation2] sm:$0xff] %v2259
    %2371 = vst [vmem:[#allocation2 + $0x8] sm:$0xff] %v2261
    %2372 = vst [vmem:[#allocation2 + $0x10] sm:$0xff] %v2332
    %2373 = vst [vmem:[#allocation2 + $0x18] sm:$0xff] %v2334
    %2374 = vst [vmem:[#allocation2 + $0x20] sm:$0xff] %v2263
    %2375 = vst [vmem:[#allocation2 + $0x28] sm:$0xff] %v2265
    %2376 = vst [vmem:[#allocation2 + $0x30] sm:$0xff] %v2336
    %2377 = vst [vmem:[#allocation2 + $0x38] sm:$0xff] %v2338
    %2378 = vst [vmem:[#allocation2 + $0x40] sm:$0xff] %v2269
    %2379 = vst [vmem:[#allocation2 + $0x48] sm:$0xff] %v2271
    %2380 = vst [vmem:[#allocation2 + $0x50] sm:$0xff] %v2342
    %2381 = vst [vmem:[#allocation2 + $0x58] sm:$0xff] %v2344
    %2382 = vst [vmem:[#allocation2 + $0x60] sm:$0xff] %v2273
    %2383 = vst [vmem:[#allocation2 + $0x68] sm:$0xff] %v2275
    %2384 = vst [vmem:[#allocation2 + $0x70] sm:$0xff] %v2346
    %2385 = vst [vmem:[#allocation2 + $0x78] sm:$0xff] %v2348
    %2386 = vst [vmem:[#allocation2 + $0x80] sm:$0xff] %v2279
    %2387 = vst [vmem:[#allocation2 + $0x88] sm:$0xff] %v2281
    %2388 = vst [vmem:[#allocation2 + $0x90] sm:$0xff] %v2352
    %2389 = vst [vmem:[#allocation2 + $0x98] sm:$0xff] %v2354
    %2390 = vst [vmem:[#allocation2 + $0xa0] sm:$0xff] %v2283
    %2391 = vst [vmem:[#allocation2 + $0xa8] sm:$0xff] %v2285
    %2392 = vst [vmem:[#allocation2 + $0xb0] sm:$0xff] %v2356
    %2393 = vst [vmem:[#allocation2 + $0xb8] sm:$0xff] %v2358
    %2394 = vst [vmem:[#allocation2 + $0xc0] sm:$0xff] %v2289
    %2395 = vst [vmem:[#allocation2 + $0xc8] sm:$0xff] %v2291
    %2396 = vst [vmem:[#allocation2 + $0xd0] sm:$0xff] %v2362
    %2397 = vst [vmem:[#allocation2 + $0xd8] sm:$0xff] %v2364
    %2398 = vst [vmem:[#allocation2 + $0xe0] sm:$0xff] %v2293
    %2399 = vst [vmem:[#allocation2 + $0xe8] sm:$0xff] %v2295
    %2400 = vst [vmem:[#allocation2 + $0xf0] sm:$0xff] %v2366
    %2401 = vst [vmem:[#allocation2 + $0xf8] sm:$0xff] %v2368
    %v2402 = vld [vmem:[#allocation11] sm:$0xff]
    %v2403 = vld [vmem:[#allocation11 + $0x8] sm:$0xff]
    %v2404 = vld [vmem:[#allocation11 + $0x10] sm:$0xff]
    %v2405 = vld [vmem:[#allocation11 + $0x18] sm:$0xff]
    %v2406 = vld [vmem:[#allocation11 + $0x20] sm:$0xff]
    %v2407 = vld [vmem:[#allocation11 + $0x28] sm:$0xff]
    %v2408 = vld [vmem:[#allocation11 + $0x30] sm:$0xff]
    %v2409 = vld [vmem:[#allocation11 + $0x38] sm:$0xff]
    %v2410 = vld [vmem:[#allocation11 + $0x40] sm:$0xff]
    %v2411 = vld [vmem:[#allocation11 + $0x48] sm:$0xff]
    %v2412 = vld [vmem:[#allocation11 + $0x50] sm:$0xff]
    %v2413 = vld [vmem:[#allocation11 + $0x58] sm:$0xff]
    %v2414 = vld [vmem:[#allocation11 + $0x60] sm:$0xff]
    %v2415 = vld [vmem:[#allocation11 + $0x68] sm:$0xff]
    %v2416 = vld [vmem:[#allocation11 + $0x70] sm:$0xff]
    %v2417 = vld [vmem:[#allocation11 + $0x78] sm:$0xff]
    %v2418 = vld [vmem:[#allocation11 + $0x80] sm:$0xff]
    %v2419 = vld [vmem:[#allocation11 + $0x88] sm:$0xff]
    %v2420 = vld [vmem:[#allocation11 + $0x90] sm:$0xff]
    %v2421 = vld [vmem:[#allocation11 + $0x98] sm:$0xff]
    %v2422 = vld [vmem:[#allocation11 + $0xa0] sm:$0xff]
    %v2423 = vld [vmem:[#allocation11 + $0xa8] sm:$0xff]
    %v2424 = vld [vmem:[#allocation11 + $0xb0] sm:$0xff]
    %v2425 = vld [vmem:[#allocation11 + $0xb8] sm:$0xff]
    %v2426 = vld [vmem:[#allocation11 + $0xc0] sm:$0xff]
    %v2427 = vld [vmem:[#allocation11 + $0xc8] sm:$0xff]
    %v2428 = vld [vmem:[#allocation11 + $0xd0] sm:$0xff]
    %v2429 = vld [vmem:[#allocation11 + $0xd8] sm:$0xff]
    %v2430 = vld [vmem:[#allocation11 + $0xe0] sm:$0xff]
    %v2431 = vld [vmem:[#allocation11 + $0xe8] sm:$0xff]
    %v2432 = vld [vmem:[#allocation11 + $0xf0] sm:$0xff]
    %v2433 = vld [vmem:[#allocation11 + $0xf8] sm:$0xff]
    %v2434 = vld [vmem:[#allocation2] sm:$0xff]
    %v2435 = vld [vmem:[#allocation2 + $0x8] sm:$0xff]
    %v2436 = vld [vmem:[#allocation2 + $0x10] sm:$0xff]
    %v2437 = vld [vmem:[#allocation2 + $0x18] sm:$0xff]
    %v2470 = vunpack.c.l.b16 %v2402
    %v2471 = vunpack.c.h.b16 %v2402
    %v2472 = vunpack.c.l.b16 %v2403
    %v2473 = vunpack.c.h.b16 %v2403
    %v2474 = vunpack.c.l.b16 %v2404
    %v2475 = vunpack.c.h.b16 %v2404
    %v2476 = vunpack.c.l.b16 %v2405
    %v2477 = vunpack.c.h.b16 %v2405
    %v2478 = vunpack.c.l.b16 %v2406
    %v2479 = vunpack.c.h.b16 %v2406
    %v2480 = vunpack.c.l.b16 %v2407
    %v2481 = vunpack.c.h.b16 %v2407
    %v2482 = vunpack.c.l.b16 %v2408
    %v2483 = vunpack.c.h.b16 %v2408
    %v2484 = vunpack.c.l.b16 %v2409
    %v2485 = vunpack.c.h.b16 %v2409
    %v2486 = vunpack.c.l.b16 %v2410
    %v2487 = vunpack.c.h.b16 %v2410
    %v2488 = vunpack.c.l.b16 %v2411
    %v2489 = vunpack.c.h.b16 %v2411
    %v2490 = vunpack.c.l.b16 %v2412
    %v2491 = vunpack.c.h.b16 %v2412
    %v2492 = vunpack.c.l.b16 %v2413
    %v2493 = vunpack.c.h.b16 %v2413
    %v2494 = vunpack.c.l.b16 %v2414
    %v2495 = vunpack.c.h.b16 %v2414
    %v2496 = vunpack.c.l.b16 %v2415
    %v2497 = vunpack.c.h.b16 %v2415
    %v2498 = vunpack.c.l.b16 %v2416
    %v2499 = vunpack.c.h.b16 %v2416
    %v2500 = vunpack.c.l.b16 %v2417
    %v2501 = vunpack.c.h.b16 %v2417
    %v2502 = vunpack.c.l.b16 %v2418
    %v2503 = vunpack.c.h.b16 %v2418
    %v2504 = vunpack.c.l.b16 %v2419
    %v2505 = vunpack.c.h.b16 %v2419
    %v2506 = vunpack.c.l.b16 %v2420
    %v2507 = vunpack.c.h.b16 %v2420
    %v2508 = vunpack.c.l.b16 %v2421
    %v2509 = vunpack.c.h.b16 %v2421
    %v2510 = vunpack.c.l.b16 %v2422
    %v2511 = vunpack.c.h.b16 %v2422
    %v2512 = vunpack.c.l.b16 %v2423
    %v2513 = vunpack.c.h.b16 %v2423
    %v2514 = vunpack.c.l.b16 %v2424
    %v2515 = vunpack.c.h.b16 %v2424
    %v2516 = vunpack.c.l.b16 %v2425
    %v2517 = vunpack.c.h.b16 %v2425
    %v2518 = vunpack.c.l.b16 %v2426
    %v2519 = vunpack.c.h.b16 %v2426
    %v2520 = vunpack.c.l.b16 %v2427
    %v2521 = vunpack.c.h.b16 %v2427
    %v2522 = vunpack.c.l.b16 %v2428
    %v2523 = vunpack.c.h.b16 %v2428
    %v2524 = vunpack.c.l.b16 %v2429
    %v2525 = vunpack.c.h.b16 %v2429
    %v2526 = vunpack.c.l.b16 %v2430
    %v2527 = vunpack.c.h.b16 %v2430
    %v2528 = vunpack.c.l.b16 %v2431
    %v2529 = vunpack.c.h.b16 %v2431
    %v2530 = vunpack.c.l.b16 %v2432
    %v2531 = vunpack.c.h.b16 %v2432
    %v2532 = vunpack.c.l.b16 %v2433
    %v2533 = vunpack.c.h.b16 %v2433
    %v2534 = vpack.c.b16 %v2474, %v2470
    %v2535 = vpack.c.b16 %v2475, %v2471
    %v2536 = vpack.c.b16 %v2476, %v2472
    %v2537 = vpack.c.b16 %v2477, %v2473
    %v2538 = vpack.c.b16 %v2482, %v2478
    %v2539 = vpack.c.b16 %v2483, %v2479
    %v2540 = vpack.c.b16 %v2484, %v2480
    %v2541 = vpack.c.b16 %v2485, %v2481
    %v2542 = vpack.c.b16 %v2490, %v2486
    %v2543 = vpack.c.b16 %v2491, %v2487
    %v2544 = vpack.c.b16 %v2492, %v2488
    %v2545 = vpack.c.b16 %v2493, %v2489
    %v2546 = vpack.c.b16 %v2498, %v2494
    %v2547 = vpack.c.b16 %v2499, %v2495
    %v2548 = vpack.c.b16 %v2500, %v2496
    %v2549 = vpack.c.b16 %v2501, %v2497
    %v2550 = vpack.c.b16 %v2506, %v2502
    %v2551 = vpack.c.b16 %v2507, %v2503
    %v2552 = vpack.c.b16 %v2508, %v2504
    %v2553 = vpack.c.b16 %v2509, %v2505
    %v2554 = vpack.c.b16 %v2514, %v2510
    %v2555 = vpack.c.b16 %v2515, %v2511
    %v2556 = vpack.c.b16 %v2516, %v2512
    %v2557 = vpack.c.b16 %v2517, %v2513
    %v2558 = vpack.c.b16 %v2522, %v2518
    %v2559 = vpack.c.b16 %v2523, %v2519
    %v2560 = vpack.c.b16 %v2524, %v2520
    %v2561 = vpack.c.b16 %v2525, %v2521
    %v2562 = vpack.c.b16 %v2530, %v2526
    %v2563 = vpack.c.b16 %v2531, %v2527
    %v2564 = vpack.c.b16 %v2532, %v2528
    %v2565 = vpack.c.b16 %v2533, %v2529
    %2598 = vmatprep.subr.bf16.mxu0 %v2535
    %2599 = vmatpush1.bf16.msra.mxu0 %v2534
    %2600 = vmatprep.subr.bf16.mxu0 %v2539
    %2601 = vmatpush1.bf16.msra.mxu0 %v2538
    %2602 = vmatprep.subr.bf16.mxu0 %v2543
    %2603 = vmatpush1.bf16.msra.mxu0 %v2542
    %2604 = vmatprep.subr.bf16.mxu0 %v2547
    %2605 = vmatpush1.bf16.msra.mxu0 %v2546
    %2606 = vmatprep.subr.bf16.mxu0 %v2551
    %2607 = vmatpush1.bf16.msra.mxu0 %v2550
    %2608 = vmatprep.subr.bf16.mxu0 %v2555
    %2609 = vmatpush1.bf16.msra.mxu0 %v2554
    %2610 = vmatprep.subr.bf16.mxu0 %v2559
    %2611 = vmatpush1.bf16.msra.mxu0 %v2558
    %2612 = vmatprep.subr.bf16.mxu0 %v2563
    %2613 = vmatpush1.bf16.msra.mxu0 %v2562
    %2614 = vmatprep.subr.bf16.mxu0 0
    %2615 = vmatpush1.bf16.msra.mxu0 0
    %2616 = vmatprep.subr.bf16.mxu0 0
    %2617 = vmatpush1.bf16.msra.mxu0 0
    %2618 = vmatprep.subr.bf16.mxu0 0
    %2619 = vmatpush1.bf16.msra.mxu0 0
    %2620 = vmatprep.subr.bf16.mxu0 0
    %2621 = vmatpush1.bf16.msra.mxu0 0
    %2622 = vmatprep.subr.bf16.mxu0 0
    %2623 = vmatpush1.bf16.msra.mxu0 0
    %2624 = vmatprep.subr.bf16.mxu0 0
    %2625 = vmatpush1.bf16.msra.mxu0 0
    %2626 = vmatprep.subr.bf16.mxu0 0
    %2627 = vmatpush1.bf16.msra.mxu0 0
    %2628 = vmatprep.subr.bf16.mxu0 0
    %2629 = vmatpush1.bf16.msra.mxu0 0
    %2630 = vmatprep.mubr.bf16.mxu0 0
    %2631 = vmatmul.mubr.bf16.gmra.mrb[0].mxu0 0
    %v2632 = vpop.f32.mrb[0].mxu0
    %v2633 = vadd.f32 0.0, %v2632
    %v2634 = vpop.f32.mrb[0].mxu0
    %v2635 = vadd.f32 0.0, %v2634
    %v2636 = vpop.f32.mrb[0].mxu0
    %v2637 = vpop.f32.mrb[0].mxu0
    %2638 = vdwg.mxu0
    %2639 = vmatprep.subr.bf16.mxu0 %v2537
    %2640 = vmatpush1.bf16.msra.mxu0 %v2536
    %2641 = vmatprep.subr.bf16.mxu0 %v2541
    %2642 = vmatpush1.bf16.msra.mxu0 %v2540
    %2643 = vmatprep.subr.bf16.mxu0 %v2545
    %2644 = vmatpush1.bf16.msra.mxu0 %v2544
    %2645 = vmatprep.subr.bf16.mxu0 %v2549
    %2646 = vmatpush1.bf16.msra.mxu0 %v2548
    %2647 = vmatprep.subr.bf16.mxu0 %v2553
    %2648 = vmatpush1.bf16.msra.mxu0 %v2552
    %2649 = vmatprep.subr.bf16.mxu0 %v2557
    %2650 = vmatpush1.bf16.msra.mxu0 %v2556
    %2651 = vmatprep.subr.bf16.mxu0 %v2561
    %2652 = vmatpush1.bf16.msra.mxu0 %v2560
    %2653 = vmatprep.subr.bf16.mxu0 %v2565
    %2654 = vmatpush1.bf16.msra.mxu0 %v2564
    %2655 = vmatprep.subr.bf16.mxu0 0
    %2656 = vmatpush1.bf16.msra.mxu0 0
    %2657 = vmatprep.subr.bf16.mxu0 0
    %2658 = vmatpush1.bf16.msra.mxu0 0
    %2659 = vmatprep.subr.bf16.mxu0 0
    %2660 = vmatpush1.bf16.msra.mxu0 0
    %2661 = vmatprep.subr.bf16.mxu0 0
    %2662 = vmatpush1.bf16.msra.mxu0 0
    %2663 = vmatprep.subr.bf16.mxu0 0
    %2664 = vmatpush1.bf16.msra.mxu0 0
    %2665 = vmatprep.subr.bf16.mxu0 0
    %2666 = vmatpush1.bf16.msra.mxu0 0
    %2667 = vmatprep.subr.bf16.mxu0 0
    %2668 = vmatpush1.bf16.msra.mxu0 0
    %2669 = vmatprep.subr.bf16.mxu0 0
    %2670 = vmatpush1.bf16.msra.mxu0 0
    %2671 = vmatprep.mubr.bf16.mxu0 0
    %2672 = vmatmul.mubr.bf16.gmra.mrb[0].mxu0 0
    %v2673 = vpop.f32.mrb[0].mxu0
    %v2674 = vadd.f32 0.0, %v2673
    %v2675 = vpop.f32.mrb[0].mxu0
    %v2676 = vadd.f32 0.0, %v2675
    %v2677 = vpop.f32.mrb[0].mxu0
    %v2678 = vpop.f32.mrb[0].mxu0
    %2679 = vdwg.mxu0
    %v2680 = vadd.f32 %v2434, %v2633
    %v2681 = vadd.f32 %v2435, %v2635
    %v2682 = vadd.f32 %v2436, %v2674
    %v2683 = vadd.f32 %v2437, %v2676
    %v2684 = vxor.u32 %v2680, 2147483648
    %v2685 = vxor.u32 %v2681, 2147483648
    %v2686 = vxor.u32 %v2682, 2147483648
    %v2687 = vmul.f32 %v2684, 1.442695
    %v2688 = vpow.pop %v2687
    %v2689 = vmul.f32 %v2685, 1.442695
    %v2690 = vpow.pop %v2689
    %v2691 = vmul.f32 %v2686, 1.442695
    %v2692 = vpow.pop %v2691
    %v2693 = vadd.f32 %v2688, 1.0
    %v2694 = vadd.f32 %v2690, 1.0
    %v2695 = vadd.f32 %v2692, 1.0
    %v2696 = vrcp.pop %v2693
    %v2697 = vmul.f32 1.0, %v2696
    %v2698 = vrcp.pop %v2694
    %v2699 = vmul.f32 1.0, %v2698
    %v2700 = vrcp.pop %v2695
    %v2701 = vmul.f32 1.0, %v2700
    %v2702 = vtanh.pop %v2683
    %v2703 = vmul.f32 %v2699, 0.0
    %v2704 = vmul.f32 %v2697, %v2702
    %v2705 = vadd.f32 %v2703, %v2704
    %v2706 = vtanh.pop %v2705
    %v2707 = vmul.f32 %v2701, %v2706
    %v2708 = vld [vmem:[#allocation2 + $0x20] sm:$0xff]
    %v2709 = vld [vmem:[#allocation2 + $0x28] sm:$0xff]
    %v2710 = vld [vmem:[#allocation2 + $0x30] sm:$0xff]
    %v2711 = vld [vmem:[#allocation2 + $0x38] sm:$0xff]
    %v2712 = vpack.c.bf16 %v2707, %v2707
    %2713 = vmatprep.subr.bf16.mxu0 %v2535
    %2714 = vmatpush1.bf16.msra.mxu0 %v2534
    %2715 = vmatprep.subr.bf16.mxu0 %v2539
    %2716 = vmatpush1.bf16.msra.mxu0 %v2538
    %2717 = vmatprep.subr.bf16.mxu0 %v2543
    %2718 = vmatpush1.bf16.msra.mxu0 %v2542
    %2719 = vmatprep.subr.bf16.mxu0 %v2547
    %2720 = vmatpush1.bf16.msra.mxu0 %v2546
    %2721 = vmatprep.subr.bf16.mxu0 %v2551
    %2722 = vmatpush1.bf16.msra.mxu0 %v2550
    %2723 = vmatprep.subr.bf16.mxu0 %v2555
    %2724 = vmatpush1.bf16.msra.mxu0 %v2554
    %2725 = vmatprep.subr.bf16.mxu0 %v2559
    %2726 = vmatpush1.bf16.msra.mxu0 %v2558
    %2727 = vmatprep.subr.bf16.mxu0 %v2563
    %2728 = vmatpush1.bf16.msra.mxu0 %v2562
    %2729 = vmatprep.subr.bf16.mxu0 0
    %2730 = vmatpush1.bf16.msra.mxu0 0
    %2731 = vmatprep.subr.bf16.mxu0 0
    %2732 = vmatpush1.bf16.msra.mxu0 0
    %2733 = vmatprep.subr.bf16.mxu0 0
    %2734 = vmatpush1.bf16.msra.mxu0 0
    %2735 = vmatprep.subr.bf16.mxu0 0
    %2736 = vmatpush1.bf16.msra.mxu0 0
    %2737 = vmatprep.subr.bf16.mxu0 0
    %2738 = vmatpush1.bf16.msra.mxu0 0
    %2739 = vmatprep.subr.bf16.mxu0 0
    %2740 = vmatpush1.bf16.msra.mxu0 0
    %2741 = vmatprep.subr.bf16.mxu0 0
    %2742 = vmatpush1.bf16.msra.mxu0 0
    %2743 = vmatprep.subr.bf16.mxu0 0
    %2744 = vmatpush1.bf16.msra.mxu0 0
    %2745 = vmatprep.mubr.bf16.mxu0 0
    %2746 = vmatmul.mubr.bf16.gmra.mrb[0].mxu0 %v2712
    %v2747 = vpop.f32.mrb[0].mxu0
    %v2748 = vadd.f32 0.0, %v2747
    %v2749 = vpop.f32.mrb[0].mxu0
    %v2750 = vadd.f32 0.0, %v2749
    %v2751 = vpop.f32.mrb[0].mxu0
    %v2752 = vpop.f32.mrb[0].mxu0
    %2753 = vdwg.mxu0
    %2754 = vmatprep.subr.bf16.mxu0 %v2537
    %2755 = vmatpush1.bf16.msra.mxu0 %v2536
    %2756 = vmatprep.subr.bf16.mxu0 %v2541
    %2757 = vmatpush1.bf16.msra.mxu0 %v2540
    %2758 = vmatprep.subr.bf16.mxu0 %v2545
    %2759 = vmatpush1.bf16.msra.mxu0 %v2544
    %2760 = vmatprep.subr.bf16.mxu0 %v2549
    %2761 = vmatpush1.bf16.msra.mxu0 %v2548
    %2762 = vmatprep.subr.bf16.mxu0 %v2553
    %2763 = vmatpush1.bf16.msra.mxu0 %v2552
    %2764 = vmatprep.subr.bf16.mxu0 %v2557
    %2765 = vmatpush1.bf16.msra.mxu0 %v2556
    %2766 = vmatprep.subr.bf16.mxu0 %v2561
    %2767 = vmatpush1.bf16.msra.mxu0 %v2560
    %2768 = vmatprep.subr.bf16.mxu0 %v2565
    %2769 = vmatpush1.bf16.msra.mxu0 %v2564
    %2770 = vmatprep.subr.bf16.mxu0 0
    %2771 = vmatpush1.bf16.msra.mxu0 0
    %2772 = vmatprep.subr.bf16.mxu0 0
    %2773 = vmatpush1.bf16.msra.mxu0 0
    %2774 = vmatprep.subr.bf16.mxu0 0
    %2775 = vmatpush1.bf16.msra.mxu0 0
    %2776 = vmatprep.subr.bf16.mxu0 0
    %2777 = vmatpush1.bf16.msra.mxu0 0
    %2778 = vmatprep.subr.bf16.mxu0 0
    %2779 = vmatpush1.bf16.msra.mxu0 0
    %2780 = vmatprep.subr.bf16.mxu0 0
    %2781 = vmatpush1.bf16.msra.mxu0 0
    %2782 = vmatprep.subr.bf16.mxu0 0
    %2783 = vmatpush1.bf16.msra.mxu0 0
    %2784 = vmatprep.subr.bf16.mxu0 0
    %2785 = vmatpush1.bf16.msra.mxu0 0
    %2786 = vmatprep.mubr.bf16.mxu0 0
    %2787 = vmatmul.mubr.bf16.gmra.mrb[0].mxu0 %v2712
    %v2788 = vpop.f32.mrb[0].mxu0
    %v2789 = vadd.f32 0.0, %v2788
    %v2790 = vpop.f32.mrb[0].mxu0
    %v2791 = vadd.f32 0.0, %v2790
    %v2792 = vpop.f32.mrb[0].mxu0
    %v2793 = vpop.f32.mrb[0].mxu0
    %2794 = vdwg.mxu0
    %v2795 = vadd.f32 %v2708, %v2748
    %v2796 = vadd.f32 %v2709, %v2750
    %v2797 = vadd.f32 %v2710, %v2789
    %v2798 = vadd.f32 %v2711, %v2791
    %v2799 = vxor.u32 %v2795, 2147483648
    %v2800 = vxor.u32 %v2796, 2147483648
    %v2801 = vxor.u32 %v2797, 2147483648
    %v2802 = vmul.f32 %v2799, 1.442695
    %v2803 = vpow.pop %v2802
    %v2804 = vmul.f32 %v2800, 1.442695
    %v2805 = vpow.pop %v2804
    %v2806 = vmul.f32 %v2801, 1.442695
    %v2807 = vpow.pop %v2806
    %v2808 = vadd.f32 %v2803, 1.0
    %v2809 = vadd.f32 %v2805, 1.0
    %v2810 = vadd.f32 %v2807, 1.0
    %v2811 = vrcp.pop %v2808
    %v2812 = vmul.f32 1.0, %v2811
    %v2813 = vrcp.pop %v2809
    %v2814 = vmul.f32 1.0, %v2813
    %v2815 = vrcp.pop %v2810
    %v2816 = vmul.f32 1.0, %v2815
    %v2817 = vtanh.pop %v2798
    %v2818 = vmul.f32 %v2814, %v2705
    %v2819 = vmul.f32 %v2812, %v2817
    %v2820 = vadd.f32 %v2818, %v2819
    %v2821 = vtanh.pop %v2820
    %v2822 = vmul.f32 %v2816, %v2821
    %v2823 = vld [vmem:[#allocation2 + $0x40] sm:$0xff]
    %v2824 = vld [vmem:[#allocation2 + $0x48] sm:$0xff]
    %v2825 = vld [vmem:[#allocation2 + $0x50] sm:$0xff]
    %v2826 = vld [vmem:[#allocation2 + $0x58] sm:$0xff]
    %v2827 = vpack.c.bf16 %v2822, %v2822
    %2828 = vmatprep.subr.bf16.mxu0 %v2535
    %2829 = vmatpush1.bf16.msra.mxu0 %v2534
    %2830 = vmatprep.subr.bf16.mxu0 %v2539
    %2831 = vmatpush1.bf16.msra.mxu0 %v2538
    %2832 = vmatprep.subr.bf16.mxu0 %v2543
    %2833 = vmatpush1.bf16.msra.mxu0 %v2542
    %2834 = vmatprep.subr.bf16.mxu0 %v2547
    %2835 = vmatpush1.bf16.msra.mxu0 %v2546
    %2836 = vmatprep.subr.bf16.mxu0 %v2551
    %2837 = vmatpush1.bf16.msra.mxu0 %v2550
    %2838 = vmatprep.subr.bf16.mxu0 %v2555
    %2839 = vmatpush1.bf16.msra.mxu0 %v2554
    %2840 = vmatprep.subr.bf16.mxu0 %v2559
    %2841 = vmatpush1.bf16.msra.mxu0 %v2558
    %2842 = vmatprep.subr.bf16.mxu0 %v2563
    %2843 = vmatpush1.bf16.msra.mxu0 %v2562
    %2844 = vmatprep.subr.bf16.mxu0 0
    %2845 = vmatpush1.bf16.msra.mxu0 0
    %2846 = vmatprep.subr.bf16.mxu0 0
    %2847 = vmatpush1.bf16.msra.mxu0 0
    %2848 = vmatprep.subr.bf16.mxu0 0
    %2849 = vmatpush1.bf16.msra.mxu0 0
    %2850 = vmatprep.subr.bf16.mxu0 0
    %2851 = vmatpush1.bf16.msra.mxu0 0
    %2852 = vmatprep.subr.bf16.mxu0 0
    %2853 = vmatpush1.bf16.msra.mxu0 0
    %2854 = vmatprep.subr.bf16.mxu0 0
    %2855 = vmatpush1.bf16.msra.mxu0 0
    %2856 = vmatprep.subr.bf16.mxu0 0
    %2857 = vmatpush1.bf16.msra.mxu0 0
    %2858 = vmatprep.subr.bf16.mxu0 0
    %2859 = vmatpush1.bf16.msra.mxu0 0
    %2860 = vmatprep.mubr.bf16.mxu0 0
    %2861 = vmatmul.mubr.bf16.gmra.mrb[0].mxu0 %v2827
    %v2862 = vpop.f32.mrb[0].mxu0
    %v2863 = vadd.f32 0.0, %v2862
    %v2864 = vpop.f32.mrb[0].mxu0
    %v2865 = vadd.f32 0.0, %v2864
    %v2866 = vpop.f32.mrb[0].mxu0
    %v2867 = vpop.f32.mrb[0].mxu0
    %2868 = vdwg.mxu0
    %2869 = vmatprep.subr.bf16.mxu0 %v2537
    %2870 = vmatpush1.bf16.msra.mxu0 %v2536
    %2871 = vmatprep.subr.bf16.mxu0 %v2541
    %2872 = vmatpush1.bf16.msra.mxu0 %v2540
    %2873 = vmatprep.subr.bf16.mxu0 %v2545
    %2874 = vmatpush1.bf16.msra.mxu0 %v2544
    %2875 = vmatprep.subr.bf16.mxu0 %v2549
    %2876 = vmatpush1.bf16.msra.mxu0 %v2548
    %2877 = vmatprep.subr.bf16.mxu0 %v2553
    %2878 = vmatpush1.bf16.msra.mxu0 %v2552
    %2879 = vmatprep.subr.bf16.mxu0 %v2557
    %2880 = vmatpush1.bf16.msra.mxu0 %v2556
    %2881 = vmatprep.subr.bf16.mxu0 %v2561
    %2882 = vmatpush1.bf16.msra.mxu0 %v2560
    %2883 = vmatprep.subr.bf16.mxu0 %v2565
    %2884 = vmatpush1.bf16.msra.mxu0 %v2564
    %2885 = vmatprep.subr.bf16.mxu0 0
    %2886 = vmatpush1.bf16.msra.mxu0 0
    %2887 = vmatprep.subr.bf16.mxu0 0
    %2888 = vmatpush1.bf16.msra.mxu0 0
    %2889 = vmatprep.subr.bf16.mxu0 0
    %2890 = vmatpush1.bf16.msra.mxu0 0
    %2891 = vmatprep.subr.bf16.mxu0 0
    %2892 = vmatpush1.bf16.msra.mxu0 0
    %2893 = vmatprep.subr.bf16.mxu0 0
    %2894 = vmatpush1.bf16.msra.mxu0 0
    %2895 = vmatprep.subr.bf16.mxu0 0
    %2896 = vmatpush1.bf16.msra.mxu0 0
    %2897 = vmatprep.subr.bf16.mxu0 0
    %2898 = vmatpush1.bf16.msra.mxu0 0
    %2899 = vmatprep.subr.bf16.mxu0 0
    %2900 = vmatpush1.bf16.msra.mxu0 0
    %2901 = vmatprep.mubr.bf16.mxu0 0
    %2902 = vmatmul.mubr.bf16.gmra.mrb[0].mxu0 %v2827
    %v2903 = vpop.f32.mrb[0].mxu0
    %v2904 = vadd.f32 0.0, %v2903
    %v2905 = vpop.f32.mrb[0].mxu0
    %v2906 = vadd.f32 0.0, %v2905
    %v2907 = vpop.f32.mrb[0].mxu0
    %v2908 = vpop.f32.mrb[0].mxu0
    %2909 = vdwg.mxu0
    %v2910 = vadd.f32 %v2823, %v2863
    %v2911 = vadd.f32 %v2824, %v2865
    %v2912 = vadd.f32 %v2825, %v2904
    %v2913 = vadd.f32 %v2826, %v2906
    %v2914 = vxor.u32 %v2910, 2147483648
    %v2915 = vxor.u32 %v2911, 2147483648
    %v2916 = vxor.u32 %v2912, 2147483648
    %v2917 = vmul.f32 %v2914, 1.442695
    %v2918 = vpow.pop %v2917
    %v2919 = vmul.f32 %v2915, 1.442695
    %v2920 = vpow.pop %v2919
    %v2921 = vmul.f32 %v2916, 1.442695
    %v2922 = vpow.pop %v2921
    %v2923 = vadd.f32 %v2918, 1.0
    %v2924 = vadd.f32 %v2920, 1.0
    %v2925 = vadd.f32 %v2922, 1.0
    %v2926 = vrcp.pop %v2923
    %v2927 = vmul.f32 1.0, %v2926
    %v2928 = vrcp.pop %v2924
    %v2929 = vmul.f32 1.0, %v2928
    %v2930 = vrcp.pop %v2925
    %v2931 = vmul.f32 1.0, %v2930
    %v2932 = vtanh.pop %v2913
    %v2933 = vmul.f32 %v2929, %v2820
    %v2934 = vmul.f32 %v2927, %v2932
    %v2935 = vadd.f32 %v2933, %v2934
    %v2936 = vtanh.pop %v2935
    %v2937 = vmul.f32 %v2931, %v2936
    %v2938 = vld [vmem:[#allocation2 + $0x60] sm:$0xff]
    %v2939 = vld [vmem:[#allocation2 + $0x68] sm:$0xff]
    %v2940 = vld [vmem:[#allocation2 + $0x70] sm:$0xff]
    %v2941 = vld [vmem:[#allocation2 + $0x78] sm:$0xff]
    %v2942 = vpack.c.bf16 %v2937, %v2937
    %2943 = vmatprep.subr.bf16.mxu0 %v2535
    %2944 = vmatpush1.bf16.msra.mxu0 %v2534
    %2945 = vmatprep.subr.bf16.mxu0 %v2539
    %2946 = vmatpush1.bf16.msra.mxu0 %v2538
    %2947 = vmatprep.subr.bf16.mxu0 %v2543
    %2948 = vmatpush1.bf16.msra.mxu0 %v2542
    %2949 = vmatprep.subr.bf16.mxu0 %v2547
    %2950 = vmatpush1.bf16.msra.mxu0 %v2546
    %2951 = vmatprep.subr.bf16.mxu0 %v2551
    %2952 = vmatpush1.bf16.msra.mxu0 %v2550
    %2953 = vmatprep.subr.bf16.mxu0 %v2555
    %2954 = vmatpush1.bf16.msra.mxu0 %v2554
    %2955 = vmatprep.subr.bf16.mxu0 %v2559
    %2956 = vmatpush1.bf16.msra.mxu0 %v2558
    %2957 = vmatprep.subr.bf16.mxu0 %v2563
    %2958 = vmatpush1.bf16.msra.mxu0 %v2562
    %2959 = vmatprep.subr.bf16.mxu0 0
    %2960 = vmatpush1.bf16.msra.mxu0 0
    %2961 = vmatprep.subr.bf16.mxu0 0
    %2962 = vmatpush1.bf16.msra.mxu0 0
    %2963 = vmatprep.subr.bf16.mxu0 0
    %2964 = vmatpush1.bf16.msra.mxu0 0
    %2965 = vmatprep.subr.bf16.mxu0 0
    %2966 = vmatpush1.bf16.msra.mxu0 0
    %2967 = vmatprep.subr.bf16.mxu0 0
    %2968 = vmatpush1.bf16.msra.mxu0 0
    %2969 = vmatprep.subr.bf16.mxu0 0
    %2970 = vmatpush1.bf16.msra.mxu0 0
    %2971 = vmatprep.subr.bf16.mxu0 0
    %2972 = vmatpush1.bf16.msra.mxu0 0
    %2973 = vmatprep.subr.bf16.mxu0 0
    %2974 = vmatpush1.bf16.msra.mxu0 0
    %2975 = vmatprep.mubr.bf16.mxu0 0
    %2976 = vmatmul.mubr.bf16.gmra.mrb[0].mxu0 %v2942
    %v2977 = vpop.f32.mrb[0].mxu0
    %v2978 = vadd.f32 0.0, %v2977
    %v2979 = vpop.f32.mrb[0].mxu0
    %v2980 = vadd.f32 0.0, %v2979
    %v2981 = vpop.f32.mrb[0].mxu0
    %v2982 = vpop.f32.mrb[0].mxu0
    %2983 = vdwg.mxu0
    %2984 = vmatprep.subr.bf16.mxu0 %v2537
    %2985 = vmatpush1.bf16.msra.mxu0 %v2536
    %2986 = vmatprep.subr.bf16.mxu0 %v2541
    %2987 = vmatpush1.bf16.msra.mxu0 %v2540
    %2988 = vmatprep.subr.bf16.mxu0 %v2545
    %2989 = vmatpush1.bf16.msra.mxu0 %v2544
    %2990 = vmatprep.subr.bf16.mxu0 %v2549
    %2991 = vmatpush1.bf16.msra.mxu0 %v2548
    %2992 = vmatprep.subr.bf16.mxu0 %v2553
    %2993 = vmatpush1.bf16.msra.mxu0 %v2552
    %2994 = vmatprep.subr.bf16.mxu0 %v2557
    %2995 = vmatpush1.bf16.msra.mxu0 %v2556
    %2996 = vmatprep.subr.bf16.mxu0 %v2561
    %2997 = vmatpush1.bf16.msra.mxu0 %v2560
    %2998 = vmatprep.subr.bf16.mxu0 %v2565
    %2999 = vmatpush1.bf16.msra.mxu0 %v2564
    %3000 = vmatprep.subr.bf16.mxu0 0
    %3001 = vmatpush1.bf16.msra.mxu0 0
    %3002 = vmatprep.subr.bf16.mxu0 0
    %3003 = vmatpush1.bf16.msra.mxu0 0
    %3004 = vmatprep.subr.bf16.mxu0 0
    %3005 = vmatpush1.bf16.msra.mxu0 0
    %3006 = vmatprep.subr.bf16.mxu0 0
    %3007 = vmatpush1.bf16.msra.mxu0 0
    %3008 = vmatprep.subr.bf16.mxu0 0
    %3009 = vmatpush1.bf16.msra.mxu0 0
    %3010 = vmatprep.subr.bf16.mxu0 0
    %3011 = vmatpush1.bf16.msra.mxu0 0
    %3012 = vmatprep.subr.bf16.mxu0 0
    %3013 = vmatpush1.bf16.msra.mxu0 0
    %3014 = vmatprep.subr.bf16.mxu0 0
    %3015 = vmatpush1.bf16.msra.mxu0 0
    %3016 = vmatprep.mubr.bf16.mxu0 0
    %3017 = vmatmul.mubr.bf16.gmra.mrb[0].mxu0 %v2942
    %v3018 = vpop.f32.mrb[0].mxu0
    %v3019 = vadd.f32 0.0, %v3018
    %v3020 = vpop.f32.mrb[0].mxu0
    %v3021 = vadd.f32 0.0, %v3020
    %v3022 = vpop.f32.mrb[0].mxu0
    %v3023 = vpop.f32.mrb[0].mxu0
    %3024 = vdwg.mxu0
    %v3025 = vadd.f32 %v2938, %v2978
    %v3026 = vadd.f32 %v2939, %v2980
    %v3027 = vadd.f32 %v2940, %v3019
    %v3028 = vadd.f32 %v2941, %v3021
    %v3029 = vxor.u32 %v3025, 2147483648
    %v3030 = vxor.u32 %v3026, 2147483648
    %v3031 = vxor.u32 %v3027, 2147483648
    %v3032 = vmul.f32 %v3029, 1.442695
    %v3033 = vpow.pop %v3032
    %v3034 = vmul.f32 %v3030, 1.442695
    %v3035 = vpow.pop %v3034
    %v3036 = vmul.f32 %v3031, 1.442695
    %v3037 = vpow.pop %v3036
    %v3038 = vadd.f32 %v3033, 1.0
    %v3039 = vadd.f32 %v3035, 1.0
    %v3040 = vadd.f32 %v3037, 1.0
    %v3041 = vrcp.pop %v3038
    %v3042 = vmul.f32 1.0, %v3041
    %v3043 = vrcp.pop %v3039
    %v3044 = vmul.f32 1.0, %v3043
    %v3045 = vrcp.pop %v3040
    %v3046 = vmul.f32 1.0, %v3045
    %v3047 = vtanh.pop %v3028
    %v3048 = vmul.f32 %v3044, %v2935
    %v3049 = vmul.f32 %v3042, %v3047
    %v3050 = vadd.f32 %v3048, %v3049
    %v3051 = vtanh.pop %v3050
    %v3052 = vmul.f32 %v3046, %v3051
    %v3053 = vld [vmem:[#allocation2 + $0x80] sm:$0xff]
    %v3054 = vld [vmem:[#allocation2 + $0x88] sm:$0xff]
    %v3055 = vld [vmem:[#allocation2 + $0x90] sm:$0xff]
    %v3056 = vld [vmem:[#allocation2 + $0x98] sm:$0xff]
    %v3057 = vpack.c.bf16 %v3052, %v3052
    %3058 = vmatprep.subr.bf16.mxu0 %v2535
    %3059 = vmatpush1.bf16.msra.mxu0 %v2534
    %3060 = vmatprep.subr.bf16.mxu0 %v2539
    %3061 = vmatpush1.bf16.msra.mxu0 %v2538
    %3062 = vmatprep.subr.bf16.mxu0 %v2543
    %3063 = vmatpush1.bf16.msra.mxu0 %v2542
    %3064 = vmatprep.subr.bf16.mxu0 %v2547
    %3065 = vmatpush1.bf16.msra.mxu0 %v2546
    %3066 = vmatprep.subr.bf16.mxu0 %v2551
    %3067 = vmatpush1.bf16.msra.mxu0 %v2550
    %3068 = vmatprep.subr.bf16.mxu0 %v2555
    %3069 = vmatpush1.bf16.msra.mxu0 %v2554
    %3070 = vmatprep.subr.bf16.mxu0 %v2559
    %3071 = vmatpush1.bf16.msra.mxu0 %v2558
    %3072 = vmatprep.subr.bf16.mxu0 %v2563
    %3073 = vmatpush1.bf16.msra.mxu0 %v2562
    %3074 = vmatprep.subr.bf16.mxu0 0
    %3075 = vmatpush1.bf16.msra.mxu0 0
    %3076 = vmatprep.subr.bf16.mxu0 0
    %3077 = vmatpush1.bf16.msra.mxu0 0
    %3078 = vmatprep.subr.bf16.mxu0 0
    %3079 = vmatpush1.bf16.msra.mxu0 0
    %3080 = vmatprep.subr.bf16.mxu0 0
    %3081 = vmatpush1.bf16.msra.mxu0 0
    %3082 = vmatprep.subr.bf16.mxu0 0
    %3083 = vmatpush1.bf16.msra.mxu0 0
    %3084 = vmatprep.subr.bf16.mxu0 0
    %3085 = vmatpush1.bf16.msra.mxu0 0
    %3086 = vmatprep.subr.bf16.mxu0 0
    %3087 = vmatpush1.bf16.msra.mxu0 0
    %3088 = vmatprep.subr.bf16.mxu0 0
    %3089 = vmatpush1.bf16.msra.mxu0 0
    %3090 = vmatprep.mubr.bf16.mxu0 0
    %3091 = vmatmul.mubr.bf16.gmra.mrb[0].mxu0 %v3057
    %v3092 = vpop.f32.mrb[0].mxu0
    %v3093 = vadd.f32 0.0, %v3092
    %v3094 = vpop.f32.mrb[0].mxu0
    %v3095 = vadd.f32 0.0, %v3094
    %v3096 = vpop.f32.mrb[0].mxu0
    %v3097 = vpop.f32.mrb[0].mxu0
    %3098 = vdwg.mxu0
    %3099 = vmatprep.subr.bf16.mxu0 %v2537
    %3100 = vmatpush1.bf16.msra.mxu0 %v2536
    %3101 = vmatprep.subr.bf16.mxu0 %v2541
    %3102 = vmatpush1.bf16.msra.mxu0 %v2540
    %3103 = vmatprep.subr.bf16.mxu0 %v2545
    %3104 = vmatpush1.bf16.msra.mxu0 %v2544
    %3105 = vmatprep.subr.bf16.mxu0 %v2549
    %3106 = vmatpush1.bf16.msra.mxu0 %v2548
    %3107 = vmatprep.subr.bf16.mxu0 %v2553
    %3108 = vmatpush1.bf16.msra.mxu0 %v2552
    %3109 = vmatprep.subr.bf16.mxu0 %v2557
    %3110 = vmatpush1.bf16.msra.mxu0 %v2556
    %3111 = vmatprep.subr.bf16.mxu0 %v2561
    %3112 = vmatpush1.bf16.msra.mxu0 %v2560
    %3113 = vmatprep.subr.bf16.mxu0 %v2565
    %3114 = vmatpush1.bf16.msra.mxu0 %v2564
    %3115 = vmatprep.subr.bf16.mxu0 0
    %3116 = vmatpush1.bf16.msra.mxu0 0
    %3117 = vmatprep.subr.bf16.mxu0 0
    %3118 = vmatpush1.bf16.msra.mxu0 0
    %3119 = vmatprep.subr.bf16.mxu0 0
    %3120 = vmatpush1.bf16.msra.mxu0 0
    %3121 = vmatprep.subr.bf16.mxu0 0
    %3122 = vmatpush1.bf16.msra.mxu0 0
    %3123 = vmatprep.subr.bf16.mxu0 0
    %3124 = vmatpush1.bf16.msra.mxu0 0
    %3125 = vmatprep.subr.bf16.mxu0 0
    %3126 = vmatpush1.bf16.msra.mxu0 0
    %3127 = vmatprep.subr.bf16.mxu0 0
    %3128 = vmatpush1.bf16.msra.mxu0 0
    %3129 = vmatprep.subr.bf16.mxu0 0
    %3130 = vmatpush1.bf16.msra.mxu0 0
    %3131 = vmatprep.mubr.bf16.mxu0 0
    %3132 = vmatmul.mubr.bf16.gmra.mrb[0].mxu0 %v3057
    %v3133 = vpop.f32.mrb[0].mxu0
    %v3134 = vadd.f32 0.0, %v3133
    %v3135 = vpop.f32.mrb[0].mxu0
    %v3136 = vadd.f32 0.0, %v3135
    %v3137 = vpop.f32.mrb[0].mxu0
    %v3138 = vpop.f32.mrb[0].mxu0
    %3139 = vdwg.mxu0
    %v3140 = vadd.f32 %v3053, %v3093
    %v3141 = vadd.f32 %v3054, %v3095
    %v3142 = vadd.f32 %v3055, %v3134
    %v3143 = vadd.f32 %v3056, %v3136
    %v3144 = vxor.u32 %v3140, 2147483648
    %v3145 = vxor.u32 %v3141, 2147483648
    %v3146 = vxor.u32 %v3142, 2147483648
    %v3147 = vmul.f32 %v3144, 1.442695
    %v3148 = vpow.pop %v3147
    %v3149 = vmul.f32 %v3145, 1.442695
    %v3150 = vpow.pop %v3149
    %v3151 = vmul.f32 %v3146, 1.442695
    %v3152 = vpow.pop %v3151
    %v3153 = vadd.f32 %v3148, 1.0
    %v3154 = vadd.f32 %v3150, 1.0
    %v3155 = vadd.f32 %v3152, 1.0
    %v3156 = vrcp.pop %v3153
    %v3157 = vmul.f32 1.0, %v3156
    %v3158 = vrcp.pop %v3154
    %v3159 = vmul.f32 1.0, %v3158
    %v3160 = vrcp.pop %v3155
    %v3161 = vmul.f32 1.0, %v3160
    %v3162 = vtanh.pop %v3143
    %v3163 = vmul.f32 %v3159, %v3050
    %v3164 = vmul.f32 %v3157, %v3162
    %v3165 = vadd.f32 %v3163, %v3164
    %v3166 = vtanh.pop %v3165
    %v3167 = vmul.f32 %v3161, %v3166
    %v3168 = vld [vmem:[#allocation2 + $0xa0] sm:$0xff]
    %v3169 = vld [vmem:[#allocation2 + $0xa8] sm:$0xff]
    %v3170 = vld [vmem:[#allocation2 + $0xb0] sm:$0xff]
    %v3171 = vld [vmem:[#allocation2 + $0xb8] sm:$0xff]
    %v3172 = vpack.c.bf16 %v3167, %v3167
    %3173 = vmatprep.subr.bf16.mxu0 %v2535
    %3174 = vmatpush1.bf16.msra.mxu0 %v2534
    %3175 = vmatprep.subr.bf16.mxu0 %v2539
    %3176 = vmatpush1.bf16.msra.mxu0 %v2538
    %3177 = vmatprep.subr.bf16.mxu0 %v2543
    %3178 = vmatpush1.bf16.msra.mxu0 %v2542
    %3179 = vmatprep.subr.bf16.mxu0 %v2547
    %3180 = vmatpush1.bf16.msra.mxu0 %v2546
    %3181 = vmatprep.subr.bf16.mxu0 %v2551
    %3182 = vmatpush1.bf16.msra.mxu0 %v2550
    %3183 = vmatprep.subr.bf16.mxu0 %v2555
    %3184 = vmatpush1.bf16.msra.mxu0 %v2554
    %3185 = vmatprep.subr.bf16.mxu0 %v2559
    %3186 = vmatpush1.bf16.msra.mxu0 %v2558
    %3187 = vmatprep.subr.bf16.mxu0 %v2563
    %3188 = vmatpush1.bf16.msra.mxu0 %v2562
    %3189 = vmatprep.subr.bf16.mxu0 0
    %3190 = vmatpush1.bf16.msra.mxu0 0
    %3191 = vmatprep.subr.bf16.mxu0 0
    %3192 = vmatpush1.bf16.msra.mxu0 0
    %3193 = vmatprep.subr.bf16.mxu0 0
    %3194 = vmatpush1.bf16.msra.mxu0 0
    %3195 = vmatprep.subr.bf16.mxu0 0
    %3196 = vmatpush1.bf16.msra.mxu0 0
    %3197 = vmatprep.subr.bf16.mxu0 0
    %3198 = vmatpush1.bf16.msra.mxu0 0
    %3199 = vmatprep.subr.bf16.mxu0 0
    %3200 = vmatpush1.bf16.msra.mxu0 0
    %3201 = vmatprep.subr.bf16.mxu0 0
    %3202 = vmatpush1.bf16.msra.mxu0 0
    %3203 = vmatprep.subr.bf16.mxu0 0
    %3204 = vmatpush1.bf16.msra.mxu0 0
    %3205 = vmatprep.mubr.bf16.mxu0 0
    %3206 = vmatmul.mubr.bf16.gmra.mrb[0].mxu0 %v3172
    %v3207 = vpop.f32.mrb[0].mxu0
    %v3208 = vadd.f32 0.0, %v3207
    %v3209 = vpop.f32.mrb[0].mxu0
    %v3210 = vadd.f32 0.0, %v3209
    %v3211 = vpop.f32.mrb[0].mxu0
    %v3212 = vpop.f32.mrb[0].mxu0
    %3213 = vdwg.mxu0
    %3214 = vmatprep.subr.bf16.mxu0 %v2537
    %3215 = vmatpush1.bf16.msra.mxu0 %v2536
    %3216 = vmatprep.subr.bf16.mxu0 %v2541
    %3217 = vmatpush1.bf16.msra.mxu0 %v2540
    %3218 = vmatprep.subr.bf16.mxu0 %v2545
    %3219 = vmatpush1.bf16.msra.mxu0 %v2544
    %3220 = vmatprep.subr.bf16.mxu0 %v2549
    %3221 = vmatpush1.bf16.msra.mxu0 %v2548
    %3222 = vmatprep.subr.bf16.mxu0 %v2553
    %3223 = vmatpush1.bf16.msra.mxu0 %v2552
    %3224 = vmatprep.subr.bf16.mxu0 %v2557
    %3225 = vmatpush1.bf16.msra.mxu0 %v2556
    %3226 = vmatprep.subr.bf16.mxu0 %v2561
    %3227 = vmatpush1.bf16.msra.mxu0 %v2560
    %3228 = vmatprep.subr.bf16.mxu0 %v2565
    %3229 = vmatpush1.bf16.msra.mxu0 %v2564
    %3230 = vmatprep.subr.bf16.mxu0 0
    %3231 = vmatpush1.bf16.msra.mxu0 0
    %3232 = vmatprep.subr.bf16.mxu0 0
    %3233 = vmatpush1.bf16.msra.mxu0 0
    %3234 = vmatprep.subr.bf16.mxu0 0
    %3235 = vmatpush1.bf16.msra.mxu0 0
    %3236 = vmatprep.subr.bf16.mxu0 0
    %3237 = vmatpush1.bf16.msra.mxu0 0
    %3238 = vmatprep.subr.bf16.mxu0 0
    %3239 = vmatpush1.bf16.msra.mxu0 0
    %3240 = vmatprep.subr.bf16.mxu0 0
    %3241 = vmatpush1.bf16.msra.mxu0 0
    %3242 = vmatprep.subr.bf16.mxu0 0
    %3243 = vmatpush1.bf16.msra.mxu0 0
    %3244 = vmatprep.subr.bf16.mxu0 0
    %3245 = vmatpush1.bf16.msra.mxu0 0
    %3246 = vmatprep.mubr.bf16.mxu0 0
    %3247 = vmatmul.mubr.bf16.gmra.mrb[0].mxu0 %v3172
    %v3248 = vpop.f32.mrb[0].mxu0
    %v3249 = vadd.f32 0.0, %v3248
    %v3250 = vpop.f32.mrb[0].mxu0
    %v3251 = vadd.f32 0.0, %v3250
    %v3252 = vpop.f32.mrb[0].mxu0
    %v3253 = vpop.f32.mrb[0].mxu0
    %3254 = vdwg.mxu0
    %v3255 = vadd.f32 %v3168, %v3208
    %v3256 = vadd.f32 %v3169, %v3210
    %v3257 = vadd.f32 %v3170, %v3249
    %v3258 = vadd.f32 %v3171, %v3251
    %v3259 = vxor.u32 %v3255, 2147483648
    %v3260 = vxor.u32 %v3256, 2147483648
    %v3261 = vxor.u32 %v3257, 2147483648
    %v3262 = vmul.f32 %v3259, 1.442695
    %v3263 = vpow.pop %v3262
    %v3264 = vmul.f32 %v3260, 1.442695
    %v3265 = vpow.pop %v3264
    %v3266 = vmul.f32 %v3261, 1.442695
    %v3267 = vpow.pop %v3266
    %v3268 = vadd.f32 %v3263, 1.0
    %v3269 = vadd.f32 %v3265, 1.0
    %v3270 = vadd.f32 %v3267, 1.0
    %v3271 = vrcp.pop %v3268
    %v3272 = vmul.f32 1.0, %v3271
    %v3273 = vrcp.pop %v3269
    %v3274 = vmul.f32 1.0, %v3273
    %v3275 = vrcp.pop %v3270
    %v3276 = vmul.f32 1.0, %v3275
    %v3277 = vtanh.pop %v3258
    %v3278 = vmul.f32 %v3274, %v3165
    %v3279 = vmul.f32 %v3272, %v3277
    %v3280 = vadd.f32 %v3278, %v3279
    %v3281 = vtanh.pop %v3280
    %v3282 = vmul.f32 %v3276, %v3281
    %v3283 = vld [vmem:[#allocation2 + $0xc0] sm:$0xff]
    %v3284 = vld [vmem:[#allocation2 + $0xc8] sm:$0xff]
    %v3285 = vld [vmem:[#allocation2 + $0xd0] sm:$0xff]
    %v3286 = vld [vmem:[#allocation2 + $0xd8] sm:$0xff]
    %v3287 = vpack.c.bf16 %v3282, %v3282
    %3288 = vmatprep.subr.bf16.mxu0 %v2535
    %3289 = vmatpush1.bf16.msra.mxu0 %v2534
    %3290 = vmatprep.subr.bf16.mxu0 %v2539
    %3291 = vmatpush1.bf16.msra.mxu0 %v2538
    %3292 = vmatprep.subr.bf16.mxu0 %v2543
    %3293 = vmatpush1.bf16.msra.mxu0 %v2542
    %3294 = vmatprep.subr.bf16.mxu0 %v2547
    %3295 = vmatpush1.bf16.msra.mxu0 %v2546
    %3296 = vmatprep.subr.bf16.mxu0 %v2551
    %3297 = vmatpush1.bf16.msra.mxu0 %v2550
    %3298 = vmatprep.subr.bf16.mxu0 %v2555
    %3299 = vmatpush1.bf16.msra.mxu0 %v2554
    %3300 = vmatprep.subr.bf16.mxu0 %v2559
    %3301 = vmatpush1.bf16.msra.mxu0 %v2558
    %3302 = vmatprep.subr.bf16.mxu0 %v2563
    %3303 = vmatpush1.bf16.msra.mxu0 %v2562
    %3304 = vmatprep.subr.bf16.mxu0 0
    %3305 = vmatpush1.bf16.msra.mxu0 0
    %3306 = vmatprep.subr.bf16.mxu0 0
    %3307 = vmatpush1.bf16.msra.mxu0 0
    %3308 = vmatprep.subr.bf16.mxu0 0
    %3309 = vmatpush1.bf16.msra.mxu0 0
    %3310 = vmatprep.subr.bf16.mxu0 0
    %3311 = vmatpush1.bf16.msra.mxu0 0
    %3312 = vmatprep.subr.bf16.mxu0 0
    %3313 = vmatpush1.bf16.msra.mxu0 0
    %3314 = vmatprep.subr.bf16.mxu0 0
    %3315 = vmatpush1.bf16.msra.mxu0 0
    %3316 = vmatprep.subr.bf16.mxu0 0
    %3317 = vmatpush1.bf16.msra.mxu0 0
    %3318 = vmatprep.subr.bf16.mxu0 0
    %3319 = vmatpush1.bf16.msra.mxu0 0
    %3320 = vmatprep.mubr.bf16.mxu0 0
    %3321 = vmatmul.mubr.bf16.gmra.mrb[0].mxu0 %v3287
    %v3322 = vpop.f32.mrb[0].mxu0
    %v3323 = vadd.f32 0.0, %v3322
    %v3324 = vpop.f32.mrb[0].mxu0
    %v3325 = vadd.f32 0.0, %v3324
    %v3326 = vpop.f32.mrb[0].mxu0
    %v3327 = vpop.f32.mrb[0].mxu0
    %3328 = vdwg.mxu0
    %3329 = vmatprep.subr.bf16.mxu0 %v2537
    %3330 = vmatpush1.bf16.msra.mxu0 %v2536
    %3331 = vmatprep.subr.bf16.mxu0 %v2541
    %3332 = vmatpush1.bf16.msra.mxu0 %v2540
    %3333 = vmatprep.subr.bf16.mxu0 %v2545
    %3334 = vmatpush1.bf16.msra.mxu0 %v2544
    %3335 = vmatprep.subr.bf16.mxu0 %v2549
    %3336 = vmatpush1.bf16.msra.mxu0 %v2548
    %3337 = vmatprep.subr.bf16.mxu0 %v2553
    %3338 = vmatpush1.bf16.msra.mxu0 %v2552
    %3339 = vmatprep.subr.bf16.mxu0 %v2557
    %3340 = vmatpush1.bf16.msra.mxu0 %v2556
    %3341 = vmatprep.subr.bf16.mxu0 %v2561
    %3342 = vmatpush1.bf16.msra.mxu0 %v2560
    %3343 = vmatprep.subr.bf16.mxu0 %v2565
    %3344 = vmatpush1.bf16.msra.mxu0 %v2564
    %3345 = vmatprep.subr.bf16.mxu0 0
    %3346 = vmatpush1.bf16.msra.mxu0 0
    %3347 = vmatprep.subr.bf16.mxu0 0
    %3348 = vmatpush1.bf16.msra.mxu0 0
    %3349 = vmatprep.subr.bf16.mxu0 0
    %3350 = vmatpush1.bf16.msra.mxu0 0
    %3351 = vmatprep.subr.bf16.mxu0 0
    %3352 = vmatpush1.bf16.msra.mxu0 0
    %3353 = vmatprep.subr.bf16.mxu0 0
    %3354 = vmatpush1.bf16.msra.mxu0 0
    %3355 = vmatprep.subr.bf16.mxu0 0
    %3356 = vmatpush1.bf16.msra.mxu0 0
    %3357 = vmatprep.subr.bf16.mxu0 0
    %3358 = vmatpush1.bf16.msra.mxu0 0
    %3359 = vmatprep.subr.bf16.mxu0 0
    %3360 = vmatpush1.bf16.msra.mxu0 0
    %3361 = vmatprep.mubr.bf16.mxu0 0
    %3362 = vmatmul.mubr.bf16.gmra.mrb[0].mxu0 %v3287
    %v3363 = vpop.f32.mrb[0].mxu0
    %v3364 = vadd.f32 0.0, %v3363
    %v3365 = vpop.f32.mrb[0].mxu0
    %v3366 = vadd.f32 0.0, %v3365
    %v3367 = vpop.f32.mrb[0].mxu0
    %v3368 = vpop.f32.mrb[0].mxu0
    %3369 = vdwg.mxu0
    %v3370 = vadd.f32 %v3283, %v3323
    %v3371 = vadd.f32 %v3284, %v3325
    %v3372 = vadd.f32 %v3285, %v3364
    %v3373 = vadd.f32 %v3286, %v3366
    %v3374 = vxor.u32 %v3370, 2147483648
    %v3375 = vxor.u32 %v3371, 2147483648
    %v3376 = vxor.u32 %v3372, 2147483648
    %v3377 = vmul.f32 %v3374, 1.442695
    %v3378 = vpow.pop %v3377
    %v3379 = vmul.f32 %v3375, 1.442695
    %v3380 = vpow.pop %v3379
    %v3381 = vmul.f32 %v3376, 1.442695
    %v3382 = vpow.pop %v3381
    %v3383 = vadd.f32 %v3378, 1.0
    %v3384 = vadd.f32 %v3380, 1.0
    %v3385 = vadd.f32 %v3382, 1.0
    %v3386 = vrcp.pop %v3383
    %v3387 = vmul.f32 1.0, %v3386
    %v3388 = vrcp.pop %v3384
    %v3389 = vmul.f32 1.0, %v3388
    %v3390 = vrcp.pop %v3385
    %v3391 = vmul.f32 1.0, %v3390
    %v3392 = vtanh.pop %v3373
    %v3393 = vmul.f32 %v3389, %v3280
    %v3394 = vmul.f32 %v3387, %v3392
    %v3395 = vadd.f32 %v3393, %v3394
    %v3396 = vtanh.pop %v3395
    %v3397 = vmul.f32 %v3391, %v3396
    %v3398 = vld [vmem:[#allocation2 + $0xe0] sm:$0xff]
    %v3399 = vld [vmem:[#allocation2 + $0xe8] sm:$0xff]
    %v3400 = vld [vmem:[#allocation2 + $0xf0] sm:$0xff]
    %v3401 = vld [vmem:[#allocation2 + $0xf8] sm:$0xff]
    %v3402 = vpack.c.bf16 %v3397, %v3397
    %3403 = vmatprep.subr.bf16.mxu0 %v2535
    %3404 = vmatpush1.bf16.msra.mxu0 %v2534
    %3405 = vmatprep.subr.bf16.mxu0 %v2539
    %3406 = vmatpush1.bf16.msra.mxu0 %v2538
    %3407 = vmatprep.subr.bf16.mxu0 %v2543
    %3408 = vmatpush1.bf16.msra.mxu0 %v2542
    %3409 = vmatprep.subr.bf16.mxu0 %v2547
    %3410 = vmatpush1.bf16.msra.mxu0 %v2546
    %3411 = vmatprep.subr.bf16.mxu0 %v2551
    %3412 = vmatpush1.bf16.msra.mxu0 %v2550
    %3413 = vmatprep.subr.bf16.mxu0 %v2555
    %3414 = vmatpush1.bf16.msra.mxu0 %v2554
    %3415 = vmatprep.subr.bf16.mxu0 %v2559
    %3416 = vmatpush1.bf16.msra.mxu0 %v2558
    %3417 = vmatprep.subr.bf16.mxu0 %v2563
    %3418 = vmatpush1.bf16.msra.mxu0 %v2562
    %3419 = vmatprep.subr.bf16.mxu0 0
    %3420 = vmatpush1.bf16.msra.mxu0 0
    %3421 = vmatprep.subr.bf16.mxu0 0
    %3422 = vmatpush1.bf16.msra.mxu0 0
    %3423 = vmatprep.subr.bf16.mxu0 0
    %3424 = vmatpush1.bf16.msra.mxu0 0
    %3425 = vmatprep.subr.bf16.mxu0 0
    %3426 = vmatpush1.bf16.msra.mxu0 0
    %3427 = vmatprep.subr.bf16.mxu0 0
    %3428 = vmatpush1.bf16.msra.mxu0 0
    %3429 = vmatprep.subr.bf16.mxu0 0
    %3430 = vmatpush1.bf16.msra.mxu0 0
    %3431 = vmatprep.subr.bf16.mxu0 0
    %3432 = vmatpush1.bf16.msra.mxu0 0
    %3433 = vmatprep.subr.bf16.mxu0 0
    %3434 = vmatpush1.bf16.msra.mxu0 0
    %3435 = vmatprep.mubr.bf16.mxu0 0
    %3436 = vmatmul.mubr.bf16.gmra.mrb[0].mxu0 %v3402
    %v3437 = vpop.f32.mrb[0].mxu0
    %v3438 = vadd.f32 0.0, %v3437
    %v3439 = vpop.f32.mrb[0].mxu0
    %v3440 = vadd.f32 0.0, %v3439
    %v3441 = vpop.f32.mrb[0].mxu0
    %v3442 = vpop.f32.mrb[0].mxu0
    %3443 = vdwg.mxu0
    %3444 = vmatprep.subr.bf16.mxu0 %v2537
    %3445 = vmatpush1.bf16.msra.mxu0 %v2536
    %3446 = vmatprep.subr.bf16.mxu0 %v2541
    %3447 = vmatpush1.bf16.msra.mxu0 %v2540
    %3448 = vmatprep.subr.bf16.mxu0 %v2545
    %3449 = vmatpush1.bf16.msra.mxu0 %v2544
    %3450 = vmatprep.subr.bf16.mxu0 %v2549
    %3451 = vmatpush1.bf16.msra.mxu0 %v2548
    %3452 = vmatprep.subr.bf16.mxu0 %v2553
    %3453 = vmatpush1.bf16.msra.mxu0 %v2552
    %3454 = vmatprep.subr.bf16.mxu0 %v2557
    %3455 = vmatpush1.bf16.msra.mxu0 %v2556
    %3456 = vmatprep.subr.bf16.mxu0 %v2561
    %3457 = vmatpush1.bf16.msra.mxu0 %v2560
    %3458 = vmatprep.subr.bf16.mxu0 %v2565
    %3459 = vmatpush1.bf16.msra.mxu0 %v2564
    %3460 = vmatprep.subr.bf16.mxu0 0
    %3461 = vmatpush1.bf16.msra.mxu0 0
    %3462 = vmatprep.subr.bf16.mxu0 0
    %3463 = vmatpush1.bf16.msra.mxu0 0
    %3464 = vmatprep.subr.bf16.mxu0 0
    %3465 = vmatpush1.bf16.msra.mxu0 0
    %3466 = vmatprep.subr.bf16.mxu0 0
    %3467 = vmatpush1.bf16.msra.mxu0 0
    %3468 = vmatprep.subr.bf16.mxu0 0
    %3469 = vmatpush1.bf16.msra.mxu0 0
    %3470 = vmatprep.subr.bf16.mxu0 0
    %3471 = vmatpush1.bf16.msra.mxu0 0
    %3472 = vmatprep.subr.bf16.mxu0 0
    %3473 = vmatpush1.bf16.msra.mxu0 0
    %3474 = vmatprep.subr.bf16.mxu0 0
    %3475 = vmatpush1.bf16.msra.mxu0 0
    %3476 = vmatprep.mubr.bf16.mxu0 0
    %3477 = vmatmul.mubr.bf16.gmra.mrb[0].mxu0 %v3402
    %v3478 = vpop.f32.mrb[0].mxu0
    %v3479 = vadd.f32 0.0, %v3478
    %v3480 = vpop.f32.mrb[0].mxu0
    %v3481 = vadd.f32 0.0, %v3480
    %v3482 = vpop.f32.mrb[0].mxu0
    %v3483 = vpop.f32.mrb[0].mxu0
    %3484 = vdwg.mxu0
    %v3485 = vadd.f32 %v3398, %v3438
    %v3486 = vadd.f32 %v3399, %v3440
    %v3487 = vadd.f32 %v3400, %v3479
    %v3488 = vadd.f32 %v3401, %v3481
    %v3489 = vxor.u32 %v3485, 2147483648
    %v3490 = vxor.u32 %v3486, 2147483648
    %v3491 = vxor.u32 %v3487, 2147483648
    %v3492 = vmul.f32 %v3489, 1.442695
    %v3493 = vpow.pop %v3492
    %v3494 = vmul.f32 %v3490, 1.442695
    %v3495 = vpow.pop %v3494
    %v3496 = vmul.f32 %v3491, 1.442695
    %v3497 = vpow.pop %v3496
    %v3498 = vadd.f32 %v3493, 1.0
    %v3499 = vadd.f32 %v3495, 1.0
    %v3500 = vadd.f32 %v3497, 1.0
    %v3501 = vrcp.pop %v3498
    %v3502 = vmul.f32 1.0, %v3501
    %v3503 = vrcp.pop %v3499
    %v3504 = vmul.f32 1.0, %v3503
    %v3505 = vrcp.pop %v3500
    %v3506 = vmul.f32 1.0, %v3505
    %v3507 = vtanh.pop %v3488
    %v3508 = vmul.f32 %v3504, %v3395
    %v3509 = vmul.f32 %v3502, %v3507
    %v3510 = vadd.f32 %v3508, %v3509
    %v3511 = vtanh.pop %v3510
    %v3512 = vmul.f32 %v3506, %v3511
    %s3513 = sld [smem:[#allocation4]]
    %s3514 = sshra.s32 %s3513, 3
    %s3515 = sand.u32 %s3513, 7
    %s3516 = sshra.s32 %s3513, 3
    %s3517 = sand.u32 %s3513, 7
    %s3518 = smul.u32 %s3514, 4
    %s3519 = smul.u32 %s3518, 8
    %s3520 = sadd.s32 %s3519, %s3517
    %s3521 = scalar_lea.vmem [#allocation13], %s3520
    %v3522 = vld [vmem:[%s3521] ss:$8 sm:$0xf]
    %v3523 = vlaneseq
    %vm3524 = vcmp.ge.s32.totalorder %v3523, 0
    %vm3525 = vcmp.lt.s32.totalorder %v3523, 512
    %vm3526 = vmand %vm3524, %vm3525
    %3527 = vst.msk [vmem:[#allocation2] ss:$8 sm:$0xf] %vm3526, %v3522
    %3528 = vst.msk [vmem:[#allocation2] ss:$8 sm:$0x0] %vm3526, %v3522
    %s3529 = sld [smem:[#allocation4 + $0x1]]
    %s3530 = sshra.s32 %s3529, 3
    %s3531 = sand.u32 %s3529, 7
    %s3532 = sshra.s32 %s3529, 3
    %s3533 = sand.u32 %s3529, 7
    %s3534 = smul.u32 %s3530, 4
    %s3535 = smul.u32 %s3534, 8
    %s3536 = sadd.s32 %s3535, %s3533
    %s3537 = scalar_lea.vmem [#allocation13], %s3536
    %v3538 = vld [vmem:[%s3537] ss:$8 sm:$0xf]
    %s3539 = scalar_lea.vmem [#allocation2], 1
    %3540 = vst.msk [vmem:[%s3539] ss:$8 sm:$0xf] %vm3526, %v3538
    %3541 = vst.msk [vmem:[%s3539] ss:$8 sm:$0x0] %vm3526, %v3538
    %s3542 = sld [smem:[#allocation4 + $0x2]]
    %s3543 = sshra.s32 %s3542, 3
    %s3544 = sand.u32 %s3542, 7
    %s3545 = sshra.s32 %s3542, 3
    %s3546 = sand.u32 %s3542, 7
    %s3547 = smul.u32 %s3543, 4
    %s3548 = smul.u32 %s3547, 8
    %s3549 = sadd.s32 %s3548, %s3546
    %s3550 = scalar_lea.vmem [#allocation13], %s3549
    %v3551 = vld [vmem:[%s3550] ss:$8 sm:$0xf]
    %s3552 = scalar_lea.vmem [#allocation2], 2
    %3553 = vst.msk [vmem:[%s3552] ss:$8 sm:$0xf] %vm3526, %v3551
    %3554 = vst.msk [vmem:[%s3552] ss:$8 sm:$0x0] %vm3526, %v3551
    %s3555 = sld [smem:[#allocation4 + $0x3]]
    %s3556 = sshra.s32 %s3555, 3
    %s3557 = sand.u32 %s3555, 7
    %s3558 = sshra.s32 %s3555, 3
    %s3559 = sand.u32 %s3555, 7
    %s3560 = smul.u32 %s3556, 4
    %s3561 = smul.u32 %s3560, 8
    %s3562 = sadd.s32 %s3561, %s3559
    %s3563 = scalar_lea.vmem [#allocation13], %s3562
    %v3564 = vld [vmem:[%s3563] ss:$8 sm:$0xf]
    %s3565 = scalar_lea.vmem [#allocation2], 3
    %3566 = vst.msk [vmem:[%s3565] ss:$8 sm:$0xf] %vm3526, %v3564
    %3567 = vst.msk [vmem:[%s3565] ss:$8 sm:$0x0] %vm3526, %v3564
    %s3568 = sld [smem:[#allocation4 + $0x4]]
    %s3569 = sshra.s32 %s3568, 3
    %s3570 = sand.u32 %s3568, 7
    %s3571 = sshra.s32 %s3568, 3
    %s3572 = sand.u32 %s3568, 7
    %s3573 = smul.u32 %s3569, 4
    %s3574 = smul.u32 %s3573, 8
    %s3575 = sadd.s32 %s3574, %s3572
    %s3576 = scalar_lea.vmem [#allocation13], %s3575
    %v3577 = vld [vmem:[%s3576] ss:$8 sm:$0xf]
    %s3578 = scalar_lea.vmem [#allocation2], 4
    %3579 = vst.msk [vmem:[%s3578] ss:$8 sm:$0xf] %vm3526, %v3577
    %3580 = vst.msk [vmem:[%s3578] ss:$8 sm:$0x0] %vm3526, %v3577
    %s3581 = sld [smem:[#allocation4 + $0x5]]
    %s3582 = sshra.s32 %s3581, 3
    %s3583 = sand.u32 %s3581, 7
    %s3584 = sshra.s32 %s3581, 3
    %s3585 = sand.u32 %s3581, 7
    %s3586 = smul.u32 %s3582, 4
    %s3587 = smul.u32 %s3586, 8
    %s3588 = sadd.s32 %s3587, %s3585
    %s3589 = scalar_lea.vmem [#allocation13], %s3588
    %v3590 = vld [vmem:[%s3589] ss:$8 sm:$0xf]
    %s3591 = scalar_lea.vmem [#allocation2], 5
    %3592 = vst.msk [vmem:[%s3591] ss:$8 sm:$0xf] %vm3526, %v3590
    %3593 = vst.msk [vmem:[%s3591] ss:$8 sm:$0x0] %vm3526, %v3590
    %s3594 = sld [smem:[#allocation4 + $0x6]]
    %s3595 = sshra.s32 %s3594, 3
    %s3596 = sand.u32 %s3594, 7
    %s3597 = sshra.s32 %s3594, 3
    %s3598 = sand.u32 %s3594, 7
    %s3599 = smul.u32 %s3595, 4
    %s3600 = smul.u32 %s3599, 8
    %s3601 = sadd.s32 %s3600, %s3598
    %s3602 = scalar_lea.vmem [#allocation13], %s3601
    %v3603 = vld [vmem:[%s3602] ss:$8 sm:$0xf]
    %s3604 = scalar_lea.vmem [#allocation2], 6
    %3605 = vst.msk [vmem:[%s3604] ss:$8 sm:$0xf] %vm3526, %v3603
    %3606 = vst.msk [vmem:[%s3604] ss:$8 sm:$0x0] %vm3526, %v3603
    %s3607 = sld [smem:[#allocation4 + $0x7]]
    %s3608 = sshra.s32 %s3607, 3
    %s3609 = sand.u32 %s3607, 7
    %s3610 = sshra.s32 %s3607, 3
    %s3611 = sand.u32 %s3607, 7
    %s3612 = smul.u32 %s3608, 4
    %s3613 = smul.u32 %s3612, 8
    %s3614 = sadd.s32 %s3613, %s3611
    %s3615 = scalar_lea.vmem [#allocation13], %s3614
    %v3616 = vld [vmem:[%s3615] ss:$8 sm:$0xf]
    %s3617 = scalar_lea.vmem [#allocation2], 7
    %3618 = vst.msk [vmem:[%s3617] ss:$8 sm:$0xf] %vm3526, %v3616
    %3619 = vst.msk [vmem:[%s3617] ss:$8 sm:$0x0] %vm3526, %v3616
    %s3620 = sld [smem:[#allocation4 + $0x8]]
    %s3621 = sshra.s32 %s3620, 3
    %s3622 = sand.u32 %s3620, 7
    %s3623 = sshra.s32 %s3620, 3
    %s3624 = sand.u32 %s3620, 7
    %s3625 = smul.u32 %s3621, 4
    %s3626 = smul.u32 %s3625, 8
    %s3627 = sadd.s32 %s3626, %s3624
    %s3628 = scalar_lea.vmem [#allocation13], %s3627
    %v3629 = vld [vmem:[%s3628] ss:$8 sm:$0xf]
    %s3630 = scalar_lea.vmem [#allocation2], 32
    %3631 = vst.msk [vmem:[%s3630] ss:$8 sm:$0xf] %vm3526, %v3629
    %3632 = vst.msk [vmem:[%s3630] ss:$8 sm:$0x0] %vm3526, %v3629
    %s3633 = sld [smem:[#allocation4 + $0x9]]
    %s3634 = sshra.s32 %s3633, 3
    %s3635 = sand.u32 %s3633, 7
    %s3636 = sshra.s32 %s3633, 3
    %s3637 = sand.u32 %s3633, 7
    %s3638 = smul.u32 %s3634, 4
    %s3639 = smul.u32 %s3638, 8
    %s3640 = sadd.s32 %s3639, %s3637
    %s3641 = scalar_lea.vmem [#allocation13], %s3640
    %v3642 = vld [vmem:[%s3641] ss:$8 sm:$0xf]
    %s3643 = scalar_lea.vmem [#allocation2], 33
    %3644 = vst.msk [vmem:[%s3643] ss:$8 sm:$0xf] %vm3526, %v3642
    %3645 = vst.msk [vmem:[%s3643] ss:$8 sm:$0x0] %vm3526, %v3642
    %s3646 = sld [smem:[#allocation4 + $0xa]]
    %s3647 = sshra.s32 %s3646, 3
    %s3648 = sand.u32 %s3646, 7
    %s3649 = sshra.s32 %s3646, 3
    %s3650 = sand.u32 %s3646, 7
    %s3651 = smul.u32 %s3647, 4
    %s3652 = smul.u32 %s3651, 8
    %s3653 = sadd.s32 %s3652, %s3650
    %s3654 = scalar_lea.vmem [#allocation13], %s3653
    %v3655 = vld [vmem:[%s3654] ss:$8 sm:$0xf]
    %s3656 = scalar_lea.vmem [#allocation2], 34
    %3657 = vst.msk [vmem:[%s3656] ss:$8 sm:$0xf] %vm3526, %v3655
    %3658 = vst.msk [vmem:[%s3656] ss:$8 sm:$0x0] %vm3526, %v3655
    %s3659 = sld [smem:[#allocation4 + $0xb]]
    %s3660 = sshra.s32 %s3659, 3
    %s3661 = sand.u32 %s3659, 7
    %s3662 = sshra.s32 %s3659, 3
    %s3663 = sand.u32 %s3659, 7
    %s3664 = smul.u32 %s3660, 4
    %s3665 = smul.u32 %s3664, 8
    %s3666 = sadd.s32 %s3665, %s3663
    %s3667 = scalar_lea.vmem [#allocation13], %s3666
    %v3668 = vld [vmem:[%s3667] ss:$8 sm:$0xf]
    %s3669 = scalar_lea.vmem [#allocation2], 35
    %3670 = vst.msk [vmem:[%s3669] ss:$8 sm:$0xf] %vm3526, %v3668
    %3671 = vst.msk [vmem:[%s3669] ss:$8 sm:$0x0] %vm3526, %v3668
    %s3672 = sld [smem:[#allocation4 + $0xc]]
    %s3673 = sshra.s32 %s3672, 3
    %s3674 = sand.u32 %s3672, 7
    %s3675 = sshra.s32 %s3672, 3
    %s3676 = sand.u32 %s3672, 7
    %s3677 = smul.u32 %s3673, 4
    %s3678 = smul.u32 %s3677, 8
    %s3679 = sadd.s32 %s3678, %s3676
    %s3680 = scalar_lea.vmem [#allocation13], %s3679
    %v3681 = vld [vmem:[%s3680] ss:$8 sm:$0xf]
    %s3682 = scalar_lea.vmem [#allocation2], 36
    %3683 = vst.msk [vmem:[%s3682] ss:$8 sm:$0xf] %vm3526, %v3681
    %3684 = vst.msk [vmem:[%s3682] ss:$8 sm:$0x0] %vm3526, %v3681
    %s3685 = sld [smem:[#allocation4 + $0xd]]
    %s3686 = sshra.s32 %s3685, 3
    %s3687 = sand.u32 %s3685, 7
    %s3688 = sshra.s32 %s3685, 3
    %s3689 = sand.u32 %s3685, 7
    %s3690 = smul.u32 %s3686, 4
    %s3691 = smul.u32 %s3690, 8
    %s3692 = sadd.s32 %s3691, %s3689
    %s3693 = scalar_lea.vmem [#allocation13], %s3692
    %v3694 = vld [vmem:[%s3693] ss:$8 sm:$0xf]
    %s3695 = scalar_lea.vmem [#allocation2], 37
    %3696 = vst.msk [vmem:[%s3695] ss:$8 sm:$0xf] %vm3526, %v3694
    %3697 = vst.msk [vmem:[%s3695] ss:$8 sm:$0x0] %vm3526, %v3694
    %s3698 = sld [smem:[#allocation4 + $0xe]]
    %s3699 = sshra.s32 %s3698, 3
    %s3700 = sand.u32 %s3698, 7
    %s3701 = sshra.s32 %s3698, 3
    %s3702 = sand.u32 %s3698, 7
    %s3703 = smul.u32 %s3699, 4
    %s3704 = smul.u32 %s3703, 8
    %s3705 = sadd.s32 %s3704, %s3702
    %s3706 = scalar_lea.vmem [#allocation13], %s3705
    %v3707 = vld [vmem:[%s3706] ss:$8 sm:$0xf]
    %s3708 = scalar_lea.vmem [#allocation2], 38
    %3709 = vst.msk [vmem:[%s3708] ss:$8 sm:$0xf] %vm3526, %v3707
    %3710 = vst.msk [vmem:[%s3708] ss:$8 sm:$0x0] %vm3526, %v3707
    %s3711 = sld [smem:[#allocation4 + $0xf]]
    %s3712 = sshra.s32 %s3711, 3
    %s3713 = sand.u32 %s3711, 7
    %s3714 = sshra.s32 %s3711, 3
    %s3715 = sand.u32 %s3711, 7
    %s3716 = smul.u32 %s3712, 4
    %s3717 = smul.u32 %s3716, 8
    %s3718 = sadd.s32 %s3717, %s3715
    %s3719 = scalar_lea.vmem [#allocation13], %s3718
    %v3720 = vld [vmem:[%s3719] ss:$8 sm:$0xf]
    %s3721 = scalar_lea.vmem [#allocation2], 39
    %3722 = vst.msk [vmem:[%s3721] ss:$8 sm:$0xf] %vm3526, %v3720
    %3723 = vst.msk [vmem:[%s3721] ss:$8 sm:$0x0] %vm3526, %v3720
    %s3724 = sld [smem:[#allocation4 + $0x10]]
    %s3725 = sshra.s32 %s3724, 3
    %s3726 = sand.u32 %s3724, 7
    %s3727 = sshra.s32 %s3724, 3
    %s3728 = sand.u32 %s3724, 7
    %s3729 = smul.u32 %s3725, 4
    %s3730 = smul.u32 %s3729, 8
    %s3731 = sadd.s32 %s3730, %s3728
    %s3732 = scalar_lea.vmem [#allocation13], %s3731
    %v3733 = vld [vmem:[%s3732] ss:$8 sm:$0xf]
    %s3734 = scalar_lea.vmem [#allocation2], 64
    %3735 = vst.msk [vmem:[%s3734] ss:$8 sm:$0xf] %vm3526, %v3733
    %3736 = vst.msk [vmem:[%s3734] ss:$8 sm:$0x0] %vm3526, %v3733
    %s3737 = sld [smem:[#allocation4 + $0x11]]
    %s3738 = sshra.s32 %s3737, 3
    %s3739 = sand.u32 %s3737, 7
    %s3740 = sshra.s32 %s3737, 3
    %s3741 = sand.u32 %s3737, 7
    %s3742 = smul.u32 %s3738, 4
    %s3743 = smul.u32 %s3742, 8
    %s3744 = sadd.s32 %s3743, %s3741
    %s3745 = scalar_lea.vmem [#allocation13], %s3744
    %v3746 = vld [vmem:[%s3745] ss:$8 sm:$0xf]
    %s3747 = scalar_lea.vmem [#allocation2], 65
    %3748 = vst.msk [vmem:[%s3747] ss:$8 sm:$0xf] %vm3526, %v3746
    %3749 = vst.msk [vmem:[%s3747] ss:$8 sm:$0x0] %vm3526, %v3746
    %s3750 = sld [smem:[#allocation4 + $0x12]]
    %s3751 = sshra.s32 %s3750, 3
    %s3752 = sand.u32 %s3750, 7
    %s3753 = sshra.s32 %s3750, 3
    %s3754 = sand.u32 %s3750, 7
    %s3755 = smul.u32 %s3751, 4
    %s3756 = smul.u32 %s3755, 8
    %s3757 = sadd.s32 %s3756, %s3754
    %s3758 = scalar_lea.vmem [#allocation13], %s3757
    %v3759 = vld [vmem:[%s3758] ss:$8 sm:$0xf]
    %s3760 = scalar_lea.vmem [#allocation2], 66
    %3761 = vst.msk [vmem:[%s3760] ss:$8 sm:$0xf] %vm3526, %v3759
    %3762 = vst.msk [vmem:[%s3760] ss:$8 sm:$0x0] %vm3526, %v3759
    %s3763 = sld [smem:[#allocation4 + $0x13]]
    %s3764 = sshra.s32 %s3763, 3
    %s3765 = sand.u32 %s3763, 7
    %s3766 = sshra.s32 %s3763, 3
    %s3767 = sand.u32 %s3763, 7
    %s3768 = smul.u32 %s3764, 4
    %s3769 = smul.u32 %s3768, 8
    %s3770 = sadd.s32 %s3769, %s3767
    %s3771 = scalar_lea.vmem [#allocation13], %s3770
    %v3772 = vld [vmem:[%s3771] ss:$8 sm:$0xf]
    %s3773 = scalar_lea.vmem [#allocation2], 67
    %3774 = vst.msk [vmem:[%s3773] ss:$8 sm:$0xf] %vm3526, %v3772
    %3775 = vst.msk [vmem:[%s3773] ss:$8 sm:$0x0] %vm3526, %v3772
    %s3776 = sld [smem:[#allocation4 + $0x14]]
    %s3777 = sshra.s32 %s3776, 3
    %s3778 = sand.u32 %s3776, 7
    %s3779 = sshra.s32 %s3776, 3
    %s3780 = sand.u32 %s3776, 7
    %s3781 = smul.u32 %s3777, 4
    %s3782 = smul.u32 %s3781, 8
    %s3783 = sadd.s32 %s3782, %s3780
    %s3784 = scalar_lea.vmem [#allocation13], %s3783
    %v3785 = vld [vmem:[%s3784] ss:$8 sm:$0xf]
    %s3786 = scalar_lea.vmem [#allocation2], 68
    %3787 = vst.msk [vmem:[%s3786] ss:$8 sm:$0xf] %vm3526, %v3785
    %3788 = vst.msk [vmem:[%s3786] ss:$8 sm:$0x0] %vm3526, %v3785
    %s3789 = sld [smem:[#allocation4 + $0x15]]
    %s3790 = sshra.s32 %s3789, 3
    %s3791 = sand.u32 %s3789, 7
    %s3792 = sshra.s32 %s3789, 3
    %s3793 = sand.u32 %s3789, 7
    %s3794 = smul.u32 %s3790, 4
    %s3795 = smul.u32 %s3794, 8
    %s3796 = sadd.s32 %s3795, %s3793
    %s3797 = scalar_lea.vmem [#allocation13], %s3796
    %v3798 = vld [vmem:[%s3797] ss:$8 sm:$0xf]
    %s3799 = scalar_lea.vmem [#allocation2], 69
    %3800 = vst.msk [vmem:[%s3799] ss:$8 sm:$0xf] %vm3526, %v3798
    %3801 = vst.msk [vmem:[%s3799] ss:$8 sm:$0x0] %vm3526, %v3798
    %s3802 = sld [smem:[#allocation4 + $0x16]]
    %s3803 = sshra.s32 %s3802, 3
    %s3804 = sand.u32 %s3802, 7
    %s3805 = sshra.s32 %s3802, 3
    %s3806 = sand.u32 %s3802, 7
    %s3807 = smul.u32 %s3803, 4
    %s3808 = smul.u32 %s3807, 8
    %s3809 = sadd.s32 %s3808, %s3806
    %s3810 = scalar_lea.vmem [#allocation13], %s3809
    %v3811 = vld [vmem:[%s3810] ss:$8 sm:$0xf]
    %s3812 = scalar_lea.vmem [#allocation2], 70
    %3813 = vst.msk [vmem:[%s3812] ss:$8 sm:$0xf] %vm3526, %v3811
    %3814 = vst.msk [vmem:[%s3812] ss:$8 sm:$0x0] %vm3526, %v3811
    %s3815 = sld [smem:[#allocation4 + $0x17]]
    %s3816 = sshra.s32 %s3815, 3
    %s3817 = sand.u32 %s3815, 7
    %s3818 = sshra.s32 %s3815, 3
    %s3819 = sand.u32 %s3815, 7
    %s3820 = smul.u32 %s3816, 4
    %s3821 = smul.u32 %s3820, 8
    %s3822 = sadd.s32 %s3821, %s3819
    %s3823 = scalar_lea.vmem [#allocation13], %s3822
    %v3824 = vld [vmem:[%s3823] ss:$8 sm:$0xf]
    %s3825 = scalar_lea.vmem [#allocation2], 71
    %3826 = vst.msk [vmem:[%s3825] ss:$8 sm:$0xf] %vm3526, %v3824
    %3827 = vst.msk [vmem:[%s3825] ss:$8 sm:$0x0] %vm3526, %v3824
    %s3828 = sld [smem:[#allocation4 + $0x18]]
    %s3829 = sshra.s32 %s3828, 3
    %s3830 = sand.u32 %s3828, 7
    %s3831 = sshra.s32 %s3828, 3
    %s3832 = sand.u32 %s3828, 7
    %s3833 = smul.u32 %s3829, 4
    %s3834 = smul.u32 %s3833, 8
    %s3835 = sadd.s32 %s3834, %s3832
    %s3836 = scalar_lea.vmem [#allocation13], %s3835
    %v3837 = vld [vmem:[%s3836] ss:$8 sm:$0xf]
    %s3838 = scalar_lea.vmem [#allocation2], 96
    %3839 = vst.msk [vmem:[%s3838] ss:$8 sm:$0xf] %vm3526, %v3837
    %3840 = vst.msk [vmem:[%s3838] ss:$8 sm:$0x0] %vm3526, %v3837
    %s3841 = sld [smem:[#allocation4 + $0x19]]
    %s3842 = sshra.s32 %s3841, 3
    %s3843 = sand.u32 %s3841, 7
    %s3844 = sshra.s32 %s3841, 3
    %s3845 = sand.u32 %s3841, 7
    %s3846 = smul.u32 %s3842, 4
    %s3847 = smul.u32 %s3846, 8
    %s3848 = sadd.s32 %s3847, %s3845
    %s3849 = scalar_lea.vmem [#allocation13], %s3848
    %v3850 = vld [vmem:[%s3849] ss:$8 sm:$0xf]
    %s3851 = scalar_lea.vmem [#allocation2], 97
    %3852 = vst.msk [vmem:[%s3851] ss:$8 sm:$0xf] %vm3526, %v3850
    %3853 = vst.msk [vmem:[%s3851] ss:$8 sm:$0x0] %vm3526, %v3850
    %s3854 = sld [smem:[#allocation4 + $0x1a]]
    %s3855 = sshra.s32 %s3854, 3
    %s3856 = sand.u32 %s3854, 7
    %s3857 = sshra.s32 %s3854, 3
    %s3858 = sand.u32 %s3854, 7
    %s3859 = smul.u32 %s3855, 4
    %s3860 = smul.u32 %s3859, 8
    %s3861 = sadd.s32 %s3860, %s3858
    %s3862 = scalar_lea.vmem [#allocation13], %s3861
    %v3863 = vld [vmem:[%s3862] ss:$8 sm:$0xf]
    %s3864 = scalar_lea.vmem [#allocation2], 98
    %3865 = vst.msk [vmem:[%s3864] ss:$8 sm:$0xf] %vm3526, %v3863
    %3866 = vst.msk [vmem:[%s3864] ss:$8 sm:$0x0] %vm3526, %v3863
    %s3867 = sld [smem:[#allocation4 + $0x1b]]
    %s3868 = sshra.s32 %s3867, 3
    %s3869 = sand.u32 %s3867, 7
    %s3870 = sshra.s32 %s3867, 3
    %s3871 = sand.u32 %s3867, 7
    %s3872 = smul.u32 %s3868, 4
    %s3873 = smul.u32 %s3872, 8
    %s3874 = sadd.s32 %s3873, %s3871
    %s3875 = scalar_lea.vmem [#allocation13], %s3874
    %v3876 = vld [vmem:[%s3875] ss:$8 sm:$0xf]
    %s3877 = scalar_lea.vmem [#allocation2], 99
    %3878 = vst.msk [vmem:[%s3877] ss:$8 sm:$0xf] %vm3526, %v3876
    %3879 = vst.msk [vmem:[%s3877] ss:$8 sm:$0x0] %vm3526, %v3876
    %s3880 = sld [smem:[#allocation4 + $0x1c]]
    %s3881 = sshra.s32 %s3880, 3
    %s3882 = sand.u32 %s3880, 7
    %s3883 = sshra.s32 %s3880, 3
    %s3884 = sand.u32 %s3880, 7
    %s3885 = smul.u32 %s3881, 4
    %s3886 = smul.u32 %s3885, 8
    %s3887 = sadd.s32 %s3886, %s3884
    %s3888 = scalar_lea.vmem [#allocation13], %s3887
    %v3889 = vld [vmem:[%s3888] ss:$8 sm:$0xf]
    %s3890 = scalar_lea.vmem [#allocation2], 100
    %3891 = vst.msk [vmem:[%s3890] ss:$8 sm:$0xf] %vm3526, %v3889
    %3892 = vst.msk [vmem:[%s3890] ss:$8 sm:$0x0] %vm3526, %v3889
    %s3893 = sld [smem:[#allocation4 + $0x1d]]
    %s3894 = sshra.s32 %s3893, 3
    %s3895 = sand.u32 %s3893, 7
    %s3896 = sshra.s32 %s3893, 3
    %s3897 = sand.u32 %s3893, 7
    %s3898 = smul.u32 %s3894, 4
    %s3899 = smul.u32 %s3898, 8
    %s3900 = sadd.s32 %s3899, %s3897
    %s3901 = scalar_lea.vmem [#allocation13], %s3900
    %v3902 = vld [vmem:[%s3901] ss:$8 sm:$0xf]
    %s3903 = scalar_lea.vmem [#allocation2], 101
    %3904 = vst.msk [vmem:[%s3903] ss:$8 sm:$0xf] %vm3526, %v3902
    %3905 = vst.msk [vmem:[%s3903] ss:$8 sm:$0x0] %vm3526, %v3902
    %s3906 = sld [smem:[#allocation4 + $0x1e]]
    %s3907 = sshra.s32 %s3906, 3
    %s3908 = sand.u32 %s3906, 7
    %s3909 = sshra.s32 %s3906, 3
    %s3910 = sand.u32 %s3906, 7
    %s3911 = smul.u32 %s3907, 4
    %s3912 = smul.u32 %s3911, 8
    %s3913 = sadd.s32 %s3912, %s3910
    %s3914 = scalar_lea.vmem [#allocation13], %s3913
    %v3915 = vld [vmem:[%s3914] ss:$8 sm:$0xf]
    %s3916 = scalar_lea.vmem [#allocation2], 102
    %3917 = vst.msk [vmem:[%s3916] ss:$8 sm:$0xf] %vm3526, %v3915
    %3918 = vst.msk [vmem:[%s3916] ss:$8 sm:$0x0] %vm3526, %v3915
    %s3919 = sld [smem:[#allocation4 + $0x1f]]
    %s3920 = sshra.s32 %s3919, 3
    %s3921 = sand.u32 %s3919, 7
    %s3922 = sshra.s32 %s3919, 3
    %s3923 = sand.u32 %s3919, 7
    %s3924 = smul.u32 %s3920, 4
    %s3925 = smul.u32 %s3924, 8
    %s3926 = sadd.s32 %s3925, %s3923
    %s3927 = scalar_lea.vmem [#allocation13], %s3926
    %v3928 = vld [vmem:[%s3927] ss:$8 sm:$0xf]
    %s3929 = scalar_lea.vmem [#allocation2], 103
    %3930 = vst.msk [vmem:[%s3929] ss:$8 sm:$0xf] %vm3526, %v3928
    %3931 = vst.msk [vmem:[%s3929] ss:$8 sm:$0x0] %vm3526, %v3928
    %s3932 = sld [smem:[#allocation4 + $0x20]]
    %s3933 = sshra.s32 %s3932, 3
    %s3934 = sand.u32 %s3932, 7
    %s3935 = sshra.s32 %s3932, 3
    %s3936 = sand.u32 %s3932, 7
    %s3937 = smul.u32 %s3933, 4
    %s3938 = smul.u32 %s3937, 8
    %s3939 = sadd.s32 %s3938, %s3936
    %s3940 = scalar_lea.vmem [#allocation13], %s3939
    %v3941 = vld [vmem:[%s3940] ss:$8 sm:$0xf]
    %s3942 = scalar_lea.vmem [#allocation2], 128
    %3943 = vst.msk [vmem:[%s3942] ss:$8 sm:$0xf] %vm3526, %v3941
    %3944 = vst.msk [vmem:[%s3942] ss:$8 sm:$0x0] %vm3526, %v3941
    %s3945 = sld [smem:[#allocation4 + $0x21]]
    %s3946 = sshra.s32 %s3945, 3
    %s3947 = sand.u32 %s3945, 7
    %s3948 = sshra.s32 %s3945, 3
    %s3949 = sand.u32 %s3945, 7
    %s3950 = smul.u32 %s3946, 4
    %s3951 = smul.u32 %s3950, 8
    %s3952 = sadd.s32 %s3951, %s3949
    %s3953 = scalar_lea.vmem [#allocation13], %s3952
    %v3954 = vld [vmem:[%s3953] ss:$8 sm:$0xf]
    %s3955 = scalar_lea.vmem [#allocation2], 129
    %3956 = vst.msk [vmem:[%s3955] ss:$8 sm:$0xf] %vm3526, %v3954
    %3957 = vst.msk [vmem:[%s3955] ss:$8 sm:$0x0] %vm3526, %v3954
    %s3958 = sld [smem:[#allocation4 + $0x22]]
    %s3959 = sshra.s32 %s3958, 3
    %s3960 = sand.u32 %s3958, 7
    %s3961 = sshra.s32 %s3958, 3
    %s3962 = sand.u32 %s3958, 7
    %s3963 = smul.u32 %s3959, 4
    %s3964 = smul.u32 %s3963, 8
    %s3965 = sadd.s32 %s3964, %s3962
    %s3966 = scalar_lea.vmem [#allocation13], %s3965
    %v3967 = vld [vmem:[%s3966] ss:$8 sm:$0xf]
    %s3968 = scalar_lea.vmem [#allocation2], 130
    %3969 = vst.msk [vmem:[%s3968] ss:$8 sm:$0xf] %vm3526, %v3967
    %3970 = vst.msk [vmem:[%s3968] ss:$8 sm:$0x0] %vm3526, %v3967
    %s3971 = sld [smem:[#allocation4 + $0x23]]
    %s3972 = sshra.s32 %s3971, 3
    %s3973 = sand.u32 %s3971, 7
    %s3974 = sshra.s32 %s3971, 3
    %s3975 = sand.u32 %s3971, 7
    %s3976 = smul.u32 %s3972, 4
    %s3977 = smul.u32 %s3976, 8
    %s3978 = sadd.s32 %s3977, %s3975
    %s3979 = scalar_lea.vmem [#allocation13], %s3978
    %v3980 = vld [vmem:[%s3979] ss:$8 sm:$0xf]
    %s3981 = scalar_lea.vmem [#allocation2], 131
    %3982 = vst.msk [vmem:[%s3981] ss:$8 sm:$0xf] %vm3526, %v3980
    %3983 = vst.msk [vmem:[%s3981] ss:$8 sm:$0x0] %vm3526, %v3980
    %s3984 = sld [smem:[#allocation4 + $0x24]]
    %s3985 = sshra.s32 %s3984, 3
    %s3986 = sand.u32 %s3984, 7
    %s3987 = sshra.s32 %s3984, 3
    %s3988 = sand.u32 %s3984, 7
    %s3989 = smul.u32 %s3985, 4
    %s3990 = smul.u32 %s3989, 8
    %s3991 = sadd.s32 %s3990, %s3988
    %s3992 = scalar_lea.vmem [#allocation13], %s3991
    %v3993 = vld [vmem:[%s3992] ss:$8 sm:$0xf]
    %s3994 = scalar_lea.vmem [#allocation2], 132
    %3995 = vst.msk [vmem:[%s3994] ss:$8 sm:$0xf] %vm3526, %v3993
    %3996 = vst.msk [vmem:[%s3994] ss:$8 sm:$0x0] %vm3526, %v3993
    %s3997 = sld [smem:[#allocation4 + $0x25]]
    %s3998 = sshra.s32 %s3997, 3
    %s3999 = sand.u32 %s3997, 7
    %s4000 = sshra.s32 %s3997, 3
    %s4001 = sand.u32 %s3997, 7
    %s4002 = smul.u32 %s3998, 4
    %s4003 = smul.u32 %s4002, 8
    %s4004 = sadd.s32 %s4003, %s4001
    %s4005 = scalar_lea.vmem [#allocation13], %s4004
    %v4006 = vld [vmem:[%s4005] ss:$8 sm:$0xf]
    %s4007 = scalar_lea.vmem [#allocation2], 133
    %4008 = vst.msk [vmem:[%s4007] ss:$8 sm:$0xf] %vm3526, %v4006
    %4009 = vst.msk [vmem:[%s4007] ss:$8 sm:$0x0] %vm3526, %v4006
    %s4010 = sld [smem:[#allocation4 + $0x26]]
    %s4011 = sshra.s32 %s4010, 3
    %s4012 = sand.u32 %s4010, 7
    %s4013 = sshra.s32 %s4010, 3
    %s4014 = sand.u32 %s4010, 7
    %s4015 = smul.u32 %s4011, 4
    %s4016 = smul.u32 %s4015, 8
    %s4017 = sadd.s32 %s4016, %s4014
    %s4018 = scalar_lea.vmem [#allocation13], %s4017
    %v4019 = vld [vmem:[%s4018] ss:$8 sm:$0xf]
    %s4020 = scalar_lea.vmem [#allocation2], 134
    %4021 = vst.msk [vmem:[%s4020] ss:$8 sm:$0xf] %vm3526, %v4019
    %4022 = vst.msk [vmem:[%s4020] ss:$8 sm:$0x0] %vm3526, %v4019
    %s4023 = sld [smem:[#allocation4 + $0x27]]
    %s4024 = sshra.s32 %s4023, 3
    %s4025 = sand.u32 %s4023, 7
    %s4026 = sshra.s32 %s4023, 3
    %s4027 = sand.u32 %s4023, 7
    %s4028 = smul.u32 %s4024, 4
    %s4029 = smul.u32 %s4028, 8
    %s4030 = sadd.s32 %s4029, %s4027
    %s4031 = scalar_lea.vmem [#allocation13], %s4030
    %v4032 = vld [vmem:[%s4031] ss:$8 sm:$0xf]
    %s4033 = scalar_lea.vmem [#allocation2], 135
    %4034 = vst.msk [vmem:[%s4033] ss:$8 sm:$0xf] %vm3526, %v4032
    %4035 = vst.msk [vmem:[%s4033] ss:$8 sm:$0x0] %vm3526, %v4032
    %s4036 = sld [smem:[#allocation4 + $0x28]]
    %s4037 = sshra.s32 %s4036, 3
    %s4038 = sand.u32 %s4036, 7
    %s4039 = sshra.s32 %s4036, 3
    %s4040 = sand.u32 %s4036, 7
    %s4041 = smul.u32 %s4037, 4
    %s4042 = smul.u32 %s4041, 8
    %s4043 = sadd.s32 %s4042, %s4040
    %s4044 = scalar_lea.vmem [#allocation13], %s4043
    %v4045 = vld [vmem:[%s4044] ss:$8 sm:$0xf]
    %s4046 = scalar_lea.vmem [#allocation2], 160
    %4047 = vst.msk [vmem:[%s4046] ss:$8 sm:$0xf] %vm3526, %v4045
    %4048 = vst.msk [vmem:[%s4046] ss:$8 sm:$0x0] %vm3526, %v4045
    %s4049 = sld [smem:[#allocation4 + $0x29]]
    %s4050 = sshra.s32 %s4049, 3
    %s4051 = sand.u32 %s4049, 7
    %s4052 = sshra.s32 %s4049, 3
    %s4053 = sand.u32 %s4049, 7
    %s4054 = smul.u32 %s4050, 4
    %s4055 = smul.u32 %s4054, 8
    %s4056 = sadd.s32 %s4055, %s4053
    %s4057 = scalar_lea.vmem [#allocation13], %s4056
    %v4058 = vld [vmem:[%s4057] ss:$8 sm:$0xf]
    %s4059 = scalar_lea.vmem [#allocation2], 161
    %4060 = vst.msk [vmem:[%s4059] ss:$8 sm:$0xf] %vm3526, %v4058
    %4061 = vst.msk [vmem:[%s4059] ss:$8 sm:$0x0] %vm3526, %v4058
    %s4062 = sld [smem:[#allocation4 + $0x2a]]
    %s4063 = sshra.s32 %s4062, 3
    %s4064 = sand.u32 %s4062, 7
    %s4065 = sshra.s32 %s4062, 3
    %s4066 = sand.u32 %s4062, 7
    %s4067 = smul.u32 %s4063, 4
    %s4068 = smul.u32 %s4067, 8
    %s4069 = sadd.s32 %s4068, %s4066
    %s4070 = scalar_lea.vmem [#allocation13], %s4069
    %v4071 = vld [vmem:[%s4070] ss:$8 sm:$0xf]
    %s4072 = scalar_lea.vmem [#allocation2], 162
    %4073 = vst.msk [vmem:[%s4072] ss:$8 sm:$0xf] %vm3526, %v4071
    %4074 = vst.msk [vmem:[%s4072] ss:$8 sm:$0x0] %vm3526, %v4071
    %s4075 = sld [smem:[#allocation4 + $0x2b]]
    %s4076 = sshra.s32 %s4075, 3
    %s4077 = sand.u32 %s4075, 7
    %s4078 = sshra.s32 %s4075, 3
    %s4079 = sand.u32 %s4075, 7
    %s4080 = smul.u32 %s4076, 4
    %s4081 = smul.u32 %s4080, 8
    %s4082 = sadd.s32 %s4081, %s4079
    %s4083 = scalar_lea.vmem [#allocation13], %s4082
    %v4084 = vld [vmem:[%s4083] ss:$8 sm:$0xf]
    %s4085 = scalar_lea.vmem [#allocation2], 163
    %4086 = vst.msk [vmem:[%s4085] ss:$8 sm:$0xf] %vm3526, %v4084
    %4087 = vst.msk [vmem:[%s4085] ss:$8 sm:$0x0] %vm3526, %v4084
    %s4088 = sld [smem:[#allocation4 + $0x2c]]
    %s4089 = sshra.s32 %s4088, 3
    %s4090 = sand.u32 %s4088, 7
    %s4091 = sshra.s32 %s4088, 3
    %s4092 = sand.u32 %s4088, 7
    %s4093 = smul.u32 %s4089, 4
    %s4094 = smul.u32 %s4093, 8
    %s4095 = sadd.s32 %s4094, %s4092
    %s4096 = scalar_lea.vmem [#allocation13], %s4095
    %v4097 = vld [vmem:[%s4096] ss:$8 sm:$0xf]
    %s4098 = scalar_lea.vmem [#allocation2], 164
    %4099 = vst.msk [vmem:[%s4098] ss:$8 sm:$0xf] %vm3526, %v4097
    %4100 = vst.msk [vmem:[%s4098] ss:$8 sm:$0x0] %vm3526, %v4097
    %s4101 = sld [smem:[#allocation4 + $0x2d]]
    %s4102 = sshra.s32 %s4101, 3
    %s4103 = sand.u32 %s4101, 7
    %s4104 = sshra.s32 %s4101, 3
    %s4105 = sand.u32 %s4101, 7
    %s4106 = smul.u32 %s4102, 4
    %s4107 = smul.u32 %s4106, 8
    %s4108 = sadd.s32 %s4107, %s4105
    %s4109 = scalar_lea.vmem [#allocation13], %s4108
    %v4110 = vld [vmem:[%s4109] ss:$8 sm:$0xf]
    %s4111 = scalar_lea.vmem [#allocation2], 165
    %4112 = vst.msk [vmem:[%s4111] ss:$8 sm:$0xf] %vm3526, %v4110
    %4113 = vst.msk [vmem:[%s4111] ss:$8 sm:$0x0] %vm3526, %v4110
    %s4114 = sld [smem:[#allocation4 + $0x2e]]
    %s4115 = sshra.s32 %s4114, 3
    %s4116 = sand.u32 %s4114, 7
    %s4117 = sshra.s32 %s4114, 3
    %s4118 = sand.u32 %s4114, 7
    %s4119 = smul.u32 %s4115, 4
    %s4120 = smul.u32 %s4119, 8
    %s4121 = sadd.s32 %s4120, %s4118
    %s4122 = scalar_lea.vmem [#allocation13], %s4121
    %v4123 = vld [vmem:[%s4122] ss:$8 sm:$0xf]
    %s4124 = scalar_lea.vmem [#allocation2], 166
    %4125 = vst.msk [vmem:[%s4124] ss:$8 sm:$0xf] %vm3526, %v4123
    %4126 = vst.msk [vmem:[%s4124] ss:$8 sm:$0x0] %vm3526, %v4123
    %s4127 = sld [smem:[#allocation4 + $0x2f]]
    %s4128 = sshra.s32 %s4127, 3
    %s4129 = sand.u32 %s4127, 7
    %s4130 = sshra.s32 %s4127, 3
    %s4131 = sand.u32 %s4127, 7
    %s4132 = smul.u32 %s4128, 4
    %s4133 = smul.u32 %s4132, 8
    %s4134 = sadd.s32 %s4133, %s4131
    %s4135 = scalar_lea.vmem [#allocation13], %s4134
    %v4136 = vld [vmem:[%s4135] ss:$8 sm:$0xf]
    %s4137 = scalar_lea.vmem [#allocation2], 167
    %4138 = vst.msk [vmem:[%s4137] ss:$8 sm:$0xf] %vm3526, %v4136
    %4139 = vst.msk [vmem:[%s4137] ss:$8 sm:$0x0] %vm3526, %v4136
    %s4140 = sld [smem:[#allocation4 + $0x30]]
    %s4141 = sshra.s32 %s4140, 3
    %s4142 = sand.u32 %s4140, 7
    %s4143 = sshra.s32 %s4140, 3
    %s4144 = sand.u32 %s4140, 7
    %s4145 = smul.u32 %s4141, 4
    %s4146 = smul.u32 %s4145, 8
    %s4147 = sadd.s32 %s4146, %s4144
    %s4148 = scalar_lea.vmem [#allocation13], %s4147
    %v4149 = vld [vmem:[%s4148] ss:$8 sm:$0xf]
    %s4150 = scalar_lea.vmem [#allocation2], 192
    %4151 = vst.msk [vmem:[%s4150] ss:$8 sm:$0xf] %vm3526, %v4149
    %4152 = vst.msk [vmem:[%s4150] ss:$8 sm:$0x0] %vm3526, %v4149
    %s4153 = sld [smem:[#allocation4 + $0x31]]
    %s4154 = sshra.s32 %s4153, 3
    %s4155 = sand.u32 %s4153, 7
    %s4156 = sshra.s32 %s4153, 3
    %s4157 = sand.u32 %s4153, 7
    %s4158 = smul.u32 %s4154, 4
    %s4159 = smul.u32 %s4158, 8
    %s4160 = sadd.s32 %s4159, %s4157
    %s4161 = scalar_lea.vmem [#allocation13], %s4160
    %v4162 = vld [vmem:[%s4161] ss:$8 sm:$0xf]
    %s4163 = scalar_lea.vmem [#allocation2], 193
    %4164 = vst.msk [vmem:[%s4163] ss:$8 sm:$0xf] %vm3526, %v4162
    %4165 = vst.msk [vmem:[%s4163] ss:$8 sm:$0x0] %vm3526, %v4162
    %s4166 = sld [smem:[#allocation4 + $0x32]]
    %s4167 = sshra.s32 %s4166, 3
    %s4168 = sand.u32 %s4166, 7
    %s4169 = sshra.s32 %s4166, 3
    %s4170 = sand.u32 %s4166, 7
    %s4171 = smul.u32 %s4167, 4
    %s4172 = smul.u32 %s4171, 8
    %s4173 = sadd.s32 %s4172, %s4170
    %s4174 = scalar_lea.vmem [#allocation13], %s4173
    %v4175 = vld [vmem:[%s4174] ss:$8 sm:$0xf]
    %s4176 = scalar_lea.vmem [#allocation2], 194
    %4177 = vst.msk [vmem:[%s4176] ss:$8 sm:$0xf] %vm3526, %v4175
    %4178 = vst.msk [vmem:[%s4176] ss:$8 sm:$0x0] %vm3526, %v4175
    %s4179 = sld [smem:[#allocation4 + $0x33]]
    %s4180 = sshra.s32 %s4179, 3
    %s4181 = sand.u32 %s4179, 7
    %s4182 = sshra.s32 %s4179, 3
    %s4183 = sand.u32 %s4179, 7
    %s4184 = smul.u32 %s4180, 4
    %s4185 = smul.u32 %s4184, 8
    %s4186 = sadd.s32 %s4185, %s4183
    %s4187 = scalar_lea.vmem [#allocation13], %s4186
    %v4188 = vld [vmem:[%s4187] ss:$8 sm:$0xf]
    %s4189 = scalar_lea.vmem [#allocation2], 195
    %4190 = vst.msk [vmem:[%s4189] ss:$8 sm:$0xf] %vm3526, %v4188
    %4191 = vst.msk [vmem:[%s4189] ss:$8 sm:$0x0] %vm3526, %v4188
    %s4192 = sld [smem:[#allocation4 + $0x34]]
    %s4193 = sshra.s32 %s4192, 3
    %s4194 = sand.u32 %s4192, 7
    %s4195 = sshra.s32 %s4192, 3
    %s4196 = sand.u32 %s4192, 7
    %s4197 = smul.u32 %s4193, 4
    %s4198 = smul.u32 %s4197, 8
    %s4199 = sadd.s32 %s4198, %s4196
    %s4200 = scalar_lea.vmem [#allocation13], %s4199
    %v4201 = vld [vmem:[%s4200] ss:$8 sm:$0xf]
    %s4202 = scalar_lea.vmem [#allocation2], 196
    %4203 = vst.msk [vmem:[%s4202] ss:$8 sm:$0xf] %vm3526, %v4201
    %4204 = vst.msk [vmem:[%s4202] ss:$8 sm:$0x0] %vm3526, %v4201
    %s4205 = sld [smem:[#allocation4 + $0x35]]
    %s4206 = sshra.s32 %s4205, 3
    %s4207 = sand.u32 %s4205, 7
    %s4208 = sshra.s32 %s4205, 3
    %s4209 = sand.u32 %s4205, 7
    %s4210 = smul.u32 %s4206, 4
    %s4211 = smul.u32 %s4210, 8
    %s4212 = sadd.s32 %s4211, %s4209
    %s4213 = scalar_lea.vmem [#allocation13], %s4212
    %v4214 = vld [vmem:[%s4213] ss:$8 sm:$0xf]
    %s4215 = scalar_lea.vmem [#allocation2], 197
    %4216 = vst.msk [vmem:[%s4215] ss:$8 sm:$0xf] %vm3526, %v4214
    %4217 = vst.msk [vmem:[%s4215] ss:$8 sm:$0x0] %vm3526, %v4214
    %s4218 = sld [smem:[#allocation4 + $0x36]]
    %s4219 = sshra.s32 %s4218, 3
    %s4220 = sand.u32 %s4218, 7
    %s4221 = sshra.s32 %s4218, 3
    %s4222 = sand.u32 %s4218, 7
    %s4223 = smul.u32 %s4219, 4
    %s4224 = smul.u32 %s4223, 8
    %s4225 = sadd.s32 %s4224, %s4222
    %s4226 = scalar_lea.vmem [#allocation13], %s4225
    %v4227 = vld [vmem:[%s4226] ss:$8 sm:$0xf]
    %s4228 = scalar_lea.vmem [#allocation2], 198
    %4229 = vst.msk [vmem:[%s4228] ss:$8 sm:$0xf] %vm3526, %v4227
    %4230 = vst.msk [vmem:[%s4228] ss:$8 sm:$0x0] %vm3526, %v4227
    %s4231 = sld [smem:[#allocation4 + $0x37]]
    %s4232 = sshra.s32 %s4231, 3
    %s4233 = sand.u32 %s4231, 7
    %s4234 = sshra.s32 %s4231, 3
    %s4235 = sand.u32 %s4231, 7
    %s4236 = smul.u32 %s4232, 4
    %s4237 = smul.u32 %s4236, 8
    %s4238 = sadd.s32 %s4237, %s4235
    %s4239 = scalar_lea.vmem [#allocation13], %s4238
    %v4240 = vld [vmem:[%s4239] ss:$8 sm:$0xf]
    %s4241 = scalar_lea.vmem [#allocation2], 199
    %4242 = vst.msk [vmem:[%s4241] ss:$8 sm:$0xf] %vm3526, %v4240
    %4243 = vst.msk [vmem:[%s4241] ss:$8 sm:$0x0] %vm3526, %v4240
    %s4244 = sld [smem:[#allocation4 + $0x38]]
    %s4245 = sshra.s32 %s4244, 3
    %s4246 = sand.u32 %s4244, 7
    %s4247 = sshra.s32 %s4244, 3
    %s4248 = sand.u32 %s4244, 7
    %s4249 = smul.u32 %s4245, 4
    %s4250 = smul.u32 %s4249, 8
    %s4251 = sadd.s32 %s4250, %s4248
    %s4252 = scalar_lea.vmem [#allocation13], %s4251
    %v4253 = vld [vmem:[%s4252] ss:$8 sm:$0xf]
    %s4254 = scalar_lea.vmem [#allocation2], 224
    %4255 = vst.msk [vmem:[%s4254] ss:$8 sm:$0xf] %vm3526, %v4253
    %4256 = vst.msk [vmem:[%s4254] ss:$8 sm:$0x0] %vm3526, %v4253
    %s4257 = sld [smem:[#allocation4 + $0x39]]
    %s4258 = sshra.s32 %s4257, 3
    %s4259 = sand.u32 %s4257, 7
    %s4260 = sshra.s32 %s4257, 3
    %s4261 = sand.u32 %s4257, 7
    %s4262 = smul.u32 %s4258, 4
    %s4263 = smul.u32 %s4262, 8
    %s4264 = sadd.s32 %s4263, %s4261
    %s4265 = scalar_lea.vmem [#allocation13], %s4264
    %v4266 = vld [vmem:[%s4265] ss:$8 sm:$0xf]
    %s4267 = scalar_lea.vmem [#allocation2], 225
    %4268 = vst.msk [vmem:[%s4267] ss:$8 sm:$0xf] %vm3526, %v4266
    %4269 = vst.msk [vmem:[%s4267] ss:$8 sm:$0x0] %vm3526, %v4266
    %s4270 = sld [smem:[#allocation4 + $0x3a]]
    %s4271 = sshra.s32 %s4270, 3
    %s4272 = sand.u32 %s4270, 7
    %s4273 = sshra.s32 %s4270, 3
    %s4274 = sand.u32 %s4270, 7
    %s4275 = smul.u32 %s4271, 4
    %s4276 = smul.u32 %s4275, 8
    %s4277 = sadd.s32 %s4276, %s4274
    %s4278 = scalar_lea.vmem [#allocation13], %s4277
    %v4279 = vld [vmem:[%s4278] ss:$8 sm:$0xf]
    %s4280 = scalar_lea.vmem [#allocation2], 226
    %4281 = vst.msk [vmem:[%s4280] ss:$8 sm:$0xf] %vm3526, %v4279
    %4282 = vst.msk [vmem:[%s4280] ss:$8 sm:$0x0] %vm3526, %v4279
    %s4283 = sld [smem:[#allocation4 + $0x3b]]
    %s4284 = sshra.s32 %s4283, 3
    %s4285 = sand.u32 %s4283, 7
    %s4286 = sshra.s32 %s4283, 3
    %s4287 = sand.u32 %s4283, 7
    %s4288 = smul.u32 %s4284, 4
    %s4289 = smul.u32 %s4288, 8
    %s4290 = sadd.s32 %s4289, %s4287
    %s4291 = scalar_lea.vmem [#allocation13], %s4290
    %v4292 = vld [vmem:[%s4291] ss:$8 sm:$0xf]
    %s4293 = scalar_lea.vmem [#allocation2], 227
    %4294 = vst.msk [vmem:[%s4293] ss:$8 sm:$0xf] %vm3526, %v4292
    %4295 = vst.msk [vmem:[%s4293] ss:$8 sm:$0x0] %vm3526, %v4292
    %s4296 = sld [smem:[#allocation4 + $0x3c]]
    %s4297 = sshra.s32 %s4296, 3
    %s4298 = sand.u32 %s4296, 7
    %s4299 = sshra.s32 %s4296, 3
    %s4300 = sand.u32 %s4296, 7
    %s4301 = smul.u32 %s4297, 4
    %s4302 = smul.u32 %s4301, 8
    %s4303 = sadd.s32 %s4302, %s4300
    %s4304 = scalar_lea.vmem [#allocation13], %s4303
    %v4305 = vld [vmem:[%s4304] ss:$8 sm:$0xf]
    %s4306 = scalar_lea.vmem [#allocation2], 228
    %4307 = vst.msk [vmem:[%s4306] ss:$8 sm:$0xf] %vm3526, %v4305
    %4308 = vst.msk [vmem:[%s4306] ss:$8 sm:$0x0] %vm3526, %v4305
    %s4309 = sld [smem:[#allocation4 + $0x3d]]
    %s4310 = sshra.s32 %s4309, 3
    %s4311 = sand.u32 %s4309, 7
    %s4312 = sshra.s32 %s4309, 3
    %s4313 = sand.u32 %s4309, 7
    %s4314 = smul.u32 %s4310, 4
    %s4315 = smul.u32 %s4314, 8
    %s4316 = sadd.s32 %s4315, %s4313
    %s4317 = scalar_lea.vmem [#allocation13], %s4316
    %v4318 = vld [vmem:[%s4317] ss:$8 sm:$0xf]
    %s4319 = scalar_lea.vmem [#allocation2], 229
    %4320 = vst.msk [vmem:[%s4319] ss:$8 sm:$0xf] %vm3526, %v4318
    %4321 = vst.msk [vmem:[%s4319] ss:$8 sm:$0x0] %vm3526, %v4318
    %s4322 = sld [smem:[#allocation4 + $0x3e]]
    %s4323 = sshra.s32 %s4322, 3
    %s4324 = sand.u32 %s4322, 7
    %s4325 = sshra.s32 %s4322, 3
    %s4326 = sand.u32 %s4322, 7
    %s4327 = smul.u32 %s4323, 4
    %s4328 = smul.u32 %s4327, 8
    %s4329 = sadd.s32 %s4328, %s4326
    %s4330 = scalar_lea.vmem [#allocation13], %s4329
    %v4331 = vld [vmem:[%s4330] ss:$8 sm:$0xf]
    %s4332 = scalar_lea.vmem [#allocation2], 230
    %4333 = vst.msk [vmem:[%s4332] ss:$8 sm:$0xf] %vm3526, %v4331
    %4334 = vst.msk [vmem:[%s4332] ss:$8 sm:$0x0] %vm3526, %v4331
    %s4335 = sld [smem:[#allocation4 + $0x3f]]
    %s4336 = sshra.s32 %s4335, 3
    %s4337 = sand.u32 %s4335, 7
    %s4338 = sshra.s32 %s4335, 3
    %s4339 = sand.u32 %s4335, 7
    %s4340 = smul.u32 %s4336, 4
    %s4341 = smul.u32 %s4340, 8
    %s4342 = sadd.s32 %s4341, %s4339
    %s4343 = scalar_lea.vmem [#allocation13], %s4342
    %v4344 = vld [vmem:[%s4343] ss:$8 sm:$0xf]
    %s4345 = scalar_lea.vmem [#allocation2], 231
    %4346 = vst.msk [vmem:[%s4345] ss:$8 sm:$0xf] %vm3526, %v4344
    %4347 = vst.msk [vmem:[%s4345] ss:$8 sm:$0x0] %vm3526, %v4344
    %v4348 = vld [vmem:[#allocation14] sm:$0xff]
    %v4349 = vld [vmem:[#allocation14 + $0x8] sm:$0xff]
    %v4350 = vld [vmem:[#allocation14 + $0x10] sm:$0xff]
    %v4351 = vld [vmem:[#allocation14 + $0x18] sm:$0xff]
    %v4352 = vld [vmem:[#allocation14 + $0x20] sm:$0xff]
    %v4353 = vld [vmem:[#allocation14 + $0x28] sm:$0xff]
    %v4354 = vld [vmem:[#allocation14 + $0x30] sm:$0xff]
    %v4355 = vld [vmem:[#allocation14 + $0x38] sm:$0xff]
    %v4356 = vld [vmem:[#allocation14 + $0x40] sm:$0xff]
    %v4357 = vld [vmem:[#allocation14 + $0x48] sm:$0xff]
    %v4358 = vld [vmem:[#allocation14 + $0x50] sm:$0xff]
    %v4359 = vld [vmem:[#allocation14 + $0x58] sm:$0xff]
    %v4360 = vld [vmem:[#allocation14 + $0x60] sm:$0xff]
    %v4361 = vld [vmem:[#allocation14 + $0x68] sm:$0xff]
    %v4362 = vld [vmem:[#allocation14 + $0x70] sm:$0xff]
    %v4363 = vld [vmem:[#allocation14 + $0x78] sm:$0xff]
    %v4364 = vld [vmem:[#allocation14 + $0x80] sm:$0xff]
    %v4365 = vld [vmem:[#allocation14 + $0x88] sm:$0xff]
    %v4366 = vld [vmem:[#allocation14 + $0x90] sm:$0xff]
    %v4367 = vld [vmem:[#allocation14 + $0x98] sm:$0xff]
    %v4368 = vld [vmem:[#allocation14 + $0xa0] sm:$0xff]
    %v4369 = vld [vmem:[#allocation14 + $0xa8] sm:$0xff]
    %v4370 = vld [vmem:[#allocation14 + $0xb0] sm:$0xff]
    %v4371 = vld [vmem:[#allocation14 + $0xb8] sm:$0xff]
    %v4372 = vld [vmem:[#allocation14 + $0xc0] sm:$0xff]
    %v4373 = vld [vmem:[#allocation14 + $0xc8] sm:$0xff]
    %v4374 = vld [vmem:[#allocation14 + $0xd0] sm:$0xff]
    %v4375 = vld [vmem:[#allocation14 + $0xd8] sm:$0xff]
    %v4376 = vld [vmem:[#allocation14 + $0xe0] sm:$0xff]
    %v4377 = vld [vmem:[#allocation14 + $0xe8] sm:$0xff]
    %v4378 = vld [vmem:[#allocation14 + $0xf0] sm:$0xff]
    %v4379 = vld [vmem:[#allocation14 + $0xf8] sm:$0xff]
    %v4380 = vpack.c.bf16 %v3512, %v3512
    %v4381 = vld [vmem:[%s15] sm:$0xf]
    %v4383 = vlaneseq
    %v4384 = vshrl.u32 %v4383, 7
    %v4385 = vsub.s32 0, %v4384
    %v4386 = vrot.slane %v4381, %v4385
    %v4387 = vlaneseq
    %v4388 = vshrl.u32 %v4387, 7
    %v4389 = vsub.s32 1, %v4388
    %v4390 = vrot.slane %v4381, %v4389
    %v4391 = vlaneseq
    %v4392 = vshrl.u32 %v4391, 7
    %v4393 = vsub.s32 2, %v4392
    %v4394 = vrot.slane %v4381, %v4393
    %v4395 = vlaneseq
    %v4396 = vshrl.u32 %v4395, 7
    %v4397 = vsub.s32 3, %v4396
    %v4398 = vrot.slane %v4381, %v4397
    %v4435 = vunpack.c.l.b16 %v4348
    %v4436 = vunpack.c.h.b16 %v4348
    %v4437 = vunpack.c.l.b16 %v4349
    %v4438 = vunpack.c.h.b16 %v4349
    %v4439 = vunpack.c.l.b16 %v4350
    %v4440 = vunpack.c.h.b16 %v4350
    %v4441 = vunpack.c.l.b16 %v4351
    %v4442 = vunpack.c.h.b16 %v4351
    %v4443 = vunpack.c.l.b16 %v4352
    %v4444 = vunpack.c.h.b16 %v4352
    %v4445 = vunpack.c.l.b16 %v4353
    %v4446 = vunpack.c.h.b16 %v4353
    %v4447 = vunpack.c.l.b16 %v4354
    %v4448 = vunpack.c.h.b16 %v4354
    %v4449 = vunpack.c.l.b16 %v4355
    %v4450 = vunpack.c.h.b16 %v4355
    %v4451 = vunpack.c.l.b16 %v4356
    %v4452 = vunpack.c.h.b16 %v4356
    %v4453 = vunpack.c.l.b16 %v4357
    %v4454 = vunpack.c.h.b16 %v4357
    %v4455 = vunpack.c.l.b16 %v4358
    %v4456 = vunpack.c.h.b16 %v4358
    %v4457 = vunpack.c.l.b16 %v4359
    %v4458 = vunpack.c.h.b16 %v4359
    %v4459 = vunpack.c.l.b16 %v4360
    %v4460 = vunpack.c.h.b16 %v4360
    %v4461 = vunpack.c.l.b16 %v4361
    %v4462 = vunpack.c.h.b16 %v4361
    %v4463 = vunpack.c.l.b16 %v4362
    %v4464 = vunpack.c.h.b16 %v4362
    %v4465 = vunpack.c.l.b16 %v4363
    %v4466 = vunpack.c.h.b16 %v4363
    %v4467 = vunpack.c.l.b16 %v4364
    %v4468 = vunpack.c.h.b16 %v4364
    %v4469 = vunpack.c.l.b16 %v4365
    %v4470 = vunpack.c.h.b16 %v4365
    %v4471 = vunpack.c.l.b16 %v4366
    %v4472 = vunpack.c.h.b16 %v4366
    %v4473 = vunpack.c.l.b16 %v4367
    %v4474 = vunpack.c.h.b16 %v4367
    %v4475 = vunpack.c.l.b16 %v4368
    %v4476 = vunpack.c.h.b16 %v4368
    %v4477 = vunpack.c.l.b16 %v4369
    %v4478 = vunpack.c.h.b16 %v4369
    %v4479 = vunpack.c.l.b16 %v4370
    %v4480 = vunpack.c.h.b16 %v4370
    %v4481 = vunpack.c.l.b16 %v4371
    %v4482 = vunpack.c.h.b16 %v4371
    %v4483 = vunpack.c.l.b16 %v4372
    %v4484 = vunpack.c.h.b16 %v4372
    %v4485 = vunpack.c.l.b16 %v4373
    %v4486 = vunpack.c.h.b16 %v4373
    %v4487 = vunpack.c.l.b16 %v4374
    %v4488 = vunpack.c.h.b16 %v4374
    %v4489 = vunpack.c.l.b16 %v4375
    %v4490 = vunpack.c.h.b16 %v4375
    %v4491 = vunpack.c.l.b16 %v4376
    %v4492 = vunpack.c.h.b16 %v4376
    %v4493 = vunpack.c.l.b16 %v4377
    %v4494 = vunpack.c.h.b16 %v4377
    %v4495 = vunpack.c.l.b16 %v4378
    %v4496 = vunpack.c.h.b16 %v4378
    %v4497 = vunpack.c.l.b16 %v4379
    %v4498 = vunpack.c.h.b16 %v4379
    %v4499 = vpack.c.b16 %v4439, %v4435
    %v4500 = vpack.c.b16 %v4440, %v4436
    %v4501 = vpack.c.b16 %v4441, %v4437
    %v4502 = vpack.c.b16 %v4442, %v4438
    %v4503 = vpack.c.b16 %v4447, %v4443
    %v4504 = vpack.c.b16 %v4448, %v4444
    %v4505 = vpack.c.b16 %v4449, %v4445
    %v4506 = vpack.c.b16 %v4450, %v4446
    %v4507 = vpack.c.b16 %v4455, %v4451
    %v4508 = vpack.c.b16 %v4456, %v4452
    %v4509 = vpack.c.b16 %v4457, %v4453
    %v4510 = vpack.c.b16 %v4458, %v4454
    %v4511 = vpack.c.b16 %v4463, %v4459
    %v4512 = vpack.c.b16 %v4464, %v4460
    %v4513 = vpack.c.b16 %v4465, %v4461
    %v4514 = vpack.c.b16 %v4466, %v4462
    %v4515 = vpack.c.b16 %v4471, %v4467
    %v4516 = vpack.c.b16 %v4472, %v4468
    %v4517 = vpack.c.b16 %v4473, %v4469
    %v4518 = vpack.c.b16 %v4474, %v4470
    %v4519 = vpack.c.b16 %v4479, %v4475
    %v4520 = vpack.c.b16 %v4480, %v4476
    %v4521 = vpack.c.b16 %v4481, %v4477
    %v4522 = vpack.c.b16 %v4482, %v4478
    %v4523 = vpack.c.b16 %v4487, %v4483
    %v4524 = vpack.c.b16 %v4488, %v4484
    %v4525 = vpack.c.b16 %v4489, %v4485
    %v4526 = vpack.c.b16 %v4490, %v4486
    %v4527 = vpack.c.b16 %v4495, %v4491
    %v4528 = vpack.c.b16 %v4496, %v4492
    %v4529 = vpack.c.b16 %v4497, %v4493
    %v4530 = vpack.c.b16 %v4498, %v4494
    %4563 = vmatprep.subr.bf16.mxu0 %v4500
    %4564 = vmatpush1.bf16.msra.mxu0 %v4499
    %4565 = vmatprep.subr.bf16.mxu0 %v4504
    %4566 = vmatpush1.bf16.msra.mxu0 %v4503
    %4567 = vmatprep.subr.bf16.mxu0 %v4508
    %4568 = vmatpush1.bf16.msra.mxu0 %v4507
    %4569 = vmatprep.subr.bf16.mxu0 %v4512
    %4570 = vmatpush1.bf16.msra.mxu0 %v4511
    %4571 = vmatprep.subr.bf16.mxu0 %v4516
    %4572 = vmatpush1.bf16.msra.mxu0 %v4515
    %4573 = vmatprep.subr.bf16.mxu0 %v4520
    %4574 = vmatpush1.bf16.msra.mxu0 %v4519
    %4575 = vmatprep.subr.bf16.mxu0 %v4524
    %4576 = vmatpush1.bf16.msra.mxu0 %v4523
    %4577 = vmatprep.subr.bf16.mxu0 %v4528
    %4578 = vmatpush1.bf16.msra.mxu0 %v4527
    %4579 = vmatprep.subr.bf16.mxu0 0
    %4580 = vmatpush1.bf16.msra.mxu0 0
    %4581 = vmatprep.subr.bf16.mxu0 0
    %4582 = vmatpush1.bf16.msra.mxu0 0
    %4583 = vmatprep.subr.bf16.mxu0 0
    %4584 = vmatpush1.bf16.msra.mxu0 0
    %4585 = vmatprep.subr.bf16.mxu0 0
    %4586 = vmatpush1.bf16.msra.mxu0 0
    %4587 = vmatprep.subr.bf16.mxu0 0
    %4588 = vmatpush1.bf16.msra.mxu0 0
    %4589 = vmatprep.subr.bf16.mxu0 0
    %4590 = vmatpush1.bf16.msra.mxu0 0
    %4591 = vmatprep.subr.bf16.mxu0 0
    %4592 = vmatpush1.bf16.msra.mxu0 0
    %4593 = vmatprep.subr.bf16.mxu0 0
    %4594 = vmatpush1.bf16.msra.mxu0 0
    %4595 = vmatprep.mubr.bf16.mxu0 0
    %4596 = vmatmul.mubr.bf16.gmra.mrb[0].mxu0 %v4380
    %v4597 = vpop.f32.mrb[0].mxu0
    %v4598 = vadd.f32 %v4386, %v4597
    %v4599 = vpop.f32.mrb[0].mxu0
    %v4600 = vadd.f32 %v4390, %v4599
    %v4601 = vpop.f32.mrb[0].mxu0
    %v4602 = vpop.f32.mrb[0].mxu0
    %4603 = vdwg.mxu0
    %4604 = vmatprep.subr.bf16.mxu0 %v4502
    %4605 = vmatpush1.bf16.msra.mxu0 %v4501
    %4606 = vmatprep.subr.bf16.mxu0 %v4506
    %4607 = vmatpush1.bf16.msra.mxu0 %v4505
    %4608 = vmatprep.subr.bf16.mxu0 %v4510
    %4609 = vmatpush1.bf16.msra.mxu0 %v4509
    %4610 = vmatprep.subr.bf16.mxu0 %v4514
    %4611 = vmatpush1.bf16.msra.mxu0 %v4513
    %4612 = vmatprep.subr.bf16.mxu0 %v4518
    %4613 = vmatpush1.bf16.msra.mxu0 %v4517
    %4614 = vmatprep.subr.bf16.mxu0 %v4522
    %4615 = vmatpush1.bf16.msra.mxu0 %v4521
    %4616 = vmatprep.subr.bf16.mxu0 %v4526
    %4617 = vmatpush1.bf16.msra.mxu0 %v4525
    %4618 = vmatprep.subr.bf16.mxu0 %v4530
    %4619 = vmatpush1.bf16.msra.mxu0 %v4529
    %4620 = vmatprep.subr.bf16.mxu0 0
    %4621 = vmatpush1.bf16.msra.mxu0 0
    %4622 = vmatprep.subr.bf16.mxu0 0
    %4623 = vmatpush1.bf16.msra.mxu0 0
    %4624 = vmatprep.subr.bf16.mxu0 0
    %4625 = vmatpush1.bf16.msra.mxu0 0
    %4626 = vmatprep.subr.bf16.mxu0 0
    %4627 = vmatpush1.bf16.msra.mxu0 0
    %4628 = vmatprep.subr.bf16.mxu0 0
    %4629 = vmatpush1.bf16.msra.mxu0 0
    %4630 = vmatprep.subr.bf16.mxu0 0
    %4631 = vmatpush1.bf16.msra.mxu0 0
    %4632 = vmatprep.subr.bf16.mxu0 0
    %4633 = vmatpush1.bf16.msra.mxu0 0
    %4634 = vmatprep.subr.bf16.mxu0 0
    %4635 = vmatpush1.bf16.msra.mxu0 0
    %4636 = vmatprep.mubr.bf16.mxu0 0
    %4637 = vmatmul.mubr.bf16.gmra.mrb[0].mxu0 %v4380
    %v4638 = vpop.f32.mrb[0].mxu0
    %v4639 = vadd.f32 %v4394, %v4638
    %v4640 = vpop.f32.mrb[0].mxu0
    %v4641 = vadd.f32 %v4398, %v4640
    %v4642 = vpop.f32.mrb[0].mxu0
    %v4643 = vpop.f32.mrb[0].mxu0
    %4644 = vdwg.mxu0
    %v4645 = vld [vmem:[#allocation16] sm:$0xff]
    %v4646 = vld [vmem:[#allocation16 + $0x8] sm:$0xff]
    %v4647 = vld [vmem:[#allocation16 + $0x10] sm:$0xff]
    %v4648 = vld [vmem:[#allocation16 + $0x18] sm:$0xff]
    %v4649 = vld [vmem:[#allocation16 + $0x20] sm:$0xff]
    %v4650 = vld [vmem:[#allocation16 + $0x28] sm:$0xff]
    %v4651 = vld [vmem:[#allocation16 + $0x30] sm:$0xff]
    %v4652 = vld [vmem:[#allocation16 + $0x38] sm:$0xff]
    %v4653 = vld [vmem:[#allocation16 + $0x40] sm:$0xff]
    %v4654 = vld [vmem:[#allocation16 + $0x48] sm:$0xff]
    %v4655 = vld [vmem:[#allocation16 + $0x50] sm:$0xff]
    %v4656 = vld [vmem:[#allocation16 + $0x58] sm:$0xff]
    %v4657 = vld [vmem:[#allocation16 + $0x60] sm:$0xff]
    %v4658 = vld [vmem:[#allocation16 + $0x68] sm:$0xff]
    %v4659 = vld [vmem:[#allocation16 + $0x70] sm:$0xff]
    %v4660 = vld [vmem:[#allocation16 + $0x78] sm:$0xff]
    %v4661 = vld [vmem:[#allocation16 + $0x80] sm:$0xff]
    %v4662 = vld [vmem:[#allocation16 + $0x88] sm:$0xff]
    %v4663 = vld [vmem:[#allocation16 + $0x90] sm:$0xff]
    %v4664 = vld [vmem:[#allocation16 + $0x98] sm:$0xff]
    %v4665 = vld [vmem:[#allocation16 + $0xa0] sm:$0xff]
    %v4666 = vld [vmem:[#allocation16 + $0xa8] sm:$0xff]
    %v4667 = vld [vmem:[#allocation16 + $0xb0] sm:$0xff]
    %v4668 = vld [vmem:[#allocation16 + $0xb8] sm:$0xff]
    %v4669 = vld [vmem:[#allocation16 + $0xc0] sm:$0xff]
    %v4670 = vld [vmem:[#allocation16 + $0xc8] sm:$0xff]
    %v4671 = vld [vmem:[#allocation16 + $0xd0] sm:$0xff]
    %v4672 = vld [vmem:[#allocation16 + $0xd8] sm:$0xff]
    %v4673 = vld [vmem:[#allocation16 + $0xe0] sm:$0xff]
    %v4674 = vld [vmem:[#allocation16 + $0xe8] sm:$0xff]
    %v4675 = vld [vmem:[#allocation16 + $0xf0] sm:$0xff]
    %v4676 = vld [vmem:[#allocation16 + $0xf8] sm:$0xff]
    %v4677 = vld [vmem:[#allocation2] sm:$0xff]
    %v4678 = vld [vmem:[#allocation2 + $0x8] sm:$0xff]
    %v4679 = vld [vmem:[#allocation2 + $0x10] sm:$0xff]
    %v4680 = vld [vmem:[#allocation2 + $0x18] sm:$0xff]
    %v4681 = vadd.f32 %v4677, %v4598
    %v4682 = vadd.f32 %v4678, %v4600
    %v4683 = vadd.f32 %v4679, %v4639
    %v4684 = vadd.f32 %v4680, %v4641
    %v4685 = vpack.c.bf16 %v1996, %v1996
    %v4718 = vunpack.c.l.b16 %v4645
    %v4719 = vunpack.c.h.b16 %v4645
    %v4720 = vunpack.c.l.b16 %v4646
    %v4721 = vunpack.c.h.b16 %v4646
    %v4722 = vunpack.c.l.b16 %v4647
    %v4723 = vunpack.c.h.b16 %v4647
    %v4724 = vunpack.c.l.b16 %v4648
    %v4725 = vunpack.c.h.b16 %v4648
    %v4726 = vunpack.c.l.b16 %v4649
    %v4727 = vunpack.c.h.b16 %v4649
    %v4728 = vunpack.c.l.b16 %v4650
    %v4729 = vunpack.c.h.b16 %v4650
    %v4730 = vunpack.c.l.b16 %v4651
    %v4731 = vunpack.c.h.b16 %v4651
    %v4732 = vunpack.c.l.b16 %v4652
    %v4733 = vunpack.c.h.b16 %v4652
    %v4734 = vunpack.c.l.b16 %v4653
    %v4735 = vunpack.c.h.b16 %v4653
    %v4736 = vunpack.c.l.b16 %v4654
    %v4737 = vunpack.c.h.b16 %v4654
    %v4738 = vunpack.c.l.b16 %v4655
    %v4739 = vunpack.c.h.b16 %v4655
    %v4740 = vunpack.c.l.b16 %v4656
    %v4741 = vunpack.c.h.b16 %v4656
    %v4742 = vunpack.c.l.b16 %v4657
    %v4743 = vunpack.c.h.b16 %v4657
    %v4744 = vunpack.c.l.b16 %v4658
    %v4745 = vunpack.c.h.b16 %v4658
    %v4746 = vunpack.c.l.b16 %v4659
    %v4747 = vunpack.c.h.b16 %v4659
    %v4748 = vunpack.c.l.b16 %v4660
    %v4749 = vunpack.c.h.b16 %v4660
    %v4750 = vunpack.c.l.b16 %v4661
    %v4751 = vunpack.c.h.b16 %v4661
    %v4752 = vunpack.c.l.b16 %v4662
    %v4753 = vunpack.c.h.b16 %v4662
    %v4754 = vunpack.c.l.b16 %v4663
    %v4755 = vunpack.c.h.b16 %v4663
    %v4756 = vunpack.c.l.b16 %v4664
    %v4757 = vunpack.c.h.b16 %v4664
    %v4758 = vunpack.c.l.b16 %v4665
    %v4759 = vunpack.c.h.b16 %v4665
    %v4760 = vunpack.c.l.b16 %v4666
    %v4761 = vunpack.c.h.b16 %v4666
    %v4762 = vunpack.c.l.b16 %v4667
    %v4763 = vunpack.c.h.b16 %v4667
    %v4764 = vunpack.c.l.b16 %v4668
    %v4765 = vunpack.c.h.b16 %v4668
    %v4766 = vunpack.c.l.b16 %v4669
    %v4767 = vunpack.c.h.b16 %v4669
    %v4768 = vunpack.c.l.b16 %v4670
    %v4769 = vunpack.c.h.b16 %v4670
    %v4770 = vunpack.c.l.b16 %v4671
    %v4771 = vunpack.c.h.b16 %v4671
    %v4772 = vunpack.c.l.b16 %v4672
    %v4773 = vunpack.c.h.b16 %v4672
    %v4774 = vunpack.c.l.b16 %v4673
    %v4775 = vunpack.c.h.b16 %v4673
    %v4776 = vunpack.c.l.b16 %v4674
    %v4777 = vunpack.c.h.b16 %v4674
    %v4778 = vunpack.c.l.b16 %v4675
    %v4779 = vunpack.c.h.b16 %v4675
    %v4780 = vunpack.c.l.b16 %v4676
    %v4781 = vunpack.c.h.b16 %v4676
    %v4782 = vpack.c.b16 %v4722, %v4718
    %v4783 = vpack.c.b16 %v4723, %v4719
    %v4784 = vpack.c.b16 %v4724, %v4720
    %v4785 = vpack.c.b16 %v4725, %v4721
    %v4786 = vpack.c.b16 %v4730, %v4726
    %v4787 = vpack.c.b16 %v4731, %v4727
    %v4788 = vpack.c.b16 %v4732, %v4728
    %v4789 = vpack.c.b16 %v4733, %v4729
    %v4790 = vpack.c.b16 %v4738, %v4734
    %v4791 = vpack.c.b16 %v4739, %v4735
    %v4792 = vpack.c.b16 %v4740, %v4736
    %v4793 = vpack.c.b16 %v4741, %v4737
    %v4794 = vpack.c.b16 %v4746, %v4742
    %v4795 = vpack.c.b16 %v4747, %v4743
    %v4796 = vpack.c.b16 %v4748, %v4744
    %v4797 = vpack.c.b16 %v4749, %v4745
    %v4798 = vpack.c.b16 %v4754, %v4750
    %v4799 = vpack.c.b16 %v4755, %v4751
    %v4800 = vpack.c.b16 %v4756, %v4752
    %v4801 = vpack.c.b16 %v4757, %v4753
    %v4802 = vpack.c.b16 %v4762, %v4758
    %v4803 = vpack.c.b16 %v4763, %v4759
    %v4804 = vpack.c.b16 %v4764, %v4760
    %v4805 = vpack.c.b16 %v4765, %v4761
    %v4806 = vpack.c.b16 %v4770, %v4766
    %v4807 = vpack.c.b16 %v4771, %v4767
    %v4808 = vpack.c.b16 %v4772, %v4768
    %v4809 = vpack.c.b16 %v4773, %v4769
    %v4810 = vpack.c.b16 %v4778, %v4774
    %v4811 = vpack.c.b16 %v4779, %v4775
    %v4812 = vpack.c.b16 %v4780, %v4776
    %v4813 = vpack.c.b16 %v4781, %v4777
    %4846 = vmatprep.subr.bf16.mxu0 %v4783
    %4847 = vmatpush1.bf16.msra.mxu0 %v4782
    %4848 = vmatprep.subr.bf16.mxu0 %v4787
    %4849 = vmatpush1.bf16.msra.mxu0 %v4786
    %4850 = vmatprep.subr.bf16.mxu0 %v4791
    %4851 = vmatpush1.bf16.msra.mxu0 %v4790
    %4852 = vmatprep.subr.bf16.mxu0 %v4795
    %4853 = vmatpush1.bf16.msra.mxu0 %v4794
    %4854 = vmatprep.subr.bf16.mxu0 %v4799
    %4855 = vmatpush1.bf16.msra.mxu0 %v4798
    %4856 = vmatprep.subr.bf16.mxu0 %v4803
    %4857 = vmatpush1.bf16.msra.mxu0 %v4802
    %4858 = vmatprep.subr.bf16.mxu0 %v4807
    %4859 = vmatpush1.bf16.msra.mxu0 %v4806
    %4860 = vmatprep.subr.bf16.mxu0 %v4811
    %4861 = vmatpush1.bf16.msra.mxu0 %v4810
    %4862 = vmatprep.subr.bf16.mxu0 0
    %4863 = vmatpush1.bf16.msra.mxu0 0
    %4864 = vmatprep.subr.bf16.mxu0 0
    %4865 = vmatpush1.bf16.msra.mxu0 0
    %4866 = vmatprep.subr.bf16.mxu0 0
    %4867 = vmatpush1.bf16.msra.mxu0 0
    %4868 = vmatprep.subr.bf16.mxu0 0
    %4869 = vmatpush1.bf16.msra.mxu0 0
    %4870 = vmatprep.subr.bf16.mxu0 0
    %4871 = vmatpush1.bf16.msra.mxu0 0
    %4872 = vmatprep.subr.bf16.mxu0 0
    %4873 = vmatpush1.bf16.msra.mxu0 0
    %4874 = vmatprep.subr.bf16.mxu0 0
    %4875 = vmatpush1.bf16.msra.mxu0 0
    %4876 = vmatprep.subr.bf16.mxu0 0
    %4877 = vmatpush1.bf16.msra.mxu0 0
    %4878 = vmatprep.mubr.bf16.mxu0 0
    %4879 = vmatmul.mubr.bf16.gmra.mrb[0].mxu0 %v4685
    %v4880 = vpop.f32.mrb[0].mxu0
    %v4881 = vadd.f32 0.0, %v4880
    %v4882 = vpop.f32.mrb[0].mxu0
    %v4883 = vadd.f32 0.0, %v4882
    %v4884 = vpop.f32.mrb[0].mxu0
    %v4885 = vpop.f32.mrb[0].mxu0
    %4886 = vdwg.mxu0
    %4887 = vmatprep.subr.bf16.mxu0 %v4785
    %4888 = vmatpush1.bf16.msra.mxu0 %v4784
    %4889 = vmatprep.subr.bf16.mxu0 %v4789
    %4890 = vmatpush1.bf16.msra.mxu0 %v4788
    %4891 = vmatprep.subr.bf16.mxu0 %v4793
    %4892 = vmatpush1.bf16.msra.mxu0 %v4792
    %4893 = vmatprep.subr.bf16.mxu0 %v4797
    %4894 = vmatpush1.bf16.msra.mxu0 %v4796
    %4895 = vmatprep.subr.bf16.mxu0 %v4801
    %4896 = vmatpush1.bf16.msra.mxu0 %v4800
    %4897 = vmatprep.subr.bf16.mxu0 %v4805
    %4898 = vmatpush1.bf16.msra.mxu0 %v4804
    %4899 = vmatprep.subr.bf16.mxu0 %v4809
    %4900 = vmatpush1.bf16.msra.mxu0 %v4808
    %4901 = vmatprep.subr.bf16.mxu0 %v4813
    %4902 = vmatpush1.bf16.msra.mxu0 %v4812
    %4903 = vmatprep.subr.bf16.mxu0 0
    %4904 = vmatpush1.bf16.msra.mxu0 0
    %4905 = vmatprep.subr.bf16.mxu0 0
    %4906 = vmatpush1.bf16.msra.mxu0 0
    %4907 = vmatprep.subr.bf16.mxu0 0
    %4908 = vmatpush1.bf16.msra.mxu0 0
    %4909 = vmatprep.subr.bf16.mxu0 0
    %4910 = vmatpush1.bf16.msra.mxu0 0
    %4911 = vmatprep.subr.bf16.mxu0 0
    %4912 = vmatpush1.bf16.msra.mxu0 0
    %4913 = vmatprep.subr.bf16.mxu0 0
    %4914 = vmatpush1.bf16.msra.mxu0 0
    %4915 = vmatprep.subr.bf16.mxu0 0
    %4916 = vmatpush1.bf16.msra.mxu0 0
    %4917 = vmatprep.subr.bf16.mxu0 0
    %4918 = vmatpush1.bf16.msra.mxu0 0
    %4919 = vmatprep.mubr.bf16.mxu0 0
    %4920 = vmatmul.mubr.bf16.gmra.mrb[0].mxu0 %v4685
    %v4921 = vpop.f32.mrb[0].mxu0
    %v4922 = vadd.f32 0.0, %v4921
    %v4923 = vpop.f32.mrb[0].mxu0
    %v4924 = vadd.f32 0.0, %v4923
    %v4925 = vpop.f32.mrb[0].mxu0
    %v4926 = vpop.f32.mrb[0].mxu0
    %4927 = vdwg.mxu0
    %v4928 = vadd.f32 %v4681, %v4881
    %v4929 = vadd.f32 %v4682, %v4883
    %v4930 = vadd.f32 %v4683, %v4922
    %v4931 = vadd.f32 %v4684, %v4924
    %v4932 = vxor.u32 %v4928, 2147483648
    %v4933 = vxor.u32 %v4929, 2147483648
    %v4934 = vxor.u32 %v4930, 2147483648
    %v4935 = vmul.f32 %v4932, 1.442695
    %v4936 = vpow.pop %v4935
    %v4937 = vmul.f32 %v4933, 1.442695
    %v4938 = vpow.pop %v4937
    %v4939 = vmul.f32 %v4934, 1.442695
    %v4940 = vpow.pop %v4939
    %v4941 = vadd.f32 %v4936, 1.0
    %v4942 = vadd.f32 %v4938, 1.0
    %v4943 = vadd.f32 %v4940, 1.0
    %v4944 = vrcp.pop %v4941
    %v4945 = vmul.f32 1.0, %v4944
    %v4946 = vrcp.pop %v4942
    %v4947 = vmul.f32 1.0, %v4946
    %v4948 = vrcp.pop %v4943
    %v4949 = vmul.f32 1.0, %v4948
    %v4950 = vtanh.pop %v4931
    %v4951 = vmul.f32 %v4947, %v1994
    %v4952 = vmul.f32 %v4945, %v4950
    %v4953 = vadd.f32 %v4951, %v4952
    %v4954 = vtanh.pop %v4953
    %v4955 = vmul.f32 %v4949, %v4954
    %4956 = vst [vmem:[#allocation3] sm:$0xff] %v4955
    %v4957 = vld [vmem:[#allocation2 + $0x20] sm:$0xff]
    %v4958 = vld [vmem:[#allocation2 + $0x28] sm:$0xff]
    %v4959 = vld [vmem:[#allocation2 + $0x30] sm:$0xff]
    %v4960 = vld [vmem:[#allocation2 + $0x38] sm:$0xff]
    %v4961 = vadd.f32 %v4957, %v4598
    %v4962 = vadd.f32 %v4958, %v4600
    %v4963 = vadd.f32 %v4959, %v4639
    %v4964 = vadd.f32 %v4960, %v4641
    %v4965 = vpack.c.bf16 %v4955, %v4955
    %4966 = vmatprep.subr.bf16.mxu0 %v4783
    %4967 = vmatpush1.bf16.msra.mxu0 %v4782
    %4968 = vmatprep.subr.bf16.mxu0 %v4787
    %4969 = vmatpush1.bf16.msra.mxu0 %v4786
    %4970 = vmatprep.subr.bf16.mxu0 %v4791
    %4971 = vmatpush1.bf16.msra.mxu0 %v4790
    %4972 = vmatprep.subr.bf16.mxu0 %v4795
    %4973 = vmatpush1.bf16.msra.mxu0 %v4794
    %4974 = vmatprep.subr.bf16.mxu0 %v4799
    %4975 = vmatpush1.bf16.msra.mxu0 %v4798
    %4976 = vmatprep.subr.bf16.mxu0 %v4803
    %4977 = vmatpush1.bf16.msra.mxu0 %v4802
    %4978 = vmatprep.subr.bf16.mxu0 %v4807
    %4979 = vmatpush1.bf16.msra.mxu0 %v4806
    %4980 = vmatprep.subr.bf16.mxu0 %v4811
    %4981 = vmatpush1.bf16.msra.mxu0 %v4810
    %4982 = vmatprep.subr.bf16.mxu0 0
    %4983 = vmatpush1.bf16.msra.mxu0 0
    %4984 = vmatprep.subr.bf16.mxu0 0
    %4985 = vmatpush1.bf16.msra.mxu0 0
    %4986 = vmatprep.subr.bf16.mxu0 0
    %4987 = vmatpush1.bf16.msra.mxu0 0
    %4988 = vmatprep.subr.bf16.mxu0 0
    %4989 = vmatpush1.bf16.msra.mxu0 0
    %4990 = vmatprep.subr.bf16.mxu0 0
    %4991 = vmatpush1.bf16.msra.mxu0 0
    %4992 = vmatprep.subr.bf16.mxu0 0
    %4993 = vmatpush1.bf16.msra.mxu0 0
    %4994 = vmatprep.subr.bf16.mxu0 0
    %4995 = vmatpush1.bf16.msra.mxu0 0
    %4996 = vmatprep.subr.bf16.mxu0 0
    %4997 = vmatpush1.bf16.msra.mxu0 0
    %4998 = vmatprep.mubr.bf16.mxu0 0
    %4999 = vmatmul.mubr.bf16.gmra.mrb[0].mxu0 %v4965
    %v5000 = vpop.f32.mrb[0].mxu0
    %v5001 = vadd.f32 0.0, %v5000
    %v5002 = vpop.f32.mrb[0].mxu0
    %v5003 = vadd.f32 0.0, %v5002
    %v5004 = vpop.f32.mrb[0].mxu0
    %v5005 = vpop.f32.mrb[0].mxu0
    %5006 = vdwg.mxu0
    %5007 = vmatprep.subr.bf16.mxu0 %v4785
    %5008 = vmatpush1.bf16.msra.mxu0 %v4784
    %5009 = vmatprep.subr.bf16.mxu0 %v4789
    %5010 = vmatpush1.bf16.msra.mxu0 %v4788
    %5011 = vmatprep.subr.bf16.mxu0 %v4793
    %5012 = vmatpush1.bf16.msra.mxu0 %v4792
    %5013 = vmatprep.subr.bf16.mxu0 %v4797
    %5014 = vmatpush1.bf16.msra.mxu0 %v4796
    %5015 = vmatprep.subr.bf16.mxu0 %v4801
    %5016 = vmatpush1.bf16.msra.mxu0 %v4800
    %5017 = vmatprep.subr.bf16.mxu0 %v4805
    %5018 = vmatpush1.bf16.msra.mxu0 %v4804
    %5019 = vmatprep.subr.bf16.mxu0 %v4809
    %5020 = vmatpush1.bf16.msra.mxu0 %v4808
    %5021 = vmatprep.subr.bf16.mxu0 %v4813
    %5022 = vmatpush1.bf16.msra.mxu0 %v4812
    %5023 = vmatprep.subr.bf16.mxu0 0
    %5024 = vmatpush1.bf16.msra.mxu0 0
    %5025 = vmatprep.subr.bf16.mxu0 0
    %5026 = vmatpush1.bf16.msra.mxu0 0
    %5027 = vmatprep.subr.bf16.mxu0 0
    %5028 = vmatpush1.bf16.msra.mxu0 0
    %5029 = vmatprep.subr.bf16.mxu0 0
    %5030 = vmatpush1.bf16.msra.mxu0 0
    %5031 = vmatprep.subr.bf16.mxu0 0
    %5032 = vmatpush1.bf16.msra.mxu0 0
    %5033 = vmatprep.subr.bf16.mxu0 0
    %5034 = vmatpush1.bf16.msra.mxu0 0
    %5035 = vmatprep.subr.bf16.mxu0 0
    %5036 = vmatpush1.bf16.msra.mxu0 0
    %5037 = vmatprep.subr.bf16.mxu0 0
    %5038 = vmatpush1.bf16.msra.mxu0 0
    %5039 = vmatprep.mubr.bf16.mxu0 0
    %5040 = vmatmul.mubr.bf16.gmra.mrb[0].mxu0 %v4965
    %v5041 = vpop.f32.mrb[0].mxu0
    %v5042 = vadd.f32 0.0, %v5041
    %v5043 = vpop.f32.mrb[0].mxu0
    %v5044 = vadd.f32 0.0, %v5043
    %v5045 = vpop.f32.mrb[0].mxu0
    %v5046 = vpop.f32.mrb[0].mxu0
    %5047 = vdwg.mxu0
    %v5048 = vadd.f32 %v4961, %v5001
    %v5049 = vadd.f32 %v4962, %v5003
    %v5050 = vadd.f32 %v4963, %v5042
    %v5051 = vadd.f32 %v4964, %v5044
    %v5052 = vxor.u32 %v5048, 2147483648
    %v5053 = vxor.u32 %v5049, 2147483648
    %v5054 = vxor.u32 %v5050, 2147483648
    %v5055 = vmul.f32 %v5052, 1.442695
    %v5056 = vpow.pop %v5055
    %v5057 = vmul.f32 %v5053, 1.442695
    %v5058 = vpow.pop %v5057
    %v5059 = vmul.f32 %v5054, 1.442695
    %v5060 = vpow.pop %v5059
    %v5061 = vadd.f32 %v5056, 1.0
    %v5062 = vadd.f32 %v5058, 1.0
    %v5063 = vadd.f32 %v5060, 1.0
    %v5064 = vrcp.pop %v5061
    %v5065 = vmul.f32 1.0, %v5064
    %v5066 = vrcp.pop %v5062
    %v5067 = vmul.f32 1.0, %v5066
    %v5068 = vrcp.pop %v5063
    %v5069 = vmul.f32 1.0, %v5068
    %v5070 = vtanh.pop %v5051
    %v5071 = vmul.f32 %v5067, %v4953
    %v5072 = vmul.f32 %v5065, %v5070
    %v5073 = vadd.f32 %v5071, %v5072
    %v5074 = vtanh.pop %v5073
    %v5075 = vmul.f32 %v5069, %v5074
    %5076 = vst [vmem:[#allocation3 + $0x8] sm:$0xff] %v5075
    %v5077 = vld [vmem:[#allocation2 + $0x40] sm:$0xff]
    %v5078 = vld [vmem:[#allocation2 + $0x48] sm:$0xff]
    %v5079 = vld [vmem:[#allocation2 + $0x50] sm:$0xff]
    %v5080 = vld [vmem:[#allocation2 + $0x58] sm:$0xff]
    %v5081 = vadd.f32 %v5077, %v4598
    %v5082 = vadd.f32 %v5078, %v4600
    %v5083 = vadd.f32 %v5079, %v4639
    %v5084 = vadd.f32 %v5080, %v4641
    %v5085 = vpack.c.bf16 %v5075, %v5075
    %5086 = vmatprep.subr.bf16.mxu0 %v4783
    %5087 = vmatpush1.bf16.msra.mxu0 %v4782
    %5088 = vmatprep.subr.bf16.mxu0 %v4787
    %5089 = vmatpush1.bf16.msra.mxu0 %v4786
    %5090 = vmatprep.subr.bf16.mxu0 %v4791
    %5091 = vmatpush1.bf16.msra.mxu0 %v4790
    %5092 = vmatprep.subr.bf16.mxu0 %v4795
    %5093 = vmatpush1.bf16.msra.mxu0 %v4794
    %5094 = vmatprep.subr.bf16.mxu0 %v4799
    %5095 = vmatpush1.bf16.msra.mxu0 %v4798
    %5096 = vmatprep.subr.bf16.mxu0 %v4803
    %5097 = vmatpush1.bf16.msra.mxu0 %v4802
    %5098 = vmatprep.subr.bf16.mxu0 %v4807
    %5099 = vmatpush1.bf16.msra.mxu0 %v4806
    %5100 = vmatprep.subr.bf16.mxu0 %v4811
    %5101 = vmatpush1.bf16.msra.mxu0 %v4810
    %5102 = vmatprep.subr.bf16.mxu0 0
    %5103 = vmatpush1.bf16.msra.mxu0 0
    %5104 = vmatprep.subr.bf16.mxu0 0
    %5105 = vmatpush1.bf16.msra.mxu0 0
    %5106 = vmatprep.subr.bf16.mxu0 0
    %5107 = vmatpush1.bf16.msra.mxu0 0
    %5108 = vmatprep.subr.bf16.mxu0 0
    %5109 = vmatpush1.bf16.msra.mxu0 0
    %5110 = vmatprep.subr.bf16.mxu0 0
    %5111 = vmatpush1.bf16.msra.mxu0 0
    %5112 = vmatprep.subr.bf16.mxu0 0
    %5113 = vmatpush1.bf16.msra.mxu0 0
    %5114 = vmatprep.subr.bf16.mxu0 0
    %5115 = vmatpush1.bf16.msra.mxu0 0
    %5116 = vmatprep.subr.bf16.mxu0 0
    %5117 = vmatpush1.bf16.msra.mxu0 0
    %5118 = vmatprep.mubr.bf16.mxu0 0
    %5119 = vmatmul.mubr.bf16.gmra.mrb[0].mxu0 %v5085
    %v5120 = vpop.f32.mrb[0].mxu0
    %v5121 = vadd.f32 0.0, %v5120
    %v5122 = vpop.f32.mrb[0].mxu0
    %v5123 = vadd.f32 0.0, %v5122
    %v5124 = vpop.f32.mrb[0].mxu0
    %v5125 = vpop.f32.mrb[0].mxu0
    %5126 = vdwg.mxu0
    %5127 = vmatprep.subr.bf16.mxu0 %v4785
    %5128 = vmatpush1.bf16.msra.mxu0 %v4784
    %5129 = vmatprep.subr.bf16.mxu0 %v4789
    %5130 = vmatpush1.bf16.msra.mxu0 %v4788
    %5131 = vmatprep.subr.bf16.mxu0 %v4793
    %5132 = vmatpush1.bf16.msra.mxu0 %v4792
    %5133 = vmatprep.subr.bf16.mxu0 %v4797
    %5134 = vmatpush1.bf16.msra.mxu0 %v4796
    %5135 = vmatprep.subr.bf16.mxu0 %v4801
    %5136 = vmatpush1.bf16.msra.mxu0 %v4800
    %5137 = vmatprep.subr.bf16.mxu0 %v4805
    %5138 = vmatpush1.bf16.msra.mxu0 %v4804
    %5139 = vmatprep.subr.bf16.mxu0 %v4809
    %5140 = vmatpush1.bf16.msra.mxu0 %v4808
    %5141 = vmatprep.subr.bf16.mxu0 %v4813
    %5142 = vmatpush1.bf16.msra.mxu0 %v4812
    %5143 = vmatprep.subr.bf16.mxu0 0
    %5144 = vmatpush1.bf16.msra.mxu0 0
    %5145 = vmatprep.subr.bf16.mxu0 0
    %5146 = vmatpush1.bf16.msra.mxu0 0
    %5147 = vmatprep.subr.bf16.mxu0 0
    %5148 = vmatpush1.bf16.msra.mxu0 0
    %5149 = vmatprep.subr.bf16.mxu0 0
    %5150 = vmatpush1.bf16.msra.mxu0 0
    %5151 = vmatprep.subr.bf16.mxu0 0
    %5152 = vmatpush1.bf16.msra.mxu0 0
    %5153 = vmatprep.subr.bf16.mxu0 0
    %5154 = vmatpush1.bf16.msra.mxu0 0
    %5155 = vmatprep.subr.bf16.mxu0 0
    %5156 = vmatpush1.bf16.msra.mxu0 0
    %5157 = vmatprep.subr.bf16.mxu0 0
    %5158 = vmatpush1.bf16.msra.mxu0 0
    %5159 = vmatprep.mubr.bf16.mxu0 0
    %5160 = vmatmul.mubr.bf16.gmra.mrb[0].mxu0 %v5085
    %v5161 = vpop.f32.mrb[0].mxu0
    %v5162 = vadd.f32 0.0, %v5161
    %v5163 = vpop.f32.mrb[0].mxu0
    %v5164 = vadd.f32 0.0, %v5163
    %v5165 = vpop.f32.mrb[0].mxu0
    %v5166 = vpop.f32.mrb[0].mxu0
    %5167 = vdwg.mxu0
    %v5168 = vadd.f32 %v5081, %v5121
    %v5169 = vadd.f32 %v5082, %v5123
    %v5170 = vadd.f32 %v5083, %v5162
    %v5171 = vadd.f32 %v5084, %v5164
    %v5172 = vxor.u32 %v5168, 2147483648
    %v5173 = vxor.u32 %v5169, 2147483648
    %v5174 = vxor.u32 %v5170, 2147483648
    %v5175 = vmul.f32 %v5172, 1.442695
    %v5176 = vpow.pop %v5175
    %v5177 = vmul.f32 %v5173, 1.442695
    %v5178 = vpow.pop %v5177
    %v5179 = vmul.f32 %v5174, 1.442695
    %v5180 = vpow.pop %v5179
    %v5181 = vadd.f32 %v5176, 1.0
    %v5182 = vadd.f32 %v5178, 1.0
    %v5183 = vadd.f32 %v5180, 1.0
    %v5184 = vrcp.pop %v5181
    %v5185 = vmul.f32 1.0, %v5184
    %v5186 = vrcp.pop %v5182
    %v5187 = vmul.f32 1.0, %v5186
    %v5188 = vrcp.pop %v5183
    %v5189 = vmul.f32 1.0, %v5188
    %v5190 = vtanh.pop %v5171
    %v5191 = vmul.f32 %v5187, %v5073
    %v5192 = vmul.f32 %v5185, %v5190
    %v5193 = vadd.f32 %v5191, %v5192
    %v5194 = vtanh.pop %v5193
    %v5195 = vmul.f32 %v5189, %v5194
    %5196 = vst [vmem:[#allocation3 + $0x10] sm:$0xff] %v5195
    %v5197 = vld [vmem:[#allocation2 + $0x60] sm:$0xff]
    %v5198 = vld [vmem:[#allocation2 + $0x68] sm:$0xff]
    %v5199 = vld [vmem:[#allocation2 + $0x70] sm:$0xff]
    %v5200 = vld [vmem:[#allocation2 + $0x78] sm:$0xff]
    %v5201 = vadd.f32 %v5197, %v4598
    %v5202 = vadd.f32 %v5198, %v4600
    %v5203 = vadd.f32 %v5199, %v4639
    %v5204 = vadd.f32 %v5200, %v4641
    %v5205 = vpack.c.bf16 %v5195, %v5195
    %5206 = vmatprep.subr.bf16.mxu0 %v4783
    %5207 = vmatpush1.bf16.msra.mxu0 %v4782
    %5208 = vmatprep.subr.bf16.mxu0 %v4787
    %5209 = vmatpush1.bf16.msra.mxu0 %v4786
    %5210 = vmatprep.subr.bf16.mxu0 %v4791
    %5211 = vmatpush1.bf16.msra.mxu0 %v4790
    %5212 = vmatprep.subr.bf16.mxu0 %v4795
    %5213 = vmatpush1.bf16.msra.mxu0 %v4794
    %5214 = vmatprep.subr.bf16.mxu0 %v4799
    %5215 = vmatpush1.bf16.msra.mxu0 %v4798
    %5216 = vmatprep.subr.bf16.mxu0 %v4803
    %5217 = vmatpush1.bf16.msra.mxu0 %v4802
    %5218 = vmatprep.subr.bf16.mxu0 %v4807
    %5219 = vmatpush1.bf16.msra.mxu0 %v4806
    %5220 = vmatprep.subr.bf16.mxu0 %v4811
    %5221 = vmatpush1.bf16.msra.mxu0 %v4810
    %5222 = vmatprep.subr.bf16.mxu0 0
    %5223 = vmatpush1.bf16.msra.mxu0 0
    %5224 = vmatprep.subr.bf16.mxu0 0
    %5225 = vmatpush1.bf16.msra.mxu0 0
    %5226 = vmatprep.subr.bf16.mxu0 0
    %5227 = vmatpush1.bf16.msra.mxu0 0
    %5228 = vmatprep.subr.bf16.mxu0 0
    %5229 = vmatpush1.bf16.msra.mxu0 0
    %5230 = vmatprep.subr.bf16.mxu0 0
    %5231 = vmatpush1.bf16.msra.mxu0 0
    %5232 = vmatprep.subr.bf16.mxu0 0
    %5233 = vmatpush1.bf16.msra.mxu0 0
    %5234 = vmatprep.subr.bf16.mxu0 0
    %5235 = vmatpush1.bf16.msra.mxu0 0
    %5236 = vmatprep.subr.bf16.mxu0 0
    %5237 = vmatpush1.bf16.msra.mxu0 0
    %5238 = vmatprep.mubr.bf16.mxu0 0
    %5239 = vmatmul.mubr.bf16.gmra.mrb[0].mxu0 %v5205
    %v5240 = vpop.f32.mrb[0].mxu0
    %v5241 = vadd.f32 0.0, %v5240
    %v5242 = vpop.f32.mrb[0].mxu0
    %v5243 = vadd.f32 0.0, %v5242
    %v5244 = vpop.f32.mrb[0].mxu0
    %v5245 = vpop.f32.mrb[0].mxu0
    %5246 = vdwg.mxu0
    %5247 = vmatprep.subr.bf16.mxu0 %v4785
    %5248 = vmatpush1.bf16.msra.mxu0 %v4784
    %5249 = vmatprep.subr.bf16.mxu0 %v4789
    %5250 = vmatpush1.bf16.msra.mxu0 %v4788
    %5251 = vmatprep.subr.bf16.mxu0 %v4793
    %5252 = vmatpush1.bf16.msra.mxu0 %v4792
    %5253 = vmatprep.subr.bf16.mxu0 %v4797
    %5254 = vmatpush1.bf16.msra.mxu0 %v4796
    %5255 = vmatprep.subr.bf16.mxu0 %v4801
    %5256 = vmatpush1.bf16.msra.mxu0 %v4800
    %5257 = vmatprep.subr.bf16.mxu0 %v4805
    %5258 = vmatpush1.bf16.msra.mxu0 %v4804
    %5259 = vmatprep.subr.bf16.mxu0 %v4809
    %5260 = vmatpush1.bf16.msra.mxu0 %v4808
    %5261 = vmatprep.subr.bf16.mxu0 %v4813
    %5262 = vmatpush1.bf16.msra.mxu0 %v4812
    %5263 = vmatprep.subr.bf16.mxu0 0
    %5264 = vmatpush1.bf16.msra.mxu0 0
    %5265 = vmatprep.subr.bf16.mxu0 0
    %5266 = vmatpush1.bf16.msra.mxu0 0
    %5267 = vmatprep.subr.bf16.mxu0 0
    %5268 = vmatpush1.bf16.msra.mxu0 0
    %5269 = vmatprep.subr.bf16.mxu0 0
    %5270 = vmatpush1.bf16.msra.mxu0 0
    %5271 = vmatprep.subr.bf16.mxu0 0
    %5272 = vmatpush1.bf16.msra.mxu0 0
    %5273 = vmatprep.subr.bf16.mxu0 0
    %5274 = vmatpush1.bf16.msra.mxu0 0
    %5275 = vmatprep.subr.bf16.mxu0 0
    %5276 = vmatpush1.bf16.msra.mxu0 0
    %5277 = vmatprep.subr.bf16.mxu0 0
    %5278 = vmatpush1.bf16.msra.mxu0 0
    %5279 = vmatprep.mubr.bf16.mxu0 0
    %5280 = vmatmul.mubr.bf16.gmra.mrb[0].mxu0 %v5205
    %v5281 = vpop.f32.mrb[0].mxu0
    %v5282 = vadd.f32 0.0, %v5281
    %v5283 = vpop.f32.mrb[0].mxu0
    %v5284 = vadd.f32 0.0, %v5283
    %v5285 = vpop.f32.mrb[0].mxu0
    %v5286 = vpop.f32.mrb[0].mxu0
    %5287 = vdwg.mxu0
    %v5288 = vadd.f32 %v5201, %v5241
    %v5289 = vadd.f32 %v5202, %v5243
    %v5290 = vadd.f32 %v5203, %v5282
    %v5291 = vadd.f32 %v5204, %v5284
    %v5292 = vxor.u32 %v5288, 2147483648
    %v5293 = vxor.u32 %v5289, 2147483648
    %v5294 = vxor.u32 %v5290, 2147483648
    %v5295 = vmul.f32 %v5292, 1.442695
    %v5296 = vpow.pop %v5295
    %v5297 = vmul.f32 %v5293, 1.442695
    %v5298 = vpow.pop %v5297
    %v5299 = vmul.f32 %v5294, 1.442695
    %v5300 = vpow.pop %v5299
    %v5301 = vadd.f32 %v5296, 1.0
    %v5302 = vadd.f32 %v5298, 1.0
    %v5303 = vadd.f32 %v5300, 1.0
    %v5304 = vrcp.pop %v5301
    %v5305 = vmul.f32 1.0, %v5304
    %v5306 = vrcp.pop %v5302
    %v5307 = vmul.f32 1.0, %v5306
    %v5308 = vrcp.pop %v5303
    %v5309 = vmul.f32 1.0, %v5308
    %v5310 = vtanh.pop %v5291
    %v5311 = vmul.f32 %v5307, %v5193
    %v5312 = vmul.f32 %v5305, %v5310
    %v5313 = vadd.f32 %v5311, %v5312
    %v5314 = vtanh.pop %v5313
    %v5315 = vmul.f32 %v5309, %v5314
    %5316 = vst [vmem:[#allocation3 + $0x18] sm:$0xff] %v5315
    %v5317 = vld [vmem:[#allocation2 + $0x80] sm:$0xff]
    %v5318 = vld [vmem:[#allocation2 + $0x88] sm:$0xff]
    %v5319 = vld [vmem:[#allocation2 + $0x90] sm:$0xff]
    %v5320 = vld [vmem:[#allocation2 + $0x98] sm:$0xff]
    %v5321 = vadd.f32 %v5317, %v4598
    %v5322 = vadd.f32 %v5318, %v4600
    %v5323 = vadd.f32 %v5319, %v4639
    %v5324 = vadd.f32 %v5320, %v4641
    %v5325 = vpack.c.bf16 %v5315, %v5315
    %5326 = vmatprep.subr.bf16.mxu0 %v4783
    %5327 = vmatpush1.bf16.msra.mxu0 %v4782
    %5328 = vmatprep.subr.bf16.mxu0 %v4787
    %5329 = vmatpush1.bf16.msra.mxu0 %v4786
    %5330 = vmatprep.subr.bf16.mxu0 %v4791
    %5331 = vmatpush1.bf16.msra.mxu0 %v4790
    %5332 = vmatprep.subr.bf16.mxu0 %v4795
    %5333 = vmatpush1.bf16.msra.mxu0 %v4794
    %5334 = vmatprep.subr.bf16.mxu0 %v4799
    %5335 = vmatpush1.bf16.msra.mxu0 %v4798
    %5336 = vmatprep.subr.bf16.mxu0 %v4803
    %5337 = vmatpush1.bf16.msra.mxu0 %v4802
    %5338 = vmatprep.subr.bf16.mxu0 %v4807
    %5339 = vmatpush1.bf16.msra.mxu0 %v4806
    %5340 = vmatprep.subr.bf16.mxu0 %v4811
    %5341 = vmatpush1.bf16.msra.mxu0 %v4810
    %5342 = vmatprep.subr.bf16.mxu0 0
    %5343 = vmatpush1.bf16.msra.mxu0 0
    %5344 = vmatprep.subr.bf16.mxu0 0
    %5345 = vmatpush1.bf16.msra.mxu0 0
    %5346 = vmatprep.subr.bf16.mxu0 0
    %5347 = vmatpush1.bf16.msra.mxu0 0
    %5348 = vmatprep.subr.bf16.mxu0 0
    %5349 = vmatpush1.bf16.msra.mxu0 0
    %5350 = vmatprep.subr.bf16.mxu0 0
    %5351 = vmatpush1.bf16.msra.mxu0 0
    %5352 = vmatprep.subr.bf16.mxu0 0
    %5353 = vmatpush1.bf16.msra.mxu0 0
    %5354 = vmatprep.subr.bf16.mxu0 0
    %5355 = vmatpush1.bf16.msra.mxu0 0
    %5356 = vmatprep.subr.bf16.mxu0 0
    %5357 = vmatpush1.bf16.msra.mxu0 0
    %5358 = vmatprep.mubr.bf16.mxu0 0
    %5359 = vmatmul.mubr.bf16.gmra.mrb[0].mxu0 %v5325
    %v5360 = vpop.f32.mrb[0].mxu0
    %v5361 = vadd.f32 0.0, %v5360
    %v5362 = vpop.f32.mrb[0].mxu0
    %v5363 = vadd.f32 0.0, %v5362
    %v5364 = vpop.f32.mrb[0].mxu0
    %v5365 = vpop.f32.mrb[0].mxu0
    %5366 = vdwg.mxu0
    %5367 = vmatprep.subr.bf16.mxu0 %v4785
    %5368 = vmatpush1.bf16.msra.mxu0 %v4784
    %5369 = vmatprep.subr.bf16.mxu0 %v4789
    %5370 = vmatpush1.bf16.msra.mxu0 %v4788
    %5371 = vmatprep.subr.bf16.mxu0 %v4793
    %5372 = vmatpush1.bf16.msra.mxu0 %v4792
    %5373 = vmatprep.subr.bf16.mxu0 %v4797
    %5374 = vmatpush1.bf16.msra.mxu0 %v4796
    %5375 = vmatprep.subr.bf16.mxu0 %v4801
    %5376 = vmatpush1.bf16.msra.mxu0 %v4800
    %5377 = vmatprep.subr.bf16.mxu0 %v4805
    %5378 = vmatpush1.bf16.msra.mxu0 %v4804
    %5379 = vmatprep.subr.bf16.mxu0 %v4809
    %5380 = vmatpush1.bf16.msra.mxu0 %v4808
    %5381 = vmatprep.subr.bf16.mxu0 %v4813
    %5382 = vmatpush1.bf16.msra.mxu0 %v4812
    %5383 = vmatprep.subr.bf16.mxu0 0
    %5384 = vmatpush1.bf16.msra.mxu0 0
    %5385 = vmatprep.subr.bf16.mxu0 0
    %5386 = vmatpush1.bf16.msra.mxu0 0
    %5387 = vmatprep.subr.bf16.mxu0 0
    %5388 = vmatpush1.bf16.msra.mxu0 0
    %5389 = vmatprep.subr.bf16.mxu0 0
    %5390 = vmatpush1.bf16.msra.mxu0 0
    %5391 = vmatprep.subr.bf16.mxu0 0
    %5392 = vmatpush1.bf16.msra.mxu0 0
    %5393 = vmatprep.subr.bf16.mxu0 0
    %5394 = vmatpush1.bf16.msra.mxu0 0
    %5395 = vmatprep.subr.bf16.mxu0 0
    %5396 = vmatpush1.bf16.msra.mxu0 0
    %5397 = vmatprep.subr.bf16.mxu0 0
    %5398 = vmatpush1.bf16.msra.mxu0 0
    %5399 = vmatprep.mubr.bf16.mxu0 0
    %5400 = vmatmul.mubr.bf16.gmra.mrb[0].mxu0 %v5325
    %v5401 = vpop.f32.mrb[0].mxu0
    %v5402 = vadd.f32 0.0, %v5401
    %v5403 = vpop.f32.mrb[0].mxu0
    %v5404 = vadd.f32 0.0, %v5403
    %v5405 = vpop.f32.mrb[0].mxu0
    %v5406 = vpop.f32.mrb[0].mxu0
    %5407 = vdwg.mxu0
    %v5408 = vadd.f32 %v5321, %v5361
    %v5409 = vadd.f32 %v5322, %v5363
    %v5410 = vadd.f32 %v5323, %v5402
    %v5411 = vadd.f32 %v5324, %v5404
    %v5412 = vxor.u32 %v5408, 2147483648
    %v5413 = vxor.u32 %v5409, 2147483648
    %v5414 = vxor.u32 %v5410, 2147483648
    %v5415 = vmul.f32 %v5412, 1.442695
    %v5416 = vpow.pop %v5415
    %v5417 = vmul.f32 %v5413, 1.442695
    %v5418 = vpow.pop %v5417
    %v5419 = vmul.f32 %v5414, 1.442695
    %v5420 = vpow.pop %v5419
    %v5421 = vadd.f32 %v5416, 1.0
    %v5422 = vadd.f32 %v5418, 1.0
    %v5423 = vadd.f32 %v5420, 1.0
    %v5424 = vrcp.pop %v5421
    %v5425 = vmul.f32 1.0, %v5424
    %v5426 = vrcp.pop %v5422
    %v5427 = vmul.f32 1.0, %v5426
    %v5428 = vrcp.pop %v5423
    %v5429 = vmul.f32 1.0, %v5428
    %v5430 = vtanh.pop %v5411
    %v5431 = vmul.f32 %v5427, %v5313
    %v5432 = vmul.f32 %v5425, %v5430
    %v5433 = vadd.f32 %v5431, %v5432
    %v5434 = vtanh.pop %v5433
    %v5435 = vmul.f32 %v5429, %v5434
    %5436 = vst [vmem:[#allocation3 + $0x20] sm:$0xff] %v5435
    %v5437 = vld [vmem:[#allocation2 + $0xa0] sm:$0xff]
    %v5438 = vld [vmem:[#allocation2 + $0xa8] sm:$0xff]
    %v5439 = vld [vmem:[#allocation2 + $0xb0] sm:$0xff]
    %v5440 = vld [vmem:[#allocation2 + $0xb8] sm:$0xff]
    %v5441 = vadd.f32 %v5437, %v4598
    %v5442 = vadd.f32 %v5438, %v4600
    %v5443 = vadd.f32 %v5439, %v4639
    %v5444 = vadd.f32 %v5440, %v4641
    %v5445 = vpack.c.bf16 %v5435, %v5435
    %5446 = vmatprep.subr.bf16.mxu0 %v4783
    %5447 = vmatpush1.bf16.msra.mxu0 %v4782
    %5448 = vmatprep.subr.bf16.mxu0 %v4787
    %5449 = vmatpush1.bf16.msra.mxu0 %v4786
    %5450 = vmatprep.subr.bf16.mxu0 %v4791
    %5451 = vmatpush1.bf16.msra.mxu0 %v4790
    %5452 = vmatprep.subr.bf16.mxu0 %v4795
    %5453 = vmatpush1.bf16.msra.mxu0 %v4794
    %5454 = vmatprep.subr.bf16.mxu0 %v4799
    %5455 = vmatpush1.bf16.msra.mxu0 %v4798
    %5456 = vmatprep.subr.bf16.mxu0 %v4803
    %5457 = vmatpush1.bf16.msra.mxu0 %v4802
    %5458 = vmatprep.subr.bf16.mxu0 %v4807
    %5459 = vmatpush1.bf16.msra.mxu0 %v4806
    %5460 = vmatprep.subr.bf16.mxu0 %v4811
    %5461 = vmatpush1.bf16.msra.mxu0 %v4810
    %5462 = vmatprep.subr.bf16.mxu0 0
    %5463 = vmatpush1.bf16.msra.mxu0 0
    %5464 = vmatprep.subr.bf16.mxu0 0
    %5465 = vmatpush1.bf16.msra.mxu0 0
    %5466 = vmatprep.subr.bf16.mxu0 0
    %5467 = vmatpush1.bf16.msra.mxu0 0
    %5468 = vmatprep.subr.bf16.mxu0 0
    %5469 = vmatpush1.bf16.msra.mxu0 0
    %5470 = vmatprep.subr.bf16.mxu0 0
    %5471 = vmatpush1.bf16.msra.mxu0 0
    %5472 = vmatprep.subr.bf16.mxu0 0
    %5473 = vmatpush1.bf16.msra.mxu0 0
    %5474 = vmatprep.subr.bf16.mxu0 0
    %5475 = vmatpush1.bf16.msra.mxu0 0
    %5476 = vmatprep.subr.bf16.mxu0 0
    %5477 = vmatpush1.bf16.msra.mxu0 0
    %5478 = vmatprep.mubr.bf16.mxu0 0
    %5479 = vmatmul.mubr.bf16.gmra.mrb[0].mxu0 %v5445
    %v5480 = vpop.f32.mrb[0].mxu0
    %v5481 = vadd.f32 0.0, %v5480
    %v5482 = vpop.f32.mrb[0].mxu0
    %v5483 = vadd.f32 0.0, %v5482
    %v5484 = vpop.f32.mrb[0].mxu0
    %v5485 = vpop.f32.mrb[0].mxu0
    %5486 = vdwg.mxu0
    %5487 = vmatprep.subr.bf16.mxu0 %v4785
    %5488 = vmatpush1.bf16.msra.mxu0 %v4784
    %5489 = vmatprep.subr.bf16.mxu0 %v4789
    %5490 = vmatpush1.bf16.msra.mxu0 %v4788
    %5491 = vmatprep.subr.bf16.mxu0 %v4793
    %5492 = vmatpush1.bf16.msra.mxu0 %v4792
    %5493 = vmatprep.subr.bf16.mxu0 %v4797
    %5494 = vmatpush1.bf16.msra.mxu0 %v4796
    %5495 = vmatprep.subr.bf16.mxu0 %v4801
    %5496 = vmatpush1.bf16.msra.mxu0 %v4800
    %5497 = vmatprep.subr.bf16.mxu0 %v4805
    %5498 = vmatpush1.bf16.msra.mxu0 %v4804
    %5499 = vmatprep.subr.bf16.mxu0 %v4809
    %5500 = vmatpush1.bf16.msra.mxu0 %v4808
    %5501 = vmatprep.subr.bf16.mxu0 %v4813
    %5502 = vmatpush1.bf16.msra.mxu0 %v4812
    %5503 = vmatprep.subr.bf16.mxu0 0
    %5504 = vmatpush1.bf16.msra.mxu0 0
    %5505 = vmatprep.subr.bf16.mxu0 0
    %5506 = vmatpush1.bf16.msra.mxu0 0
    %5507 = vmatprep.subr.bf16.mxu0 0
    %5508 = vmatpush1.bf16.msra.mxu0 0
    %5509 = vmatprep.subr.bf16.mxu0 0
    %5510 = vmatpush1.bf16.msra.mxu0 0
    %5511 = vmatprep.subr.bf16.mxu0 0
    %5512 = vmatpush1.bf16.msra.mxu0 0
    %5513 = vmatprep.subr.bf16.mxu0 0
    %5514 = vmatpush1.bf16.msra.mxu0 0
    %5515 = vmatprep.subr.bf16.mxu0 0
    %5516 = vmatpush1.bf16.msra.mxu0 0
    %5517 = vmatprep.subr.bf16.mxu0 0
    %5518 = vmatpush1.bf16.msra.mxu0 0
    %5519 = vmatprep.mubr.bf16.mxu0 0
    %5520 = vmatmul.mubr.bf16.gmra.mrb[0].mxu0 %v5445
    %v5521 = vpop.f32.mrb[0].mxu0
    %v5522 = vadd.f32 0.0, %v5521
    %v5523 = vpop.f32.mrb[0].mxu0
    %v5524 = vadd.f32 0.0, %v5523
    %v5525 = vpop.f32.mrb[0].mxu0
    %v5526 = vpop.f32.mrb[0].mxu0
    %5527 = vdwg.mxu0
    %v5528 = vadd.f32 %v5441, %v5481
    %v5529 = vadd.f32 %v5442, %v5483
    %v5530 = vadd.f32 %v5443, %v5522
    %v5531 = vadd.f32 %v5444, %v5524
    %v5532 = vxor.u32 %v5528, 2147483648
    %v5533 = vxor.u32 %v5529, 2147483648
    %v5534 = vxor.u32 %v5530, 2147483648
    %v5535 = vmul.f32 %v5532, 1.442695
    %v5536 = vpow.pop %v5535
    %v5537 = vmul.f32 %v5533, 1.442695
    %v5538 = vpow.pop %v5537
    %v5539 = vmul.f32 %v5534, 1.442695
    %v5540 = vpow.pop %v5539
    %v5541 = vadd.f32 %v5536, 1.0
    %v5542 = vadd.f32 %v5538, 1.0
    %v5543 = vadd.f32 %v5540, 1.0
    %v5544 = vrcp.pop %v5541
    %v5545 = vmul.f32 1.0, %v5544
    %v5546 = vrcp.pop %v5542
    %v5547 = vmul.f32 1.0, %v5546
    %v5548 = vrcp.pop %v5543
    %v5549 = vmul.f32 1.0, %v5548
    %v5550 = vtanh.pop %v5531
    %v5551 = vmul.f32 %v5547, %v5433
    %v5552 = vmul.f32 %v5545, %v5550
    %v5553 = vadd.f32 %v5551, %v5552
    %v5554 = vtanh.pop %v5553
    %v5555 = vmul.f32 %v5549, %v5554
    %5556 = vst [vmem:[#allocation3 + $0x28] sm:$0xff] %v5555
    %v5557 = vld [vmem:[#allocation2 + $0xc0] sm:$0xff]
    %v5558 = vld [vmem:[#allocation2 + $0xc8] sm:$0xff]
    %v5559 = vld [vmem:[#allocation2 + $0xd0] sm:$0xff]
    %v5560 = vld [vmem:[#allocation2 + $0xd8] sm:$0xff]
    %v5561 = vadd.f32 %v5557, %v4598
    %v5562 = vadd.f32 %v5558, %v4600
    %v5563 = vadd.f32 %v5559, %v4639
    %v5564 = vadd.f32 %v5560, %v4641
    %v5565 = vpack.c.bf16 %v5555, %v5555
    %5566 = vmatprep.subr.bf16.mxu0 %v4783
    %5567 = vmatpush1.bf16.msra.mxu0 %v4782
    %5568 = vmatprep.subr.bf16.mxu0 %v4787
    %5569 = vmatpush1.bf16.msra.mxu0 %v4786
    %5570 = vmatprep.subr.bf16.mxu0 %v4791
    %5571 = vmatpush1.bf16.msra.mxu0 %v4790
    %5572 = vmatprep.subr.bf16.mxu0 %v4795
    %5573 = vmatpush1.bf16.msra.mxu0 %v4794
    %5574 = vmatprep.subr.bf16.mxu0 %v4799
    %5575 = vmatpush1.bf16.msra.mxu0 %v4798
    %5576 = vmatprep.subr.bf16.mxu0 %v4803
    %5577 = vmatpush1.bf16.msra.mxu0 %v4802
    %5578 = vmatprep.subr.bf16.mxu0 %v4807
    %5579 = vmatpush1.bf16.msra.mxu0 %v4806
    %5580 = vmatprep.subr.bf16.mxu0 %v4811
    %5581 = vmatpush1.bf16.msra.mxu0 %v4810
    %5582 = vmatprep.subr.bf16.mxu0 0
    %5583 = vmatpush1.bf16.msra.mxu0 0
    %5584 = vmatprep.subr.bf16.mxu0 0
    %5585 = vmatpush1.bf16.msra.mxu0 0
    %5586 = vmatprep.subr.bf16.mxu0 0
    %5587 = vmatpush1.bf16.msra.mxu0 0
    %5588 = vmatprep.subr.bf16.mxu0 0
    %5589 = vmatpush1.bf16.msra.mxu0 0
    %5590 = vmatprep.subr.bf16.mxu0 0
    %5591 = vmatpush1.bf16.msra.mxu0 0
    %5592 = vmatprep.subr.bf16.mxu0 0
    %5593 = vmatpush1.bf16.msra.mxu0 0
    %5594 = vmatprep.subr.bf16.mxu0 0
    %5595 = vmatpush1.bf16.msra.mxu0 0
    %5596 = vmatprep.subr.bf16.mxu0 0
    %5597 = vmatpush1.bf16.msra.mxu0 0
    %5598 = vmatprep.mubr.bf16.mxu0 0
    %5599 = vmatmul.mubr.bf16.gmra.mrb[0].mxu0 %v5565
    %v5600 = vpop.f32.mrb[0].mxu0
    %v5601 = vadd.f32 0.0, %v5600
    %v5602 = vpop.f32.mrb[0].mxu0
    %v5603 = vadd.f32 0.0, %v5602
    %v5604 = vpop.f32.mrb[0].mxu0
    %v5605 = vpop.f32.mrb[0].mxu0
    %5606 = vdwg.mxu0
    %5607 = vmatprep.subr.bf16.mxu0 %v4785
    %5608 = vmatpush1.bf16.msra.mxu0 %v4784
    %5609 = vmatprep.subr.bf16.mxu0 %v4789
    %5610 = vmatpush1.bf16.msra.mxu0 %v4788
    %5611 = vmatprep.subr.bf16.mxu0 %v4793
    %5612 = vmatpush1.bf16.msra.mxu0 %v4792
    %5613 = vmatprep.subr.bf16.mxu0 %v4797
    %5614 = vmatpush1.bf16.msra.mxu0 %v4796
    %5615 = vmatprep.subr.bf16.mxu0 %v4801
    %5616 = vmatpush1.bf16.msra.mxu0 %v4800
    %5617 = vmatprep.subr.bf16.mxu0 %v4805
    %5618 = vmatpush1.bf16.msra.mxu0 %v4804
    %5619 = vmatprep.subr.bf16.mxu0 %v4809
    %5620 = vmatpush1.bf16.msra.mxu0 %v4808
    %5621 = vmatprep.subr.bf16.mxu0 %v4813
    %5622 = vmatpush1.bf16.msra.mxu0 %v4812
    %5623 = vmatprep.subr.bf16.mxu0 0
    %5624 = vmatpush1.bf16.msra.mxu0 0
    %5625 = vmatprep.subr.bf16.mxu0 0
    %5626 = vmatpush1.bf16.msra.mxu0 0
    %5627 = vmatprep.subr.bf16.mxu0 0
    %5628 = vmatpush1.bf16.msra.mxu0 0
    %5629 = vmatprep.subr.bf16.mxu0 0
    %5630 = vmatpush1.bf16.msra.mxu0 0
    %5631 = vmatprep.subr.bf16.mxu0 0
    %5632 = vmatpush1.bf16.msra.mxu0 0
    %5633 = vmatprep.subr.bf16.mxu0 0
    %5634 = vmatpush1.bf16.msra.mxu0 0
    %5635 = vmatprep.subr.bf16.mxu0 0
    %5636 = vmatpush1.bf16.msra.mxu0 0
    %5637 = vmatprep.subr.bf16.mxu0 0
    %5638 = vmatpush1.bf16.msra.mxu0 0
    %5639 = vmatprep.mubr.bf16.mxu0 0
    %5640 = vmatmul.mubr.bf16.gmra.mrb[0].mxu0 %v5565
    %v5641 = vpop.f32.mrb[0].mxu0
    %v5642 = vadd.f32 0.0, %v5641
    %v5643 = vpop.f32.mrb[0].mxu0
    %v5644 = vadd.f32 0.0, %v5643
    %v5645 = vpop.f32.mrb[0].mxu0
    %v5646 = vpop.f32.mrb[0].mxu0
    %5647 = vdwg.mxu0
    %v5648 = vadd.f32 %v5561, %v5601
    %v5649 = vadd.f32 %v5562, %v5603
    %v5650 = vadd.f32 %v5563, %v5642
    %v5651 = vadd.f32 %v5564, %v5644
    %v5652 = vxor.u32 %v5648, 2147483648
    %v5653 = vxor.u32 %v5649, 2147483648
    %v5654 = vxor.u32 %v5650, 2147483648
    %v5655 = vmul.f32 %v5652, 1.442695
    %v5656 = vpow.pop %v5655
    %v5657 = vmul.f32 %v5653, 1.442695
    %v5658 = vpow.pop %v5657
    %v5659 = vmul.f32 %v5654, 1.442695
    %v5660 = vpow.pop %v5659
    %v5661 = vadd.f32 %v5656, 1.0
    %v5662 = vadd.f32 %v5658, 1.0
    %v5663 = vadd.f32 %v5660, 1.0
    %v5664 = vrcp.pop %v5661
    %v5665 = vmul.f32 1.0, %v5664
    %v5666 = vrcp.pop %v5662
    %v5667 = vmul.f32 1.0, %v5666
    %v5668 = vrcp.pop %v5663
    %v5669 = vmul.f32 1.0, %v5668
    %v5670 = vtanh.pop %v5651
    %v5671 = vmul.f32 %v5667, %v5553
    %v5672 = vmul.f32 %v5665, %v5670
    %v5673 = vadd.f32 %v5671, %v5672
    %v5674 = vtanh.pop %v5673
    %v5675 = vmul.f32 %v5669, %v5674
    %5676 = vst [vmem:[#allocation3 + $0x30] sm:$0xff] %v5675
    %v5677 = vld [vmem:[#allocation2 + $0xe0] sm:$0xff]
    %v5678 = vld [vmem:[#allocation2 + $0xe8] sm:$0xff]
    %v5679 = vld [vmem:[#allocation2 + $0xf0] sm:$0xff]
    %v5680 = vld [vmem:[#allocation2 + $0xf8] sm:$0xff]
    %v5681 = vadd.f32 %v5677, %v4598
    %v5682 = vadd.f32 %v5678, %v4600
    %v5683 = vadd.f32 %v5679, %v4639
    %v5684 = vadd.f32 %v5680, %v4641
    %v5685 = vpack.c.bf16 %v5675, %v5675
    %5686 = vmatprep.subr.bf16.mxu0 %v4783
    %5687 = vmatpush1.bf16.msra.mxu0 %v4782
    %5688 = vmatprep.subr.bf16.mxu0 %v4787
    %5689 = vmatpush1.bf16.msra.mxu0 %v4786
    %5690 = vmatprep.subr.bf16.mxu0 %v4791
    %5691 = vmatpush1.bf16.msra.mxu0 %v4790
    %5692 = vmatprep.subr.bf16.mxu0 %v4795
    %5693 = vmatpush1.bf16.msra.mxu0 %v4794
    %5694 = vmatprep.subr.bf16.mxu0 %v4799
    %5695 = vmatpush1.bf16.msra.mxu0 %v4798
    %5696 = vmatprep.subr.bf16.mxu0 %v4803
    %5697 = vmatpush1.bf16.msra.mxu0 %v4802
    %5698 = vmatprep.subr.bf16.mxu0 %v4807
    %5699 = vmatpush1.bf16.msra.mxu0 %v4806
    %5700 = vmatprep.subr.bf16.mxu0 %v4811
    %5701 = vmatpush1.bf16.msra.mxu0 %v4810
    %5702 = vmatprep.subr.bf16.mxu0 0
    %5703 = vmatpush1.bf16.msra.mxu0 0
    %5704 = vmatprep.subr.bf16.mxu0 0
    %5705 = vmatpush1.bf16.msra.mxu0 0
    %5706 = vmatprep.subr.bf16.mxu0 0
    %5707 = vmatpush1.bf16.msra.mxu0 0
    %5708 = vmatprep.subr.bf16.mxu0 0
    %5709 = vmatpush1.bf16.msra.mxu0 0
    %5710 = vmatprep.subr.bf16.mxu0 0
    %5711 = vmatpush1.bf16.msra.mxu0 0
    %5712 = vmatprep.subr.bf16.mxu0 0
    %5713 = vmatpush1.bf16.msra.mxu0 0
    %5714 = vmatprep.subr.bf16.mxu0 0
    %5715 = vmatpush1.bf16.msra.mxu0 0
    %5716 = vmatprep.subr.bf16.mxu0 0
    %5717 = vmatpush1.bf16.msra.mxu0 0
    %5718 = vmatprep.mubr.bf16.mxu0 0
    %5719 = vmatmul.mubr.bf16.gmra.mrb[0].mxu0 %v5685
    %v5720 = vpop.f32.mrb[0].mxu0
    %v5721 = vadd.f32 0.0, %v5720
    %v5722 = vpop.f32.mrb[0].mxu0
    %v5723 = vadd.f32 0.0, %v5722
    %v5724 = vpop.f32.mrb[0].mxu0
    %v5725 = vpop.f32.mrb[0].mxu0
    %5726 = vdwg.mxu0
    %5727 = vmatprep.subr.bf16.mxu0 %v4785
    %5728 = vmatpush1.bf16.msra.mxu0 %v4784
    %5729 = vmatprep.subr.bf16.mxu0 %v4789
    %5730 = vmatpush1.bf16.msra.mxu0 %v4788
    %5731 = vmatprep.subr.bf16.mxu0 %v4793
    %5732 = vmatpush1.bf16.msra.mxu0 %v4792
    %5733 = vmatprep.subr.bf16.mxu0 %v4797
    %5734 = vmatpush1.bf16.msra.mxu0 %v4796
    %5735 = vmatprep.subr.bf16.mxu0 %v4801
    %5736 = vmatpush1.bf16.msra.mxu0 %v4800
    %5737 = vmatprep.subr.bf16.mxu0 %v4805
    %5738 = vmatpush1.bf16.msra.mxu0 %v4804
    %5739 = vmatprep.subr.bf16.mxu0 %v4809
    %5740 = vmatpush1.bf16.msra.mxu0 %v4808
    %5741 = vmatprep.subr.bf16.mxu0 %v4813
    %5742 = vmatpush1.bf16.msra.mxu0 %v4812
    %5743 = vmatprep.subr.bf16.mxu0 0
    %5744 = vmatpush1.bf16.msra.mxu0 0
    %5745 = vmatprep.subr.bf16.mxu0 0
    %5746 = vmatpush1.bf16.msra.mxu0 0
    %5747 = vmatprep.subr.bf16.mxu0 0
    %5748 = vmatpush1.bf16.msra.mxu0 0
    %5749 = vmatprep.subr.bf16.mxu0 0
    %5750 = vmatpush1.bf16.msra.mxu0 0
    %5751 = vmatprep.subr.bf16.mxu0 0
    %5752 = vmatpush1.bf16.msra.mxu0 0
    %5753 = vmatprep.subr.bf16.mxu0 0
    %5754 = vmatpush1.bf16.msra.mxu0 0
    %5755 = vmatprep.subr.bf16.mxu0 0
    %5756 = vmatpush1.bf16.msra.mxu0 0
    %5757 = vmatprep.subr.bf16.mxu0 0
    %5758 = vmatpush1.bf16.msra.mxu0 0
    %5759 = vmatprep.mubr.bf16.mxu0 0
    %5760 = vmatmul.mubr.bf16.gmra.mrb[0].mxu0 %v5685
    %v5761 = vpop.f32.mrb[0].mxu0
    %v5762 = vadd.f32 0.0, %v5761
    %v5763 = vpop.f32.mrb[0].mxu0
    %v5764 = vadd.f32 0.0, %v5763
    %v5765 = vpop.f32.mrb[0].mxu0
    %v5766 = vpop.f32.mrb[0].mxu0
    %5767 = vdwg.mxu0
    %v5768 = vadd.f32 %v5681, %v5721
    %v5769 = vadd.f32 %v5682, %v5723
    %v5770 = vadd.f32 %v5683, %v5762
    %v5771 = vadd.f32 %v5684, %v5764
    %v5772 = vxor.u32 %v5768, 2147483648
    %v5773 = vxor.u32 %v5769, 2147483648
    %v5774 = vxor.u32 %v5770, 2147483648
    %v5775 = vmul.f32 %v5772, 1.442695
    %v5776 = vpow.pop %v5775
    %v5777 = vmul.f32 %v5773, 1.442695
    %v5778 = vpow.pop %v5777
    %v5779 = vmul.f32 %v5774, 1.442695
    %v5780 = vpow.pop %v5779
    %v5781 = vadd.f32 %v5776, 1.0
    %v5782 = vadd.f32 %v5778, 1.0
    %v5783 = vadd.f32 %v5780, 1.0
    %v5784 = vrcp.pop %v5781
    %v5785 = vmul.f32 1.0, %v5784
    %v5786 = vrcp.pop %v5782
    %v5787 = vmul.f32 1.0, %v5786
    %v5788 = vrcp.pop %v5783
    %v5789 = vmul.f32 1.0, %v5788
    %v5790 = vtanh.pop %v5771
    %v5791 = vmul.f32 %v5787, %v5673
    %v5792 = vmul.f32 %v5785, %v5790
    %v5793 = vadd.f32 %v5791, %v5792
    %v5794 = vtanh.pop %v5793
    %v5795 = vmul.f32 %v5789, %v5794
    %5796 = vst [vmem:[#allocation3 + $0x38] sm:$0xff] %v5795
    %v5797 = vld [vmem:[#allocation3] sm:$0xff]
    %v5798 = vld [vmem:[#allocation3 + $0x8] sm:$0xff]
    %v5799 = vld [vmem:[#allocation3 + $0x10] sm:$0xff]
    %v5800 = vld [vmem:[#allocation3 + $0x18] sm:$0xff]
    %v5801 = vld [vmem:[#allocation3 + $0x20] sm:$0xff]
    %v5802 = vld [vmem:[#allocation3 + $0x28] sm:$0xff]
    %v5803 = vld [vmem:[#allocation3 + $0x30] sm:$0xff]
    %v5804 = vld [vmem:[#allocation3 + $0x38] sm:$0xff]
    %v5805 = vld [vmem:[#allocation17] sm:$0xff]
    %v5806 = vld [vmem:[#allocation17 + $0x8] sm:$0xff]
    %v5807 = vld [vmem:[#allocation17 + $0x10] sm:$0xff]
    %v5808 = vld [vmem:[#allocation17 + $0x18] sm:$0xff]
    %v5809 = vld [vmem:[#allocation17 + $0x20] sm:$0xff]
    %v5810 = vld [vmem:[#allocation17 + $0x28] sm:$0xff]
    %v5811 = vld [vmem:[#allocation17 + $0x30] sm:$0xff]
    %v5812 = vld [vmem:[#allocation17 + $0x38] sm:$0xff]
    %v5813 = vld [vmem:[#allocation17 + $0x40] sm:$0xff]
    %v5814 = vld [vmem:[#allocation17 + $0x48] sm:$0xff]
    %v5815 = vld [vmem:[#allocation17 + $0x50] sm:$0xff]
    %v5816 = vld [vmem:[#allocation17 + $0x58] sm:$0xff]
    %v5817 = vld [vmem:[#allocation17 + $0x60] sm:$0xff]
    %v5818 = vld [vmem:[#allocation17 + $0x68] sm:$0xff]
    %v5819 = vld [vmem:[#allocation17 + $0x70] sm:$0xff]
    %v5820 = vld [vmem:[#allocation17 + $0x78] sm:$0xff]
    %v5821 = vld [vmem:[#allocation17 + $0x80] sm:$0xff]
    %v5822 = vld [vmem:[#allocation17 + $0x88] sm:$0xff]
    %v5823 = vld [vmem:[#allocation17 + $0x90] sm:$0xff]
    %v5824 = vld [vmem:[#allocation17 + $0x98] sm:$0xff]
    %v5825 = vld [vmem:[#allocation17 + $0xa0] sm:$0xff]
    %v5826 = vld [vmem:[#allocation17 + $0xa8] sm:$0xff]
    %v5827 = vld [vmem:[#allocation17 + $0xb0] sm:$0xff]
    %v5828 = vld [vmem:[#allocation17 + $0xb8] sm:$0xff]
    %v5829 = vld [vmem:[#allocation17 + $0xc0] sm:$0xff]
    %v5830 = vld [vmem:[#allocation17 + $0xc8] sm:$0xff]
    %v5831 = vld [vmem:[#allocation17 + $0xd0] sm:$0xff]
    %v5832 = vld [vmem:[#allocation17 + $0xd8] sm:$0xff]
    %v5833 = vld [vmem:[#allocation17 + $0xe0] sm:$0xff]
    %v5834 = vld [vmem:[#allocation17 + $0xe8] sm:$0xff]
    %v5835 = vld [vmem:[#allocation17 + $0xf0] sm:$0xff]
    %v5836 = vld [vmem:[#allocation17 + $0xf8] sm:$0xff]
    %v5837 = vpack.c.bf16 %v5798, %v5797
    %v5838 = vpack.c.bf16 %v5800, %v5799
    %v5839 = vpack.c.bf16 %v5802, %v5801
    %v5840 = vpack.c.bf16 %v5804, %v5803
    %v5841 = vld [vmem:[%s18] sm:$0xf]
    %v5843 = vlaneseq
    %v5844 = vshrl.u32 %v5843, 7
    %v5845 = vsub.s32 0, %v5844
    %v5846 = vrot.slane %v5841, %v5845
    %v5847 = vlaneseq
    %v5848 = vshrl.u32 %v5847, 7
    %v5849 = vsub.s32 1, %v5848
    %v5850 = vrot.slane %v5841, %v5849
    %v5851 = vlaneseq
    %v5852 = vshrl.u32 %v5851, 7
    %v5853 = vsub.s32 2, %v5852
    %v5854 = vrot.slane %v5841, %v5853
    %v5855 = vlaneseq
    %v5856 = vshrl.u32 %v5855, 7
    %v5857 = vsub.s32 3, %v5856
    %v5858 = vrot.slane %v5841, %v5857
    %v5895 = vunpack.c.l.b16 %v5805
    %v5896 = vunpack.c.h.b16 %v5805
    %v5897 = vunpack.c.l.b16 %v5806
    %v5898 = vunpack.c.h.b16 %v5806
    %v5899 = vunpack.c.l.b16 %v5807
    %v5900 = vunpack.c.h.b16 %v5807
    %v5901 = vunpack.c.l.b16 %v5808
    %v5902 = vunpack.c.h.b16 %v5808
    %v5903 = vunpack.c.l.b16 %v5809
    %v5904 = vunpack.c.h.b16 %v5809
    %v5905 = vunpack.c.l.b16 %v5810
    %v5906 = vunpack.c.h.b16 %v5810
    %v5907 = vunpack.c.l.b16 %v5811
    %v5908 = vunpack.c.h.b16 %v5811
    %v5909 = vunpack.c.l.b16 %v5812
    %v5910 = vunpack.c.h.b16 %v5812
    %v5911 = vunpack.c.l.b16 %v5813
    %v5912 = vunpack.c.h.b16 %v5813
    %v5913 = vunpack.c.l.b16 %v5814
    %v5914 = vunpack.c.h.b16 %v5814
    %v5915 = vunpack.c.l.b16 %v5815
    %v5916 = vunpack.c.h.b16 %v5815
    %v5917 = vunpack.c.l.b16 %v5816
    %v5918 = vunpack.c.h.b16 %v5816
    %v5919 = vunpack.c.l.b16 %v5817
    %v5920 = vunpack.c.h.b16 %v5817
    %v5921 = vunpack.c.l.b16 %v5818
    %v5922 = vunpack.c.h.b16 %v5818
    %v5923 = vunpack.c.l.b16 %v5819
    %v5924 = vunpack.c.h.b16 %v5819
    %v5925 = vunpack.c.l.b16 %v5820
    %v5926 = vunpack.c.h.b16 %v5820
    %v5927 = vunpack.c.l.b16 %v5821
    %v5928 = vunpack.c.h.b16 %v5821
    %v5929 = vunpack.c.l.b16 %v5822
    %v5930 = vunpack.c.h.b16 %v5822
    %v5931 = vunpack.c.l.b16 %v5823
    %v5932 = vunpack.c.h.b16 %v5823
    %v5933 = vunpack.c.l.b16 %v5824
    %v5934 = vunpack.c.h.b16 %v5824
    %v5935 = vunpack.c.l.b16 %v5825
    %v5936 = vunpack.c.h.b16 %v5825
    %v5937 = vunpack.c.l.b16 %v5826
    %v5938 = vunpack.c.h.b16 %v5826
    %v5939 = vunpack.c.l.b16 %v5827
    %v5940 = vunpack.c.h.b16 %v5827
    %v5941 = vunpack.c.l.b16 %v5828
    %v5942 = vunpack.c.h.b16 %v5828
    %v5943 = vunpack.c.l.b16 %v5829
    %v5944 = vunpack.c.h.b16 %v5829
    %v5945 = vunpack.c.l.b16 %v5830
    %v5946 = vunpack.c.h.b16 %v5830
    %v5947 = vunpack.c.l.b16 %v5831
    %v5948 = vunpack.c.h.b16 %v5831
    %v5949 = vunpack.c.l.b16 %v5832
    %v5950 = vunpack.c.h.b16 %v5832
    %v5951 = vunpack.c.l.b16 %v5833
    %v5952 = vunpack.c.h.b16 %v5833
    %v5953 = vunpack.c.l.b16 %v5834
    %v5954 = vunpack.c.h.b16 %v5834
    %v5955 = vunpack.c.l.b16 %v5835
    %v5956 = vunpack.c.h.b16 %v5835
    %v5957 = vunpack.c.l.b16 %v5836
    %v5958 = vunpack.c.h.b16 %v5836
    %v5959 = vpack.c.b16 %v5899, %v5895
    %v5960 = vpack.c.b16 %v5900, %v5896
    %v5961 = vpack.c.b16 %v5901, %v5897
    %v5962 = vpack.c.b16 %v5902, %v5898
    %v5963 = vpack.c.b16 %v5907, %v5903
    %v5964 = vpack.c.b16 %v5908, %v5904
    %v5965 = vpack.c.b16 %v5909, %v5905
    %v5966 = vpack.c.b16 %v5910, %v5906
    %v5967 = vpack.c.b16 %v5915, %v5911
    %v5968 = vpack.c.b16 %v5916, %v5912
    %v5969 = vpack.c.b16 %v5917, %v5913
    %v5970 = vpack.c.b16 %v5918, %v5914
    %v5971 = vpack.c.b16 %v5923, %v5919
    %v5972 = vpack.c.b16 %v5924, %v5920
    %v5973 = vpack.c.b16 %v5925, %v5921
    %v5974 = vpack.c.b16 %v5926, %v5922
    %v5975 = vpack.c.b16 %v5931, %v5927
    %v5976 = vpack.c.b16 %v5932, %v5928
    %v5977 = vpack.c.b16 %v5933, %v5929
    %v5978 = vpack.c.b16 %v5934, %v5930
    %v5979 = vpack.c.b16 %v5939, %v5935
    %v5980 = vpack.c.b16 %v5940, %v5936
    %v5981 = vpack.c.b16 %v5941, %v5937
    %v5982 = vpack.c.b16 %v5942, %v5938
    %v5983 = vpack.c.b16 %v5947, %v5943
    %v5984 = vpack.c.b16 %v5948, %v5944
    %v5985 = vpack.c.b16 %v5949, %v5945
    %v5986 = vpack.c.b16 %v5950, %v5946
    %v5987 = vpack.c.b16 %v5955, %v5951
    %v5988 = vpack.c.b16 %v5956, %v5952
    %v5989 = vpack.c.b16 %v5957, %v5953
    %v5990 = vpack.c.b16 %v5958, %v5954
    %6023 = vmatprep.subr.bf16.mxu0 %v5960
    %6024 = vmatpush1.bf16.msra.mxu0 %v5959
    %6025 = vmatprep.subr.bf16.mxu0 %v5964
    %6026 = vmatpush1.bf16.msra.mxu0 %v5963
    %6027 = vmatprep.subr.bf16.mxu0 %v5968
    %6028 = vmatpush1.bf16.msra.mxu0 %v5967
    %6029 = vmatprep.subr.bf16.mxu0 %v5972
    %6030 = vmatpush1.bf16.msra.mxu0 %v5971
    %6031 = vmatprep.subr.bf16.mxu0 %v5976
    %6032 = vmatpush1.bf16.msra.mxu0 %v5975
    %6033 = vmatprep.subr.bf16.mxu0 %v5980
    %6034 = vmatpush1.bf16.msra.mxu0 %v5979
    %6035 = vmatprep.subr.bf16.mxu0 %v5984
    %6036 = vmatpush1.bf16.msra.mxu0 %v5983
    %6037 = vmatprep.subr.bf16.mxu0 %v5988
    %6038 = vmatpush1.bf16.msra.mxu0 %v5987
    %6039 = vmatprep.subr.bf16.mxu0 0
    %6040 = vmatpush1.bf16.msra.mxu0 0
    %6041 = vmatprep.subr.bf16.mxu0 0
    %6042 = vmatpush1.bf16.msra.mxu0 0
    %6043 = vmatprep.subr.bf16.mxu0 0
    %6044 = vmatpush1.bf16.msra.mxu0 0
    %6045 = vmatprep.subr.bf16.mxu0 0
    %6046 = vmatpush1.bf16.msra.mxu0 0
    %6047 = vmatprep.subr.bf16.mxu0 0
    %6048 = vmatpush1.bf16.msra.mxu0 0
    %6049 = vmatprep.subr.bf16.mxu0 0
    %6050 = vmatpush1.bf16.msra.mxu0 0
    %6051 = vmatprep.subr.bf16.mxu0 0
    %6052 = vmatpush1.bf16.msra.mxu0 0
    %6053 = vmatprep.subr.bf16.mxu0 0
    %6054 = vmatpush1.bf16.msra.mxu0 0
    %6055 = vmatprep.mubr.bf16.mxu0 0
    %6056 = vmatmul.mubr.bf16.gmra.mrb[0].mxu0 %v5837
    %v6057 = vpop.f32.mrb[0].mxu0
    %v6058 = vadd.f32 %v5846, %v6057
    %v6059 = vpop.f32.mrb[0].mxu0
    %v6060 = vadd.f32 %v5850, %v6059
    %v6061 = vpop.f32.mrb[0].mxu0
    %v6062 = vadd.f32 %v5846, %v6061
    %v6063 = vpop.f32.mrb[0].mxu0
    %v6064 = vadd.f32 %v5850, %v6063
    %6065 = vmatprep.mubr.bf16.mxu0 0
    %6066 = vmatmul.mubr.bf16.gmra.mrb[0].mxu0 %v5838
    %v6067 = vpop.f32.mrb[0].mxu0
    %v6068 = vadd.f32 %v5846, %v6067
    %v6069 = vpop.f32.mrb[0].mxu0
    %v6070 = vadd.f32 %v5850, %v6069
    %v6071 = vpop.f32.mrb[0].mxu0
    %v6072 = vadd.f32 %v5846, %v6071
    %v6073 = vpop.f32.mrb[0].mxu0
    %v6074 = vadd.f32 %v5850, %v6073
    %6075 = vmatprep.mubr.bf16.mxu0 0
    %6076 = vmatmul.mubr.bf16.gmra.mrb[0].mxu0 %v5839
    %v6077 = vpop.f32.mrb[0].mxu0
    %v6078 = vadd.f32 %v5846, %v6077
    %v6079 = vpop.f32.mrb[0].mxu0
    %v6080 = vadd.f32 %v5850, %v6079
    %v6081 = vpop.f32.mrb[0].mxu0
    %v6082 = vadd.f32 %v5846, %v6081
    %v6083 = vpop.f32.mrb[0].mxu0
    %v6084 = vadd.f32 %v5850, %v6083
    %6085 = vmatprep.mubr.bf16.mxu0 0
    %6086 = vmatmul.mubr.bf16.gmra.mrb[0].mxu0 %v5840
    %v6087 = vpop.f32.mrb[0].mxu0
    %v6088 = vadd.f32 %v5846, %v6087
    %v6089 = vpop.f32.mrb[0].mxu0
    %v6090 = vadd.f32 %v5850, %v6089
    %v6091 = vpop.f32.mrb[0].mxu0
    %v6092 = vadd.f32 %v5846, %v6091
    %v6093 = vpop.f32.mrb[0].mxu0
    %v6094 = vadd.f32 %v5850, %v6093
    %6095 = vdwg.mxu0
    %6096 = vmatprep.subr.bf16.mxu0 %v5962
    %6097 = vmatpush1.bf16.msra.mxu0 %v5961
    %6098 = vmatprep.subr.bf16.mxu0 %v5966
    %6099 = vmatpush1.bf16.msra.mxu0 %v5965
    %6100 = vmatprep.subr.bf16.mxu0 %v5970
    %6101 = vmatpush1.bf16.msra.mxu0 %v5969
    %6102 = vmatprep.subr.bf16.mxu0 %v5974
    %6103 = vmatpush1.bf16.msra.mxu0 %v5973
    %6104 = vmatprep.subr.bf16.mxu0 %v5978
    %6105 = vmatpush1.bf16.msra.mxu0 %v5977
    %6106 = vmatprep.subr.bf16.mxu0 %v5982
    %6107 = vmatpush1.bf16.msra.mxu0 %v5981
    %6108 = vmatprep.subr.bf16.mxu0 %v5986
    %6109 = vmatpush1.bf16.msra.mxu0 %v5985
    %6110 = vmatprep.subr.bf16.mxu0 %v5990
    %6111 = vmatpush1.bf16.msra.mxu0 %v5989
    %6112 = vmatprep.subr.bf16.mxu0 0
    %6113 = vmatpush1.bf16.msra.mxu0 0
    %6114 = vmatprep.subr.bf16.mxu0 0
    %6115 = vmatpush1.bf16.msra.mxu0 0
    %6116 = vmatprep.subr.bf16.mxu0 0
    %6117 = vmatpush1.bf16.msra.mxu0 0
    %6118 = vmatprep.subr.bf16.mxu0 0
    %6119 = vmatpush1.bf16.msra.mxu0 0
    %6120 = vmatprep.subr.bf16.mxu0 0
    %6121 = vmatpush1.bf16.msra.mxu0 0
    %6122 = vmatprep.subr.bf16.mxu0 0
    %6123 = vmatpush1.bf16.msra.mxu0 0
    %6124 = vmatprep.subr.bf16.mxu0 0
    %6125 = vmatpush1.bf16.msra.mxu0 0
    %6126 = vmatprep.subr.bf16.mxu0 0
    %6127 = vmatpush1.bf16.msra.mxu0 0
    %6128 = vmatprep.mubr.bf16.mxu0 0
    %6129 = vmatmul.mubr.bf16.gmra.mrb[0].mxu0 %v5837
    %v6130 = vpop.f32.mrb[0].mxu0
    %v6131 = vadd.f32 %v5854, %v6130
    %v6132 = vpop.f32.mrb[0].mxu0
    %v6133 = vadd.f32 %v5858, %v6132
    %v6134 = vpop.f32.mrb[0].mxu0
    %v6135 = vadd.f32 %v5854, %v6134
    %v6136 = vpop.f32.mrb[0].mxu0
    %v6137 = vadd.f32 %v5858, %v6136
    %6138 = vmatprep.mubr.bf16.mxu0 0
    %6139 = vmatmul.mubr.bf16.gmra.mrb[0].mxu0 %v5838
    %v6140 = vpop.f32.mrb[0].mxu0
    %v6141 = vadd.f32 %v5854, %v6140
    %v6142 = vpop.f32.mrb[0].mxu0
    %v6143 = vadd.f32 %v5858, %v6142
    %v6144 = vpop.f32.mrb[0].mxu0
    %v6145 = vadd.f32 %v5854, %v6144
    %v6146 = vpop.f32.mrb[0].mxu0
    %v6147 = vadd.f32 %v5858, %v6146
    %6148 = vmatprep.mubr.bf16.mxu0 0
    %6149 = vmatmul.mubr.bf16.gmra.mrb[0].mxu0 %v5839
    %v6150 = vpop.f32.mrb[0].mxu0
    %v6151 = vadd.f32 %v5854, %v6150
    %v6152 = vpop.f32.mrb[0].mxu0
    %v6153 = vadd.f32 %v5858, %v6152
    %v6154 = vpop.f32.mrb[0].mxu0
    %v6155 = vadd.f32 %v5854, %v6154
    %v6156 = vpop.f32.mrb[0].mxu0
    %v6157 = vadd.f32 %v5858, %v6156
    %6158 = vmatprep.mubr.bf16.mxu0 0
    %6159 = vmatmul.mubr.bf16.gmra.mrb[0].mxu0 %v5840
    %v6160 = vpop.f32.mrb[0].mxu0
    %v6161 = vadd.f32 %v5854, %v6160
    %v6162 = vpop.f32.mrb[0].mxu0
    %v6163 = vadd.f32 %v5858, %v6162
    %v6164 = vpop.f32.mrb[0].mxu0
    %v6165 = vadd.f32 %v5854, %v6164
    %v6166 = vpop.f32.mrb[0].mxu0
    %v6167 = vadd.f32 %v5858, %v6166
    %6168 = vdwg.mxu0
    %6169 = vst [vmem:[#allocation2] sm:$0xff] %v6058
    %6170 = vst [vmem:[#allocation2 + $0x8] sm:$0xff] %v6060
    %6171 = vst [vmem:[#allocation2 + $0x10] sm:$0xff] %v6131
    %6172 = vst [vmem:[#allocation2 + $0x18] sm:$0xff] %v6133
    %6173 = vst [vmem:[#allocation2 + $0x20] sm:$0xff] %v6062
    %6174 = vst [vmem:[#allocation2 + $0x28] sm:$0xff] %v6064
    %6175 = vst [vmem:[#allocation2 + $0x30] sm:$0xff] %v6135
    %6176 = vst [vmem:[#allocation2 + $0x38] sm:$0xff] %v6137
    %6177 = vst [vmem:[#allocation2 + $0x40] sm:$0xff] %v6068
    %6178 = vst [vmem:[#allocation2 + $0x48] sm:$0xff] %v6070
    %6179 = vst [vmem:[#allocation2 + $0x50] sm:$0xff] %v6141
    %6180 = vst [vmem:[#allocation2 + $0x58] sm:$0xff] %v6143
    %6181 = vst [vmem:[#allocation2 + $0x60] sm:$0xff] %v6072
    %6182 = vst [vmem:[#allocation2 + $0x68] sm:$0xff] %v6074
    %6183 = vst [vmem:[#allocation2 + $0x70] sm:$0xff] %v6145
    %6184 = vst [vmem:[#allocation2 + $0x78] sm:$0xff] %v6147
    %6185 = vst [vmem:[#allocation2 + $0x80] sm:$0xff] %v6078
    %6186 = vst [vmem:[#allocation2 + $0x88] sm:$0xff] %v6080
    %6187 = vst [vmem:[#allocation2 + $0x90] sm:$0xff] %v6151
    %6188 = vst [vmem:[#allocation2 + $0x98] sm:$0xff] %v6153
    %6189 = vst [vmem:[#allocation2 + $0xa0] sm:$0xff] %v6082
    %6190 = vst [vmem:[#allocation2 + $0xa8] sm:$0xff] %v6084
    %6191 = vst [vmem:[#allocation2 + $0xb0] sm:$0xff] %v6155
    %6192 = vst [vmem:[#allocation2 + $0xb8] sm:$0xff] %v6157
    %6193 = vst [vmem:[#allocation2 + $0xc0] sm:$0xff] %v6088
    %6194 = vst [vmem:[#allocation2 + $0xc8] sm:$0xff] %v6090
    %6195 = vst [vmem:[#allocation2 + $0xd0] sm:$0xff] %v6161
    %6196 = vst [vmem:[#allocation2 + $0xd8] sm:$0xff] %v6163
    %6197 = vst [vmem:[#allocation2 + $0xe0] sm:$0xff] %v6092
    %6198 = vst [vmem:[#allocation2 + $0xe8] sm:$0xff] %v6094
    %6199 = vst [vmem:[#allocation2 + $0xf0] sm:$0xff] %v6165
    %6200 = vst [vmem:[#allocation2 + $0xf8] sm:$0xff] %v6167
    %v6201 = vld [vmem:[#allocation19] sm:$0xff]
    %v6202 = vld [vmem:[#allocation19 + $0x8] sm:$0xff]
    %v6203 = vld [vmem:[#allocation19 + $0x10] sm:$0xff]
    %v6204 = vld [vmem:[#allocation19 + $0x18] sm:$0xff]
    %v6205 = vld [vmem:[#allocation19 + $0x20] sm:$0xff]
    %v6206 = vld [vmem:[#allocation19 + $0x28] sm:$0xff]
    %v6207 = vld [vmem:[#allocation19 + $0x30] sm:$0xff]
    %v6208 = vld [vmem:[#allocation19 + $0x38] sm:$0xff]
    %v6209 = vld [vmem:[#allocation19 + $0x40] sm:$0xff]
    %v6210 = vld [vmem:[#allocation19 + $0x48] sm:$0xff]
    %v6211 = vld [vmem:[#allocation19 + $0x50] sm:$0xff]
    %v6212 = vld [vmem:[#allocation19 + $0x58] sm:$0xff]
    %v6213 = vld [vmem:[#allocation19 + $0x60] sm:$0xff]
    %v6214 = vld [vmem:[#allocation19 + $0x68] sm:$0xff]
    %v6215 = vld [vmem:[#allocation19 + $0x70] sm:$0xff]
    %v6216 = vld [vmem:[#allocation19 + $0x78] sm:$0xff]
    %v6217 = vld [vmem:[#allocation19 + $0x80] sm:$0xff]
    %v6218 = vld [vmem:[#allocation19 + $0x88] sm:$0xff]
    %v6219 = vld [vmem:[#allocation19 + $0x90] sm:$0xff]
    %v6220 = vld [vmem:[#allocation19 + $0x98] sm:$0xff]
    %v6221 = vld [vmem:[#allocation19 + $0xa0] sm:$0xff]
    %v6222 = vld [vmem:[#allocation19 + $0xa8] sm:$0xff]
    %v6223 = vld [vmem:[#allocation19 + $0xb0] sm:$0xff]
    %v6224 = vld [vmem:[#allocation19 + $0xb8] sm:$0xff]
    %v6225 = vld [vmem:[#allocation19 + $0xc0] sm:$0xff]
    %v6226 = vld [vmem:[#allocation19 + $0xc8] sm:$0xff]
    %v6227 = vld [vmem:[#allocation19 + $0xd0] sm:$0xff]
    %v6228 = vld [vmem:[#allocation19 + $0xd8] sm:$0xff]
    %v6229 = vld [vmem:[#allocation19 + $0xe0] sm:$0xff]
    %v6230 = vld [vmem:[#allocation19 + $0xe8] sm:$0xff]
    %v6231 = vld [vmem:[#allocation19 + $0xf0] sm:$0xff]
    %v6232 = vld [vmem:[#allocation19 + $0xf8] sm:$0xff]
    %v6233 = vld [vmem:[#allocation2] sm:$0xff]
    %v6234 = vld [vmem:[#allocation2 + $0x8] sm:$0xff]
    %v6235 = vld [vmem:[#allocation2 + $0x10] sm:$0xff]
    %v6236 = vld [vmem:[#allocation2 + $0x18] sm:$0xff]
    %v6269 = vunpack.c.l.b16 %v6201
    %v6270 = vunpack.c.h.b16 %v6201
    %v6271 = vunpack.c.l.b16 %v6202
    %v6272 = vunpack.c.h.b16 %v6202
    %v6273 = vunpack.c.l.b16 %v6203
    %v6274 = vunpack.c.h.b16 %v6203
    %v6275 = vunpack.c.l.b16 %v6204
    %v6276 = vunpack.c.h.b16 %v6204
    %v6277 = vunpack.c.l.b16 %v6205
    %v6278 = vunpack.c.h.b16 %v6205
    %v6279 = vunpack.c.l.b16 %v6206
    %v6280 = vunpack.c.h.b16 %v6206
    %v6281 = vunpack.c.l.b16 %v6207
    %v6282 = vunpack.c.h.b16 %v6207
    %v6283 = vunpack.c.l.b16 %v6208
    %v6284 = vunpack.c.h.b16 %v6208
    %v6285 = vunpack.c.l.b16 %v6209
    %v6286 = vunpack.c.h.b16 %v6209
    %v6287 = vunpack.c.l.b16 %v6210
    %v6288 = vunpack.c.h.b16 %v6210
    %v6289 = vunpack.c.l.b16 %v6211
    %v6290 = vunpack.c.h.b16 %v6211
    %v6291 = vunpack.c.l.b16 %v6212
    %v6292 = vunpack.c.h.b16 %v6212
    %v6293 = vunpack.c.l.b16 %v6213
    %v6294 = vunpack.c.h.b16 %v6213
    %v6295 = vunpack.c.l.b16 %v6214
    %v6296 = vunpack.c.h.b16 %v6214
    %v6297 = vunpack.c.l.b16 %v6215
    %v6298 = vunpack.c.h.b16 %v6215
    %v6299 = vunpack.c.l.b16 %v6216
    %v6300 = vunpack.c.h.b16 %v6216
    %v6301 = vunpack.c.l.b16 %v6217
    %v6302 = vunpack.c.h.b16 %v6217
    %v6303 = vunpack.c.l.b16 %v6218
    %v6304 = vunpack.c.h.b16 %v6218
    %v6305 = vunpack.c.l.b16 %v6219
    %v6306 = vunpack.c.h.b16 %v6219
    %v6307 = vunpack.c.l.b16 %v6220
    %v6308 = vunpack.c.h.b16 %v6220
    %v6309 = vunpack.c.l.b16 %v6221
    %v6310 = vunpack.c.h.b16 %v6221
    %v6311 = vunpack.c.l.b16 %v6222
    %v6312 = vunpack.c.h.b16 %v6222
    %v6313 = vunpack.c.l.b16 %v6223
    %v6314 = vunpack.c.h.b16 %v6223
    %v6315 = vunpack.c.l.b16 %v6224
    %v6316 = vunpack.c.h.b16 %v6224
    %v6317 = vunpack.c.l.b16 %v6225
    %v6318 = vunpack.c.h.b16 %v6225
    %v6319 = vunpack.c.l.b16 %v6226
    %v6320 = vunpack.c.h.b16 %v6226
    %v6321 = vunpack.c.l.b16 %v6227
    %v6322 = vunpack.c.h.b16 %v6227
    %v6323 = vunpack.c.l.b16 %v6228
    %v6324 = vunpack.c.h.b16 %v6228
    %v6325 = vunpack.c.l.b16 %v6229
    %v6326 = vunpack.c.h.b16 %v6229
    %v6327 = vunpack.c.l.b16 %v6230
    %v6328 = vunpack.c.h.b16 %v6230
    %v6329 = vunpack.c.l.b16 %v6231
    %v6330 = vunpack.c.h.b16 %v6231
    %v6331 = vunpack.c.l.b16 %v6232
    %v6332 = vunpack.c.h.b16 %v6232
    %v6333 = vpack.c.b16 %v6273, %v6269
    %v6334 = vpack.c.b16 %v6274, %v6270
    %v6335 = vpack.c.b16 %v6275, %v6271
    %v6336 = vpack.c.b16 %v6276, %v6272
    %v6337 = vpack.c.b16 %v6281, %v6277
    %v6338 = vpack.c.b16 %v6282, %v6278
    %v6339 = vpack.c.b16 %v6283, %v6279
    %v6340 = vpack.c.b16 %v6284, %v6280
    %v6341 = vpack.c.b16 %v6289, %v6285
    %v6342 = vpack.c.b16 %v6290, %v6286
    %v6343 = vpack.c.b16 %v6291, %v6287
    %v6344 = vpack.c.b16 %v6292, %v6288
    %v6345 = vpack.c.b16 %v6297, %v6293
    %v6346 = vpack.c.b16 %v6298, %v6294
    %v6347 = vpack.c.b16 %v6299, %v6295
    %v6348 = vpack.c.b16 %v6300, %v6296
    %v6349 = vpack.c.b16 %v6305, %v6301
    %v6350 = vpack.c.b16 %v6306, %v6302
    %v6351 = vpack.c.b16 %v6307, %v6303
    %v6352 = vpack.c.b16 %v6308, %v6304
    %v6353 = vpack.c.b16 %v6313, %v6309
    %v6354 = vpack.c.b16 %v6314, %v6310
    %v6355 = vpack.c.b16 %v6315, %v6311
    %v6356 = vpack.c.b16 %v6316, %v6312
    %v6357 = vpack.c.b16 %v6321, %v6317
    %v6358 = vpack.c.b16 %v6322, %v6318
    %v6359 = vpack.c.b16 %v6323, %v6319
    %v6360 = vpack.c.b16 %v6324, %v6320
    %v6361 = vpack.c.b16 %v6329, %v6325
    %v6362 = vpack.c.b16 %v6330, %v6326
    %v6363 = vpack.c.b16 %v6331, %v6327
    %v6364 = vpack.c.b16 %v6332, %v6328
    %6397 = vmatprep.subr.bf16.mxu0 %v6334
    %6398 = vmatpush1.bf16.msra.mxu0 %v6333
    %6399 = vmatprep.subr.bf16.mxu0 %v6338
    %6400 = vmatpush1.bf16.msra.mxu0 %v6337
    %6401 = vmatprep.subr.bf16.mxu0 %v6342
    %6402 = vmatpush1.bf16.msra.mxu0 %v6341
    %6403 = vmatprep.subr.bf16.mxu0 %v6346
    %6404 = vmatpush1.bf16.msra.mxu0 %v6345
    %6405 = vmatprep.subr.bf16.mxu0 %v6350
    %6406 = vmatpush1.bf16.msra.mxu0 %v6349
    %6407 = vmatprep.subr.bf16.mxu0 %v6354
    %6408 = vmatpush1.bf16.msra.mxu0 %v6353
    %6409 = vmatprep.subr.bf16.mxu0 %v6358
    %6410 = vmatpush1.bf16.msra.mxu0 %v6357
    %6411 = vmatprep.subr.bf16.mxu0 %v6362
    %6412 = vmatpush1.bf16.msra.mxu0 %v6361
    %6413 = vmatprep.subr.bf16.mxu0 0
    %6414 = vmatpush1.bf16.msra.mxu0 0
    %6415 = vmatprep.subr.bf16.mxu0 0
    %6416 = vmatpush1.bf16.msra.mxu0 0
    %6417 = vmatprep.subr.bf16.mxu0 0
    %6418 = vmatpush1.bf16.msra.mxu0 0
    %6419 = vmatprep.subr.bf16.mxu0 0
    %6420 = vmatpush1.bf16.msra.mxu0 0
    %6421 = vmatprep.subr.bf16.mxu0 0
    %6422 = vmatpush1.bf16.msra.mxu0 0
    %6423 = vmatprep.subr.bf16.mxu0 0
    %6424 = vmatpush1.bf16.msra.mxu0 0
    %6425 = vmatprep.subr.bf16.mxu0 0
    %6426 = vmatpush1.bf16.msra.mxu0 0
    %6427 = vmatprep.subr.bf16.mxu0 0
    %6428 = vmatpush1.bf16.msra.mxu0 0
    %6429 = vmatprep.mubr.bf16.mxu0 0
    %6430 = vmatmul.mubr.bf16.gmra.mrb[0].mxu0 %v4380
    %v6431 = vpop.f32.mrb[0].mxu0
    %v6432 = vadd.f32 0.0, %v6431
    %v6433 = vpop.f32.mrb[0].mxu0
    %v6434 = vadd.f32 0.0, %v6433
    %v6435 = vpop.f32.mrb[0].mxu0
    %v6436 = vpop.f32.mrb[0].mxu0
    %6437 = vdwg.mxu0
    %6438 = vmatprep.subr.bf16.mxu0 %v6336
    %6439 = vmatpush1.bf16.msra.mxu0 %v6335
    %6440 = vmatprep.subr.bf16.mxu0 %v6340
    %6441 = vmatpush1.bf16.msra.mxu0 %v6339
    %6442 = vmatprep.subr.bf16.mxu0 %v6344
    %6443 = vmatpush1.bf16.msra.mxu0 %v6343
    %6444 = vmatprep.subr.bf16.mxu0 %v6348
    %6445 = vmatpush1.bf16.msra.mxu0 %v6347
    %6446 = vmatprep.subr.bf16.mxu0 %v6352
    %6447 = vmatpush1.bf16.msra.mxu0 %v6351
    %6448 = vmatprep.subr.bf16.mxu0 %v6356
    %6449 = vmatpush1.bf16.msra.mxu0 %v6355
    %6450 = vmatprep.subr.bf16.mxu0 %v6360
    %6451 = vmatpush1.bf16.msra.mxu0 %v6359
    %6452 = vmatprep.subr.bf16.mxu0 %v6364
    %6453 = vmatpush1.bf16.msra.mxu0 %v6363
    %6454 = vmatprep.subr.bf16.mxu0 0
    %6455 = vmatpush1.bf16.msra.mxu0 0
    %6456 = vmatprep.subr.bf16.mxu0 0
    %6457 = vmatpush1.bf16.msra.mxu0 0
    %6458 = vmatprep.subr.bf16.mxu0 0
    %6459 = vmatpush1.bf16.msra.mxu0 0
    %6460 = vmatprep.subr.bf16.mxu0 0
    %6461 = vmatpush1.bf16.msra.mxu0 0
    %6462 = vmatprep.subr.bf16.mxu0 0
    %6463 = vmatpush1.bf16.msra.mxu0 0
    %6464 = vmatprep.subr.bf16.mxu0 0
    %6465 = vmatpush1.bf16.msra.mxu0 0
    %6466 = vmatprep.subr.bf16.mxu0 0
    %6467 = vmatpush1.bf16.msra.mxu0 0
    %6468 = vmatprep.subr.bf16.mxu0 0
    %6469 = vmatpush1.bf16.msra.mxu0 0
    %6470 = vmatprep.mubr.bf16.mxu0 0
    %6471 = vmatmul.mubr.bf16.gmra.mrb[0].mxu0 %v4380
    %v6472 = vpop.f32.mrb[0].mxu0
    %v6473 = vadd.f32 0.0, %v6472
    %v6474 = vpop.f32.mrb[0].mxu0
    %v6475 = vadd.f32 0.0, %v6474
    %v6476 = vpop.f32.mrb[0].mxu0
    %v6477 = vpop.f32.mrb[0].mxu0
    %6478 = vdwg.mxu0
    %v6479 = vadd.f32 %v6233, %v6432
    %v6480 = vadd.f32 %v6234, %v6434
    %v6481 = vadd.f32 %v6235, %v6473
    %v6482 = vadd.f32 %v6236, %v6475
    %v6483 = vxor.u32 %v6479, 2147483648
    %v6484 = vxor.u32 %v6480, 2147483648
    %v6485 = vxor.u32 %v6481, 2147483648
    %v6486 = vmul.f32 %v6483, 1.442695
    %v6487 = vpow.pop %v6486
    %v6488 = vmul.f32 %v6484, 1.442695
    %v6489 = vpow.pop %v6488
    %v6490 = vmul.f32 %v6485, 1.442695
    %v6491 = vpow.pop %v6490
    %v6492 = vadd.f32 %v6487, 1.0
    %v6493 = vadd.f32 %v6489, 1.0
    %v6494 = vadd.f32 %v6491, 1.0
    %v6495 = vrcp.pop %v6492
    %v6496 = vmul.f32 1.0, %v6495
    %v6497 = vrcp.pop %v6493
    %v6498 = vmul.f32 1.0, %v6497
    %v6499 = vrcp.pop %v6494
    %v6500 = vmul.f32 1.0, %v6499
    %v6501 = vtanh.pop %v6482
    %v6502 = vmul.f32 %v6498, %v3510
    %v6503 = vmul.f32 %v6496, %v6501
    %v6504 = vadd.f32 %v6502, %v6503
    %v6505 = vtanh.pop %v6504
    %v6506 = vmul.f32 %v6500, %v6505
    %v6508 = vcombine.high %v6506, %v6506
    %v6510 = vunpack.c.l.s4 1966171168
    %v6511 = vunpack.c.0.s8 %v6510
    %v6512 = vlaneseq
    %v6513 = vshrl.u32 %v6512, 7
    %v6514 = vsub.s32 %v6511, %v6513
    %v6515 = vrot.slane %v6506, %v6514
    %v6517 = vunpack.c.l.s4 1966171168
    %v6518 = vunpack.c.0.s8 %v6517
    %v6519 = vlaneseq
    %v6520 = vshrl.u32 %v6519, 7
    %v6521 = vsub.s32 %v6518, %v6520
    %v6522 = vrot.slane %v6508, %v6521
    %v6523 = vcombine.high %v6515, %v6515
    %v6524 = vcombine.high %v6522, %v6522
    %v6526 = vunpack.c.l.s4 1966171168
    %v6527 = vunpack.c.0.s8 %v6526
    %v6528 = vlaneseq
    %v6529 = vshrl.u32 %v6528, 7
    %v6530 = vsub.s32 %v6527, %v6529
    %v6531 = vrot.slane %v6515, %v6530
    %v6533 = vunpack.c.l.s4 1966171168
    %v6534 = vunpack.c.0.s8 %v6533
    %v6535 = vlaneseq
    %v6536 = vshrl.u32 %v6535, 7
    %v6537 = vsub.s32 %v6534, %v6536
    %v6538 = vrot.slane %v6522, %v6537
    %v6540 = vunpack.c.l.s4 1966171168
    %v6541 = vunpack.c.0.s8 %v6540
    %v6542 = vlaneseq
    %v6543 = vshrl.u32 %v6542, 7
    %v6544 = vsub.s32 %v6541, %v6543
    %v6545 = vrot.slane %v6523, %v6544
    %v6547 = vunpack.c.l.s4 1966171168
    %v6548 = vunpack.c.0.s8 %v6547
    %v6549 = vlaneseq
    %v6550 = vshrl.u32 %v6549, 7
    %v6551 = vsub.s32 %v6548, %v6550
    %v6552 = vrot.slane %v6524, %v6551
    %v6553 = vcombine.high %v6531, %v6531
    %v6554 = vcombine.high %v6538, %v6538
    %v6555 = vcombine.high %v6545, %v6545
    %v6556 = vcombine.high %v6552, %v6552
    %6565 = vst [vmem:[%s19] sm:$0x1] %v6531
    %6566 = vst [vmem:[%s19 + $0x8] sm:$0x1] %v6545
    %6567 = vst [vmem:[%s19 + $0x10] sm:$0x1] %v6553
    %6568 = vst [vmem:[%s19 + $0x18] sm:$0x1] %v6555
    %6569 = vst [vmem:[%s19 + $0x20] sm:$0x1] %v6538
    %6570 = vst [vmem:[%s19 + $0x28] sm:$0x1] %v6552
    %6571 = vst [vmem:[%s19 + $0x30] sm:$0x1] %v6554
    %6572 = vst [vmem:[%s19 + $0x38] sm:$0x1] %v6556
    %v6573 = vld [vmem:[#allocation2 + $0x20] sm:$0xff]
    %v6574 = vld [vmem:[#allocation2 + $0x28] sm:$0xff]
    %v6575 = vld [vmem:[#allocation2 + $0x30] sm:$0xff]
    %v6576 = vld [vmem:[#allocation2 + $0x38] sm:$0xff]
    %v6577 = vpack.c.bf16 %v6506, %v6506
    %6578 = vmatprep.subr.bf16.mxu0 %v6334
    %6579 = vmatpush1.bf16.msra.mxu0 %v6333
    %6580 = vmatprep.subr.bf16.mxu0 %v6338
    %6581 = vmatpush1.bf16.msra.mxu0 %v6337
    %6582 = vmatprep.subr.bf16.mxu0 %v6342
    %6583 = vmatpush1.bf16.msra.mxu0 %v6341
    %6584 = vmatprep.subr.bf16.mxu0 %v6346
    %6585 = vmatpush1.bf16.msra.mxu0 %v6345
    %6586 = vmatprep.subr.bf16.mxu0 %v6350
    %6587 = vmatpush1.bf16.msra.mxu0 %v6349
    %6588 = vmatprep.subr.bf16.mxu0 %v6354
    %6589 = vmatpush1.bf16.msra.mxu0 %v6353
    %6590 = vmatprep.subr.bf16.mxu0 %v6358
    %6591 = vmatpush1.bf16.msra.mxu0 %v6357
    %6592 = vmatprep.subr.bf16.mxu0 %v6362
    %6593 = vmatpush1.bf16.msra.mxu0 %v6361
    %6594 = vmatprep.subr.bf16.mxu0 0
    %6595 = vmatpush1.bf16.msra.mxu0 0
    %6596 = vmatprep.subr.bf16.mxu0 0
    %6597 = vmatpush1.bf16.msra.mxu0 0
    %6598 = vmatprep.subr.bf16.mxu0 0
    %6599 = vmatpush1.bf16.msra.mxu0 0
    %6600 = vmatprep.subr.bf16.mxu0 0
    %6601 = vmatpush1.bf16.msra.mxu0 0
    %6602 = vmatprep.subr.bf16.mxu0 0
    %6603 = vmatpush1.bf16.msra.mxu0 0
    %6604 = vmatprep.subr.bf16.mxu0 0
    %6605 = vmatpush1.bf16.msra.mxu0 0
    %6606 = vmatprep.subr.bf16.mxu0 0
    %6607 = vmatpush1.bf16.msra.mxu0 0
    %6608 = vmatprep.subr.bf16.mxu0 0
    %6609 = vmatpush1.bf16.msra.mxu0 0
    %6610 = vmatprep.mubr.bf16.mxu0 0
    %6611 = vmatmul.mubr.bf16.gmra.mrb[0].mxu0 %v6577
    %v6612 = vpop.f32.mrb[0].mxu0
    %v6613 = vadd.f32 0.0, %v6612
    %v6614 = vpop.f32.mrb[0].mxu0
    %v6615 = vadd.f32 0.0, %v6614
    %v6616 = vpop.f32.mrb[0].mxu0
    %v6617 = vpop.f32.mrb[0].mxu0
    %6618 = vdwg.mxu0
    %6619 = vmatprep.subr.bf16.mxu0 %v6336
    %6620 = vmatpush1.bf16.msra.mxu0 %v6335
    %6621 = vmatprep.subr.bf16.mxu0 %v6340
    %6622 = vmatpush1.bf16.msra.mxu0 %v6339
    %6623 = vmatprep.subr.bf16.mxu0 %v6344
    %6624 = vmatpush1.bf16.msra.mxu0 %v6343
    %6625 = vmatprep.subr.bf16.mxu0 %v6348
    %6626 = vmatpush1.bf16.msra.mxu0 %v6347
    %6627 = vmatprep.subr.bf16.mxu0 %v6352
    %6628 = vmatpush1.bf16.msra.mxu0 %v6351
    %6629 = vmatprep.subr.bf16.mxu0 %v6356
    %6630 = vmatpush1.bf16.msra.mxu0 %v6355
    %6631 = vmatprep.subr.bf16.mxu0 %v6360
    %6632 = vmatpush1.bf16.msra.mxu0 %v6359
    %6633 = vmatprep.subr.bf16.mxu0 %v6364
    %6634 = vmatpush1.bf16.msra.mxu0 %v6363
    %6635 = vmatprep.subr.bf16.mxu0 0
    %6636 = vmatpush1.bf16.msra.mxu0 0
    %6637 = vmatprep.subr.bf16.mxu0 0
    %6638 = vmatpush1.bf16.msra.mxu0 0
    %6639 = vmatprep.subr.bf16.mxu0 0
    %6640 = vmatpush1.bf16.msra.mxu0 0
    %6641 = vmatprep.subr.bf16.mxu0 0
    %6642 = vmatpush1.bf16.msra.mxu0 0
    %6643 = vmatprep.subr.bf16.mxu0 0
    %6644 = vmatpush1.bf16.msra.mxu0 0
    %6645 = vmatprep.subr.bf16.mxu0 0
    %6646 = vmatpush1.bf16.msra.mxu0 0
    %6647 = vmatprep.subr.bf16.mxu0 0
    %6648 = vmatpush1.bf16.msra.mxu0 0
    %6649 = vmatprep.subr.bf16.mxu0 0
    %6650 = vmatpush1.bf16.msra.mxu0 0
    %6651 = vmatprep.mubr.bf16.mxu0 0
    %6652 = vmatmul.mubr.bf16.gmra.mrb[0].mxu0 %v6577
    %v6653 = vpop.f32.mrb[0].mxu0
    %v6654 = vadd.f32 0.0, %v6653
    %v6655 = vpop.f32.mrb[0].mxu0
    %v6656 = vadd.f32 0.0, %v6655
    %v6657 = vpop.f32.mrb[0].mxu0
    %v6658 = vpop.f32.mrb[0].mxu0
    %6659 = vdwg.mxu0
    %v6660 = vadd.f32 %v6573, %v6613
    %v6661 = vadd.f32 %v6574, %v6615
    %v6662 = vadd.f32 %v6575, %v6654
    %v6663 = vadd.f32 %v6576, %v6656
    %v6664 = vxor.u32 %v6660, 2147483648
    %v6665 = vxor.u32 %v6661, 2147483648
    %v6666 = vxor.u32 %v6662, 2147483648
    %v6667 = vmul.f32 %v6664, 1.442695
    %v6668 = vpow.pop %v6667
    %v6669 = vmul.f32 %v6665, 1.442695
    %v6670 = vpow.pop %v6669
    %v6671 = vmul.f32 %v6666, 1.442695
    %v6672 = vpow.pop %v6671
    %v6673 = vadd.f32 %v6668, 1.0
    %v6674 = vadd.f32 %v6670, 1.0
    %v6675 = vadd.f32 %v6672, 1.0
    %v6676 = vrcp.pop %v6673
    %v6677 = vmul.f32 1.0, %v6676
    %v6678 = vrcp.pop %v6674
    %v6679 = vmul.f32 1.0, %v6678
    %v6680 = vrcp.pop %v6675
    %v6681 = vmul.f32 1.0, %v6680
    %v6682 = vtanh.pop %v6663
    %v6683 = vmul.f32 %v6679, %v6504
    %v6684 = vmul.f32 %v6677, %v6682
    %v6685 = vadd.f32 %v6683, %v6684
    %v6686 = vtanh.pop %v6685
    %v6687 = vmul.f32 %v6681, %v6686
    %v6689 = vcombine.high %v6687, %v6687
    %v6691 = vunpack.c.l.s4 1966171168
    %v6692 = vunpack.c.0.s8 %v6691
    %v6693 = vlaneseq
    %v6694 = vshrl.u32 %v6693, 7
    %v6695 = vsub.s32 %v6692, %v6694
    %v6696 = vrot.slane %v6687, %v6695
    %v6698 = vunpack.c.l.s4 1966171168
    %v6699 = vunpack.c.0.s8 %v6698
    %v6700 = vlaneseq
    %v6701 = vshrl.u32 %v6700, 7
    %v6702 = vsub.s32 %v6699, %v6701
    %v6703 = vrot.slane %v6689, %v6702
    %v6704 = vcombine.high %v6696, %v6696
    %v6705 = vcombine.high %v6703, %v6703
    %v6707 = vunpack.c.l.s4 1966171168
    %v6708 = vunpack.c.0.s8 %v6707
    %v6709 = vlaneseq
    %v6710 = vshrl.u32 %v6709, 7
    %v6711 = vsub.s32 %v6708, %v6710
    %v6712 = vrot.slane %v6696, %v6711
    %v6714 = vunpack.c.l.s4 1966171168
    %v6715 = vunpack.c.0.s8 %v6714
    %v6716 = vlaneseq
    %v6717 = vshrl.u32 %v6716, 7
    %v6718 = vsub.s32 %v6715, %v6717
    %v6719 = vrot.slane %v6703, %v6718
    %v6721 = vunpack.c.l.s4 1966171168
    %v6722 = vunpack.c.0.s8 %v6721
    %v6723 = vlaneseq
    %v6724 = vshrl.u32 %v6723, 7
    %v6725 = vsub.s32 %v6722, %v6724
    %v6726 = vrot.slane %v6704, %v6725
    %v6728 = vunpack.c.l.s4 1966171168
    %v6729 = vunpack.c.0.s8 %v6728
    %v6730 = vlaneseq
    %v6731 = vshrl.u32 %v6730, 7
    %v6732 = vsub.s32 %v6729, %v6731
    %v6733 = vrot.slane %v6705, %v6732
    %v6734 = vcombine.high %v6712, %v6712
    %v6735 = vcombine.high %v6719, %v6719
    %v6736 = vcombine.high %v6726, %v6726
    %v6737 = vcombine.high %v6733, %v6733
    %6746 = vst [vmem:[%s19 + $0x1] sm:$0x1] %v6712
    %6747 = vst [vmem:[%s19 + $0x9] sm:$0x1] %v6726
    %6748 = vst [vmem:[%s19 + $0x11] sm:$0x1] %v6734
    %6749 = vst [vmem:[%s19 + $0x19] sm:$0x1] %v6736
    %6750 = vst [vmem:[%s19 + $0x21] sm:$0x1] %v6719
    %6751 = vst [vmem:[%s19 + $0x29] sm:$0x1] %v6733
    %6752 = vst [vmem:[%s19 + $0x31] sm:$0x1] %v6735
    %6753 = vst [vmem:[%s19 + $0x39] sm:$0x1] %v6737
    %v6754 = vld [vmem:[#allocation2 + $0x40] sm:$0xff]
    %v6755 = vld [vmem:[#allocation2 + $0x48] sm:$0xff]
    %v6756 = vld [vmem:[#allocation2 + $0x50] sm:$0xff]
    %v6757 = vld [vmem:[#allocation2 + $0x58] sm:$0xff]
    %v6758 = vpack.c.bf16 %v6687, %v6687
    %6759 = vmatprep.subr.bf16.mxu0 %v6334
    %6760 = vmatpush1.bf16.msra.mxu0 %v6333
    %6761 = vmatprep.subr.bf16.mxu0 %v6338
    %6762 = vmatpush1.bf16.msra.mxu0 %v6337
    %6763 = vmatprep.subr.bf16.mxu0 %v6342
    %6764 = vmatpush1.bf16.msra.mxu0 %v6341
    %6765 = vmatprep.subr.bf16.mxu0 %v6346
    %6766 = vmatpush1.bf16.msra.mxu0 %v6345
    %6767 = vmatprep.subr.bf16.mxu0 %v6350
    %6768 = vmatpush1.bf16.msra.mxu0 %v6349
    %6769 = vmatprep.subr.bf16.mxu0 %v6354
    %6770 = vmatpush1.bf16.msra.mxu0 %v6353
    %6771 = vmatprep.subr.bf16.mxu0 %v6358
    %6772 = vmatpush1.bf16.msra.mxu0 %v6357
    %6773 = vmatprep.subr.bf16.mxu0 %v6362
    %6774 = vmatpush1.bf16.msra.mxu0 %v6361
    %6775 = vmatprep.subr.bf16.mxu0 0
    %6776 = vmatpush1.bf16.msra.mxu0 0
    %6777 = vmatprep.subr.bf16.mxu0 0
    %6778 = vmatpush1.bf16.msra.mxu0 0
    %6779 = vmatprep.subr.bf16.mxu0 0
    %6780 = vmatpush1.bf16.msra.mxu0 0
    %6781 = vmatprep.subr.bf16.mxu0 0
    %6782 = vmatpush1.bf16.msra.mxu0 0
    %6783 = vmatprep.subr.bf16.mxu0 0
    %6784 = vmatpush1.bf16.msra.mxu0 0
    %6785 = vmatprep.subr.bf16.mxu0 0
    %6786 = vmatpush1.bf16.msra.mxu0 0
    %6787 = vmatprep.subr.bf16.mxu0 0
    %6788 = vmatpush1.bf16.msra.mxu0 0
    %6789 = vmatprep.subr.bf16.mxu0 0
    %6790 = vmatpush1.bf16.msra.mxu0 0
    %6791 = vmatprep.mubr.bf16.mxu0 0
    %6792 = vmatmul.mubr.bf16.gmra.mrb[0].mxu0 %v6758
    %v6793 = vpop.f32.mrb[0].mxu0
    %v6794 = vadd.f32 0.0, %v6793
    %v6795 = vpop.f32.mrb[0].mxu0
    %v6796 = vadd.f32 0.0, %v6795
    %v6797 = vpop.f32.mrb[0].mxu0
    %v6798 = vpop.f32.mrb[0].mxu0
    %6799 = vdwg.mxu0
    %6800 = vmatprep.subr.bf16.mxu0 %v6336
    %6801 = vmatpush1.bf16.msra.mxu0 %v6335
    %6802 = vmatprep.subr.bf16.mxu0 %v6340
    %6803 = vmatpush1.bf16.msra.mxu0 %v6339
    %6804 = vmatprep.subr.bf16.mxu0 %v6344
    %6805 = vmatpush1.bf16.msra.mxu0 %v6343
    %6806 = vmatprep.subr.bf16.mxu0 %v6348
    %6807 = vmatpush1.bf16.msra.mxu0 %v6347
    %6808 = vmatprep.subr.bf16.mxu0 %v6352
    %6809 = vmatpush1.bf16.msra.mxu0 %v6351
    %6810 = vmatprep.subr.bf16.mxu0 %v6356
    %6811 = vmatpush1.bf16.msra.mxu0 %v6355
    %6812 = vmatprep.subr.bf16.mxu0 %v6360
    %6813 = vmatpush1.bf16.msra.mxu0 %v6359
    %6814 = vmatprep.subr.bf16.mxu0 %v6364
    %6815 = vmatpush1.bf16.msra.mxu0 %v6363
    %6816 = vmatprep.subr.bf16.mxu0 0
    %6817 = vmatpush1.bf16.msra.mxu0 0
    %6818 = vmatprep.subr.bf16.mxu0 0
    %6819 = vmatpush1.bf16.msra.mxu0 0
    %6820 = vmatprep.subr.bf16.mxu0 0
    %6821 = vmatpush1.bf16.msra.mxu0 0
    %6822 = vmatprep.subr.bf16.mxu0 0
    %6823 = vmatpush1.bf16.msra.mxu0 0
    %6824 = vmatprep.subr.bf16.mxu0 0
    %6825 = vmatpush1.bf16.msra.mxu0 0
    %6826 = vmatprep.subr.bf16.mxu0 0
    %6827 = vmatpush1.bf16.msra.mxu0 0
    %6828 = vmatprep.subr.bf16.mxu0 0
    %6829 = vmatpush1.bf16.msra.mxu0 0
    %6830 = vmatprep.subr.bf16.mxu0 0
    %6831 = vmatpush1.bf16.msra.mxu0 0
    %6832 = vmatprep.mubr.bf16.mxu0 0
    %6833 = vmatmul.mubr.bf16.gmra.mrb[0].mxu0 %v6758
    %v6834 = vpop.f32.mrb[0].mxu0
    %v6835 = vadd.f32 0.0, %v6834
    %v6836 = vpop.f32.mrb[0].mxu0
    %v6837 = vadd.f32 0.0, %v6836
    %v6838 = vpop.f32.mrb[0].mxu0
    %v6839 = vpop.f32.mrb[0].mxu0
    %6840 = vdwg.mxu0
    %v6841 = vadd.f32 %v6754, %v6794
    %v6842 = vadd.f32 %v6755, %v6796
    %v6843 = vadd.f32 %v6756, %v6835
    %v6844 = vadd.f32 %v6757, %v6837
    %v6845 = vxor.u32 %v6841, 2147483648
    %v6846 = vxor.u32 %v6842, 2147483648
    %v6847 = vxor.u32 %v6843, 2147483648
    %v6848 = vmul.f32 %v6845, 1.442695
    %v6849 = vpow.pop %v6848
    %v6850 = vmul.f32 %v6846, 1.442695
    %v6851 = vpow.pop %v6850
    %v6852 = vmul.f32 %v6847, 1.442695
    %v6853 = vpow.pop %v6852
    %v6854 = vadd.f32 %v6849, 1.0
    %v6855 = vadd.f32 %v6851, 1.0
    %v6856 = vadd.f32 %v6853, 1.0
    %v6857 = vrcp.pop %v6854
    %v6858 = vmul.f32 1.0, %v6857
    %v6859 = vrcp.pop %v6855
    %v6860 = vmul.f32 1.0, %v6859
    %v6861 = vrcp.pop %v6856
    %v6862 = vmul.f32 1.0, %v6861
    %v6863 = vtanh.pop %v6844
    %v6864 = vmul.f32 %v6860, %v6685
    %v6865 = vmul.f32 %v6858, %v6863
    %v6866 = vadd.f32 %v6864, %v6865
    %v6867 = vtanh.pop %v6866
    %v6868 = vmul.f32 %v6862, %v6867
    %v6870 = vcombine.high %v6868, %v6868
    %v6872 = vunpack.c.l.s4 1966171168
    %v6873 = vunpack.c.0.s8 %v6872
    %v6874 = vlaneseq
    %v6875 = vshrl.u32 %v6874, 7
    %v6876 = vsub.s32 %v6873, %v6875
    %v6877 = vrot.slane %v6868, %v6876
    %v6879 = vunpack.c.l.s4 1966171168
    %v6880 = vunpack.c.0.s8 %v6879
    %v6881 = vlaneseq
    %v6882 = vshrl.u32 %v6881, 7
    %v6883 = vsub.s32 %v6880, %v6882
    %v6884 = vrot.slane %v6870, %v6883
    %v6885 = vcombine.high %v6877, %v6877
    %v6886 = vcombine.high %v6884, %v6884
    %v6888 = vunpack.c.l.s4 1966171168
    %v6889 = vunpack.c.0.s8 %v6888
    %v6890 = vlaneseq
    %v6891 = vshrl.u32 %v6890, 7
    %v6892 = vsub.s32 %v6889, %v6891
    %v6893 = vrot.slane %v6877, %v6892
    %v6895 = vunpack.c.l.s4 1966171168
    %v6896 = vunpack.c.0.s8 %v6895
    %v6897 = vlaneseq
    %v6898 = vshrl.u32 %v6897, 7
    %v6899 = vsub.s32 %v6896, %v6898
    %v6900 = vrot.slane %v6884, %v6899
    %v6902 = vunpack.c.l.s4 1966171168
    %v6903 = vunpack.c.0.s8 %v6902
    %v6904 = vlaneseq
    %v6905 = vshrl.u32 %v6904, 7
    %v6906 = vsub.s32 %v6903, %v6905
    %v6907 = vrot.slane %v6885, %v6906
    %v6909 = vunpack.c.l.s4 1966171168
    %v6910 = vunpack.c.0.s8 %v6909
    %v6911 = vlaneseq
    %v6912 = vshrl.u32 %v6911, 7
    %v6913 = vsub.s32 %v6910, %v6912
    %v6914 = vrot.slane %v6886, %v6913
    %v6915 = vcombine.high %v6893, %v6893
    %v6916 = vcombine.high %v6900, %v6900
    %v6917 = vcombine.high %v6907, %v6907
    %v6918 = vcombine.high %v6914, %v6914
    %6927 = vst [vmem:[%s19 + $0x2] sm:$0x1] %v6893
    %6928 = vst [vmem:[%s19 + $0xa] sm:$0x1] %v6907
    %6929 = vst [vmem:[%s19 + $0x12] sm:$0x1] %v6915
    %6930 = vst [vmem:[%s19 + $0x1a] sm:$0x1] %v6917
    %6931 = vst [vmem:[%s19 + $0x22] sm:$0x1] %v6900
    %6932 = vst [vmem:[%s19 + $0x2a] sm:$0x1] %v6914
    %6933 = vst [vmem:[%s19 + $0x32] sm:$0x1] %v6916
    %6934 = vst [vmem:[%s19 + $0x3a] sm:$0x1] %v6918
    %v6935 = vld [vmem:[#allocation2 + $0x60] sm:$0xff]
    %v6936 = vld [vmem:[#allocation2 + $0x68] sm:$0xff]
    %v6937 = vld [vmem:[#allocation2 + $0x70] sm:$0xff]
    %v6938 = vld [vmem:[#allocation2 + $0x78] sm:$0xff]
    %v6939 = vpack.c.bf16 %v6868, %v6868
    %6940 = vmatprep.subr.bf16.mxu0 %v6334
    %6941 = vmatpush1.bf16.msra.mxu0 %v6333
    %6942 = vmatprep.subr.bf16.mxu0 %v6338
    %6943 = vmatpush1.bf16.msra.mxu0 %v6337
    %6944 = vmatprep.subr.bf16.mxu0 %v6342
    %6945 = vmatpush1.bf16.msra.mxu0 %v6341
    %6946 = vmatprep.subr.bf16.mxu0 %v6346
    %6947 = vmatpush1.bf16.msra.mxu0 %v6345
    %6948 = vmatprep.subr.bf16.mxu0 %v6350
    %6949 = vmatpush1.bf16.msra.mxu0 %v6349
    %6950 = vmatprep.subr.bf16.mxu0 %v6354
    %6951 = vmatpush1.bf16.msra.mxu0 %v6353
    %6952 = vmatprep.subr.bf16.mxu0 %v6358
    %6953 = vmatpush1.bf16.msra.mxu0 %v6357
    %6954 = vmatprep.subr.bf16.mxu0 %v6362
    %6955 = vmatpush1.bf16.msra.mxu0 %v6361
    %6956 = vmatprep.subr.bf16.mxu0 0
    %6957 = vmatpush1.bf16.msra.mxu0 0
    %6958 = vmatprep.subr.bf16.mxu0 0
    %6959 = vmatpush1.bf16.msra.mxu0 0
    %6960 = vmatprep.subr.bf16.mxu0 0
    %6961 = vmatpush1.bf16.msra.mxu0 0
    %6962 = vmatprep.subr.bf16.mxu0 0
    %6963 = vmatpush1.bf16.msra.mxu0 0
    %6964 = vmatprep.subr.bf16.mxu0 0
    %6965 = vmatpush1.bf16.msra.mxu0 0
    %6966 = vmatprep.subr.bf16.mxu0 0
    %6967 = vmatpush1.bf16.msra.mxu0 0
    %6968 = vmatprep.subr.bf16.mxu0 0
    %6969 = vmatpush1.bf16.msra.mxu0 0
    %6970 = vmatprep.subr.bf16.mxu0 0
    %6971 = vmatpush1.bf16.msra.mxu0 0
    %6972 = vmatprep.mubr.bf16.mxu0 0
    %6973 = vmatmul.mubr.bf16.gmra.mrb[0].mxu0 %v6939
    %v6974 = vpop.f32.mrb[0].mxu0
    %v6975 = vadd.f32 0.0, %v6974
    %v6976 = vpop.f32.mrb[0].mxu0
    %v6977 = vadd.f32 0.0, %v6976
    %v6978 = vpop.f32.mrb[0].mxu0
    %v6979 = vpop.f32.mrb[0].mxu0
    %6980 = vdwg.mxu0
    %6981 = vmatprep.subr.bf16.mxu0 %v6336
    %6982 = vmatpush1.bf16.msra.mxu0 %v6335
    %6983 = vmatprep.subr.bf16.mxu0 %v6340
    %6984 = vmatpush1.bf16.msra.mxu0 %v6339
    %6985 = vmatprep.subr.bf16.mxu0 %v6344
    %6986 = vmatpush1.bf16.msra.mxu0 %v6343
    %6987 = vmatprep.subr.bf16.mxu0 %v6348
    %6988 = vmatpush1.bf16.msra.mxu0 %v6347
    %6989 = vmatprep.subr.bf16.mxu0 %v6352
    %6990 = vmatpush1.bf16.msra.mxu0 %v6351
    %6991 = vmatprep.subr.bf16.mxu0 %v6356
    %6992 = vmatpush1.bf16.msra.mxu0 %v6355
    %6993 = vmatprep.subr.bf16.mxu0 %v6360
    %6994 = vmatpush1.bf16.msra.mxu0 %v6359
    %6995 = vmatprep.subr.bf16.mxu0 %v6364
    %6996 = vmatpush1.bf16.msra.mxu0 %v6363
    %6997 = vmatprep.subr.bf16.mxu0 0
    %6998 = vmatpush1.bf16.msra.mxu0 0
    %6999 = vmatprep.subr.bf16.mxu0 0
    %7000 = vmatpush1.bf16.msra.mxu0 0
    %7001 = vmatprep.subr.bf16.mxu0 0
    %7002 = vmatpush1.bf16.msra.mxu0 0
    %7003 = vmatprep.subr.bf16.mxu0 0
    %7004 = vmatpush1.bf16.msra.mxu0 0
    %7005 = vmatprep.subr.bf16.mxu0 0
    %7006 = vmatpush1.bf16.msra.mxu0 0
    %7007 = vmatprep.subr.bf16.mxu0 0
    %7008 = vmatpush1.bf16.msra.mxu0 0
    %7009 = vmatprep.subr.bf16.mxu0 0
    %7010 = vmatpush1.bf16.msra.mxu0 0
    %7011 = vmatprep.subr.bf16.mxu0 0
    %7012 = vmatpush1.bf16.msra.mxu0 0
    %7013 = vmatprep.mubr.bf16.mxu0 0
    %7014 = vmatmul.mubr.bf16.gmra.mrb[0].mxu0 %v6939
    %v7015 = vpop.f32.mrb[0].mxu0
    %v7016 = vadd.f32 0.0, %v7015
    %v7017 = vpop.f32.mrb[0].mxu0
    %v7018 = vadd.f32 0.0, %v7017
    %v7019 = vpop.f32.mrb[0].mxu0
    %v7020 = vpop.f32.mrb[0].mxu0
    %7021 = vdwg.mxu0
    %v7022 = vadd.f32 %v6935, %v6975
    %v7023 = vadd.f32 %v6936, %v6977
    %v7024 = vadd.f32 %v6937, %v7016
    %v7025 = vadd.f32 %v6938, %v7018
    %v7026 = vxor.u32 %v7022, 2147483648
    %v7027 = vxor.u32 %v7023, 2147483648
    %v7028 = vxor.u32 %v7024, 2147483648
    %v7029 = vmul.f32 %v7026, 1.442695
    %v7030 = vpow.pop %v7029
    %v7031 = vmul.f32 %v7027, 1.442695
    %v7032 = vpow.pop %v7031
    %v7033 = vmul.f32 %v7028, 1.442695
    %v7034 = vpow.pop %v7033
    %v7035 = vadd.f32 %v7030, 1.0
    %v7036 = vadd.f32 %v7032, 1.0
    %v7037 = vadd.f32 %v7034, 1.0
    %v7038 = vrcp.pop %v7035
    %v7039 = vmul.f32 1.0, %v7038
    %v7040 = vrcp.pop %v7036
    %v7041 = vmul.f32 1.0, %v7040
    %v7042 = vrcp.pop %v7037
    %v7043 = vmul.f32 1.0, %v7042
    %v7044 = vtanh.pop %v7025
    %v7045 = vmul.f32 %v7041, %v6866
    %v7046 = vmul.f32 %v7039, %v7044
    %v7047 = vadd.f32 %v7045, %v7046
    %v7048 = vtanh.pop %v7047
    %v7049 = vmul.f32 %v7043, %v7048
    %v7051 = vcombine.high %v7049, %v7049
    %v7053 = vunpack.c.l.s4 1966171168
    %v7054 = vunpack.c.0.s8 %v7053
    %v7055 = vlaneseq
    %v7056 = vshrl.u32 %v7055, 7
    %v7057 = vsub.s32 %v7054, %v7056
    %v7058 = vrot.slane %v7049, %v7057
    %v7060 = vunpack.c.l.s4 1966171168
    %v7061 = vunpack.c.0.s8 %v7060
    %v7062 = vlaneseq
    %v7063 = vshrl.u32 %v7062, 7
    %v7064 = vsub.s32 %v7061, %v7063
    %v7065 = vrot.slane %v7051, %v7064
    %v7066 = vcombine.high %v7058, %v7058
    %v7067 = vcombine.high %v7065, %v7065
    %v7069 = vunpack.c.l.s4 1966171168
    %v7070 = vunpack.c.0.s8 %v7069
    %v7071 = vlaneseq
    %v7072 = vshrl.u32 %v7071, 7
    %v7073 = vsub.s32 %v7070, %v7072
    %v7074 = vrot.slane %v7058, %v7073
    %v7076 = vunpack.c.l.s4 1966171168
    %v7077 = vunpack.c.0.s8 %v7076
    %v7078 = vlaneseq
    %v7079 = vshrl.u32 %v7078, 7
    %v7080 = vsub.s32 %v7077, %v7079
    %v7081 = vrot.slane %v7065, %v7080
    %v7083 = vunpack.c.l.s4 1966171168
    %v7084 = vunpack.c.0.s8 %v7083
    %v7085 = vlaneseq
    %v7086 = vshrl.u32 %v7085, 7
    %v7087 = vsub.s32 %v7084, %v7086
    %v7088 = vrot.slane %v7066, %v7087
    %v7090 = vunpack.c.l.s4 1966171168
    %v7091 = vunpack.c.0.s8 %v7090
    %v7092 = vlaneseq
    %v7093 = vshrl.u32 %v7092, 7
    %v7094 = vsub.s32 %v7091, %v7093
    %v7095 = vrot.slane %v7067, %v7094
    %v7096 = vcombine.high %v7074, %v7074
    %v7097 = vcombine.high %v7081, %v7081
    %v7098 = vcombine.high %v7088, %v7088
    %v7099 = vcombine.high %v7095, %v7095
    %7108 = vst [vmem:[%s19 + $0x3] sm:$0x1] %v7074
    %7109 = vst [vmem:[%s19 + $0xb] sm:$0x1] %v7088
    %7110 = vst [vmem:[%s19 + $0x13] sm:$0x1] %v7096
    %7111 = vst [vmem:[%s19 + $0x1b] sm:$0x1] %v7098
    %7112 = vst [vmem:[%s19 + $0x23] sm:$0x1] %v7081
    %7113 = vst [vmem:[%s19 + $0x2b] sm:$0x1] %v7095
    %7114 = vst [vmem:[%s19 + $0x33] sm:$0x1] %v7097
    %7115 = vst [vmem:[%s19 + $0x3b] sm:$0x1] %v7099
    %v7116 = vld [vmem:[#allocation2 + $0x80] sm:$0xff]
    %v7117 = vld [vmem:[#allocation2 + $0x88] sm:$0xff]
    %v7118 = vld [vmem:[#allocation2 + $0x90] sm:$0xff]
    %v7119 = vld [vmem:[#allocation2 + $0x98] sm:$0xff]
    %v7120 = vpack.c.bf16 %v7049, %v7049
    %7121 = vmatprep.subr.bf16.mxu0 %v6334
    %7122 = vmatpush1.bf16.msra.mxu0 %v6333
    %7123 = vmatprep.subr.bf16.mxu0 %v6338
    %7124 = vmatpush1.bf16.msra.mxu0 %v6337
    %7125 = vmatprep.subr.bf16.mxu0 %v6342
    %7126 = vmatpush1.bf16.msra.mxu0 %v6341
    %7127 = vmatprep.subr.bf16.mxu0 %v6346
    %7128 = vmatpush1.bf16.msra.mxu0 %v6345
    %7129 = vmatprep.subr.bf16.mxu0 %v6350
    %7130 = vmatpush1.bf16.msra.mxu0 %v6349
    %7131 = vmatprep.subr.bf16.mxu0 %v6354
    %7132 = vmatpush1.bf16.msra.mxu0 %v6353
    %7133 = vmatprep.subr.bf16.mxu0 %v6358
    %7134 = vmatpush1.bf16.msra.mxu0 %v6357
    %7135 = vmatprep.subr.bf16.mxu0 %v6362
    %7136 = vmatpush1.bf16.msra.mxu0 %v6361
    %7137 = vmatprep.subr.bf16.mxu0 0
    %7138 = vmatpush1.bf16.msra.mxu0 0
    %7139 = vmatprep.subr.bf16.mxu0 0
    %7140 = vmatpush1.bf16.msra.mxu0 0
    %7141 = vmatprep.subr.bf16.mxu0 0
    %7142 = vmatpush1.bf16.msra.mxu0 0
    %7143 = vmatprep.subr.bf16.mxu0 0
    %7144 = vmatpush1.bf16.msra.mxu0 0
    %7145 = vmatprep.subr.bf16.mxu0 0
    %7146 = vmatpush1.bf16.msra.mxu0 0
    %7147 = vmatprep.subr.bf16.mxu0 0
    %7148 = vmatpush1.bf16.msra.mxu0 0
    %7149 = vmatprep.subr.bf16.mxu0 0
    %7150 = vmatpush1.bf16.msra.mxu0 0
    %7151 = vmatprep.subr.bf16.mxu0 0
    %7152 = vmatpush1.bf16.msra.mxu0 0
    %7153 = vmatprep.mubr.bf16.mxu0 0
    %7154 = vmatmul.mubr.bf16.gmra.mrb[0].mxu0 %v7120
    %v7155 = vpop.f32.mrb[0].mxu0
    %v7156 = vadd.f32 0.0, %v7155
    %v7157 = vpop.f32.mrb[0].mxu0
    %v7158 = vadd.f32 0.0, %v7157
    %v7159 = vpop.f32.mrb[0].mxu0
    %v7160 = vpop.f32.mrb[0].mxu0
    %7161 = vdwg.mxu0
    %7162 = vmatprep.subr.bf16.mxu0 %v6336
    %7163 = vmatpush1.bf16.msra.mxu0 %v6335
    %7164 = vmatprep.subr.bf16.mxu0 %v6340
    %7165 = vmatpush1.bf16.msra.mxu0 %v6339
    %7166 = vmatprep.subr.bf16.mxu0 %v6344
    %7167 = vmatpush1.bf16.msra.mxu0 %v6343
    %7168 = vmatprep.subr.bf16.mxu0 %v6348
    %7169 = vmatpush1.bf16.msra.mxu0 %v6347
    %7170 = vmatprep.subr.bf16.mxu0 %v6352
    %7171 = vmatpush1.bf16.msra.mxu0 %v6351
    %7172 = vmatprep.subr.bf16.mxu0 %v6356
    %7173 = vmatpush1.bf16.msra.mxu0 %v6355
    %7174 = vmatprep.subr.bf16.mxu0 %v6360
    %7175 = vmatpush1.bf16.msra.mxu0 %v6359
    %7176 = vmatprep.subr.bf16.mxu0 %v6364
    %7177 = vmatpush1.bf16.msra.mxu0 %v6363
    %7178 = vmatprep.subr.bf16.mxu0 0
    %7179 = vmatpush1.bf16.msra.mxu0 0
    %7180 = vmatprep.subr.bf16.mxu0 0
    %7181 = vmatpush1.bf16.msra.mxu0 0
    %7182 = vmatprep.subr.bf16.mxu0 0
    %7183 = vmatpush1.bf16.msra.mxu0 0
    %7184 = vmatprep.subr.bf16.mxu0 0
    %7185 = vmatpush1.bf16.msra.mxu0 0
    %7186 = vmatprep.subr.bf16.mxu0 0
    %7187 = vmatpush1.bf16.msra.mxu0 0
    %7188 = vmatprep.subr.bf16.mxu0 0
    %7189 = vmatpush1.bf16.msra.mxu0 0
    %7190 = vmatprep.subr.bf16.mxu0 0
    %7191 = vmatpush1.bf16.msra.mxu0 0
    %7192 = vmatprep.subr.bf16.mxu0 0
    %7193 = vmatpush1.bf16.msra.mxu0 0
    %7194 = vmatprep.mubr.bf16.mxu0 0
    %7195 = vmatmul.mubr.bf16.gmra.mrb[0].mxu0 %v7120
    %v7196 = vpop.f32.mrb[0].mxu0
    %v7197 = vadd.f32 0.0, %v7196
    %v7198 = vpop.f32.mrb[0].mxu0
    %v7199 = vadd.f32 0.0, %v7198
    %v7200 = vpop.f32.mrb[0].mxu0
    %v7201 = vpop.f32.mrb[0].mxu0
    %7202 = vdwg.mxu0
    %v7203 = vadd.f32 %v7116, %v7156
    %v7204 = vadd.f32 %v7117, %v7158
    %v7205 = vadd.f32 %v7118, %v7197
    %v7206 = vadd.f32 %v7119, %v7199
    %v7207 = vxor.u32 %v7203, 2147483648
    %v7208 = vxor.u32 %v7204, 2147483648
    %v7209 = vxor.u32 %v7205, 2147483648
    %v7210 = vmul.f32 %v7207, 1.442695
    %v7211 = vpow.pop %v7210
    %v7212 = vmul.f32 %v7208, 1.442695
    %v7213 = vpow.pop %v7212
    %v7214 = vmul.f32 %v7209, 1.442695
    %v7215 = vpow.pop %v7214
    %v7216 = vadd.f32 %v7211, 1.0
    %v7217 = vadd.f32 %v7213, 1.0
    %v7218 = vadd.f32 %v7215, 1.0
    %v7219 = vrcp.pop %v7216
    %v7220 = vmul.f32 1.0, %v7219
    %v7221 = vrcp.pop %v7217
    %v7222 = vmul.f32 1.0, %v7221
    %v7223 = vrcp.pop %v7218
    %v7224 = vmul.f32 1.0, %v7223
    %v7225 = vtanh.pop %v7206
    %v7226 = vmul.f32 %v7222, %v7047
    %v7227 = vmul.f32 %v7220, %v7225
    %v7228 = vadd.f32 %v7226, %v7227
    %v7229 = vtanh.pop %v7228
    %v7230 = vmul.f32 %v7224, %v7229
    %v7232 = vcombine.high %v7230, %v7230
    %v7234 = vunpack.c.l.s4 1966171168
    %v7235 = vunpack.c.0.s8 %v7234
    %v7236 = vlaneseq
    %v7237 = vshrl.u32 %v7236, 7
    %v7238 = vsub.s32 %v7235, %v7237
    %v7239 = vrot.slane %v7230, %v7238
    %v7241 = vunpack.c.l.s4 1966171168
    %v7242 = vunpack.c.0.s8 %v7241
    %v7243 = vlaneseq
    %v7244 = vshrl.u32 %v7243, 7
    %v7245 = vsub.s32 %v7242, %v7244
    %v7246 = vrot.slane %v7232, %v7245
    %v7247 = vcombine.high %v7239, %v7239
    %v7248 = vcombine.high %v7246, %v7246
    %v7250 = vunpack.c.l.s4 1966171168
    %v7251 = vunpack.c.0.s8 %v7250
    %v7252 = vlaneseq
    %v7253 = vshrl.u32 %v7252, 7
    %v7254 = vsub.s32 %v7251, %v7253
    %v7255 = vrot.slane %v7239, %v7254
    %v7257 = vunpack.c.l.s4 1966171168
    %v7258 = vunpack.c.0.s8 %v7257
    %v7259 = vlaneseq
    %v7260 = vshrl.u32 %v7259, 7
    %v7261 = vsub.s32 %v7258, %v7260
    %v7262 = vrot.slane %v7246, %v7261
    %v7264 = vunpack.c.l.s4 1966171168
    %v7265 = vunpack.c.0.s8 %v7264
    %v7266 = vlaneseq
    %v7267 = vshrl.u32 %v7266, 7
    %v7268 = vsub.s32 %v7265, %v7267
    %v7269 = vrot.slane %v7247, %v7268
    %v7271 = vunpack.c.l.s4 1966171168
    %v7272 = vunpack.c.0.s8 %v7271
    %v7273 = vlaneseq
    %v7274 = vshrl.u32 %v7273, 7
    %v7275 = vsub.s32 %v7272, %v7274
    %v7276 = vrot.slane %v7248, %v7275
    %v7277 = vcombine.high %v7255, %v7255
    %v7278 = vcombine.high %v7262, %v7262
    %v7279 = vcombine.high %v7269, %v7269
    %v7280 = vcombine.high %v7276, %v7276
    %7289 = vst [vmem:[%s19 + $0x4] sm:$0x1] %v7255
    %7290 = vst [vmem:[%s19 + $0xc] sm:$0x1] %v7269
    %7291 = vst [vmem:[%s19 + $0x14] sm:$0x1] %v7277
    %7292 = vst [vmem:[%s19 + $0x1c] sm:$0x1] %v7279
    %7293 = vst [vmem:[%s19 + $0x24] sm:$0x1] %v7262
    %7294 = vst [vmem:[%s19 + $0x2c] sm:$0x1] %v7276
    %7295 = vst [vmem:[%s19 + $0x34] sm:$0x1] %v7278
    %7296 = vst [vmem:[%s19 + $0x3c] sm:$0x1] %v7280
    %v7297 = vld [vmem:[#allocation2 + $0xa0] sm:$0xff]
    %v7298 = vld [vmem:[#allocation2 + $0xa8] sm:$0xff]
    %v7299 = vld [vmem:[#allocation2 + $0xb0] sm:$0xff]
    %v7300 = vld [vmem:[#allocation2 + $0xb8] sm:$0xff]
    %v7301 = vpack.c.bf16 %v7230, %v7230
    %7302 = vmatprep.subr.bf16.mxu0 %v6334
    %7303 = vmatpush1.bf16.msra.mxu0 %v6333
    %7304 = vmatprep.subr.bf16.mxu0 %v6338
    %7305 = vmatpush1.bf16.msra.mxu0 %v6337
    %7306 = vmatprep.subr.bf16.mxu0 %v6342
    %7307 = vmatpush1.bf16.msra.mxu0 %v6341
    %7308 = vmatprep.subr.bf16.mxu0 %v6346
    %7309 = vmatpush1.bf16.msra.mxu0 %v6345
    %7310 = vmatprep.subr.bf16.mxu0 %v6350
    %7311 = vmatpush1.bf16.msra.mxu0 %v6349
    %7312 = vmatprep.subr.bf16.mxu0 %v6354
    %7313 = vmatpush1.bf16.msra.mxu0 %v6353
    %7314 = vmatprep.subr.bf16.mxu0 %v6358
    %7315 = vmatpush1.bf16.msra.mxu0 %v6357
    %7316 = vmatprep.subr.bf16.mxu0 %v6362
    %7317 = vmatpush1.bf16.msra.mxu0 %v6361
    %7318 = vmatprep.subr.bf16.mxu0 0
    %7319 = vmatpush1.bf16.msra.mxu0 0
    %7320 = vmatprep.subr.bf16.mxu0 0
    %7321 = vmatpush1.bf16.msra.mxu0 0
    %7322 = vmatprep.subr.bf16.mxu0 0
    %7323 = vmatpush1.bf16.msra.mxu0 0
    %7324 = vmatprep.subr.bf16.mxu0 0
    %7325 = vmatpush1.bf16.msra.mxu0 0
    %7326 = vmatprep.subr.bf16.mxu0 0
    %7327 = vmatpush1.bf16.msra.mxu0 0
    %7328 = vmatprep.subr.bf16.mxu0 0
    %7329 = vmatpush1.bf16.msra.mxu0 0
    %7330 = vmatprep.subr.bf16.mxu0 0
    %7331 = vmatpush1.bf16.msra.mxu0 0
    %7332 = vmatprep.subr.bf16.mxu0 0
    %7333 = vmatpush1.bf16.msra.mxu0 0
    %7334 = vmatprep.mubr.bf16.mxu0 0
    %7335 = vmatmul.mubr.bf16.gmra.mrb[0].mxu0 %v7301
    %v7336 = vpop.f32.mrb[0].mxu0
    %v7337 = vadd.f32 0.0, %v7336
    %v7338 = vpop.f32.mrb[0].mxu0
    %v7339 = vadd.f32 0.0, %v7338
    %v7340 = vpop.f32.mrb[0].mxu0
    %v7341 = vpop.f32.mrb[0].mxu0
    %7342 = vdwg.mxu0
    %7343 = vmatprep.subr.bf16.mxu0 %v6336
    %7344 = vmatpush1.bf16.msra.mxu0 %v6335
    %7345 = vmatprep.subr.bf16.mxu0 %v6340
    %7346 = vmatpush1.bf16.msra.mxu0 %v6339
    %7347 = vmatprep.subr.bf16.mxu0 %v6344
    %7348 = vmatpush1.bf16.msra.mxu0 %v6343
    %7349 = vmatprep.subr.bf16.mxu0 %v6348
    %7350 = vmatpush1.bf16.msra.mxu0 %v6347
    %7351 = vmatprep.subr.bf16.mxu0 %v6352
    %7352 = vmatpush1.bf16.msra.mxu0 %v6351
    %7353 = vmatprep.subr.bf16.mxu0 %v6356
    %7354 = vmatpush1.bf16.msra.mxu0 %v6355
    %7355 = vmatprep.subr.bf16.mxu0 %v6360
    %7356 = vmatpush1.bf16.msra.mxu0 %v6359
    %7357 = vmatprep.subr.bf16.mxu0 %v6364
    %7358 = vmatpush1.bf16.msra.mxu0 %v6363
    %7359 = vmatprep.subr.bf16.mxu0 0
    %7360 = vmatpush1.bf16.msra.mxu0 0
    %7361 = vmatprep.subr.bf16.mxu0 0
    %7362 = vmatpush1.bf16.msra.mxu0 0
    %7363 = vmatprep.subr.bf16.mxu0 0
    %7364 = vmatpush1.bf16.msra.mxu0 0
    %7365 = vmatprep.subr.bf16.mxu0 0
    %7366 = vmatpush1.bf16.msra.mxu0 0
    %7367 = vmatprep.subr.bf16.mxu0 0
    %7368 = vmatpush1.bf16.msra.mxu0 0
    %7369 = vmatprep.subr.bf16.mxu0 0
    %7370 = vmatpush1.bf16.msra.mxu0 0
    %7371 = vmatprep.subr.bf16.mxu0 0
    %7372 = vmatpush1.bf16.msra.mxu0 0
    %7373 = vmatprep.subr.bf16.mxu0 0
    %7374 = vmatpush1.bf16.msra.mxu0 0
    %7375 = vmatprep.mubr.bf16.mxu0 0
    %7376 = vmatmul.mubr.bf16.gmra.mrb[0].mxu0 %v7301
    %v7377 = vpop.f32.mrb[0].mxu0
    %v7378 = vadd.f32 0.0, %v7377
    %v7379 = vpop.f32.mrb[0].mxu0
    %v7380 = vadd.f32 0.0, %v7379
    %v7381 = vpop.f32.mrb[0].mxu0
    %v7382 = vpop.f32.mrb[0].mxu0
    %7383 = vdwg.mxu0
    %v7384 = vadd.f32 %v7297, %v7337
    %v7385 = vadd.f32 %v7298, %v7339
    %v7386 = vadd.f32 %v7299, %v7378
    %v7387 = vadd.f32 %v7300, %v7380
    %v7388 = vxor.u32 %v7384, 2147483648
    %v7389 = vxor.u32 %v7385, 2147483648
    %v7390 = vxor.u32 %v7386, 2147483648
    %v7391 = vmul.f32 %v7388, 1.442695
    %v7392 = vpow.pop %v7391
    %v7393 = vmul.f32 %v7389, 1.442695
    %v7394 = vpow.pop %v7393
    %v7395 = vmul.f32 %v7390, 1.442695
    %v7396 = vpow.pop %v7395
    %v7397 = vadd.f32 %v7392, 1.0
    %v7398 = vadd.f32 %v7394, 1.0
    %v7399 = vadd.f32 %v7396, 1.0
    %v7400 = vrcp.pop %v7397
    %v7401 = vmul.f32 1.0, %v7400
    %v7402 = vrcp.pop %v7398
    %v7403 = vmul.f32 1.0, %v7402
    %v7404 = vrcp.pop %v7399
    %v7405 = vmul.f32 1.0, %v7404
    %v7406 = vtanh.pop %v7387
    %v7407 = vmul.f32 %v7403, %v7228
    %v7408 = vmul.f32 %v7401, %v7406
    %v7409 = vadd.f32 %v7407, %v7408
    %v7410 = vtanh.pop %v7409
    %v7411 = vmul.f32 %v7405, %v7410
    %v7413 = vcombine.high %v7411, %v7411
    %v7415 = vunpack.c.l.s4 1966171168
    %v7416 = vunpack.c.0.s8 %v7415
    %v7417 = vlaneseq
    %v7418 = vshrl.u32 %v7417, 7
    %v7419 = vsub.s32 %v7416, %v7418
    %v7420 = vrot.slane %v7411, %v7419
    %v7422 = vunpack.c.l.s4 1966171168
    %v7423 = vunpack.c.0.s8 %v7422
    %v7424 = vlaneseq
    %v7425 = vshrl.u32 %v7424, 7
    %v7426 = vsub.s32 %v7423, %v7425
    %v7427 = vrot.slane %v7413, %v7426
    %v7428 = vcombine.high %v7420, %v7420
    %v7429 = vcombine.high %v7427, %v7427
    %v7431 = vunpack.c.l.s4 1966171168
    %v7432 = vunpack.c.0.s8 %v7431
    %v7433 = vlaneseq
    %v7434 = vshrl.u32 %v7433, 7
    %v7435 = vsub.s32 %v7432, %v7434
    %v7436 = vrot.slane %v7420, %v7435
    %v7438 = vunpack.c.l.s4 1966171168
    %v7439 = vunpack.c.0.s8 %v7438
    %v7440 = vlaneseq
    %v7441 = vshrl.u32 %v7440, 7
    %v7442 = vsub.s32 %v7439, %v7441
    %v7443 = vrot.slane %v7427, %v7442
    %v7445 = vunpack.c.l.s4 1966171168
    %v7446 = vunpack.c.0.s8 %v7445
    %v7447 = vlaneseq
    %v7448 = vshrl.u32 %v7447, 7
    %v7449 = vsub.s32 %v7446, %v7448
    %v7450 = vrot.slane %v7428, %v7449
    %v7452 = vunpack.c.l.s4 1966171168
    %v7453 = vunpack.c.0.s8 %v7452
    %v7454 = vlaneseq
    %v7455 = vshrl.u32 %v7454, 7
    %v7456 = vsub.s32 %v7453, %v7455
    %v7457 = vrot.slane %v7429, %v7456
    %v7458 = vcombine.high %v7436, %v7436
    %v7459 = vcombine.high %v7443, %v7443
    %v7460 = vcombine.high %v7450, %v7450
    %v7461 = vcombine.high %v7457, %v7457
    %7470 = vst [vmem:[%s19 + $0x5] sm:$0x1] %v7436
    %7471 = vst [vmem:[%s19 + $0xd] sm:$0x1] %v7450
    %7472 = vst [vmem:[%s19 + $0x15] sm:$0x1] %v7458
    %7473 = vst [vmem:[%s19 + $0x1d] sm:$0x1] %v7460
    %7474 = vst [vmem:[%s19 + $0x25] sm:$0x1] %v7443
    %7475 = vst [vmem:[%s19 + $0x2d] sm:$0x1] %v7457
    %7476 = vst [vmem:[%s19 + $0x35] sm:$0x1] %v7459
    %7477 = vst [vmem:[%s19 + $0x3d] sm:$0x1] %v7461
    %v7478 = vld [vmem:[#allocation2 + $0xc0] sm:$0xff]
    %v7479 = vld [vmem:[#allocation2 + $0xc8] sm:$0xff]
    %v7480 = vld [vmem:[#allocation2 + $0xd0] sm:$0xff]
    %v7481 = vld [vmem:[#allocation2 + $0xd8] sm:$0xff]
    %v7482 = vpack.c.bf16 %v7411, %v7411
    %7483 = vmatprep.subr.bf16.mxu0 %v6334
    %7484 = vmatpush1.bf16.msra.mxu0 %v6333
    %7485 = vmatprep.subr.bf16.mxu0 %v6338
    %7486 = vmatpush1.bf16.msra.mxu0 %v6337
    %7487 = vmatprep.subr.bf16.mxu0 %v6342
    %7488 = vmatpush1.bf16.msra.mxu0 %v6341
    %7489 = vmatprep.subr.bf16.mxu0 %v6346
    %7490 = vmatpush1.bf16.msra.mxu0 %v6345
    %7491 = vmatprep.subr.bf16.mxu0 %v6350
    %7492 = vmatpush1.bf16.msra.mxu0 %v6349
    %7493 = vmatprep.subr.bf16.mxu0 %v6354
    %7494 = vmatpush1.bf16.msra.mxu0 %v6353
    %7495 = vmatprep.subr.bf16.mxu0 %v6358
    %7496 = vmatpush1.bf16.msra.mxu0 %v6357
    %7497 = vmatprep.subr.bf16.mxu0 %v6362
    %7498 = vmatpush1.bf16.msra.mxu0 %v6361
    %7499 = vmatprep.subr.bf16.mxu0 0
    %7500 = vmatpush1.bf16.msra.mxu0 0
    %7501 = vmatprep.subr.bf16.mxu0 0
    %7502 = vmatpush1.bf16.msra.mxu0 0
    %7503 = vmatprep.subr.bf16.mxu0 0
    %7504 = vmatpush1.bf16.msra.mxu0 0
    %7505 = vmatprep.subr.bf16.mxu0 0
    %7506 = vmatpush1.bf16.msra.mxu0 0
    %7507 = vmatprep.subr.bf16.mxu0 0
    %7508 = vmatpush1.bf16.msra.mxu0 0
    %7509 = vmatprep.subr.bf16.mxu0 0
    %7510 = vmatpush1.bf16.msra.mxu0 0
    %7511 = vmatprep.subr.bf16.mxu0 0
    %7512 = vmatpush1.bf16.msra.mxu0 0
    %7513 = vmatprep.subr.bf16.mxu0 0
    %7514 = vmatpush1.bf16.msra.mxu0 0
    %7515 = vmatprep.mubr.bf16.mxu0 0
    %7516 = vmatmul.mubr.bf16.gmra.mrb[0].mxu0 %v7482
    %v7517 = vpop.f32.mrb[0].mxu0
    %v7518 = vadd.f32 0.0, %v7517
    %v7519 = vpop.f32.mrb[0].mxu0
    %v7520 = vadd.f32 0.0, %v7519
    %v7521 = vpop.f32.mrb[0].mxu0
    %v7522 = vpop.f32.mrb[0].mxu0
    %7523 = vdwg.mxu0
    %7524 = vmatprep.subr.bf16.mxu0 %v6336
    %7525 = vmatpush1.bf16.msra.mxu0 %v6335
    %7526 = vmatprep.subr.bf16.mxu0 %v6340
    %7527 = vmatpush1.bf16.msra.mxu0 %v6339
    %7528 = vmatprep.subr.bf16.mxu0 %v6344
    %7529 = vmatpush1.bf16.msra.mxu0 %v6343
    %7530 = vmatprep.subr.bf16.mxu0 %v6348
    %7531 = vmatpush1.bf16.msra.mxu0 %v6347
    %7532 = vmatprep.subr.bf16.mxu0 %v6352
    %7533 = vmatpush1.bf16.msra.mxu0 %v6351
    %7534 = vmatprep.subr.bf16.mxu0 %v6356
    %7535 = vmatpush1.bf16.msra.mxu0 %v6355
    %7536 = vmatprep.subr.bf16.mxu0 %v6360
    %7537 = vmatpush1.bf16.msra.mxu0 %v6359
    %7538 = vmatprep.subr.bf16.mxu0 %v6364
    %7539 = vmatpush1.bf16.msra.mxu0 %v6363
    %7540 = vmatprep.subr.bf16.mxu0 0
    %7541 = vmatpush1.bf16.msra.mxu0 0
    %7542 = vmatprep.subr.bf16.mxu0 0
    %7543 = vmatpush1.bf16.msra.mxu0 0
    %7544 = vmatprep.subr.bf16.mxu0 0
    %7545 = vmatpush1.bf16.msra.mxu0 0
    %7546 = vmatprep.subr.bf16.mxu0 0
    %7547 = vmatpush1.bf16.msra.mxu0 0
    %7548 = vmatprep.subr.bf16.mxu0 0
    %7549 = vmatpush1.bf16.msra.mxu0 0
    %7550 = vmatprep.subr.bf16.mxu0 0
    %7551 = vmatpush1.bf16.msra.mxu0 0
    %7552 = vmatprep.subr.bf16.mxu0 0
    %7553 = vmatpush1.bf16.msra.mxu0 0
    %7554 = vmatprep.subr.bf16.mxu0 0
    %7555 = vmatpush1.bf16.msra.mxu0 0
    %7556 = vmatprep.mubr.bf16.mxu0 0
    %7557 = vmatmul.mubr.bf16.gmra.mrb[0].mxu0 %v7482
    %v7558 = vpop.f32.mrb[0].mxu0
    %v7559 = vadd.f32 0.0, %v7558
    %v7560 = vpop.f32.mrb[0].mxu0
    %v7561 = vadd.f32 0.0, %v7560
    %v7562 = vpop.f32.mrb[0].mxu0
    %v7563 = vpop.f32.mrb[0].mxu0
    %7564 = vdwg.mxu0
    %v7565 = vadd.f32 %v7478, %v7518
    %v7566 = vadd.f32 %v7479, %v7520
    %v7567 = vadd.f32 %v7480, %v7559
    %v7568 = vadd.f32 %v7481, %v7561
    %v7569 = vxor.u32 %v7565, 2147483648
    %v7570 = vxor.u32 %v7566, 2147483648
    %v7571 = vxor.u32 %v7567, 2147483648
    %v7572 = vmul.f32 %v7569, 1.442695
    %v7573 = vpow.pop %v7572
    %v7574 = vmul.f32 %v7570, 1.442695
    %v7575 = vpow.pop %v7574
    %v7576 = vmul.f32 %v7571, 1.442695
    %v7577 = vpow.pop %v7576
    %v7578 = vadd.f32 %v7573, 1.0
    %v7579 = vadd.f32 %v7575, 1.0
    %v7580 = vadd.f32 %v7577, 1.0
    %v7581 = vrcp.pop %v7578
    %v7582 = vmul.f32 1.0, %v7581
    %v7583 = vrcp.pop %v7579
    %v7584 = vmul.f32 1.0, %v7583
    %v7585 = vrcp.pop %v7580
    %v7586 = vmul.f32 1.0, %v7585
    %v7587 = vtanh.pop %v7568
    %v7588 = vmul.f32 %v7584, %v7409
    %v7589 = vmul.f32 %v7582, %v7587
    %v7590 = vadd.f32 %v7588, %v7589
    %v7591 = vtanh.pop %v7590
    %v7592 = vmul.f32 %v7586, %v7591
    %v7594 = vcombine.high %v7592, %v7592
    %v7596 = vunpack.c.l.s4 1966171168
    %v7597 = vunpack.c.0.s8 %v7596
    %v7598 = vlaneseq
    %v7599 = vshrl.u32 %v7598, 7
    %v7600 = vsub.s32 %v7597, %v7599
    %v7601 = vrot.slane %v7592, %v7600
    %v7603 = vunpack.c.l.s4 1966171168
    %v7604 = vunpack.c.0.s8 %v7603
    %v7605 = vlaneseq
    %v7606 = vshrl.u32 %v7605, 7
    %v7607 = vsub.s32 %v7604, %v7606
    %v7608 = vrot.slane %v7594, %v7607
    %v7609 = vcombine.high %v7601, %v7601
    %v7610 = vcombine.high %v7608, %v7608
    %v7612 = vunpack.c.l.s4 1966171168
    %v7613 = vunpack.c.0.s8 %v7612
    %v7614 = vlaneseq
    %v7615 = vshrl.u32 %v7614, 7
    %v7616 = vsub.s32 %v7613, %v7615
    %v7617 = vrot.slane %v7601, %v7616
    %v7619 = vunpack.c.l.s4 1966171168
    %v7620 = vunpack.c.0.s8 %v7619
    %v7621 = vlaneseq
    %v7622 = vshrl.u32 %v7621, 7
    %v7623 = vsub.s32 %v7620, %v7622
    %v7624 = vrot.slane %v7608, %v7623
    %v7626 = vunpack.c.l.s4 1966171168
    %v7627 = vunpack.c.0.s8 %v7626
    %v7628 = vlaneseq
    %v7629 = vshrl.u32 %v7628, 7
    %v7630 = vsub.s32 %v7627, %v7629
    %v7631 = vrot.slane %v7609, %v7630
    %v7633 = vunpack.c.l.s4 1966171168
    %v7634 = vunpack.c.0.s8 %v7633
    %v7635 = vlaneseq
    %v7636 = vshrl.u32 %v7635, 7
    %v7637 = vsub.s32 %v7634, %v7636
    %v7638 = vrot.slane %v7610, %v7637
    %v7639 = vcombine.high %v7617, %v7617
    %v7640 = vcombine.high %v7624, %v7624
    %v7641 = vcombine.high %v7631, %v7631
    %v7642 = vcombine.high %v7638, %v7638
    %7651 = vst [vmem:[%s19 + $0x6] sm:$0x1] %v7617
    %7652 = vst [vmem:[%s19 + $0xe] sm:$0x1] %v7631
    %7653 = vst [vmem:[%s19 + $0x16] sm:$0x1] %v7639
    %7654 = vst [vmem:[%s19 + $0x1e] sm:$0x1] %v7641
    %7655 = vst [vmem:[%s19 + $0x26] sm:$0x1] %v7624
    %7656 = vst [vmem:[%s19 + $0x2e] sm:$0x1] %v7638
    %7657 = vst [vmem:[%s19 + $0x36] sm:$0x1] %v7640
    %7658 = vst [vmem:[%s19 + $0x3e] sm:$0x1] %v7642
    %v7659 = vld [vmem:[#allocation2 + $0xe0] sm:$0xff]
    %v7660 = vld [vmem:[#allocation2 + $0xe8] sm:$0xff]
    %v7661 = vld [vmem:[#allocation2 + $0xf0] sm:$0xff]
    %v7662 = vld [vmem:[#allocation2 + $0xf8] sm:$0xff]
    %v7663 = vpack.c.bf16 %v7592, %v7592
    %7664 = vmatprep.subr.bf16.mxu0 %v6334
    %7665 = vmatpush1.bf16.msra.mxu0 %v6333
    %7666 = vmatprep.subr.bf16.mxu0 %v6338
    %7667 = vmatpush1.bf16.msra.mxu0 %v6337
    %7668 = vmatprep.subr.bf16.mxu0 %v6342
    %7669 = vmatpush1.bf16.msra.mxu0 %v6341
    %7670 = vmatprep.subr.bf16.mxu0 %v6346
    %7671 = vmatpush1.bf16.msra.mxu0 %v6345
    %7672 = vmatprep.subr.bf16.mxu0 %v6350
    %7673 = vmatpush1.bf16.msra.mxu0 %v6349
    %7674 = vmatprep.subr.bf16.mxu0 %v6354
    %7675 = vmatpush1.bf16.msra.mxu0 %v6353
    %7676 = vmatprep.subr.bf16.mxu0 %v6358
    %7677 = vmatpush1.bf16.msra.mxu0 %v6357
    %7678 = vmatprep.subr.bf16.mxu0 %v6362
    %7679 = vmatpush1.bf16.msra.mxu0 %v6361
    %7680 = vmatprep.subr.bf16.mxu0 0
    %7681 = vmatpush1.bf16.msra.mxu0 0
    %7682 = vmatprep.subr.bf16.mxu0 0
    %7683 = vmatpush1.bf16.msra.mxu0 0
    %7684 = vmatprep.subr.bf16.mxu0 0
    %7685 = vmatpush1.bf16.msra.mxu0 0
    %7686 = vmatprep.subr.bf16.mxu0 0
    %7687 = vmatpush1.bf16.msra.mxu0 0
    %7688 = vmatprep.subr.bf16.mxu0 0
    %7689 = vmatpush1.bf16.msra.mxu0 0
    %7690 = vmatprep.subr.bf16.mxu0 0
    %7691 = vmatpush1.bf16.msra.mxu0 0
    %7692 = vmatprep.subr.bf16.mxu0 0
    %7693 = vmatpush1.bf16.msra.mxu0 0
    %7694 = vmatprep.subr.bf16.mxu0 0
    %7695 = vmatpush1.bf16.msra.mxu0 0
    %7696 = vmatprep.mubr.bf16.mxu0 0
    %7697 = vmatmul.mubr.bf16.gmra.mrb[0].mxu0 %v7663
    %v7698 = vpop.f32.mrb[0].mxu0
    %v7699 = vadd.f32 0.0, %v7698
    %v7700 = vpop.f32.mrb[0].mxu0
    %v7701 = vadd.f32 0.0, %v7700
    %v7702 = vpop.f32.mrb[0].mxu0
    %v7703 = vpop.f32.mrb[0].mxu0
    %7704 = vdwg.mxu0
    %7705 = vmatprep.subr.bf16.mxu0 %v6336
    %7706 = vmatpush1.bf16.msra.mxu0 %v6335
    %7707 = vmatprep.subr.bf16.mxu0 %v6340
    %7708 = vmatpush1.bf16.msra.mxu0 %v6339
    %7709 = vmatprep.subr.bf16.mxu0 %v6344
    %7710 = vmatpush1.bf16.msra.mxu0 %v6343
    %7711 = vmatprep.subr.bf16.mxu0 %v6348
    %7712 = vmatpush1.bf16.msra.mxu0 %v6347
    %7713 = vmatprep.subr.bf16.mxu0 %v6352
    %7714 = vmatpush1.bf16.msra.mxu0 %v6351
    %7715 = vmatprep.subr.bf16.mxu0 %v6356
    %7716 = vmatpush1.bf16.msra.mxu0 %v6355
    %7717 = vmatprep.subr.bf16.mxu0 %v6360
    %7718 = vmatpush1.bf16.msra.mxu0 %v6359
    %7719 = vmatprep.subr.bf16.mxu0 %v6364
    %7720 = vmatpush1.bf16.msra.mxu0 %v6363
    %7721 = vmatprep.subr.bf16.mxu0 0
    %7722 = vmatpush1.bf16.msra.mxu0 0
    %7723 = vmatprep.subr.bf16.mxu0 0
    %7724 = vmatpush1.bf16.msra.mxu0 0
    %7725 = vmatprep.subr.bf16.mxu0 0
    %7726 = vmatpush1.bf16.msra.mxu0 0
    %7727 = vmatprep.subr.bf16.mxu0 0
    %7728 = vmatpush1.bf16.msra.mxu0 0
    %7729 = vmatprep.subr.bf16.mxu0 0
    %7730 = vmatpush1.bf16.msra.mxu0 0
    %7731 = vmatprep.subr.bf16.mxu0 0
    %7732 = vmatpush1.bf16.msra.mxu0 0
    %7733 = vmatprep.subr.bf16.mxu0 0
    %7734 = vmatpush1.bf16.msra.mxu0 0
    %7735 = vmatprep.subr.bf16.mxu0 0
    %7736 = vmatpush1.bf16.msra.mxu0 0
    %7737 = vmatprep.mubr.bf16.mxu0 0
    %7738 = vmatmul.mubr.bf16.gmra.mrb[0].mxu0 %v7663
    %v7739 = vpop.f32.mrb[0].mxu0
    %v7740 = vadd.f32 0.0, %v7739
    %v7741 = vpop.f32.mrb[0].mxu0
    %v7742 = vadd.f32 0.0, %v7741
    %v7743 = vpop.f32.mrb[0].mxu0
    %v7744 = vpop.f32.mrb[0].mxu0
    %7745 = vdwg.mxu0
    %v7746 = vadd.f32 %v7659, %v7699
    %v7747 = vadd.f32 %v7660, %v7701
    %v7748 = vadd.f32 %v7661, %v7740
    %v7749 = vadd.f32 %v7662, %v7742
    %v7750 = vxor.u32 %v7746, 2147483648
    %v7751 = vxor.u32 %v7747, 2147483648
    %v7752 = vxor.u32 %v7748, 2147483648
    %v7753 = vmul.f32 %v7750, 1.442695
    %v7754 = vpow.pop %v7753
    %v7755 = vmul.f32 %v7751, 1.442695
    %v7756 = vpow.pop %v7755
    %v7757 = vmul.f32 %v7752, 1.442695
    %v7758 = vpow.pop %v7757
    %v7759 = vadd.f32 %v7754, 1.0
    %v7760 = vadd.f32 %v7756, 1.0
    %v7761 = vadd.f32 %v7758, 1.0
    %v7762 = vrcp.pop %v7759
    %v7763 = vmul.f32 1.0, %v7762
    %v7764 = vrcp.pop %v7760
    %v7765 = vmul.f32 1.0, %v7764
    %v7766 = vrcp.pop %v7761
    %v7767 = vmul.f32 1.0, %v7766
    %v7768 = vtanh.pop %v7749
    %v7769 = vmul.f32 %v7765, %v7590
    %v7770 = vmul.f32 %v7763, %v7768
    %v7771 = vadd.f32 %v7769, %v7770
    %v7772 = vtanh.pop %v7771
    %v7773 = vmul.f32 %v7767, %v7772
    %v7775 = vcombine.high %v7773, %v7773
    %v7777 = vunpack.c.l.s4 1966171168
    %v7778 = vunpack.c.0.s8 %v7777
    %v7779 = vlaneseq
    %v7780 = vshrl.u32 %v7779, 7
    %v7781 = vsub.s32 %v7778, %v7780
    %v7782 = vrot.slane %v7773, %v7781
    %v7784 = vunpack.c.l.s4 1966171168
    %v7785 = vunpack.c.0.s8 %v7784
    %v7786 = vlaneseq
    %v7787 = vshrl.u32 %v7786, 7
    %v7788 = vsub.s32 %v7785, %v7787
    %v7789 = vrot.slane %v7775, %v7788
    %v7790 = vcombine.high %v7782, %v7782
    %v7791 = vcombine.high %v7789, %v7789
    %v7793 = vunpack.c.l.s4 1966171168
    %v7794 = vunpack.c.0.s8 %v7793
    %v7795 = vlaneseq
    %v7796 = vshrl.u32 %v7795, 7
    %v7797 = vsub.s32 %v7794, %v7796
    %v7798 = vrot.slane %v7782, %v7797
    %v7800 = vunpack.c.l.s4 1966171168
    %v7801 = vunpack.c.0.s8 %v7800
    %v7802 = vlaneseq
    %v7803 = vshrl.u32 %v7802, 7
    %v7804 = vsub.s32 %v7801, %v7803
    %v7805 = vrot.slane %v7789, %v7804
    %v7807 = vunpack.c.l.s4 1966171168
    %v7808 = vunpack.c.0.s8 %v7807
    %v7809 = vlaneseq
    %v7810 = vshrl.u32 %v7809, 7
    %v7811 = vsub.s32 %v7808, %v7810
    %v7812 = vrot.slane %v7790, %v7811
    %v7814 = vunpack.c.l.s4 1966171168
    %v7815 = vunpack.c.0.s8 %v7814
    %v7816 = vlaneseq
    %v7817 = vshrl.u32 %v7816, 7
    %v7818 = vsub.s32 %v7815, %v7817
    %v7819 = vrot.slane %v7791, %v7818
    %v7820 = vcombine.high %v7798, %v7798
    %v7821 = vcombine.high %v7805, %v7805
    %v7822 = vcombine.high %v7812, %v7812
    %v7823 = vcombine.high %v7819, %v7819
    %7832 = vst [vmem:[%s19 + $0x7] sm:$0x1] %v7798
    %7833 = vst [vmem:[%s19 + $0xf] sm:$0x1] %v7812
    %7834 = vst [vmem:[%s19 + $0x17] sm:$0x1] %v7820
    %7835 = vst [vmem:[%s19 + $0x1f] sm:$0x1] %v7822
    %7836 = vst [vmem:[%s19 + $0x27] sm:$0x1] %v7805
    %7837 = vst [vmem:[%s19 + $0x2f] sm:$0x1] %v7819
    %7838 = vst [vmem:[%s19 + $0x37] sm:$0x1] %v7821
    %7839 = vst [vmem:[%s19 + $0x3f] sm:$0x1] %v7823
    // Predicated region
    $region118: #{video_title_generator_forward.2} parent=1 // pred_check
      _
    $region119: #{video_title_generator_forward.2} parent=1 // pred_check_branch
      %7841 = sbr.rel (0) target = $region121
    $region120: #{video_title_generator_forward.2} parent=1 // pred_region
      _
    $region121: #{video_title_generator_forward.2} parent=1 // pred_fallthru
      _
    // Predicated region
    $region122: #{video_title_generator_forward.2} parent=1 // pred_check
      _
    $region123: #{video_title_generator_forward.2} parent=1 // pred_check_branch
      %7843 = sbr.rel (0) target = $region125
    $region124: #{video_title_generator_forward.2} parent=1 // pred_region
      _
    $region125: #{video_title_generator_forward.2} parent=1 // pred_fallthru
      _
    %7844 = vsyncpa [#allocation5], 1
    %7845 = vsyncpa [#allocation9], 1
    %7846 = vsyncpa [#allocation12], 1
    %7847 = vsyncpa [#allocation15], 1
    %7848 = vsyncpa [#allocation18], 1
    %7849 = vsyncpa [#allocation6], 1

</llo_original>
